<compile_context>
chip_gen: v6e
topology: v6e:2x2x1
jax: 0.10.0
libtpu: 0.0.40
codegen_flags: <defaults>
</compile_context>

<pallas_src>
import jax
import jax.numpy as jnp
from jax.experimental import pallas as pl
from jax.experimental.pallas import tpu as pltpu

LANE = 128  # TPU lane width; channel axes are padded to a multiple of this.


def _round_up(n, m):
    return ((n + m - 1) // m) * m


def _conv3x3_bn_relu(xp_ref, patch_ref, w_ref, s_ref, b_ref):
    """3x3 same-pad conv as a single im2col matmul + fused per-channel affine + ReLU.

    xp_ref   : (H+2, W+2, Cp) bf16  zero-border padded source (VMEM scratch)
    patch_ref: (H, W, 9*Cp)   bf16  im2col scratch (VMEM)
    w_ref    : (9*Cp, Cp)     bf16  flattened conv weights, rows ordered (dy, dx, cin)
    s_ref    : (1, Cp)        f32   folded BN scale (zero in padded channels)
    b_ref    : (1, Cp)        f32   folded BN bias  (zero in padded channels)
    returns  : (H*W, Cp)      f32   activation
    """
    H, W, Cp9 = patch_ref.shape
    Cp = Cp9 // 9

    # im2col: 9 shifted taps packed along the lane axis.  Cp is a multiple of 128 so
    # every destination offset j*Cp is lane-aligned -> plain full-vreg stores; the
    # dy/dx shifts are cheap sublane/XLU work.
    for j in range(9):
        dy, dx = divmod(j, 3)
        patch_ref[:, :, j * Cp:(j + 1) * Cp] = xp_ref[dy:dy + H, dx:dx + W, :]

    # W is a multiple of 8, so (H, W, 9Cp) -> (H*W, 9Cp) is a free sublane merge.
    patch = patch_ref[...].reshape(H * W, 9 * Cp)
    # One bf16 MXU matmul with K = 9*Cp, f32 accumulation.
    acc = jnp.dot(patch, w_ref[...], preferred_element_type=jnp.float32)
    # f32 epilogue (BN affine + ReLU); padded channels come out exactly 0.
    return jnp.maximum(acc * s_ref[...] + b_ref[...], 0.0)


def double_conv_kernel(x_ref, w1_ref, s1_ref, b1_ref, w2_ref, s2_ref, b2_ref,
                       o_ref, xp_ref, patch_ref):
    """Fused (conv3x3 -> BN -> ReLU) x 2 for one batch element.

    x_ref    : (H, W, Cp)      bf16 channel-padded input tile
    o_ref    : (H, W, Cp)      f32  channel-padded output tile (padding sliced off in wrapper)
    xp_ref   : (H+2, W+2, Cp)  bf16 shared padded-activation scratch
    patch_ref: (H, W, 9*Cp)    bf16 shared im2col scratch
    """
    H, W, Cp = o_ref.shape

    # Border-only zeroing (4 thin slabs).  The (H, W) interior is fully overwritten by
    # each stage, so the border stays zero for both convs.  No full-buffer memset.
    xp_ref[0:1, :, :] = jnp.zeros((1, W + 2, Cp), xp_ref.dtype)
    xp_ref[H + 1:H + 2, :, :] = jnp.zeros((1, W + 2, Cp), xp_ref.dtype)
    xp_ref[:, 0:1, :] = jnp.zeros((H + 2, 1, Cp), xp_ref.dtype)
    xp_ref[:, W + 1:W + 2, :] = jnp.zeros((H + 2, 1, Cp), xp_ref.dtype)

    # Stage 1: conv(x) -> BN -> ReLU.
    xp_ref[1:H + 1, 1:W + 1, :] = x_ref[...]
    h = _conv3x3_bn_relu(xp_ref, patch_ref, w1_ref, s1_ref, b1_ref)

    # Stage 2: intermediate activation stays in VMEM (bf16), reusing the same scratches.
    xp_ref[1:H + 1, 1:W + 1, :] = h.reshape(H, W, Cp).astype(xp_ref.dtype)
    y = _conv3x3_bn_relu(xp_ref, patch_ref, w2_ref, s2_ref, b2_ref)

    # Lane-dense (Cp = 128*k) unmasked output store.
    o_ref[...] = y.reshape(H, W, Cp).astype(o_ref.dtype)


def double_conv_pallas(x_pad, w1, s1, b1, w2, s2, b2):
    """Launch the fused DoubleConv kernel over the batch.

    x_pad: (N, H, W, Cp) bf16, channels already zero-padded to Cp (multiple of 128).
    Returns (N, H, W, Cp) f32 (padded channels are zero).
    """
    N, H, W, Cp = x_pad.shape
    assert Cp % LANE == 0, "channel axis must be padded to a multiple of 128 lanes"
    assert W % 8 == 0, "W must be a multiple of 8 so the (H,W,*)<->(H*W,*) reshapes are free"
    assert w1.shape == (9 * Cp, Cp) and w2.shape == (9 * Cp, Cp)

    return pl.pallas_call(
        double_conv_kernel,
        out_shape=jax.ShapeDtypeStruct((N, H, W, Cp), jnp.float32),
        grid_spec=pltpu.PrefetchScalarGridSpec(
            num_scalar_prefetch=0,
            grid=(N,),
            in_specs=[
                pl.BlockSpec((None, H, W, Cp), lambda n: (n, 0, 0, 0)),
                pl.BlockSpec((9 * Cp, Cp), lambda n: (0, 0)),
                pl.BlockSpec((1, Cp), lambda n: (0, 0)),
                pl.BlockSpec((1, Cp), lambda n: (0, 0)),
                pl.BlockSpec((9 * Cp, Cp), lambda n: (0, 0)),
                pl.BlockSpec((1, Cp), lambda n: (0, 0)),
                pl.BlockSpec((1, Cp), lambda n: (0, 0)),
            ],
            out_specs=pl.BlockSpec((None, H, W, Cp), lambda n: (n, 0, 0, 0)),
            scratch_shapes=[
                # Shared by both conv stages (bf16 halves the footprint vs f32).
                pltpu.VMEM((H + 2, W + 2, Cp), jnp.bfloat16),
                pltpu.VMEM((H, W, 9 * Cp), jnp.bfloat16),
            ],
        ),
        compiler_params=pltpu.CompilerParams(
            # NOTE: "parallel" only annotates independence; true v7x megacore split
            # would need pltpu.CORE_PARALLEL / pl.core_map (see TODO in header).
            dimension_semantics=("parallel",)),
    )(x_pad, w1, s1, b1, w2, s2, b2)


def init_double_conv_params(key, in_channels, out_channels):
    """Deterministic synthetic params in PyTorch-native layouts (OIHW weights, BN stats)."""
    k1, k2, k3, k4, k5, k6 = jax.random.split(key, 6)
    return {
        "w1": 0.1 * jax.random.normal(k1, (out_channels, in_channels, 3, 3), jnp.float32),
        "w2": 0.1 * jax.random.normal(k2, (out_channels, out_channels, 3, 3), jnp.float32),
        "gamma1": 1.0 + 0.1 * jax.random.normal(k3, (out_channels,), jnp.float32),
        "beta1": 0.1 * jax.random.normal(k4, (out_channels,), jnp.float32),
        "mean1": jnp.zeros((out_channels,), jnp.float32),
        "var1": jnp.ones((out_channels,), jnp.float32),
        "gamma2": 1.0 + 0.1 * jax.random.normal(k5, (out_channels,), jnp.float32),
        "beta2": 0.1 * jax.random.normal(k6, (out_channels,), jnp.float32),
        "mean2": jnp.zeros((out_channels,), jnp.float32),
        "var2": jnp.ones((out_channels,), jnp.float32),
    }


@jax.jit
def double_conv_forward(x_nchw, params):
    """Forward pass equivalent to DoubleConv.forward (NCHW in, NCHW out)."""
    eps = 1e-5
    Cout, Cin = params["w1"].shape[:2]
    Cp = _round_up(max(Cin, Cout), LANE)   # one lane-padded channel width for both stages

    def prep_w(w_oihw):
        # OIHW -> (kh, kw, cin, cout), zero-pad both channel axes to Cp, flatten rows
        # (dy, dx, cin)-major to match the kernel's im2col packing, cast to bf16.
        o, i = w_oihw.shape[:2]
        w = jnp.transpose(w_oihw, (2, 3, 1, 0))
        w = jnp.pad(w, ((0, 0), (0, 0), (0, Cp - i), (0, Cp - o)))
        return w.reshape(9 * Cp, Cp).astype(jnp.bfloat16)

    def fold_bn(gamma, beta, mean, var):
        s = gamma * jax.lax.rsqrt(var + eps)
        b = beta - mean * s
        pad = (0, Cp - s.shape[0])  # zero scale/bias in padded channels -> ReLU(0)=0
        return jnp.pad(s, pad).reshape(1, Cp), jnp.pad(b, pad).reshape(1, Cp)

    w1 = prep_w(params["w1"])
    w2 = prep_w(params["w2"])
    s1, b1 = fold_bn(params["gamma1"], params["beta1"], params["mean1"], params["var1"])
    s2, b2 = fold_bn(params["gamma2"], params["beta2"], params["mean2"], params["var2"])

    # NCHW -> NHWC, zero-pad channels to Cp lanes, bf16 for the MXU (boundary only).
    x = jnp.transpose(x_nchw, (0, 2, 3, 1))
    x = jnp.pad(x, ((0, 0), (0, 0), (0, 0), (0, Cp - Cin))).astype(jnp.bfloat16)

    y = double_conv_pallas(x, w1, s1, b1, w2, s2, b2)
    y = y[..., :Cout]                               # strip lane padding
    return jnp.transpose(y, (0, 3, 1, 2))           # NHWC -> NCHW


def double_conv_reference(x_nchw, params, eps=1e-5):
    """Pure-JAX f32 reference (XLA convs) for correctness checking."""
    def stage(x, w, gamma, beta, mean, var):
        y = jax.lax.conv_general_dilated(
            x, w, window_strides=(1, 1), padding=((1, 1), (1, 1)),
            dimension_numbers=("NCHW", "OIHW", "NCHW"),
            precision=jax.lax.Precision.HIGHEST)
        s = gamma * jax.lax.rsqrt(var + eps)
        y = y * s[None, :, None, None] + (beta - mean * s)[None, :, None, None]
        return jnp.maximum(y, 0.0)

    h = stage(x_nchw, params["w1"], params["gamma1"], params["beta1"],
              params["mean1"], params["var1"])
    return stage(h, params["w2"], params["gamma2"], params["beta2"],
                 params["mean2"], params["var2"])


if __name__ == "__main__":
    key = jax.random.PRNGKey(0)
    kx, kp = jax.random.split(key)

    N, C_in, C_out, H, W = 2, 4, 8, 16, 16
    x = jax.random.normal(kx, (N, C_in, H, W), jnp.float32)
    params = init_double_conv_params(kp, C_in, C_out)

    out = jax.block_until_ready(double_conv_forward(x, params))

    assert out.shape == (N, C_out, H, W), out.shape
    assert bool(jnp.all(jnp.isfinite(out)))
    assert bool(jnp.all(out >= 0.0))  # ReLU output

    ref = double_conv_reference(x, params)
    max_err = float(jnp.max(jnp.abs(out - ref)))
    # bf16 MXU operands with f32 accumulation: tolerance loosened accordingly.
    assert bool(jnp.allclose(out, ref, atol=3e-2, rtol=3e-2)), max_err

    print("KERNEL_OK")
</pallas_src>

<mosaic_0001>
module attributes {stable_mosaic.version = 11 : i64} {
  func.func @double_conv_kernel(%arg0: i32, %arg1: memref<1x16x16x128xbf16, #tpu.memory_space<vmem>>, %arg2: memref<1152x128xbf16, #tpu.memory_space<vmem>>, %arg3: memref<1x128xf32, #tpu.memory_space<vmem>>, %arg4: memref<1x128xf32, #tpu.memory_space<vmem>>, %arg5: memref<1152x128xbf16, #tpu.memory_space<vmem>>, %arg6: memref<1x128xf32, #tpu.memory_space<vmem>>, %arg7: memref<1x128xf32, #tpu.memory_space<vmem>>, %arg8: memref<1x16x16x128xf32, #tpu.memory_space<vmem>>, %arg9: memref<18x18x128xbf16, #tpu.memory_space<vmem>>, %arg10: memref<16x16x1152xbf16, #tpu.memory_space<vmem>>) attributes {dimension_semantics = [#tpu.dimension_semantics<parallel>], iteration_bounds = array<i64: 2>, scalar_prefetch = 0 : i64, scratch_operands = 2 : i64, tpu.core_type = #tpu.core_type<tc>, window_params = [{transform_indices = @transform_0, window_bounds = array<i64: 1, 16, 16, 128>}, {pipeline_mode = #tpu.pipeline_mode<synchronous>, transform_indices = @transform_1, window_bounds = array<i64: 1152, 128>}, {pipeline_mode = #tpu.pipeline_mode<synchronous>, transform_indices = @transform_2, window_bounds = array<i64: 1, 128>}, {pipeline_mode = #tpu.pipeline_mode<synchronous>, transform_indices = @transform_3, window_bounds = array<i64: 1, 128>}, {pipeline_mode = #tpu.pipeline_mode<synchronous>, transform_indices = @transform_4, window_bounds = array<i64: 1152, 128>}, {pipeline_mode = #tpu.pipeline_mode<synchronous>, transform_indices = @transform_5, window_bounds = array<i64: 1, 128>}, {pipeline_mode = #tpu.pipeline_mode<synchronous>, transform_indices = @transform_6, window_bounds = array<i64: 1, 128>}, {transform_indices = @transform_7, window_bounds = array<i64: 1, 16, 16, 128>}]} {
    %cst = arith.constant 0.000000e+00 : bf16
    %0 = vector.broadcast %cst : bf16 to vector<1x18x128xbf16>
    %c0 = arith.constant 0 : index
    %c0_0 = arith.constant 0 : index
    %c0_1 = arith.constant 0 : index
    %1 = vector.load %arg9[%c0, %c0_0, %c0_1] : memref<18x18x128xbf16, #tpu.memory_space<vmem>>, vector<1x18x128xbf16>
    tpu.vector_store %arg9[%c0, %c0_0, %c0_1], %0 {strides = array<i32>} : memref<18x18x128xbf16, #tpu.memory_space<vmem>>, vector<1x18x128xbf16>,
    %cst_2 = arith.constant 0.000000e+00 : bf16
    %2 = vector.broadcast %cst_2 : bf16 to vector<1x18x128xbf16>
    %c17 = arith.constant 17 : index
    %c0_3 = arith.constant 0 : index
    %c0_4 = arith.constant 0 : index
    %3 = vector.load %arg9[%c17, %c0_3, %c0_4] : memref<18x18x128xbf16, #tpu.memory_space<vmem>>, vector<1x18x128xbf16>
    tpu.vector_store %arg9[%c17, %c0_3, %c0_4], %2 {strides = array<i32>} : memref<18x18x128xbf16, #tpu.memory_space<vmem>>, vector<1x18x128xbf16>,
    %cst_5 = arith.constant 0.000000e+00 : bf16
    %4 = vector.broadcast %cst_5 : bf16 to vector<18x1x128xbf16>
    %c0_6 = arith.constant 0 : index
    %c0_7 = arith.constant 0 : index
    %c0_8 = arith.constant 0 : index
    %5 = vector.load %arg9[%c0_6, %c0_7, %c0_8] : memref<18x18x128xbf16, #tpu.memory_space<vmem>>, vector<18x1x128xbf16>
    tpu.vector_store %arg9[%c0_6, %c0_7, %c0_8], %4 {strides = array<i32>} : memref<18x18x128xbf16, #tpu.memory_space<vmem>>, vector<18x1x128xbf16>,
    %cst_9 = arith.constant 0.000000e+00 : bf16
    %6 = vector.broadcast %cst_9 : bf16 to vector<18x1x128xbf16>
    %c0_10 = arith.constant 0 : index
    %c17_11 = arith.constant 17 : index
    %c0_12 = arith.constant 0 : index
    %7 = vector.load %arg9[%c0_10, %c17_11, %c0_12] : memref<18x18x128xbf16, #tpu.memory_space<vmem>>, vector<18x1x128xbf16>
    tpu.vector_store %arg9[%c0_10, %c17_11, %c0_12], %6 {strides = array<i32>} : memref<18x18x128xbf16, #tpu.memory_space<vmem>>, vector<18x1x128xbf16>,
    %c0_13 = arith.constant 0 : index
    %c0_14 = arith.constant 0 : index
    %c0_15 = arith.constant 0 : index
    %c0_16 = arith.constant 0 : index
    %8 = vector.load %arg1[%c0_13, %c0_14, %c0_15, %c0_16] : memref<1x16x16x128xbf16, #tpu.memory_space<vmem>>, vector<1x16x16x128xbf16>
    %9 = vector.shape_cast %8 : vector<1x16x16x128xbf16> to vector<16x16x128xbf16>
    %c1 = arith.constant 1 : index
    %c1_17 = arith.constant 1 : index
    %c0_18 = arith.constant 0 : index
    %10 = vector.load %arg9[%c1, %c1_17, %c0_18] : memref<18x18x128xbf16, #tpu.memory_space<vmem>>, vector<16x16x128xbf16>
    tpu.vector_store %arg9[%c1, %c1_17, %c0_18], %9 {strides = array<i32>} : memref<18x18x128xbf16, #tpu.memory_space<vmem>>, vector<16x16x128xbf16>,
    %c0_19 = arith.constant 0 : index
    %c0_20 = arith.constant 0 : index
    %c0_21 = arith.constant 0 : index
    %11 = vector.load %arg9[%c0_19, %c0_20, %c0_21] : memref<18x18x128xbf16, #tpu.memory_space<vmem>>, vector<16x16x128xbf16>
    %c0_22 = arith.constant 0 : index
    %c0_23 = arith.constant 0 : index
    %c0_24 = arith.constant 0 : index
    %12 = vector.load %arg10[%c0_22, %c0_23, %c0_24] : memref<16x16x1152xbf16, #tpu.memory_space<vmem>>, vector<16x16x128xbf16>
    tpu.vector_store %arg10[%c0_22, %c0_23, %c0_24], %11 {strides = array<i32>} : memref<16x16x1152xbf16, #tpu.memory_space<vmem>>, vector<16x16x128xbf16>,
    %c0_25 = arith.constant 0 : index
    %c1_26 = arith.constant 1 : index
    %c0_27 = arith.constant 0 : index
    %13 = vector.load %arg9[%c0_25, %c1_26, %c0_27] : memref<18x18x128xbf16, #tpu.memory_space<vmem>>, vector<16x16x128xbf16>
    %c0_28 = arith.constant 0 : index
    %c0_29 = arith.constant 0 : index
    %c128 = arith.constant 128 : index
    %14 = vector.load %arg10[%c0_28, %c0_29, %c128] : memref<16x16x1152xbf16, #tpu.memory_space<vmem>>, vector<16x16x128xbf16>
    tpu.vector_store %arg10[%c0_28, %c0_29, %c128], %13 {strides = array<i32>} : memref<16x16x1152xbf16, #tpu.memory_space<vmem>>, vector<16x16x128xbf16>,
    %c0_30 = arith.constant 0 : index
    %c2 = arith.constant 2 : index
    %c0_31 = arith.constant 0 : index
    %15 = vector.load %arg9[%c0_30, %c2, %c0_31] : memref<18x18x128xbf16, #tpu.memory_space<vmem>>, vector<16x16x128xbf16>
    %c0_32 = arith.constant 0 : index
    %c0_33 = arith.constant 0 : index
    %c256 = arith.constant 256 : index
    %16 = vector.load %arg10[%c0_32, %c0_33, %c256] : memref<16x16x1152xbf16, #tpu.memory_space<vmem>>, vector<16x16x128xbf16>
    tpu.vector_store %arg10[%c0_32, %c0_33, %c256], %15 {strides = array<i32>} : memref<16x16x1152xbf16, #tpu.memory_space<vmem>>, vector<16x16x128xbf16>,
    %c1_34 = arith.constant 1 : index
    %c0_35 = arith.constant 0 : index
    %c0_36 = arith.constant 0 : index
    %17 = vector.load %arg9[%c1_34, %c0_35, %c0_36] : memref<18x18x128xbf16, #tpu.memory_space<vmem>>, vector<16x16x128xbf16>
    %c0_37 = arith.constant 0 : index
    %c0_38 = arith.constant 0 : index
    %c384 = arith.constant 384 : index
    %18 = vector.load %arg10[%c0_37, %c0_38, %c384] : memref<16x16x1152xbf16, #tpu.memory_space<vmem>>, vector<16x16x128xbf16>
    tpu.vector_store %arg10[%c0_37, %c0_38, %c384], %17 {strides = array<i32>} : memref<16x16x1152xbf16, #tpu.memory_space<vmem>>, vector<16x16x128xbf16>,
    %c1_39 = arith.constant 1 : index
    %c1_40 = arith.constant 1 : index
    %c0_41 = arith.constant 0 : index
    %19 = vector.load %arg9[%c1_39, %c1_40, %c0_41] : memref<18x18x128xbf16, #tpu.memory_space<vmem>>, vector<16x16x128xbf16>
    %c0_42 = arith.constant 0 : index
    %c0_43 = arith.constant 0 : index
    %c512 = arith.constant 512 : index
    %20 = vector.load %arg10[%c0_42, %c0_43, %c512] : memref<16x16x1152xbf16, #tpu.memory_space<vmem>>, vector<16x16x128xbf16>
    tpu.vector_store %arg10[%c0_42, %c0_43, %c512], %19 {strides = array<i32>} : memref<16x16x1152xbf16, #tpu.memory_space<vmem>>, vector<16x16x128xbf16>,
    %c1_44 = arith.constant 1 : index
    %c2_45 = arith.constant 2 : index
    %c0_46 = arith.constant 0 : index
    %21 = vector.load %arg9[%c1_44, %c2_45, %c0_46] : memref<18x18x128xbf16, #tpu.memory_space<vmem>>, vector<16x16x128xbf16>
    %c0_47 = arith.constant 0 : index
    %c0_48 = arith.constant 0 : index
    %c640 = arith.constant 640 : index
    %22 = vector.load %arg10[%c0_47, %c0_48, %c640] : memref<16x16x1152xbf16, #tpu.memory_space<vmem>>, vector<16x16x128xbf16>
    tpu.vector_store %arg10[%c0_47, %c0_48, %c640], %21 {strides = array<i32>} : memref<16x16x1152xbf16, #tpu.memory_space<vmem>>, vector<16x16x128xbf16>,
    %c2_49 = arith.constant 2 : index
    %c0_50 = arith.constant 0 : index
    %c0_51 = arith.constant 0 : index
    %23 = vector.load %arg9[%c2_49, %c0_50, %c0_51] : memref<18x18x128xbf16, #tpu.memory_space<vmem>>, vector<16x16x128xbf16>
    %c0_52 = arith.constant 0 : index
    %c0_53 = arith.constant 0 : index
    %c768 = arith.constant 768 : index
    %24 = vector.load %arg10[%c0_52, %c0_53, %c768] : memref<16x16x1152xbf16, #tpu.memory_space<vmem>>, vector<16x16x128xbf16>
    tpu.vector_store %arg10[%c0_52, %c0_53, %c768], %23 {strides = array<i32>} : memref<16x16x1152xbf16, #tpu.memory_space<vmem>>, vector<16x16x128xbf16>,
    %c2_54 = arith.constant 2 : index
    %c1_55 = arith.constant 1 : index
    %c0_56 = arith.constant 0 : index
    %25 = vector.load %arg9[%c2_54, %c1_55, %c0_56] : memref<18x18x128xbf16, #tpu.memory_space<vmem>>, vector<16x16x128xbf16>
    %c0_57 = arith.constant 0 : index
    %c0_58 = arith.constant 0 : index
    %c896 = arith.constant 896 : index
    %26 = vector.load %arg10[%c0_57, %c0_58, %c896] : memref<16x16x1152xbf16, #tpu.memory_space<vmem>>, vector<16x16x128xbf16>
    tpu.vector_store %arg10[%c0_57, %c0_58, %c896], %25 {strides = array<i32>} : memref<16x16x1152xbf16, #tpu.memory_space<vmem>>, vector<16x16x128xbf16>,
    %c2_59 = arith.constant 2 : index
    %c2_60 = arith.constant 2 : index
    %c0_61 = arith.constant 0 : index
    %27 = vector.load %arg9[%c2_59, %c2_60, %c0_61] : memref<18x18x128xbf16, #tpu.memory_space<vmem>>, vector<16x16x128xbf16>
    %c0_62 = arith.constant 0 : index
    %c0_63 = arith.constant 0 : index
    %c1024 = arith.constant 1024 : index
    %28 = vector.load %arg10[%c0_62, %c0_63, %c1024] : memref<16x16x1152xbf16, #tpu.memory_space<vmem>>, vector<16x16x128xbf16>
    tpu.vector_store %arg10[%c0_62, %c0_63, %c1024], %27 {strides = array<i32>} : memref<16x16x1152xbf16, #tpu.memory_space<vmem>>, vector<16x16x128xbf16>,
    %c0_64 = arith.constant 0 : index
    %c0_65 = arith.constant 0 : index
    %c0_66 = arith.constant 0 : index
    %29 = vector.load %arg10[%c0_64, %c0_65, %c0_66] : memref<16x16x1152xbf16, #tpu.memory_space<vmem>>, vector<16x16x1152xbf16>
    %30 = vector.shape_cast %29 : vector<16x16x1152xbf16> to vector<256x1152xbf16>
    %c0_67 = arith.constant 0 : index
    %c0_68 = arith.constant 0 : index
    %31 = vector.load %arg2[%c0_67, %c0_68] : memref<1152x128xbf16, #tpu.memory_space<vmem>>, vector<1152x128xbf16>
    %cst_69 = arith.constant dense<0.000000e+00> : vector<256x128xf32>
    %32 = tpu.matmul %30, %31, %cst_69 {dimension_numbers = #tpu.dot_dimension_numbers<[1], [0], [0], [1], [0, 0, 1, 1], [], []>} : vector<256x1152xbf16>, vector<1152x128xbf16>, vector<256x128xf32> -> vector<256x128xf32>
    %c0_70 = arith.constant 0 : index
    %c0_71 = arith.constant 0 : index
    %33 = vector.load %arg3[%c0_70, %c0_71] : memref<1x128xf32, #tpu.memory_space<vmem>>, vector<1x128xf32>
    %34 = vector.broadcast %33 : vector<1x128xf32> to vector<256x128xf32>
    %35 = arith.mulf %32, %34 : vector<256x128xf32>
    %c0_72 = arith.constant 0 : index
    %c0_73 = arith.constant 0 : index
    %36 = vector.load %arg4[%c0_72, %c0_73] : memref<1x128xf32, #tpu.memory_space<vmem>>, vector<1x128xf32>
    %37 = vector.broadcast %36 : vector<1x128xf32> to vector<256x128xf32>
    %38 = arith.addf %35, %37 : vector<256x128xf32>
    %cst_74 = arith.constant 0.000000e+00 : f32
    %39 = vector.broadcast %cst_74 : f32 to vector<256x128xf32>
    %40 = arith.maximumf %38, %39 : vector<256x128xf32>
    %41 = vector.shape_cast %40 : vector<256x128xf32> to vector<16x16x128xf32>
    %42 = arith.truncf %41 : vector<16x16x128xf32> to vector<16x16x128xbf16>
    %c1_75 = arith.constant 1 : index
    %c1_76 = arith.constant 1 : index
    %c0_77 = arith.constant 0 : index
    %43 = vector.load %arg9[%c1_75, %c1_76, %c0_77] : memref<18x18x128xbf16, #tpu.memory_space<vmem>>, vector<16x16x128xbf16>
    tpu.vector_store %arg9[%c1_75, %c1_76, %c0_77], %42 {strides = array<i32>} : memref<18x18x128xbf16, #tpu.memory_space<vmem>>, vector<16x16x128xbf16>,
    %c0_78 = arith.constant 0 : index
    %c0_79 = arith.constant 0 : index
    %c0_80 = arith.constant 0 : index
    %44 = vector.load %arg9[%c0_78, %c0_79, %c0_80] : memref<18x18x128xbf16, #tpu.memory_space<vmem>>, vector<16x16x128xbf16>
    %c0_81 = arith.constant 0 : index
    %c0_82 = arith.constant 0 : index
    %c0_83 = arith.constant 0 : index
    %45 = vector.load %arg10[%c0_81, %c0_82, %c0_83] : memref<16x16x1152xbf16, #tpu.memory_space<vmem>>, vector<16x16x128xbf16>
    tpu.vector_store %arg10[%c0_81, %c0_82, %c0_83], %44 {strides = array<i32>} : memref<16x16x1152xbf16, #tpu.memory_space<vmem>>, vector<16x16x128xbf16>,
    %c0_84 = arith.constant 0 : index
    %c1_85 = arith.constant 1 : index
    %c0_86 = arith.constant 0 : index
    %46 = vector.load %arg9[%c0_84, %c1_85, %c0_86] : memref<18x18x128xbf16, #tpu.memory_space<vmem>>, vector<16x16x128xbf16>
    %c0_87 = arith.constant 0 : index
    %c0_88 = arith.constant 0 : index
    %c128_89 = arith.constant 128 : index
    %47 = vector.load %arg10[%c0_87, %c0_88, %c128_89] : memref<16x16x1152xbf16, #tpu.memory_space<vmem>>, vector<16x16x128xbf16>
    tpu.vector_store %arg10[%c0_87, %c0_88, %c128_89], %46 {strides = array<i32>} : memref<16x16x1152xbf16, #tpu.memory_space<vmem>>, vector<16x16x128xbf16>,
    %c0_90 = arith.constant 0 : index
    %c2_91 = arith.constant 2 : index
    %c0_92 = arith.constant 0 : index
    %48 = vector.load %arg9[%c0_90, %c2_91, %c0_92] : memref<18x18x128xbf16, #tpu.memory_space<vmem>>, vector<16x16x128xbf16>
    %c0_93 = arith.constant 0 : index
    %c0_94 = arith.constant 0 : index
    %c256_95 = arith.constant 256 : index
    %49 = vector.load %arg10[%c0_93, %c0_94, %c256_95] : memref<16x16x1152xbf16, #tpu.memory_space<vmem>>, vector<16x16x128xbf16>
    tpu.vector_store %arg10[%c0_93, %c0_94, %c256_95], %48 {strides = array<i32>} : memref<16x16x1152xbf16, #tpu.memory_space<vmem>>, vector<16x16x128xbf16>,
    %c1_96 = arith.constant 1 : index
    %c0_97 = arith.constant 0 : index
    %c0_98 = arith.constant 0 : index
    %50 = vector.load %arg9[%c1_96, %c0_97, %c0_98] : memref<18x18x128xbf16, #tpu.memory_space<vmem>>, vector<16x16x128xbf16>
    %c0_99 = arith.constant 0 : index
    %c0_100 = arith.constant 0 : index
    %c384_101 = arith.constant 384 : index
    %51 = vector.load %arg10[%c0_99, %c0_100, %c384_101] : memref<16x16x1152xbf16, #tpu.memory_space<vmem>>, vector<16x16x128xbf16>
    tpu.vector_store %arg10[%c0_99, %c0_100, %c384_101], %50 {strides = array<i32>} : memref<16x16x1152xbf16, #tpu.memory_space<vmem>>, vector<16x16x128xbf16>,
    %c1_102 = arith.constant 1 : index
    %c1_103 = arith.constant 1 : index
    %c0_104 = arith.constant 0 : index
    %52 = vector.load %arg9[%c1_102, %c1_103, %c0_104] : memref<18x18x128xbf16, #tpu.memory_space<vmem>>, vector<16x16x128xbf16>
    %c0_105 = arith.constant 0 : index
    %c0_106 = arith.constant 0 : index
    %c512_107 = arith.constant 512 : index
    %53 = vector.load %arg10[%c0_105, %c0_106, %c512_107] : memref<16x16x1152xbf16, #tpu.memory_space<vmem>>, vector<16x16x128xbf16>
    tpu.vector_store %arg10[%c0_105, %c0_106, %c512_107], %52 {strides = array<i32>} : memref<16x16x1152xbf16, #tpu.memory_space<vmem>>, vector<16x16x128xbf16>,
    %c1_108 = arith.constant 1 : index
    %c2_109 = arith.constant 2 : index
    %c0_110 = arith.constant 0 : index
    %54 = vector.load %arg9[%c1_108, %c2_109, %c0_110] : memref<18x18x128xbf16, #tpu.memory_space<vmem>>, vector<16x16x128xbf16>
    %c0_111 = arith.constant 0 : index
    %c0_112 = arith.constant 0 : index
    %c640_113 = arith.constant 640 : index
    %55 = vector.load %arg10[%c0_111, %c0_112, %c640_113] : memref<16x16x1152xbf16, #tpu.memory_space<vmem>>, vector<16x16x128xbf16>
    tpu.vector_store %arg10[%c0_111, %c0_112, %c640_113], %54 {strides = array<i32>} : memref<16x16x1152xbf16, #tpu.memory_space<vmem>>, vector<16x16x128xbf16>,
    %c2_114 = arith.constant 2 : index
    %c0_115 = arith.constant 0 : index
    %c0_116 = arith.constant 0 : index
    %56 = vector.load %arg9[%c2_114, %c0_115, %c0_116] : memref<18x18x128xbf16, #tpu.memory_space<vmem>>, vector<16x16x128xbf16>
    %c0_117 = arith.constant 0 : index
    %c0_118 = arith.constant 0 : index
    %c768_119 = arith.constant 768 : index
    %57 = vector.load %arg10[%c0_117, %c0_118, %c768_119] : memref<16x16x1152xbf16, #tpu.memory_space<vmem>>, vector<16x16x128xbf16>
    tpu.vector_store %arg10[%c0_117, %c0_118, %c768_119], %56 {strides = array<i32>} : memref<16x16x1152xbf16, #tpu.memory_space<vmem>>, vector<16x16x128xbf16>,
    %c2_120 = arith.constant 2 : index
    %c1_121 = arith.constant 1 : index
    %c0_122 = arith.constant 0 : index
    %58 = vector.load %arg9[%c2_120, %c1_121, %c0_122] : memref<18x18x128xbf16, #tpu.memory_space<vmem>>, vector<16x16x128xbf16>
    %c0_123 = arith.constant 0 : index
    %c0_124 = arith.constant 0 : index
    %c896_125 = arith.constant 896 : index
    %59 = vector.load %arg10[%c0_123, %c0_124, %c896_125] : memref<16x16x1152xbf16, #tpu.memory_space<vmem>>, vector<16x16x128xbf16>
    tpu.vector_store %arg10[%c0_123, %c0_124, %c896_125], %58 {strides = array<i32>} : memref<16x16x1152xbf16, #tpu.memory_space<vmem>>, vector<16x16x128xbf16>,
    %c2_126 = arith.constant 2 : index
    %c2_127 = arith.constant 2 : index
    %c0_128 = arith.constant 0 : index
    %60 = vector.load %arg9[%c2_126, %c2_127, %c0_128] : memref<18x18x128xbf16, #tpu.memory_space<vmem>>, vector<16x16x128xbf16>
    %c0_129 = arith.constant 0 : index
    %c0_130 = arith.constant 0 : index
    %c1024_131 = arith.constant 1024 : index
    %61 = vector.load %arg10[%c0_129, %c0_130, %c1024_131] : memref<16x16x1152xbf16, #tpu.memory_space<vmem>>, vector<16x16x128xbf16>
    tpu.vector_store %arg10[%c0_129, %c0_130, %c1024_131], %60 {strides = array<i32>} : memref<16x16x1152xbf16, #tpu.memory_space<vmem>>, vector<16x16x128xbf16>,
    %c0_132 = arith.constant 0 : index
    %c0_133 = arith.constant 0 : index
    %c0_134 = arith.constant 0 : index
    %62 = vector.load %arg10[%c0_132, %c0_133, %c0_134] : memref<16x16x1152xbf16, #tpu.memory_space<vmem>>, vector<16x16x1152xbf16>
    %63 = vector.shape_cast %62 : vector<16x16x1152xbf16> to vector<256x1152xbf16>
    %c0_135 = arith.constant 0 : index
    %c0_136 = arith.constant 0 : index
    %64 = vector.load %arg5[%c0_135, %c0_136] : memref<1152x128xbf16, #tpu.memory_space<vmem>>, vector<1152x128xbf16>
    %cst_137 = arith.constant dense<0.000000e+00> : vector<256x128xf32>
    %65 = tpu.matmul %63, %64, %cst_137 {dimension_numbers = #tpu.dot_dimension_numbers<[1], [0], [0], [1], [0, 0, 1, 1], [], []>} : vector<256x1152xbf16>, vector<1152x128xbf16>, vector<256x128xf32> -> vector<256x128xf32>
    %c0_138 = arith.constant 0 : index
    %c0_139 = arith.constant 0 : index
    %66 = vector.load %arg6[%c0_138, %c0_139] : memref<1x128xf32, #tpu.memory_space<vmem>>, vector<1x128xf32>
    %67 = vector.broadcast %66 : vector<1x128xf32> to vector<256x128xf32>
    %68 = arith.mulf %65, %67 : vector<256x128xf32>
    %c0_140 = arith.constant 0 : index
    %c0_141 = arith.constant 0 : index
    %69 = vector.load %arg7[%c0_140, %c0_141] : memref<1x128xf32, #tpu.memory_space<vmem>>, vector<1x128xf32>
    %70 = vector.broadcast %69 : vector<1x128xf32> to vector<256x128xf32>
    %71 = arith.addf %68, %70 : vector<256x128xf32>
    %cst_142 = arith.constant 0.000000e+00 : f32
    %72 = vector.broadcast %cst_142 : f32 to vector<256x128xf32>
    %73 = arith.maximumf %71, %72 : vector<256x128xf32>
    %74 = vector.shape_cast %73 : vector<256x128xf32> to vector<16x16x128xf32>
    %c0_143 = arith.constant 0 : index
    %c0_144 = arith.constant 0 : index
    %c0_145 = arith.constant 0 : index
    %c0_146 = arith.constant 0 : index
    %75 = vector.load %arg8[%c0_143, %c0_144, %c0_145, %c0_146] : memref<1x16x16x128xf32, #tpu.memory_space<vmem>>, vector<1x16x16x128xf32>
    %76 = vector.shape_cast %75 : vector<1x16x16x128xf32> to vector<16x16x128xf32>
    %77 = vector.shape_cast %74 : vector<16x16x128xf32> to vector<1x16x16x128xf32>
    tpu.vector_store %arg8[%c0_143, %c0_144, %c0_145, %c0_146], %77 {strides = array<i32>} : memref<1x16x16x128xf32, #tpu.memory_space<vmem>>, vector<1x16x16x128xf32>,
    return
  }
  func.func @transform_0(%arg0: i32) -> (i32, i32, i32, i32) {
    %c0_i32 = arith.constant 0 : i32
    %c0_i32_0 = arith.constant 0 : i32
    %c0_i32_1 = arith.constant 0 : i32
    %c0_i32_2 = arith.constant 0 : i32
    return %arg0, %c0_i32, %c0_i32_0, %c0_i32_1 : i32, i32, i32, i32
  }
  func.func @transform_1(%arg0: i32) -> (i32, i32) {
    %c0_i32 = arith.constant 0 : i32
    %c0_i32_0 = arith.constant 0 : i32
    %c0_i32_1 = arith.constant 0 : i32
    return %c0_i32, %c0_i32_0 : i32, i32
  }
  func.func @transform_2(%arg0: i32) -> (i32, i32) {
    %c0_i32 = arith.constant 0 : i32
    %c0_i32_0 = arith.constant 0 : i32
    %c0_i32_1 = arith.constant 0 : i32
    return %c0_i32, %c0_i32_0 : i32, i32
  }
  func.func @transform_3(%arg0: i32) -> (i32, i32) {
    %c0_i32 = arith.constant 0 : i32
    %c0_i32_0 = arith.constant 0 : i32
    %c0_i32_1 = arith.constant 0 : i32
    return %c0_i32, %c0_i32_0 : i32, i32
  }
  func.func @transform_4(%arg0: i32) -> (i32, i32) {
    %c0_i32 = arith.constant 0 : i32
    %c0_i32_0 = arith.constant 0 : i32
    %c0_i32_1 = arith.constant 0 : i32
    return %c0_i32, %c0_i32_0 : i32, i32
  }
  func.func @transform_5(%arg0: i32) -> (i32, i32) {
    %c0_i32 = arith.constant 0 : i32
    %c0_i32_0 = arith.constant 0 : i32
    %c0_i32_1 = arith.constant 0 : i32
    return %c0_i32, %c0_i32_0 : i32, i32
  }
  func.func @transform_6(%arg0: i32) -> (i32, i32) {
    %c0_i32 = arith.constant 0 : i32
    %c0_i32_0 = arith.constant 0 : i32
    %c0_i32_1 = arith.constant 0 : i32
    return %c0_i32, %c0_i32_0 : i32, i32
  }
  func.func @transform_7(%arg0: i32) -> (i32, i32, i32, i32) {
    %c0_i32 = arith.constant 0 : i32
    %c0_i32_0 = arith.constant 0 : i32
    %c0_i32_1 = arith.constant 0 : i32
    %c0_i32_2 = arith.constant 0 : i32
    return %arg0, %c0_i32, %c0_i32_0, %c0_i32_1 : i32, i32, i32, i32
  }
}

</mosaic_0001>

<llo_original>
// kernel: double_conv_forward.1
$region0: #{double_conv_forward.1}
  #allocation0 [shape = 'u32[]', space=smem, size = 0x4, offset = 0x4, fixed_abs, tag = 'smem constant byte address 0x4 - core index']
  #allocation1 [shape = 'u32[144,128]{1,0:T(1,128)}', space=vmem, size = 0x12000, scoped, tag = 'internal scratch']
  #allocation2 [shape = 'bf16[18,18,128]{2,1,0:T(8,128)(2,1)}', space=vmem, size = 0x1b000, scoped, tag = 'scratch operand']
  #allocation3 [shape = 'bf16[16,16,1152]{2,1,0:T(8,128)(2,1)}', space=vmem, size = 0x90000, scoped, tag = 'scratch operand']
  %s0 = inlined_call_operand.vmem [shape: bf16[2,16,16,128], index: 0, kind: input, shape index: {}]
  %s1 = inlined_call_operand.vmem [shape: bf16[1152,128], index: 1, kind: input, shape index: {}]
  %s2 = inlined_call_operand.vmem [shape: f32[1,128], index: 2, kind: input, shape index: {}]
  %s3 = inlined_call_operand.vmem [shape: f32[1,128], index: 3, kind: input, shape index: {}]
  %s4 = inlined_call_operand.vmem [shape: bf16[1152,128], index: 4, kind: input, shape index: {}]
  %s5 = inlined_call_operand.vmem [shape: f32[1,128], index: 5, kind: input, shape index: {}]
  %s6 = inlined_call_operand.vmem [shape: f32[1,128], index: 6, kind: input, shape index: {}]
  %s7 = inlined_call_operand.vmem [shape: f32[2,16,16,128], index: 7, kind: output, shape index: {}]
  %s8 = sld [smem:[#allocation0]]
  $region61: #{double_conv_forward.1} parent=0
    _
  %s10 = ssub.s32 1, %s8
  %s11 = scalar_select 0, %s10, %s8
  loop: start=0, step=1, limit=4
  $region2: #{double_conv_forward.1} parent=0 // loop_pre_header
    _
  $region3: #{double_conv_forward.1} parent=0 // loop_header
    %s13 = sphi 0, %s17
    %p14 = scmp.ge.s32.totalorder %s13, 4
    %s23 = sphi 0, %s25
    %s26 = sphi 0, %s23
    %s27 = sphi 0, %s26
    %s43 = sphi 0, %s27
    %s47 = sphi 0, %s47
    %s49 = sphi 0, %s47
    %s50 = sphi 0, %s49
    %s64 = sphi 0, %s50
    %s68 = sphi 0, %s68
    %s70 = sphi 0, %s68
    %s71 = sphi 0, %s70
    %s85 = sphi 0, %s71
    %s89 = sphi 0, %s89
    %s91 = sphi 0, %s89
    %s92 = sphi 0, %s91
    %s106 = sphi 0, %s92
    %s110 = sphi 0, %s110
    %s112 = sphi 0, %s110
    %s113 = sphi 0, %s112
    %s127 = sphi 0, %s113
    %s131 = sphi 0, %s131
    %s133 = sphi 0, %s131
    %s134 = sphi 0, %s133
    %s148 = sphi 0, %s134
    %s152 = sphi 0, %s152
    %s154 = sphi 0, %s152
    %s155 = sphi 0, %s154
    %s169 = sphi 0, %s155
    %s175 = sphi 0, %s177
    %s178 = sphi 0, %s175
    %s179 = sphi 0, %s178
    %s195 = sphi 0, %s179
  $region4: #{double_conv_forward.1} parent=0 // loop_header_branch
    %16 = sbr.rel (%p14) target = $region8
  $region5: #{double_conv_forward.1} parent=0 // loop_body
    %s18 = ssub.s32 %s13, 1
    %s19 = ssub.s32 %s13, 2
    %s20 = sadd.s32 %s13, 1
    %s21 = ssub.s32 %s13, %s20
    %p22 = scmp.eq.s32.totalorder %s21, 0
    %s24 = sadd.s32 %s23, 1
    %s25 = scalar_select %p22, %s23, %s24
    %p28 = pneg %p22
    %p29 = scmp.eq.s32.totalorder %s13, 1
    %p30 = por %p28, %p29
    %p31 = scmp.ne.s32.totalorder %s23, %s26
    %p32 = scmp.eq.s32.totalorder %s13, 0
    %p33 = por %p31, %p32
    %p34 = scmp.ne.s32.totalorder %s23, %s26
    %p35 = scmp.eq.s32.totalorder %s18, 1
    %p36 = por %p34, %p35
    %p37 = scmp.ne.s32.totalorder %s26, %s27
    %p38 = scmp.eq.s32.totalorder %s18, 0
    %p39 = por %p37, %p38
    %p40 = scmp.ne.s32.totalorder %s26, %s27
    %p41 = scmp.eq.s32.totalorder %s19, 1
    %p42 = por %p40, %p41
    %p44 = scmp.ne.s32.totalorder %s27, %s43
    %p45 = scmp.eq.s32.totalorder %s19, 0
    %p46 = por %p44, %p45
    %s48 = sadd.s32 %s47, 1
    %p51 = scmp.eq.s32.totalorder %s13, 1
    %p52 = scmp.ne.s32.totalorder %s47, %s49
    %p53 = scmp.eq.s32.totalorder %s13, 0
    %p54 = por %p52, %p53
    %p55 = scmp.ne.s32.totalorder %s47, %s49
    %p56 = scmp.eq.s32.totalorder %s18, 1
    %p57 = por %p55, %p56
    %p58 = scmp.ne.s32.totalorder %s49, %s50
    %p59 = scmp.eq.s32.totalorder %s18, 0
    %p60 = por %p58, %p59
    %p61 = scmp.ne.s32.totalorder %s49, %s50
    %p62 = scmp.eq.s32.totalorder %s19, 1
    %p63 = por %p61, %p62
    %p65 = scmp.ne.s32.totalorder %s50, %s64
    %p66 = scmp.eq.s32.totalorder %s19, 0
    %p67 = por %p65, %p66
    %s69 = sadd.s32 %s68, 1
    %p72 = scmp.eq.s32.totalorder %s13, 1
    %p73 = scmp.ne.s32.totalorder %s68, %s70
    %p74 = scmp.eq.s32.totalorder %s13, 0
    %p75 = por %p73, %p74
    %p76 = scmp.ne.s32.totalorder %s68, %s70
    %p77 = scmp.eq.s32.totalorder %s18, 1
    %p78 = por %p76, %p77
    %p79 = scmp.ne.s32.totalorder %s70, %s71
    %p80 = scmp.eq.s32.totalorder %s18, 0
    %p81 = por %p79, %p80
    %p82 = scmp.ne.s32.totalorder %s70, %s71
    %p83 = scmp.eq.s32.totalorder %s19, 1
    %p84 = por %p82, %p83
    %p86 = scmp.ne.s32.totalorder %s71, %s85
    %p87 = scmp.eq.s32.totalorder %s19, 0
    %p88 = por %p86, %p87
    %s90 = sadd.s32 %s89, 1
    %p93 = scmp.eq.s32.totalorder %s13, 1
    %p94 = scmp.ne.s32.totalorder %s89, %s91
    %p95 = scmp.eq.s32.totalorder %s13, 0
    %p96 = por %p94, %p95
    %p97 = scmp.ne.s32.totalorder %s89, %s91
    %p98 = scmp.eq.s32.totalorder %s18, 1
    %p99 = por %p97, %p98
    %p100 = scmp.ne.s32.totalorder %s91, %s92
    %p101 = scmp.eq.s32.totalorder %s18, 0
    %p102 = por %p100, %p101
    %p103 = scmp.ne.s32.totalorder %s91, %s92
    %p104 = scmp.eq.s32.totalorder %s19, 1
    %p105 = por %p103, %p104
    %p107 = scmp.ne.s32.totalorder %s92, %s106
    %p108 = scmp.eq.s32.totalorder %s19, 0
    %p109 = por %p107, %p108
    %s111 = sadd.s32 %s110, 1
    %p114 = scmp.eq.s32.totalorder %s13, 1
    %p115 = scmp.ne.s32.totalorder %s110, %s112
    %p116 = scmp.eq.s32.totalorder %s13, 0
    %p117 = por %p115, %p116
    %p118 = scmp.ne.s32.totalorder %s110, %s112
    %p119 = scmp.eq.s32.totalorder %s18, 1
    %p120 = por %p118, %p119
    %p121 = scmp.ne.s32.totalorder %s112, %s113
    %p122 = scmp.eq.s32.totalorder %s18, 0
    %p123 = por %p121, %p122
    %p124 = scmp.ne.s32.totalorder %s112, %s113
    %p125 = scmp.eq.s32.totalorder %s19, 1
    %p126 = por %p124, %p125
    %p128 = scmp.ne.s32.totalorder %s113, %s127
    %p129 = scmp.eq.s32.totalorder %s19, 0
    %p130 = por %p128, %p129
    %s132 = sadd.s32 %s131, 1
    %p135 = scmp.eq.s32.totalorder %s13, 1
    %p136 = scmp.ne.s32.totalorder %s131, %s133
    %p137 = scmp.eq.s32.totalorder %s13, 0
    %p138 = por %p136, %p137
    %p139 = scmp.ne.s32.totalorder %s131, %s133
    %p140 = scmp.eq.s32.totalorder %s18, 1
    %p141 = por %p139, %p140
    %p142 = scmp.ne.s32.totalorder %s133, %s134
    %p143 = scmp.eq.s32.totalorder %s18, 0
    %p144 = por %p142, %p143
    %p145 = scmp.ne.s32.totalorder %s133, %s134
    %p146 = scmp.eq.s32.totalorder %s19, 1
    %p147 = por %p145, %p146
    %p149 = scmp.ne.s32.totalorder %s134, %s148
    %p150 = scmp.eq.s32.totalorder %s19, 0
    %p151 = por %p149, %p150
    %s153 = sadd.s32 %s152, 1
    %p156 = scmp.eq.s32.totalorder %s13, 1
    %p157 = scmp.ne.s32.totalorder %s152, %s154
    %p158 = scmp.eq.s32.totalorder %s13, 0
    %p159 = por %p157, %p158
    %p160 = scmp.ne.s32.totalorder %s152, %s154
    %p161 = scmp.eq.s32.totalorder %s18, 1
    %p162 = por %p160, %p161
    %p163 = scmp.ne.s32.totalorder %s154, %s155
    %p164 = scmp.eq.s32.totalorder %s18, 0
    %p165 = por %p163, %p164
    %p166 = scmp.ne.s32.totalorder %s154, %s155
    %p167 = scmp.eq.s32.totalorder %s19, 1
    %p168 = por %p166, %p167
    %p170 = scmp.ne.s32.totalorder %s155, %s169
    %p171 = scmp.eq.s32.totalorder %s19, 0
    %p172 = por %p170, %p171
    %s173 = ssub.s32 %s13, %s20
    %p174 = scmp.eq.s32.totalorder %s173, 0
    %s176 = sadd.s32 %s175, 1
    %s177 = scalar_select %p174, %s175, %s176
    %p180 = pneg %p174
    %p181 = scmp.eq.s32.totalorder %s13, 1
    %p182 = por %p180, %p181
    %p183 = scmp.ne.s32.totalorder %s175, %s178
    %p184 = scmp.eq.s32.totalorder %s13, 0
    %p185 = por %p183, %p184
    %p186 = scmp.ne.s32.totalorder %s175, %s178
    %p187 = scmp.eq.s32.totalorder %s18, 1
    %p188 = por %p186, %p187
    %p189 = scmp.ne.s32.totalorder %s178, %s179
    %p190 = scmp.eq.s32.totalorder %s18, 0
    %p191 = por %p189, %p190
    %p192 = scmp.ne.s32.totalorder %s178, %s179
    %p193 = scmp.eq.s32.totalorder %s19, 1
    %p194 = por %p192, %p193
    %p196 = scmp.ne.s32.totalorder %s179, %s195
    %p197 = scmp.eq.s32.totalorder %s19, 0
    %p198 = por %p196, %p197
    %p199 = scmp.le.s32.totalorder 1, %s13
    %p200 = scmp.lt.s32.totalorder %s13, 3
    %p201 = pnand %p199, %p200
    %p202 = pneg %p201
    // Predicated region
    $region9: #{double_conv_forward.1} parent=5 // pred_check
      _
    $region10: #{double_conv_forward.1} parent=5 // pred_check_branch
      %204 = sbr.rel (%p201) target = $region12
    $region11: #{double_conv_forward.1} parent=5 // pred_region
      %s205 = ssub.s32 %s13, 1
      // Predicated region
      $region13: #{double_conv_forward.1} parent=11 // pred_check
        %p206 = pneg %p60
      $region14: #{double_conv_forward.1} parent=11 // pred_check_branch
        %208 = sbr.rel (%p206) target = $region16
      $region15: #{double_conv_forward.1} parent=11 // pred_region
        _
      $region16: #{double_conv_forward.1} parent=11 // pred_fallthru
        _
      // Predicated region
      $region17: #{double_conv_forward.1} parent=11 // pred_check
        %p209 = pneg %p81
      $region18: #{double_conv_forward.1} parent=11 // pred_check_branch
        %211 = sbr.rel (%p209) target = $region20
      $region19: #{double_conv_forward.1} parent=11 // pred_region
        _
      $region20: #{double_conv_forward.1} parent=11 // pred_fallthru
        _
      // Predicated region
      $region21: #{double_conv_forward.1} parent=11 // pred_check
        %p212 = pneg %p102
      $region22: #{double_conv_forward.1} parent=11 // pred_check_branch
        %214 = sbr.rel (%p212) target = $region24
      $region23: #{double_conv_forward.1} parent=11 // pred_region
        _
      $region24: #{double_conv_forward.1} parent=11 // pred_fallthru
        _
      // Predicated region
      $region25: #{double_conv_forward.1} parent=11 // pred_check
        %p215 = pneg %p123
      $region26: #{double_conv_forward.1} parent=11 // pred_check_branch
        %217 = sbr.rel (%p215) target = $region28
      $region27: #{double_conv_forward.1} parent=11 // pred_region
        _
      $region28: #{double_conv_forward.1} parent=11 // pred_fallthru
        _
      // Predicated region
      $region29: #{double_conv_forward.1} parent=11 // pred_check
        %p218 = pneg %p144
      $region30: #{double_conv_forward.1} parent=11 // pred_check_branch
        %220 = sbr.rel (%p218) target = $region32
      $region31: #{double_conv_forward.1} parent=11 // pred_region
        _
      $region32: #{double_conv_forward.1} parent=11 // pred_fallthru
        _
      // Predicated region
      $region33: #{double_conv_forward.1} parent=11 // pred_check
        %p221 = pneg %p165
      $region34: #{double_conv_forward.1} parent=11 // pred_check_branch
        %223 = sbr.rel (%p221) target = $region36
      $region35: #{double_conv_forward.1} parent=11 // pred_region
        _
      $region36: #{double_conv_forward.1} parent=11 // pred_fallthru
        _
    $region12: #{double_conv_forward.1} parent=5 // pred_fallthru
      _
    %p224 = scmp.lt.s32.totalorder %s13, 2
    // Predicated region
    $region37: #{double_conv_forward.1} parent=5 // pred_check
      %p225 = pneg %p224
    $region38: #{double_conv_forward.1} parent=5 // pred_check_branch
      %227 = sbr.rel (%p225) target = $region40
    $region39: #{double_conv_forward.1} parent=5 // pred_region
      // Predicated region
      $region41: #{double_conv_forward.1} parent=39 // pred_check
        %p228 = pneg %p33
      $region42: #{double_conv_forward.1} parent=39 // pred_check_branch
        %230 = sbr.rel (%p228) target = $region44
      $region43: #{double_conv_forward.1} parent=39 // pred_region
        %p231 = scmp.lt.s32.totalorder %s13, 1
        %s232 = scalar_select %p231, %s13, 1
        %s233 = smul.addr %s232, 32
        %s234 = smul.addr %s233, 4
        %s235 = scalar_lea.vmem %s0, %s234
      $region44: #{double_conv_forward.1} parent=39 // pred_fallthru
        _
    $region40: #{double_conv_forward.1} parent=5 // pred_fallthru
      _
    %p236 = scmp.le.s32.totalorder 1, %s13
    %p237 = scmp.lt.s32.totalorder %s13, 3
    %p238 = pnand %p236, %p237
    %p239 = pneg %p238
    // Predicated region
    $region45: #{double_conv_forward.1} parent=5 // pred_check
      _
    $region46: #{double_conv_forward.1} parent=5 // pred_check_branch
      %241 = sbr.rel (%p238) target = $region48
    $region47: #{double_conv_forward.1} parent=5 // pred_region
      %s242 = ssub.s32 %s13, 1
      %p243 = scmp.lt.s32.totalorder %s18, 1
      %s244 = scalar_select %p243, %s18, 1
      %s245 = smul.addr %s244, 32
      %s246 = smul.addr %s245, 4
      %s247 = scalar_lea.vmem %s0, %s246
      %p248 = pneg %p39
      %p249 = pneg %p36
      %p250 = pneg %p60
      %p251 = pneg %p57
      %p252 = pneg %p81
      %p253 = pneg %p78
      %p254 = pneg %p102
      %p255 = pneg %p99
      %p256 = pneg %p123
      %p257 = pneg %p120
      %p258 = pneg %p144
      %p259 = pneg %p141
      %p260 = pneg %p165
      %p261 = pneg %p162
      %p262 = pneg %p191
      %p263 = pneg %p188
      %p264 = scmp.lt.s32.totalorder %s18, 1
      %s265 = scalar_select %p264, %s18, 1
      %s266 = smul.addr %s265, 32
      %s267 = smul.addr %s266, 8
      %s268 = scalar_lea.vmem %s7, %s267
      %p269 = scmp.lt.s32.totalorder %s18, 1
      %s270 = scalar_select %p269, %s18, 1
      %s271 = smul.addr %s270, 32
      %s272 = smul.addr %s271, 4
      %s273 = scalar_lea.vmem %s0, %s272
      %p274 = scmp.lt.s32.totalorder %s18, 1
      %s275 = scalar_select %p274, %s18, 1
      %s276 = smul.addr %s275, 32
      %s277 = smul.addr %s276, 8
      %s278 = scalar_lea.vmem %s7, %s277
      %280 = vst [vmem:[#allocation2] sm:$0xf] 0
      %281 = vst [vmem:[#allocation2 + $0x4] sm:$0xf] 0
      %282 = vst [vmem:[#allocation2 + $0x8] sm:$0x1] 0
      %s283 = scalar_lea.vmem [#allocation2], 204
      %284 = vst [vmem:[%s283] sm:$0xf] 0
      %285 = vst [vmem:[%s283 + $0x4] sm:$0xf] 0
      %286 = vst [vmem:[%s283 + $0x8] sm:$0x1] 0
      %vm287 = vcmask 1040384
      %vm288 = vsmask.f32 256
      %vm289 = vmand %vm287, %vm288
      %v290 = vld [vmem:[#allocation2] sm:$0x1]
      %v291 = vsel %vm289, 0, %v290
      %292 = vst [vmem:[#allocation2] sm:$0x1] %v291
      %v293 = vld [vmem:[#allocation2 + $0xc] sm:$0x1]
      %v294 = vsel %vm289, 0, %v293
      %295 = vst [vmem:[#allocation2 + $0xc] sm:$0x1] %v294
      %v296 = vld [vmem:[#allocation2 + $0x18] sm:$0x1]
      %v297 = vsel %vm289, 0, %v296
      %298 = vst [vmem:[#allocation2 + $0x18] sm:$0x1] %v297
      %v299 = vld [vmem:[#allocation2 + $0x24] sm:$0x1]
      %v300 = vsel %vm289, 0, %v299
      %301 = vst [vmem:[#allocation2 + $0x24] sm:$0x1] %v300
      %v302 = vld [vmem:[#allocation2 + $0x30] sm:$0x1]
      %v303 = vsel %vm289, 0, %v302
      %304 = vst [vmem:[#allocation2 + $0x30] sm:$0x1] %v303
      %v305 = vld [vmem:[#allocation2 + $0x3c] sm:$0x1]
      %v306 = vsel %vm289, 0, %v305
      %307 = vst [vmem:[#allocation2 + $0x3c] sm:$0x1] %v306
      %v308 = vld [vmem:[#allocation2 + $0x48] sm:$0x1]
      %v309 = vsel %vm289, 0, %v308
      %310 = vst [vmem:[#allocation2 + $0x48] sm:$0x1] %v309
      %v311 = vld [vmem:[#allocation2 + $0x54] sm:$0x1]
      %v312 = vsel %vm289, 0, %v311
      %313 = vst [vmem:[#allocation2 + $0x54] sm:$0x1] %v312
      %v314 = vld [vmem:[#allocation2 + $0x60] sm:$0x1]
      %v315 = vsel %vm289, 0, %v314
      %316 = vst [vmem:[#allocation2 + $0x60] sm:$0x1] %v315
      %v317 = vld [vmem:[#allocation2 + $0x6c] sm:$0x1]
      %v318 = vsel %vm289, 0, %v317
      %319 = vst [vmem:[#allocation2 + $0x6c] sm:$0x1] %v318
      %v320 = vld [vmem:[#allocation2 + $0x78] sm:$0x1]
      %v321 = vsel %vm289, 0, %v320
      %322 = vst [vmem:[#allocation2 + $0x78] sm:$0x1] %v321
      %v323 = vld [vmem:[#allocation2 + $0x84] sm:$0x1]
      %v324 = vsel %vm289, 0, %v323
      %325 = vst [vmem:[#allocation2 + $0x84] sm:$0x1] %v324
      %v326 = vld [vmem:[#allocation2 + $0x90] sm:$0x1]
      %v327 = vsel %vm289, 0, %v326
      %328 = vst [vmem:[#allocation2 + $0x90] sm:$0x1] %v327
      %v329 = vld [vmem:[#allocation2 + $0x9c] sm:$0x1]
      %v330 = vsel %vm289, 0, %v329
      %331 = vst [vmem:[#allocation2 + $0x9c] sm:$0x1] %v330
      %v332 = vld [vmem:[#allocation2 + $0xa8] sm:$0x1]
      %v333 = vsel %vm289, 0, %v332
      %334 = vst [vmem:[#allocation2 + $0xa8] sm:$0x1] %v333
      %v335 = vld [vmem:[#allocation2 + $0xb4] sm:$0x1]
      %v336 = vsel %vm289, 0, %v335
      %337 = vst [vmem:[#allocation2 + $0xb4] sm:$0x1] %v336
      %v338 = vld [vmem:[#allocation2 + $0xc0] sm:$0x1]
      %v339 = vsel %vm289, 0, %v338
      %340 = vst [vmem:[#allocation2 + $0xc0] sm:$0x1] %v339
      %v341 = vld [vmem:[#allocation2 + $0xcc] sm:$0x1]
      %v342 = vsel %vm289, 0, %v341
      %343 = vst [vmem:[#allocation2 + $0xcc] sm:$0x1] %v342
      %vm344 = vsmask.f32 7938
      %vm345 = vmand %vm287, %vm344
      %v346 = vld [vmem:[#allocation2 + $0x8] sm:$0x1]
      %v347 = vsel %vm345, 0, %v346
      %348 = vst [vmem:[#allocation2 + $0x8] sm:$0x1] %v347
      %v349 = vld [vmem:[#allocation2 + $0x14] sm:$0x1]
      %v350 = vsel %vm345, 0, %v349
      %351 = vst [vmem:[#allocation2 + $0x14] sm:$0x1] %v350
      %v352 = vld [vmem:[#allocation2 + $0x20] sm:$0x1]
      %v353 = vsel %vm345, 0, %v352
      %354 = vst [vmem:[#allocation2 + $0x20] sm:$0x1] %v353
      %v355 = vld [vmem:[#allocation2 + $0x2c] sm:$0x1]
      %v356 = vsel %vm345, 0, %v355
      %357 = vst [vmem:[#allocation2 + $0x2c] sm:$0x1] %v356
      %v358 = vld [vmem:[#allocation2 + $0x38] sm:$0x1]
      %v359 = vsel %vm345, 0, %v358
      %360 = vst [vmem:[#allocation2 + $0x38] sm:$0x1] %v359
      %v361 = vld [vmem:[#allocation2 + $0x44] sm:$0x1]
      %v362 = vsel %vm345, 0, %v361
      %363 = vst [vmem:[#allocation2 + $0x44] sm:$0x1] %v362
      %v364 = vld [vmem:[#allocation2 + $0x50] sm:$0x1]
      %v365 = vsel %vm345, 0, %v364
      %366 = vst [vmem:[#allocation2 + $0x50] sm:$0x1] %v365
      %v367 = vld [vmem:[#allocation2 + $0x5c] sm:$0x1]
      %v368 = vsel %vm345, 0, %v367
      %369 = vst [vmem:[#allocation2 + $0x5c] sm:$0x1] %v368
      %v370 = vld [vmem:[#allocation2 + $0x68] sm:$0x1]
      %v371 = vsel %vm345, 0, %v370
      %372 = vst [vmem:[#allocation2 + $0x68] sm:$0x1] %v371
      %v373 = vld [vmem:[#allocation2 + $0x74] sm:$0x1]
      %v374 = vsel %vm345, 0, %v373
      %375 = vst [vmem:[#allocation2 + $0x74] sm:$0x1] %v374
      %v376 = vld [vmem:[#allocation2 + $0x80] sm:$0x1]
      %v377 = vsel %vm345, 0, %v376
      %378 = vst [vmem:[#allocation2 + $0x80] sm:$0x1] %v377
      %v379 = vld [vmem:[#allocation2 + $0x8c] sm:$0x1]
      %v380 = vsel %vm345, 0, %v379
      %381 = vst [vmem:[#allocation2 + $0x8c] sm:$0x1] %v380
      %v382 = vld [vmem:[#allocation2 + $0x98] sm:$0x1]
      %v383 = vsel %vm345, 0, %v382
      %384 = vst [vmem:[#allocation2 + $0x98] sm:$0x1] %v383
      %v385 = vld [vmem:[#allocation2 + $0xa4] sm:$0x1]
      %v386 = vsel %vm345, 0, %v385
      %387 = vst [vmem:[#allocation2 + $0xa4] sm:$0x1] %v386
      %v388 = vld [vmem:[#allocation2 + $0xb0] sm:$0x1]
      %v389 = vsel %vm345, 0, %v388
      %390 = vst [vmem:[#allocation2 + $0xb0] sm:$0x1] %v389
      %v391 = vld [vmem:[#allocation2 + $0xbc] sm:$0x1]
      %v392 = vsel %vm345, 0, %v391
      %393 = vst [vmem:[#allocation2 + $0xbc] sm:$0x1] %v392
      %v394 = vld [vmem:[#allocation2 + $0xc8] sm:$0x1]
      %v395 = vsel %vm345, 0, %v394
      %396 = vst [vmem:[#allocation2 + $0xc8] sm:$0x1] %v395
      %v397 = vld [vmem:[#allocation2 + $0xd4] sm:$0x1]
      %v398 = vsel %vm345, 0, %v397
      %399 = vst [vmem:[#allocation2 + $0xd4] sm:$0x1] %v398
      %v400 = vld [vmem:[%s273] sm:$0xf]
      %v401 = vld [vmem:[%s273 + $0x4] sm:$0xf]
      %v402 = vld [vmem:[%s273 + $0x8] sm:$0xf]
      %v403 = vld [vmem:[%s273 + $0xc] sm:$0xf]
      %v404 = vld [vmem:[%s273 + $0x10] sm:$0xf]
      %v405 = vld [vmem:[%s273 + $0x14] sm:$0xf]
      %v406 = vld [vmem:[%s273 + $0x18] sm:$0xf]
      %v407 = vld [vmem:[%s273 + $0x1c] sm:$0xf]
      %v408 = vld [vmem:[%s273 + $0x20] sm:$0xf]
      %v409 = vld [vmem:[%s273 + $0x24] sm:$0xf]
      %v410 = vld [vmem:[%s273 + $0x28] sm:$0xf]
      %v411 = vld [vmem:[%s273 + $0x2c] sm:$0xf]
      %v412 = vld [vmem:[%s273 + $0x30] sm:$0xf]
      %v413 = vld [vmem:[%s273 + $0x34] sm:$0xf]
      %v414 = vld [vmem:[%s273 + $0x38] sm:$0xf]
      %v415 = vld [vmem:[%s273 + $0x3c] sm:$0xf]
      %v416 = vld [vmem:[%s273 + $0x40] sm:$0xf]
      %v417 = vld [vmem:[%s273 + $0x44] sm:$0xf]
      %v418 = vld [vmem:[%s273 + $0x48] sm:$0xf]
      %v419 = vld [vmem:[%s273 + $0x4c] sm:$0xf]
      %v420 = vld [vmem:[%s273 + $0x50] sm:$0xf]
      %v421 = vld [vmem:[%s273 + $0x54] sm:$0xf]
      %v422 = vld [vmem:[%s273 + $0x58] sm:$0xf]
      %v423 = vld [vmem:[%s273 + $0x5c] sm:$0xf]
      %v424 = vld [vmem:[%s273 + $0x60] sm:$0xf]
      %v425 = vld [vmem:[%s273 + $0x64] sm:$0xf]
      %v426 = vld [vmem:[%s273 + $0x68] sm:$0xf]
      %v427 = vld [vmem:[%s273 + $0x6c] sm:$0xf]
      %v428 = vld [vmem:[%s273 + $0x70] sm:$0xf]
      %v429 = vld [vmem:[%s273 + $0x74] sm:$0xf]
      %v430 = vld [vmem:[%s273 + $0x78] sm:$0xf]
      %v431 = vld [vmem:[%s273 + $0x7c] sm:$0xf]
      %vm432 = vsmask.f32 4368
      %vm433 = vmor %vm288, %vm432
      %v435 = vshrl.u32 %v400, 16
      %v437 = vrot.slane %v435, 7
      %v438 = vshll.u32 %v400, 16
      %v440 = vor.u32 %v437, %v438
      %v441 = vrot.slane %v437, 4
      %v443 = vshrl.u32 %v401, 16
      %v445 = vrot.slane %v443, 7
      %v446 = vshll.u32 %v401, 16
      %v448 = vor.u32 %v445, %v446
      %v449 = vsel %vm433, %v441, %v448
      %v450 = vrot.slane %v445, 4
      %v452 = vshrl.u32 %v402, 16
      %v454 = vrot.slane %v452, 7
      %v455 = vshll.u32 %v402, 16
      %v457 = vor.u32 %v454, %v455
      %v458 = vrot.slane %v454, 4
      %v460 = vshrl.u32 %v403, 16
      %v462 = vrot.slane %v460, 7
      %v463 = vshll.u32 %v403, 16
      %v465 = vor.u32 %v462, %v463
      %v466 = vsel %vm433, %v458, %v465
      %v467 = vrot.slane %v462, 4
      %v469 = vshrl.u32 %v404, 16
      %v471 = vrot.slane %v469, 7
      %v472 = vshll.u32 %v404, 16
      %v474 = vor.u32 %v471, %v472
      %v475 = vrot.slane %v471, 4
      %v477 = vshrl.u32 %v405, 16
      %v479 = vrot.slane %v477, 7
      %v480 = vshll.u32 %v405, 16
      %v482 = vor.u32 %v479, %v480
      %v483 = vsel %vm433, %v475, %v482
      %v484 = vrot.slane %v479, 4
      %v486 = vshrl.u32 %v406, 16
      %v488 = vrot.slane %v486, 7
      %v489 = vshll.u32 %v406, 16
      %v491 = vor.u32 %v488, %v489
      %v492 = vrot.slane %v488, 4
      %v494 = vshrl.u32 %v407, 16
      %v496 = vrot.slane %v494, 7
      %v497 = vshll.u32 %v407, 16
      %v499 = vor.u32 %v496, %v497
      %v500 = vsel %vm433, %v492, %v499
      %v501 = vrot.slane %v496, 4
      %v503 = vshrl.u32 %v408, 16
      %v505 = vrot.slane %v503, 7
      %v506 = vshll.u32 %v408, 16
      %v508 = vor.u32 %v505, %v506
      %v509 = vrot.slane %v505, 4
      %v511 = vshrl.u32 %v409, 16
      %v513 = vrot.slane %v511, 7
      %v514 = vshll.u32 %v409, 16
      %v516 = vor.u32 %v513, %v514
      %v517 = vsel %vm433, %v509, %v516
      %v518 = vrot.slane %v513, 4
      %v520 = vshrl.u32 %v410, 16
      %v522 = vrot.slane %v520, 7
      %v523 = vshll.u32 %v410, 16
      %v525 = vor.u32 %v522, %v523
      %v526 = vrot.slane %v522, 4
      %v528 = vshrl.u32 %v411, 16
      %v530 = vrot.slane %v528, 7
      %v531 = vshll.u32 %v411, 16
      %v533 = vor.u32 %v530, %v531
      %v534 = vsel %vm433, %v526, %v533
      %v535 = vrot.slane %v530, 4
      %v537 = vshrl.u32 %v412, 16
      %v539 = vrot.slane %v537, 7
      %v540 = vshll.u32 %v412, 16
      %v542 = vor.u32 %v539, %v540
      %v543 = vrot.slane %v539, 4
      %v545 = vshrl.u32 %v413, 16
      %v547 = vrot.slane %v545, 7
      %v548 = vshll.u32 %v413, 16
      %v550 = vor.u32 %v547, %v548
      %v551 = vsel %vm433, %v543, %v550
      %v552 = vrot.slane %v547, 4
      %v554 = vshrl.u32 %v414, 16
      %v556 = vrot.slane %v554, 7
      %v557 = vshll.u32 %v414, 16
      %v559 = vor.u32 %v556, %v557
      %v560 = vrot.slane %v556, 4
      %v562 = vshrl.u32 %v415, 16
      %v564 = vrot.slane %v562, 7
      %v565 = vshll.u32 %v415, 16
      %v567 = vor.u32 %v564, %v565
      %v568 = vsel %vm433, %v560, %v567
      %v569 = vrot.slane %v564, 4
      %v571 = vshrl.u32 %v416, 16
      %v573 = vrot.slane %v571, 7
      %v574 = vshll.u32 %v416, 16
      %v576 = vor.u32 %v573, %v574
      %v577 = vrot.slane %v573, 4
      %v579 = vshrl.u32 %v417, 16
      %v581 = vrot.slane %v579, 7
      %v582 = vshll.u32 %v417, 16
      %v584 = vor.u32 %v581, %v582
      %v585 = vsel %vm433, %v577, %v584
      %v586 = vrot.slane %v581, 4
      %v588 = vshrl.u32 %v418, 16
      %v590 = vrot.slane %v588, 7
      %v591 = vshll.u32 %v418, 16
      %v593 = vor.u32 %v590, %v591
      %v594 = vrot.slane %v590, 4
      %v596 = vshrl.u32 %v419, 16
      %v598 = vrot.slane %v596, 7
      %v599 = vshll.u32 %v419, 16
      %v601 = vor.u32 %v598, %v599
      %v602 = vsel %vm433, %v594, %v601
      %v603 = vrot.slane %v598, 4
      %v605 = vshrl.u32 %v420, 16
      %v607 = vrot.slane %v605, 7
      %v608 = vshll.u32 %v420, 16
      %v610 = vor.u32 %v607, %v608
      %v611 = vrot.slane %v607, 4
      %v613 = vshrl.u32 %v421, 16
      %v615 = vrot.slane %v613, 7
      %v616 = vshll.u32 %v421, 16
      %v618 = vor.u32 %v615, %v616
      %v619 = vsel %vm433, %v611, %v618
      %v620 = vrot.slane %v615, 4
      %v622 = vshrl.u32 %v422, 16
      %v624 = vrot.slane %v622, 7
      %v625 = vshll.u32 %v422, 16
      %v627 = vor.u32 %v624, %v625
      %v628 = vrot.slane %v624, 4
      %v630 = vshrl.u32 %v423, 16
      %v632 = vrot.slane %v630, 7
      %v633 = vshll.u32 %v423, 16
      %v635 = vor.u32 %v632, %v633
      %v636 = vsel %vm433, %v628, %v635
      %v637 = vrot.slane %v632, 4
      %v639 = vshrl.u32 %v424, 16
      %v641 = vrot.slane %v639, 7
      %v642 = vshll.u32 %v424, 16
      %v644 = vor.u32 %v641, %v642
      %v645 = vrot.slane %v641, 4
      %v647 = vshrl.u32 %v425, 16
      %v649 = vrot.slane %v647, 7
      %v650 = vshll.u32 %v425, 16
      %v652 = vor.u32 %v649, %v650
      %v653 = vsel %vm433, %v645, %v652
      %v654 = vrot.slane %v649, 4
      %v656 = vshrl.u32 %v426, 16
      %v658 = vrot.slane %v656, 7
      %v659 = vshll.u32 %v426, 16
      %v661 = vor.u32 %v658, %v659
      %v662 = vrot.slane %v658, 4
      %v664 = vshrl.u32 %v427, 16
      %v666 = vrot.slane %v664, 7
      %v667 = vshll.u32 %v427, 16
      %v669 = vor.u32 %v666, %v667
      %v670 = vsel %vm433, %v662, %v669
      %v671 = vrot.slane %v666, 4
      %v673 = vshrl.u32 %v428, 16
      %v675 = vrot.slane %v673, 7
      %v676 = vshll.u32 %v428, 16
      %v678 = vor.u32 %v675, %v676
      %v679 = vrot.slane %v675, 4
      %v681 = vshrl.u32 %v429, 16
      %v683 = vrot.slane %v681, 7
      %v684 = vshll.u32 %v429, 16
      %v686 = vor.u32 %v683, %v684
      %v687 = vsel %vm433, %v679, %v686
      %v688 = vrot.slane %v683, 4
      %v690 = vshrl.u32 %v430, 16
      %v692 = vrot.slane %v690, 7
      %v693 = vshll.u32 %v430, 16
      %v695 = vor.u32 %v692, %v693
      %v696 = vrot.slane %v692, 4
      %v698 = vshrl.u32 %v431, 16
      %v700 = vrot.slane %v698, 7
      %v701 = vshll.u32 %v431, 16
      %v703 = vor.u32 %v700, %v701
      %v704 = vsel %vm433, %v696, %v703
      %v705 = vrot.slane %v700, 4
      %s754 = scalar_lea.vmem [#allocation2], 12
      %vm755 = vcmask 1043456
      %vm756 = vmand %vm755, %vm344
      %v757 = vld [vmem:[%s754] sm:$0xf]
      %v758 = vsel %vm756, %v440, %v757
      %759 = vst [vmem:[%s754] sm:$0xf] %v758
      %760 = vst [vmem:[%s754 + $0x4] sm:$0xf] %v449
      %v761 = vld [vmem:[%s754 + $0x8] sm:$0x1]
      %v762 = vsel %vm289, %v450, %v761
      %763 = vst [vmem:[%s754 + $0x8] sm:$0x1] %v762
      %v764 = vld [vmem:[%s754 + $0xc] sm:$0xf]
      %v765 = vsel %vm756, %v457, %v764
      %766 = vst [vmem:[%s754 + $0xc] sm:$0xf] %v765
      %767 = vst [vmem:[%s754 + $0x10] sm:$0xf] %v466
      %v768 = vld [vmem:[%s754 + $0x14] sm:$0x1]
      %v769 = vsel %vm289, %v467, %v768
      %770 = vst [vmem:[%s754 + $0x14] sm:$0x1] %v769
      %v771 = vld [vmem:[%s754 + $0x18] sm:$0xf]
      %v772 = vsel %vm756, %v474, %v771
      %773 = vst [vmem:[%s754 + $0x18] sm:$0xf] %v772
      %774 = vst [vmem:[%s754 + $0x1c] sm:$0xf] %v483
      %v775 = vld [vmem:[%s754 + $0x20] sm:$0x1]
      %v776 = vsel %vm289, %v484, %v775
      %777 = vst [vmem:[%s754 + $0x20] sm:$0x1] %v776
      %v778 = vld [vmem:[%s754 + $0x24] sm:$0xf]
      %v779 = vsel %vm756, %v491, %v778
      %780 = vst [vmem:[%s754 + $0x24] sm:$0xf] %v779
      %781 = vst [vmem:[%s754 + $0x28] sm:$0xf] %v500
      %v782 = vld [vmem:[%s754 + $0x2c] sm:$0x1]
      %v783 = vsel %vm289, %v501, %v782
      %784 = vst [vmem:[%s754 + $0x2c] sm:$0x1] %v783
      %v785 = vld [vmem:[%s754 + $0x30] sm:$0xf]
      %v786 = vsel %vm756, %v508, %v785
      %787 = vst [vmem:[%s754 + $0x30] sm:$0xf] %v786
      %788 = vst [vmem:[%s754 + $0x34] sm:$0xf] %v517
      %v789 = vld [vmem:[%s754 + $0x38] sm:$0x1]
      %v790 = vsel %vm289, %v518, %v789
      %791 = vst [vmem:[%s754 + $0x38] sm:$0x1] %v790
      %v792 = vld [vmem:[%s754 + $0x3c] sm:$0xf]
      %v793 = vsel %vm756, %v525, %v792
      %794 = vst [vmem:[%s754 + $0x3c] sm:$0xf] %v793
      %795 = vst [vmem:[%s754 + $0x40] sm:$0xf] %v534
      %v796 = vld [vmem:[%s754 + $0x44] sm:$0x1]
      %v797 = vsel %vm289, %v535, %v796
      %798 = vst [vmem:[%s754 + $0x44] sm:$0x1] %v797
      %v799 = vld [vmem:[%s754 + $0x48] sm:$0xf]
      %v800 = vsel %vm756, %v542, %v799
      %801 = vst [vmem:[%s754 + $0x48] sm:$0xf] %v800
      %802 = vst [vmem:[%s754 + $0x4c] sm:$0xf] %v551
      %v803 = vld [vmem:[%s754 + $0x50] sm:$0x1]
      %v804 = vsel %vm289, %v552, %v803
      %805 = vst [vmem:[%s754 + $0x50] sm:$0x1] %v804
      %v806 = vld [vmem:[%s754 + $0x54] sm:$0xf]
      %v807 = vsel %vm756, %v559, %v806
      %808 = vst [vmem:[%s754 + $0x54] sm:$0xf] %v807
      %809 = vst [vmem:[%s754 + $0x58] sm:$0xf] %v568
      %v810 = vld [vmem:[%s754 + $0x5c] sm:$0x1]
      %v811 = vsel %vm289, %v569, %v810
      %812 = vst [vmem:[%s754 + $0x5c] sm:$0x1] %v811
      %v813 = vld [vmem:[%s754 + $0x60] sm:$0xf]
      %v814 = vsel %vm756, %v576, %v813
      %815 = vst [vmem:[%s754 + $0x60] sm:$0xf] %v814
      %816 = vst [vmem:[%s754 + $0x64] sm:$0xf] %v585
      %v817 = vld [vmem:[%s754 + $0x68] sm:$0x1]
      %v818 = vsel %vm289, %v586, %v817
      %819 = vst [vmem:[%s754 + $0x68] sm:$0x1] %v818
      %v820 = vld [vmem:[%s754 + $0x6c] sm:$0xf]
      %v821 = vsel %vm756, %v593, %v820
      %822 = vst [vmem:[%s754 + $0x6c] sm:$0xf] %v821
      %823 = vst [vmem:[%s754 + $0x70] sm:$0xf] %v602
      %v824 = vld [vmem:[%s754 + $0x74] sm:$0x1]
      %v825 = vsel %vm289, %v603, %v824
      %826 = vst [vmem:[%s754 + $0x74] sm:$0x1] %v825
      %v827 = vld [vmem:[%s754 + $0x78] sm:$0xf]
      %v828 = vsel %vm756, %v610, %v827
      %829 = vst [vmem:[%s754 + $0x78] sm:$0xf] %v828
      %830 = vst [vmem:[%s754 + $0x7c] sm:$0xf] %v619
      %v831 = vld [vmem:[%s754 + $0x80] sm:$0x1]
      %v832 = vsel %vm289, %v620, %v831
      %833 = vst [vmem:[%s754 + $0x80] sm:$0x1] %v832
      %v834 = vld [vmem:[%s754 + $0x84] sm:$0xf]
      %v835 = vsel %vm756, %v627, %v834
      %836 = vst [vmem:[%s754 + $0x84] sm:$0xf] %v835
      %837 = vst [vmem:[%s754 + $0x88] sm:$0xf] %v636
      %v838 = vld [vmem:[%s754 + $0x8c] sm:$0x1]
      %v839 = vsel %vm289, %v637, %v838
      %840 = vst [vmem:[%s754 + $0x8c] sm:$0x1] %v839
      %v841 = vld [vmem:[%s754 + $0x90] sm:$0xf]
      %v842 = vsel %vm756, %v644, %v841
      %843 = vst [vmem:[%s754 + $0x90] sm:$0xf] %v842
      %844 = vst [vmem:[%s754 + $0x94] sm:$0xf] %v653
      %v845 = vld [vmem:[%s754 + $0x98] sm:$0x1]
      %v846 = vsel %vm289, %v654, %v845
      %847 = vst [vmem:[%s754 + $0x98] sm:$0x1] %v846
      %v848 = vld [vmem:[%s754 + $0x9c] sm:$0xf]
      %v849 = vsel %vm756, %v661, %v848
      %850 = vst [vmem:[%s754 + $0x9c] sm:$0xf] %v849
      %851 = vst [vmem:[%s754 + $0xa0] sm:$0xf] %v670
      %v852 = vld [vmem:[%s754 + $0xa4] sm:$0x1]
      %v853 = vsel %vm289, %v671, %v852
      %854 = vst [vmem:[%s754 + $0xa4] sm:$0x1] %v853
      %v855 = vld [vmem:[%s754 + $0xa8] sm:$0xf]
      %v856 = vsel %vm756, %v678, %v855
      %857 = vst [vmem:[%s754 + $0xa8] sm:$0xf] %v856
      %858 = vst [vmem:[%s754 + $0xac] sm:$0xf] %v687
      %v859 = vld [vmem:[%s754 + $0xb0] sm:$0x1]
      %v860 = vsel %vm289, %v688, %v859
      %861 = vst [vmem:[%s754 + $0xb0] sm:$0x1] %v860
      %v862 = vld [vmem:[%s754 + $0xb4] sm:$0xf]
      %v863 = vsel %vm756, %v695, %v862
      %864 = vst [vmem:[%s754 + $0xb4] sm:$0xf] %v863
      %865 = vst [vmem:[%s754 + $0xb8] sm:$0xf] %v704
      %v866 = vld [vmem:[%s754 + $0xbc] sm:$0x1]
      %v867 = vsel %vm289, %v705, %v866
      %868 = vst [vmem:[%s754 + $0xbc] sm:$0x1] %v867
      %v869 = vld [vmem:[#allocation2] sm:$0xf]
      %v870 = vld [vmem:[#allocation2 + $0x4] sm:$0xf]
      %v871 = vld [vmem:[#allocation2 + $0xc] sm:$0xf]
      %v872 = vld [vmem:[#allocation2 + $0x10] sm:$0xf]
      %v873 = vld [vmem:[#allocation2 + $0x18] sm:$0xf]
      %v874 = vld [vmem:[#allocation2 + $0x1c] sm:$0xf]
      %v875 = vld [vmem:[#allocation2 + $0x24] sm:$0xf]
      %v876 = vld [vmem:[#allocation2 + $0x28] sm:$0xf]
      %v877 = vld [vmem:[#allocation2 + $0x30] sm:$0xf]
      %v878 = vld [vmem:[#allocation2 + $0x34] sm:$0xf]
      %v879 = vld [vmem:[#allocation2 + $0x3c] sm:$0xf]
      %v880 = vld [vmem:[#allocation2 + $0x40] sm:$0xf]
      %v881 = vld [vmem:[#allocation2 + $0x48] sm:$0xf]
      %v882 = vld [vmem:[#allocation2 + $0x4c] sm:$0xf]
      %v883 = vld [vmem:[#allocation2 + $0x54] sm:$0xf]
      %v884 = vld [vmem:[#allocation2 + $0x58] sm:$0xf]
      %v885 = vld [vmem:[#allocation2 + $0x60] sm:$0xf]
      %v886 = vld [vmem:[#allocation2 + $0x64] sm:$0xf]
      %v887 = vld [vmem:[#allocation2 + $0x6c] sm:$0xf]
      %v888 = vld [vmem:[#allocation2 + $0x70] sm:$0xf]
      %v889 = vld [vmem:[#allocation2 + $0x78] sm:$0xf]
      %v890 = vld [vmem:[#allocation2 + $0x7c] sm:$0xf]
      %v891 = vld [vmem:[#allocation2 + $0x84] sm:$0xf]
      %v892 = vld [vmem:[#allocation2 + $0x88] sm:$0xf]
      %v893 = vld [vmem:[#allocation2 + $0x90] sm:$0xf]
      %v894 = vld [vmem:[#allocation2 + $0x94] sm:$0xf]
      %v895 = vld [vmem:[#allocation2 + $0x9c] sm:$0xf]
      %v896 = vld [vmem:[#allocation2 + $0xa0] sm:$0xf]
      %v897 = vld [vmem:[#allocation2 + $0xa8] sm:$0xf]
      %v898 = vld [vmem:[#allocation2 + $0xac] sm:$0xf]
      %v899 = vld [vmem:[#allocation2 + $0xb4] sm:$0xf]
      %v900 = vld [vmem:[#allocation2 + $0xb8] sm:$0xf]
      %901 = vst [vmem:[#allocation3] sm:$0xf] %v869
      %902 = vst [vmem:[#allocation3 + $0x24] sm:$0xf] %v870
      %903 = vst [vmem:[#allocation3 + $0x48] sm:$0xf] %v871
      %904 = vst [vmem:[#allocation3 + $0x6c] sm:$0xf] %v872
      %905 = vst [vmem:[#allocation3 + $0x90] sm:$0xf] %v873
      %906 = vst [vmem:[#allocation3 + $0xb4] sm:$0xf] %v874
      %907 = vst [vmem:[#allocation3 + $0xd8] sm:$0xf] %v875
      %908 = vst [vmem:[#allocation3 + $0xfc] sm:$0xf] %v876
      %909 = vst [vmem:[#allocation3 + $0x120] sm:$0xf] %v877
      %910 = vst [vmem:[#allocation3 + $0x144] sm:$0xf] %v878
      %911 = vst [vmem:[#allocation3 + $0x168] sm:$0xf] %v879
      %912 = vst [vmem:[#allocation3 + $0x18c] sm:$0xf] %v880
      %913 = vst [vmem:[#allocation3 + $0x1b0] sm:$0xf] %v881
      %914 = vst [vmem:[#allocation3 + $0x1d4] sm:$0xf] %v882
      %915 = vst [vmem:[#allocation3 + $0x1f8] sm:$0xf] %v883
      %916 = vst [vmem:[#allocation3 + $0x21c] sm:$0xf] %v884
      %917 = vst [vmem:[#allocation3 + $0x240] sm:$0xf] %v885
      %918 = vst [vmem:[#allocation3 + $0x264] sm:$0xf] %v886
      %919 = vst [vmem:[#allocation3 + $0x288] sm:$0xf] %v887
      %920 = vst [vmem:[#allocation3 + $0x2ac] sm:$0xf] %v888
      %921 = vst [vmem:[#allocation3 + $0x2d0] sm:$0xf] %v889
      %922 = vst [vmem:[#allocation3 + $0x2f4] sm:$0xf] %v890
      %923 = vst [vmem:[#allocation3 + $0x318] sm:$0xf] %v891
      %924 = vst [vmem:[#allocation3 + $0x33c] sm:$0xf] %v892
      %925 = vst [vmem:[#allocation3 + $0x360] sm:$0xf] %v893
      %926 = vst [vmem:[#allocation3 + $0x384] sm:$0xf] %v894
      %927 = vst [vmem:[#allocation3 + $0x3a8] sm:$0xf] %v895
      %928 = vst [vmem:[#allocation3 + $0x3cc] sm:$0xf] %v896
      %929 = vst [vmem:[#allocation3 + $0x3f0] sm:$0xf] %v897
      %930 = vst [vmem:[#allocation3 + $0x414] sm:$0xf] %v898
      %931 = vst [vmem:[#allocation3 + $0x438] sm:$0xf] %v899
      %932 = vst [vmem:[#allocation3 + $0x45c] sm:$0xf] %v900
      %v933 = vld [vmem:[#allocation2] sm:$0xf]
      %v934 = vld [vmem:[#allocation2 + $0x4] sm:$0xf]
      %v935 = vld [vmem:[#allocation2 + $0x8] sm:$0x1]
      %v936 = vld [vmem:[#allocation2 + $0xc] sm:$0xf]
      %v937 = vld [vmem:[#allocation2 + $0x10] sm:$0xf]
      %v938 = vld [vmem:[#allocation2 + $0x14] sm:$0x1]
      %v939 = vld [vmem:[#allocation2 + $0x18] sm:$0xf]
      %v940 = vld [vmem:[#allocation2 + $0x1c] sm:$0xf]
      %v941 = vld [vmem:[#allocation2 + $0x20] sm:$0x1]
      %v942 = vld [vmem:[#allocation2 + $0x24] sm:$0xf]
      %v943 = vld [vmem:[#allocation2 + $0x28] sm:$0xf]
      %v944 = vld [vmem:[#allocation2 + $0x2c] sm:$0x1]
      %v945 = vld [vmem:[#allocation2 + $0x30] sm:$0xf]
      %v946 = vld [vmem:[#allocation2 + $0x34] sm:$0xf]
      %v947 = vld [vmem:[#allocation2 + $0x38] sm:$0x1]
      %v948 = vld [vmem:[#allocation2 + $0x3c] sm:$0xf]
      %v949 = vld [vmem:[#allocation2 + $0x40] sm:$0xf]
      %v950 = vld [vmem:[#allocation2 + $0x44] sm:$0x1]
      %v951 = vld [vmem:[#allocation2 + $0x48] sm:$0xf]
      %v952 = vld [vmem:[#allocation2 + $0x4c] sm:$0xf]
      %v953 = vld [vmem:[#allocation2 + $0x50] sm:$0x1]
      %v954 = vld [vmem:[#allocation2 + $0x54] sm:$0xf]
      %v955 = vld [vmem:[#allocation2 + $0x58] sm:$0xf]
      %v956 = vld [vmem:[#allocation2 + $0x5c] sm:$0x1]
      %v957 = vld [vmem:[#allocation2 + $0x60] sm:$0xf]
      %v958 = vld [vmem:[#allocation2 + $0x64] sm:$0xf]
      %v959 = vld [vmem:[#allocation2 + $0x68] sm:$0x1]
      %v960 = vld [vmem:[#allocation2 + $0x6c] sm:$0xf]
      %v961 = vld [vmem:[#allocation2 + $0x70] sm:$0xf]
      %v962 = vld [vmem:[#allocation2 + $0x74] sm:$0x1]
      %v963 = vld [vmem:[#allocation2 + $0x78] sm:$0xf]
      %v964 = vld [vmem:[#allocation2 + $0x7c] sm:$0xf]
      %v965 = vld [vmem:[#allocation2 + $0x80] sm:$0x1]
      %v966 = vld [vmem:[#allocation2 + $0x84] sm:$0xf]
      %v967 = vld [vmem:[#allocation2 + $0x88] sm:$0xf]
      %v968 = vld [vmem:[#allocation2 + $0x8c] sm:$0x1]
      %v969 = vld [vmem:[#allocation2 + $0x90] sm:$0xf]
      %v970 = vld [vmem:[#allocation2 + $0x94] sm:$0xf]
      %v971 = vld [vmem:[#allocation2 + $0x98] sm:$0x1]
      %v972 = vld [vmem:[#allocation2 + $0x9c] sm:$0xf]
      %v973 = vld [vmem:[#allocation2 + $0xa0] sm:$0xf]
      %v974 = vld [vmem:[#allocation2 + $0xa4] sm:$0x1]
      %v975 = vld [vmem:[#allocation2 + $0xa8] sm:$0xf]
      %v976 = vld [vmem:[#allocation2 + $0xac] sm:$0xf]
      %v977 = vld [vmem:[#allocation2 + $0xb0] sm:$0x1]
      %v978 = vld [vmem:[#allocation2 + $0xb4] sm:$0xf]
      %v979 = vld [vmem:[#allocation2 + $0xb8] sm:$0xf]
      %v980 = vld [vmem:[#allocation2 + $0xbc] sm:$0x1]
      %vm981 = vsmask.f32 3328
      %vm982 = vsmask.f32 7440
      %vm983 = vmor %vm981, %vm982
      %v985 = vshrl.u32 %v933, 16
      %v987 = vrot.slane %v985, 4
      %v988 = vshll.u32 %v933, 16
      %v990 = vrot.slane %v988, 5
      %v991 = vor.u32 %v987, %v990
      %v992 = vrot.slane %v991, 4
      %v994 = vshll.u32 %v934, 16
      %v996 = vrot.slane %v994, 5
      %v997 = vsel %vm983, %v992, %v996
      %v998 = vshrl.u32 %v934, 16
      %v1000 = vrot.slane %v998, 4
      %v1001 = vor.u32 %v1000, %v996
      %v1002 = vrot.slane %v1001, 4
      %v1004 = vshll.u32 %v935, 16
      %v1006 = vrot.slane %v1004, 5
      %v1007 = vsel %vm983, %v1002, %v1006
      %v1009 = vshrl.u32 %v936, 16
      %v1011 = vrot.slane %v1009, 4
      %v1012 = vshll.u32 %v936, 16
      %v1014 = vrot.slane %v1012, 5
      %v1015 = vor.u32 %v1011, %v1014
      %v1016 = vrot.slane %v1015, 4
      %v1018 = vshll.u32 %v937, 16
      %v1020 = vrot.slane %v1018, 5
      %v1021 = vsel %vm983, %v1016, %v1020
      %v1022 = vshrl.u32 %v937, 16
      %v1024 = vrot.slane %v1022, 4
      %v1025 = vor.u32 %v1024, %v1020
      %v1026 = vrot.slane %v1025, 4
      %v1028 = vshll.u32 %v938, 16
      %v1030 = vrot.slane %v1028, 5
      %v1031 = vsel %vm983, %v1026, %v1030
      %v1033 = vshrl.u32 %v939, 16
      %v1035 = vrot.slane %v1033, 4
      %v1036 = vshll.u32 %v939, 16
      %v1038 = vrot.slane %v1036, 5
      %v1039 = vor.u32 %v1035, %v1038
      %v1040 = vrot.slane %v1039, 4
      %v1042 = vshll.u32 %v940, 16
      %v1044 = vrot.slane %v1042, 5
      %v1045 = vsel %vm983, %v1040, %v1044
      %v1046 = vshrl.u32 %v940, 16
      %v1048 = vrot.slane %v1046, 4
      %v1049 = vor.u32 %v1048, %v1044
      %v1050 = vrot.slane %v1049, 4
      %v1052 = vshll.u32 %v941, 16
      %v1054 = vrot.slane %v1052, 5
      %v1055 = vsel %vm983, %v1050, %v1054
      %v1057 = vshrl.u32 %v942, 16
      %v1059 = vrot.slane %v1057, 4
      %v1060 = vshll.u32 %v942, 16
      %v1062 = vrot.slane %v1060, 5
      %v1063 = vor.u32 %v1059, %v1062
      %v1064 = vrot.slane %v1063, 4
      %v1066 = vshll.u32 %v943, 16
      %v1068 = vrot.slane %v1066, 5
      %v1069 = vsel %vm983, %v1064, %v1068
      %v1070 = vshrl.u32 %v943, 16
      %v1072 = vrot.slane %v1070, 4
      %v1073 = vor.u32 %v1072, %v1068
      %v1074 = vrot.slane %v1073, 4
      %v1076 = vshll.u32 %v944, 16
      %v1078 = vrot.slane %v1076, 5
      %v1079 = vsel %vm983, %v1074, %v1078
      %v1081 = vshrl.u32 %v945, 16
      %v1083 = vrot.slane %v1081, 4
      %v1084 = vshll.u32 %v945, 16
      %v1086 = vrot.slane %v1084, 5
      %v1087 = vor.u32 %v1083, %v1086
      %v1088 = vrot.slane %v1087, 4
      %v1090 = vshll.u32 %v946, 16
      %v1092 = vrot.slane %v1090, 5
      %v1093 = vsel %vm983, %v1088, %v1092
      %v1094 = vshrl.u32 %v946, 16
      %v1096 = vrot.slane %v1094, 4
      %v1097 = vor.u32 %v1096, %v1092
      %v1098 = vrot.slane %v1097, 4
      %v1100 = vshll.u32 %v947, 16
      %v1102 = vrot.slane %v1100, 5
      %v1103 = vsel %vm983, %v1098, %v1102
      %v1105 = vshrl.u32 %v948, 16
      %v1107 = vrot.slane %v1105, 4
      %v1108 = vshll.u32 %v948, 16
      %v1110 = vrot.slane %v1108, 5
      %v1111 = vor.u32 %v1107, %v1110
      %v1112 = vrot.slane %v1111, 4
      %v1114 = vshll.u32 %v949, 16
      %v1116 = vrot.slane %v1114, 5
      %v1117 = vsel %vm983, %v1112, %v1116
      %v1118 = vshrl.u32 %v949, 16
      %v1120 = vrot.slane %v1118, 4
      %v1121 = vor.u32 %v1120, %v1116
      %v1122 = vrot.slane %v1121, 4
      %v1124 = vshll.u32 %v950, 16
      %v1126 = vrot.slane %v1124, 5
      %v1127 = vsel %vm983, %v1122, %v1126
      %v1129 = vshrl.u32 %v951, 16
      %v1131 = vrot.slane %v1129, 4
      %v1132 = vshll.u32 %v951, 16
      %v1134 = vrot.slane %v1132, 5
      %v1135 = vor.u32 %v1131, %v1134
      %v1136 = vrot.slane %v1135, 4
      %v1138 = vshll.u32 %v952, 16
      %v1140 = vrot.slane %v1138, 5
      %v1141 = vsel %vm983, %v1136, %v1140
      %v1142 = vshrl.u32 %v952, 16
      %v1144 = vrot.slane %v1142, 4
      %v1145 = vor.u32 %v1144, %v1140
      %v1146 = vrot.slane %v1145, 4
      %v1148 = vshll.u32 %v953, 16
      %v1150 = vrot.slane %v1148, 5
      %v1151 = vsel %vm983, %v1146, %v1150
      %v1153 = vshrl.u32 %v954, 16
      %v1155 = vrot.slane %v1153, 4
      %v1156 = vshll.u32 %v954, 16
      %v1158 = vrot.slane %v1156, 5
      %v1159 = vor.u32 %v1155, %v1158
      %v1160 = vrot.slane %v1159, 4
      %v1162 = vshll.u32 %v955, 16
      %v1164 = vrot.slane %v1162, 5
      %v1165 = vsel %vm983, %v1160, %v1164
      %v1166 = vshrl.u32 %v955, 16
      %v1168 = vrot.slane %v1166, 4
      %v1169 = vor.u32 %v1168, %v1164
      %v1170 = vrot.slane %v1169, 4
      %v1172 = vshll.u32 %v956, 16
      %v1174 = vrot.slane %v1172, 5
      %v1175 = vsel %vm983, %v1170, %v1174
      %v1177 = vshrl.u32 %v957, 16
      %v1179 = vrot.slane %v1177, 4
      %v1180 = vshll.u32 %v957, 16
      %v1182 = vrot.slane %v1180, 5
      %v1183 = vor.u32 %v1179, %v1182
      %v1184 = vrot.slane %v1183, 4
      %v1186 = vshll.u32 %v958, 16
      %v1188 = vrot.slane %v1186, 5
      %v1189 = vsel %vm983, %v1184, %v1188
      %v1190 = vshrl.u32 %v958, 16
      %v1192 = vrot.slane %v1190, 4
      %v1193 = vor.u32 %v1192, %v1188
      %v1194 = vrot.slane %v1193, 4
      %v1196 = vshll.u32 %v959, 16
      %v1198 = vrot.slane %v1196, 5
      %v1199 = vsel %vm983, %v1194, %v1198
      %v1201 = vshrl.u32 %v960, 16
      %v1203 = vrot.slane %v1201, 4
      %v1204 = vshll.u32 %v960, 16
      %v1206 = vrot.slane %v1204, 5
      %v1207 = vor.u32 %v1203, %v1206
      %v1208 = vrot.slane %v1207, 4
      %v1210 = vshll.u32 %v961, 16
      %v1212 = vrot.slane %v1210, 5
      %v1213 = vsel %vm983, %v1208, %v1212
      %v1214 = vshrl.u32 %v961, 16
      %v1216 = vrot.slane %v1214, 4
      %v1217 = vor.u32 %v1216, %v1212
      %v1218 = vrot.slane %v1217, 4
      %v1220 = vshll.u32 %v962, 16
      %v1222 = vrot.slane %v1220, 5
      %v1223 = vsel %vm983, %v1218, %v1222
      %v1225 = vshrl.u32 %v963, 16
      %v1227 = vrot.slane %v1225, 4
      %v1228 = vshll.u32 %v963, 16
      %v1230 = vrot.slane %v1228, 5
      %v1231 = vor.u32 %v1227, %v1230
      %v1232 = vrot.slane %v1231, 4
      %v1234 = vshll.u32 %v964, 16
      %v1236 = vrot.slane %v1234, 5
      %v1237 = vsel %vm983, %v1232, %v1236
      %v1238 = vshrl.u32 %v964, 16
      %v1240 = vrot.slane %v1238, 4
      %v1241 = vor.u32 %v1240, %v1236
      %v1242 = vrot.slane %v1241, 4
      %v1244 = vshll.u32 %v965, 16
      %v1246 = vrot.slane %v1244, 5
      %v1247 = vsel %vm983, %v1242, %v1246
      %v1249 = vshrl.u32 %v966, 16
      %v1251 = vrot.slane %v1249, 4
      %v1252 = vshll.u32 %v966, 16
      %v1254 = vrot.slane %v1252, 5
      %v1255 = vor.u32 %v1251, %v1254
      %v1256 = vrot.slane %v1255, 4
      %v1258 = vshll.u32 %v967, 16
      %v1260 = vrot.slane %v1258, 5
      %v1261 = vsel %vm983, %v1256, %v1260
      %v1262 = vshrl.u32 %v967, 16
      %v1264 = vrot.slane %v1262, 4
      %v1265 = vor.u32 %v1264, %v1260
      %v1266 = vrot.slane %v1265, 4
      %v1268 = vshll.u32 %v968, 16
      %v1270 = vrot.slane %v1268, 5
      %v1271 = vsel %vm983, %v1266, %v1270
      %v1273 = vshrl.u32 %v969, 16
      %v1275 = vrot.slane %v1273, 4
      %v1276 = vshll.u32 %v969, 16
      %v1278 = vrot.slane %v1276, 5
      %v1279 = vor.u32 %v1275, %v1278
      %v1280 = vrot.slane %v1279, 4
      %v1282 = vshll.u32 %v970, 16
      %v1284 = vrot.slane %v1282, 5
      %v1285 = vsel %vm983, %v1280, %v1284
      %v1286 = vshrl.u32 %v970, 16
      %v1288 = vrot.slane %v1286, 4
      %v1289 = vor.u32 %v1288, %v1284
      %v1290 = vrot.slane %v1289, 4
      %v1292 = vshll.u32 %v971, 16
      %v1294 = vrot.slane %v1292, 5
      %v1295 = vsel %vm983, %v1290, %v1294
      %v1297 = vshrl.u32 %v972, 16
      %v1299 = vrot.slane %v1297, 4
      %v1300 = vshll.u32 %v972, 16
      %v1302 = vrot.slane %v1300, 5
      %v1303 = vor.u32 %v1299, %v1302
      %v1304 = vrot.slane %v1303, 4
      %v1306 = vshll.u32 %v973, 16
      %v1308 = vrot.slane %v1306, 5
      %v1309 = vsel %vm983, %v1304, %v1308
      %v1310 = vshrl.u32 %v973, 16
      %v1312 = vrot.slane %v1310, 4
      %v1313 = vor.u32 %v1312, %v1308
      %v1314 = vrot.slane %v1313, 4
      %v1316 = vshll.u32 %v974, 16
      %v1318 = vrot.slane %v1316, 5
      %v1319 = vsel %vm983, %v1314, %v1318
      %v1321 = vshrl.u32 %v975, 16
      %v1323 = vrot.slane %v1321, 4
      %v1324 = vshll.u32 %v975, 16
      %v1326 = vrot.slane %v1324, 5
      %v1327 = vor.u32 %v1323, %v1326
      %v1328 = vrot.slane %v1327, 4
      %v1330 = vshll.u32 %v976, 16
      %v1332 = vrot.slane %v1330, 5
      %v1333 = vsel %vm983, %v1328, %v1332
      %v1334 = vshrl.u32 %v976, 16
      %v1336 = vrot.slane %v1334, 4
      %v1337 = vor.u32 %v1336, %v1332
      %v1338 = vrot.slane %v1337, 4
      %v1340 = vshll.u32 %v977, 16
      %v1342 = vrot.slane %v1340, 5
      %v1343 = vsel %vm983, %v1338, %v1342
      %v1345 = vshrl.u32 %v978, 16
      %v1347 = vrot.slane %v1345, 4
      %v1348 = vshll.u32 %v978, 16
      %v1350 = vrot.slane %v1348, 5
      %v1351 = vor.u32 %v1347, %v1350
      %v1352 = vrot.slane %v1351, 4
      %v1354 = vshll.u32 %v979, 16
      %v1356 = vrot.slane %v1354, 5
      %v1357 = vsel %vm983, %v1352, %v1356
      %v1358 = vshrl.u32 %v979, 16
      %v1360 = vrot.slane %v1358, 4
      %v1361 = vor.u32 %v1360, %v1356
      %v1362 = vrot.slane %v1361, 4
      %v1364 = vshll.u32 %v980, 16
      %v1366 = vrot.slane %v1364, 5
      %v1367 = vsel %vm983, %v1362, %v1366
      %1400 = vst [vmem:[#allocation3 + $0x4] sm:$0xf] %v997
      %1401 = vst [vmem:[#allocation3 + $0x28] sm:$0xf] %v1007
      %1402 = vst [vmem:[#allocation3 + $0x4c] sm:$0xf] %v1021
      %1403 = vst [vmem:[#allocation3 + $0x70] sm:$0xf] %v1031
      %1404 = vst [vmem:[#allocation3 + $0x94] sm:$0xf] %v1045
      %1405 = vst [vmem:[#allocation3 + $0xb8] sm:$0xf] %v1055
      %1406 = vst [vmem:[#allocation3 + $0xdc] sm:$0xf] %v1069
      %1407 = vst [vmem:[#allocation3 + $0x100] sm:$0xf] %v1079
      %1408 = vst [vmem:[#allocation3 + $0x124] sm:$0xf] %v1093
      %1409 = vst [vmem:[#allocation3 + $0x148] sm:$0xf] %v1103
      %1410 = vst [vmem:[#allocation3 + $0x16c] sm:$0xf] %v1117
      %1411 = vst [vmem:[#allocation3 + $0x190] sm:$0xf] %v1127
      %1412 = vst [vmem:[#allocation3 + $0x1b4] sm:$0xf] %v1141
      %1413 = vst [vmem:[#allocation3 + $0x1d8] sm:$0xf] %v1151
      %1414 = vst [vmem:[#allocation3 + $0x1fc] sm:$0xf] %v1165
      %1415 = vst [vmem:[#allocation3 + $0x220] sm:$0xf] %v1175
      %1416 = vst [vmem:[#allocation3 + $0x244] sm:$0xf] %v1189
      %1417 = vst [vmem:[#allocation3 + $0x268] sm:$0xf] %v1199
      %1418 = vst [vmem:[#allocation3 + $0x28c] sm:$0xf] %v1213
      %1419 = vst [vmem:[#allocation3 + $0x2b0] sm:$0xf] %v1223
      %1420 = vst [vmem:[#allocation3 + $0x2d4] sm:$0xf] %v1237
      %1421 = vst [vmem:[#allocation3 + $0x2f8] sm:$0xf] %v1247
      %1422 = vst [vmem:[#allocation3 + $0x31c] sm:$0xf] %v1261
      %1423 = vst [vmem:[#allocation3 + $0x340] sm:$0xf] %v1271
      %1424 = vst [vmem:[#allocation3 + $0x364] sm:$0xf] %v1285
      %1425 = vst [vmem:[#allocation3 + $0x388] sm:$0xf] %v1295
      %1426 = vst [vmem:[#allocation3 + $0x3ac] sm:$0xf] %v1309
      %1427 = vst [vmem:[#allocation3 + $0x3d0] sm:$0xf] %v1319
      %1428 = vst [vmem:[#allocation3 + $0x3f4] sm:$0xf] %v1333
      %1429 = vst [vmem:[#allocation3 + $0x418] sm:$0xf] %v1343
      %1430 = vst [vmem:[#allocation3 + $0x43c] sm:$0xf] %v1357
      %1431 = vst [vmem:[#allocation3 + $0x460] sm:$0xf] %v1367
      %v1432 = vld [vmem:[#allocation2] sm:$0xe]
      %v1433 = vld [vmem:[#allocation2 + $0x4] sm:$0xf]
      %v1434 = vld [vmem:[#allocation2 + $0x8] sm:$0x1]
      %v1435 = vld [vmem:[#allocation2 + $0xc] sm:$0xe]
      %v1436 = vld [vmem:[#allocation2 + $0x10] sm:$0xf]
      %v1437 = vld [vmem:[#allocation2 + $0x14] sm:$0x1]
      %v1438 = vld [vmem:[#allocation2 + $0x18] sm:$0xe]
      %v1439 = vld [vmem:[#allocation2 + $0x1c] sm:$0xf]
      %v1440 = vld [vmem:[#allocation2 + $0x20] sm:$0x1]
      %v1441 = vld [vmem:[#allocation2 + $0x24] sm:$0xe]
      %v1442 = vld [vmem:[#allocation2 + $0x28] sm:$0xf]
      %v1443 = vld [vmem:[#allocation2 + $0x2c] sm:$0x1]
      %v1444 = vld [vmem:[#allocation2 + $0x30] sm:$0xe]
      %v1445 = vld [vmem:[#allocation2 + $0x34] sm:$0xf]
      %v1446 = vld [vmem:[#allocation2 + $0x38] sm:$0x1]
      %v1447 = vld [vmem:[#allocation2 + $0x3c] sm:$0xe]
      %v1448 = vld [vmem:[#allocation2 + $0x40] sm:$0xf]
      %v1449 = vld [vmem:[#allocation2 + $0x44] sm:$0x1]
      %v1450 = vld [vmem:[#allocation2 + $0x48] sm:$0xe]
      %v1451 = vld [vmem:[#allocation2 + $0x4c] sm:$0xf]
      %v1452 = vld [vmem:[#allocation2 + $0x50] sm:$0x1]
      %v1453 = vld [vmem:[#allocation2 + $0x54] sm:$0xe]
      %v1454 = vld [vmem:[#allocation2 + $0x58] sm:$0xf]
      %v1455 = vld [vmem:[#allocation2 + $0x5c] sm:$0x1]
      %v1456 = vld [vmem:[#allocation2 + $0x60] sm:$0xe]
      %v1457 = vld [vmem:[#allocation2 + $0x64] sm:$0xf]
      %v1458 = vld [vmem:[#allocation2 + $0x68] sm:$0x1]
      %v1459 = vld [vmem:[#allocation2 + $0x6c] sm:$0xe]
      %v1460 = vld [vmem:[#allocation2 + $0x70] sm:$0xf]
      %v1461 = vld [vmem:[#allocation2 + $0x74] sm:$0x1]
      %v1462 = vld [vmem:[#allocation2 + $0x78] sm:$0xe]
      %v1463 = vld [vmem:[#allocation2 + $0x7c] sm:$0xf]
      %v1464 = vld [vmem:[#allocation2 + $0x80] sm:$0x1]
      %v1465 = vld [vmem:[#allocation2 + $0x84] sm:$0xe]
      %v1466 = vld [vmem:[#allocation2 + $0x88] sm:$0xf]
      %v1467 = vld [vmem:[#allocation2 + $0x8c] sm:$0x1]
      %v1468 = vld [vmem:[#allocation2 + $0x90] sm:$0xe]
      %v1469 = vld [vmem:[#allocation2 + $0x94] sm:$0xf]
      %v1470 = vld [vmem:[#allocation2 + $0x98] sm:$0x1]
      %v1471 = vld [vmem:[#allocation2 + $0x9c] sm:$0xe]
      %v1472 = vld [vmem:[#allocation2 + $0xa0] sm:$0xf]
      %v1473 = vld [vmem:[#allocation2 + $0xa4] sm:$0x1]
      %v1474 = vld [vmem:[#allocation2 + $0xa8] sm:$0xe]
      %v1475 = vld [vmem:[#allocation2 + $0xac] sm:$0xf]
      %v1476 = vld [vmem:[#allocation2 + $0xb0] sm:$0x1]
      %v1477 = vld [vmem:[#allocation2 + $0xb4] sm:$0xe]
      %v1478 = vld [vmem:[#allocation2 + $0xb8] sm:$0xf]
      %v1479 = vld [vmem:[#allocation2 + $0xbc] sm:$0x1]
      %vm1528 = vcmask 1042432
      %vm1529 = vcmask 1046532
      %vm1530 = vmor %vm1528, %vm1529
      %v1531 = vrot.slane %v1432, 5
      %v1532 = vrot.slane %v1531, 4
      %v1533 = vrot.slane %v1433, 5
      %v1534 = vsel %vm1530, %v1532, %v1533
      %v1535 = vrot.slane %v1533, 4
      %v1536 = vrot.slane %v1434, 5
      %v1537 = vsel %vm1530, %v1535, %v1536
      %v1538 = vrot.slane %v1435, 5
      %v1539 = vrot.slane %v1538, 4
      %v1540 = vrot.slane %v1436, 5
      %v1541 = vsel %vm1530, %v1539, %v1540
      %v1542 = vrot.slane %v1540, 4
      %v1543 = vrot.slane %v1437, 5
      %v1544 = vsel %vm1530, %v1542, %v1543
      %v1545 = vrot.slane %v1438, 5
      %v1546 = vrot.slane %v1545, 4
      %v1547 = vrot.slane %v1439, 5
      %v1548 = vsel %vm1530, %v1546, %v1547
      %v1549 = vrot.slane %v1547, 4
      %v1550 = vrot.slane %v1440, 5
      %v1551 = vsel %vm1530, %v1549, %v1550
      %v1552 = vrot.slane %v1441, 5
      %v1553 = vrot.slane %v1552, 4
      %v1554 = vrot.slane %v1442, 5
      %v1555 = vsel %vm1530, %v1553, %v1554
      %v1556 = vrot.slane %v1554, 4
      %v1557 = vrot.slane %v1443, 5
      %v1558 = vsel %vm1530, %v1556, %v1557
      %v1559 = vrot.slane %v1444, 5
      %v1560 = vrot.slane %v1559, 4
      %v1561 = vrot.slane %v1445, 5
      %v1562 = vsel %vm1530, %v1560, %v1561
      %v1563 = vrot.slane %v1561, 4
      %v1564 = vrot.slane %v1446, 5
      %v1565 = vsel %vm1530, %v1563, %v1564
      %v1566 = vrot.slane %v1447, 5
      %v1567 = vrot.slane %v1566, 4
      %v1568 = vrot.slane %v1448, 5
      %v1569 = vsel %vm1530, %v1567, %v1568
      %v1570 = vrot.slane %v1568, 4
      %v1571 = vrot.slane %v1449, 5
      %v1572 = vsel %vm1530, %v1570, %v1571
      %v1573 = vrot.slane %v1450, 5
      %v1574 = vrot.slane %v1573, 4
      %v1575 = vrot.slane %v1451, 5
      %v1576 = vsel %vm1530, %v1574, %v1575
      %v1577 = vrot.slane %v1575, 4
      %v1578 = vrot.slane %v1452, 5
      %v1579 = vsel %vm1530, %v1577, %v1578
      %v1580 = vrot.slane %v1453, 5
      %v1581 = vrot.slane %v1580, 4
      %v1582 = vrot.slane %v1454, 5
      %v1583 = vsel %vm1530, %v1581, %v1582
      %v1584 = vrot.slane %v1582, 4
      %v1585 = vrot.slane %v1455, 5
      %v1586 = vsel %vm1530, %v1584, %v1585
      %v1587 = vrot.slane %v1456, 5
      %v1588 = vrot.slane %v1587, 4
      %v1589 = vrot.slane %v1457, 5
      %v1590 = vsel %vm1530, %v1588, %v1589
      %v1591 = vrot.slane %v1589, 4
      %v1592 = vrot.slane %v1458, 5
      %v1593 = vsel %vm1530, %v1591, %v1592
      %v1594 = vrot.slane %v1459, 5
      %v1595 = vrot.slane %v1594, 4
      %v1596 = vrot.slane %v1460, 5
      %v1597 = vsel %vm1530, %v1595, %v1596
      %v1598 = vrot.slane %v1596, 4
      %v1599 = vrot.slane %v1461, 5
      %v1600 = vsel %vm1530, %v1598, %v1599
      %v1601 = vrot.slane %v1462, 5
      %v1602 = vrot.slane %v1601, 4
      %v1603 = vrot.slane %v1463, 5
      %v1604 = vsel %vm1530, %v1602, %v1603
      %v1605 = vrot.slane %v1603, 4
      %v1606 = vrot.slane %v1464, 5
      %v1607 = vsel %vm1530, %v1605, %v1606
      %v1608 = vrot.slane %v1465, 5
      %v1609 = vrot.slane %v1608, 4
      %v1610 = vrot.slane %v1466, 5
      %v1611 = vsel %vm1530, %v1609, %v1610
      %v1612 = vrot.slane %v1610, 4
      %v1613 = vrot.slane %v1467, 5
      %v1614 = vsel %vm1530, %v1612, %v1613
      %v1615 = vrot.slane %v1468, 5
      %v1616 = vrot.slane %v1615, 4
      %v1617 = vrot.slane %v1469, 5
      %v1618 = vsel %vm1530, %v1616, %v1617
      %v1619 = vrot.slane %v1617, 4
      %v1620 = vrot.slane %v1470, 5
      %v1621 = vsel %vm1530, %v1619, %v1620
      %v1622 = vrot.slane %v1471, 5
      %v1623 = vrot.slane %v1622, 4
      %v1624 = vrot.slane %v1472, 5
      %v1625 = vsel %vm1530, %v1623, %v1624
      %v1626 = vrot.slane %v1624, 4
      %v1627 = vrot.slane %v1473, 5
      %v1628 = vsel %vm1530, %v1626, %v1627
      %v1629 = vrot.slane %v1474, 5
      %v1630 = vrot.slane %v1629, 4
      %v1631 = vrot.slane %v1475, 5
      %v1632 = vsel %vm1530, %v1630, %v1631
      %v1633 = vrot.slane %v1631, 4
      %v1634 = vrot.slane %v1476, 5
      %v1635 = vsel %vm1530, %v1633, %v1634
      %v1636 = vrot.slane %v1477, 5
      %v1637 = vrot.slane %v1636, 4
      %v1638 = vrot.slane %v1478, 5
      %v1639 = vsel %vm1530, %v1637, %v1638
      %v1640 = vrot.slane %v1638, 4
      %v1641 = vrot.slane %v1479, 5
      %v1642 = vsel %vm1530, %v1640, %v1641
      %1675 = vst [vmem:[#allocation3 + $0x8] sm:$0xf] %v1534
      %1676 = vst [vmem:[#allocation3 + $0x2c] sm:$0xf] %v1537
      %1677 = vst [vmem:[#allocation3 + $0x50] sm:$0xf] %v1541
      %1678 = vst [vmem:[#allocation3 + $0x74] sm:$0xf] %v1544
      %1679 = vst [vmem:[#allocation3 + $0x98] sm:$0xf] %v1548
      %1680 = vst [vmem:[#allocation3 + $0xbc] sm:$0xf] %v1551
      %1681 = vst [vmem:[#allocation3 + $0xe0] sm:$0xf] %v1555
      %1682 = vst [vmem:[#allocation3 + $0x104] sm:$0xf] %v1558
      %1683 = vst [vmem:[#allocation3 + $0x128] sm:$0xf] %v1562
      %1684 = vst [vmem:[#allocation3 + $0x14c] sm:$0xf] %v1565
      %1685 = vst [vmem:[#allocation3 + $0x170] sm:$0xf] %v1569
      %1686 = vst [vmem:[#allocation3 + $0x194] sm:$0xf] %v1572
      %1687 = vst [vmem:[#allocation3 + $0x1b8] sm:$0xf] %v1576
      %1688 = vst [vmem:[#allocation3 + $0x1dc] sm:$0xf] %v1579
      %1689 = vst [vmem:[#allocation3 + $0x200] sm:$0xf] %v1583
      %1690 = vst [vmem:[#allocation3 + $0x224] sm:$0xf] %v1586
      %1691 = vst [vmem:[#allocation3 + $0x248] sm:$0xf] %v1590
      %1692 = vst [vmem:[#allocation3 + $0x26c] sm:$0xf] %v1593
      %1693 = vst [vmem:[#allocation3 + $0x290] sm:$0xf] %v1597
      %1694 = vst [vmem:[#allocation3 + $0x2b4] sm:$0xf] %v1600
      %1695 = vst [vmem:[#allocation3 + $0x2d8] sm:$0xf] %v1604
      %1696 = vst [vmem:[#allocation3 + $0x2fc] sm:$0xf] %v1607
      %1697 = vst [vmem:[#allocation3 + $0x320] sm:$0xf] %v1611
      %1698 = vst [vmem:[#allocation3 + $0x344] sm:$0xf] %v1614
      %1699 = vst [vmem:[#allocation3 + $0x368] sm:$0xf] %v1618
      %1700 = vst [vmem:[#allocation3 + $0x38c] sm:$0xf] %v1621
      %1701 = vst [vmem:[#allocation3 + $0x3b0] sm:$0xf] %v1625
      %1702 = vst [vmem:[#allocation3 + $0x3d4] sm:$0xf] %v1628
      %1703 = vst [vmem:[#allocation3 + $0x3f8] sm:$0xf] %v1632
      %1704 = vst [vmem:[#allocation3 + $0x41c] sm:$0xf] %v1635
      %1705 = vst [vmem:[#allocation3 + $0x440] sm:$0xf] %v1639
      %1706 = vst [vmem:[#allocation3 + $0x464] sm:$0xf] %v1642
      %v1707 = vld [vmem:[%s754] sm:$0xf]
      %v1708 = vld [vmem:[%s754 + $0x4] sm:$0xf]
      %v1709 = vld [vmem:[%s754 + $0xc] sm:$0xf]
      %v1710 = vld [vmem:[%s754 + $0x10] sm:$0xf]
      %v1711 = vld [vmem:[%s754 + $0x18] sm:$0xf]
      %v1712 = vld [vmem:[%s754 + $0x1c] sm:$0xf]
      %v1713 = vld [vmem:[%s754 + $0x24] sm:$0xf]
      %v1714 = vld [vmem:[%s754 + $0x28] sm:$0xf]
      %v1715 = vld [vmem:[%s754 + $0x30] sm:$0xf]
      %v1716 = vld [vmem:[%s754 + $0x34] sm:$0xf]
      %v1717 = vld [vmem:[%s754 + $0x3c] sm:$0xf]
      %v1718 = vld [vmem:[%s754 + $0x40] sm:$0xf]
      %v1719 = vld [vmem:[%s754 + $0x48] sm:$0xf]
      %v1720 = vld [vmem:[%s754 + $0x4c] sm:$0xf]
      %v1721 = vld [vmem:[%s754 + $0x54] sm:$0xf]
      %v1722 = vld [vmem:[%s754 + $0x58] sm:$0xf]
      %v1723 = vld [vmem:[%s754 + $0x60] sm:$0xf]
      %v1724 = vld [vmem:[%s754 + $0x64] sm:$0xf]
      %v1725 = vld [vmem:[%s754 + $0x6c] sm:$0xf]
      %v1726 = vld [vmem:[%s754 + $0x70] sm:$0xf]
      %v1727 = vld [vmem:[%s754 + $0x78] sm:$0xf]
      %v1728 = vld [vmem:[%s754 + $0x7c] sm:$0xf]
      %v1729 = vld [vmem:[%s754 + $0x84] sm:$0xf]
      %v1730 = vld [vmem:[%s754 + $0x88] sm:$0xf]
      %v1731 = vld [vmem:[%s754 + $0x90] sm:$0xf]
      %v1732 = vld [vmem:[%s754 + $0x94] sm:$0xf]
      %v1733 = vld [vmem:[%s754 + $0x9c] sm:$0xf]
      %v1734 = vld [vmem:[%s754 + $0xa0] sm:$0xf]
      %v1735 = vld [vmem:[%s754 + $0xa8] sm:$0xf]
      %v1736 = vld [vmem:[%s754 + $0xac] sm:$0xf]
      %v1737 = vld [vmem:[%s754 + $0xb4] sm:$0xf]
      %v1738 = vld [vmem:[%s754 + $0xb8] sm:$0xf]
      %1739 = vst [vmem:[#allocation3 + $0xc] sm:$0xf] %v1707
      %1740 = vst [vmem:[#allocation3 + $0x30] sm:$0xf] %v1708
      %1741 = vst [vmem:[#allocation3 + $0x54] sm:$0xf] %v1709
      %1742 = vst [vmem:[#allocation3 + $0x78] sm:$0xf] %v1710
      %1743 = vst [vmem:[#allocation3 + $0x9c] sm:$0xf] %v1711
      %1744 = vst [vmem:[#allocation3 + $0xc0] sm:$0xf] %v1712
      %1745 = vst [vmem:[#allocation3 + $0xe4] sm:$0xf] %v1713
      %1746 = vst [vmem:[#allocation3 + $0x108] sm:$0xf] %v1714
      %1747 = vst [vmem:[#allocation3 + $0x12c] sm:$0xf] %v1715
      %1748 = vst [vmem:[#allocation3 + $0x150] sm:$0xf] %v1716
      %1749 = vst [vmem:[#allocation3 + $0x174] sm:$0xf] %v1717
      %1750 = vst [vmem:[#allocation3 + $0x198] sm:$0xf] %v1718
      %1751 = vst [vmem:[#allocation3 + $0x1bc] sm:$0xf] %v1719
      %1752 = vst [vmem:[#allocation3 + $0x1e0] sm:$0xf] %v1720
      %1753 = vst [vmem:[#allocation3 + $0x204] sm:$0xf] %v1721
      %1754 = vst [vmem:[#allocation3 + $0x228] sm:$0xf] %v1722
      %1755 = vst [vmem:[#allocation3 + $0x24c] sm:$0xf] %v1723
      %1756 = vst [vmem:[#allocation3 + $0x270] sm:$0xf] %v1724
      %1757 = vst [vmem:[#allocation3 + $0x294] sm:$0xf] %v1725
      %1758 = vst [vmem:[#allocation3 + $0x2b8] sm:$0xf] %v1726
      %1759 = vst [vmem:[#allocation3 + $0x2dc] sm:$0xf] %v1727
      %1760 = vst [vmem:[#allocation3 + $0x300] sm:$0xf] %v1728
      %1761 = vst [vmem:[#allocation3 + $0x324] sm:$0xf] %v1729
      %1762 = vst [vmem:[#allocation3 + $0x348] sm:$0xf] %v1730
      %1763 = vst [vmem:[#allocation3 + $0x36c] sm:$0xf] %v1731
      %1764 = vst [vmem:[#allocation3 + $0x390] sm:$0xf] %v1732
      %1765 = vst [vmem:[#allocation3 + $0x3b4] sm:$0xf] %v1733
      %1766 = vst [vmem:[#allocation3 + $0x3d8] sm:$0xf] %v1734
      %1767 = vst [vmem:[#allocation3 + $0x3fc] sm:$0xf] %v1735
      %1768 = vst [vmem:[#allocation3 + $0x420] sm:$0xf] %v1736
      %1769 = vst [vmem:[#allocation3 + $0x444] sm:$0xf] %v1737
      %1770 = vst [vmem:[#allocation3 + $0x468] sm:$0xf] %v1738
      %v1771 = vld [vmem:[%s754] sm:$0xf]
      %v1772 = vld [vmem:[%s754 + $0x4] sm:$0xf]
      %v1773 = vld [vmem:[%s754 + $0x8] sm:$0x1]
      %v1774 = vld [vmem:[%s754 + $0xc] sm:$0xf]
      %v1775 = vld [vmem:[%s754 + $0x10] sm:$0xf]
      %v1776 = vld [vmem:[%s754 + $0x14] sm:$0x1]
      %v1777 = vld [vmem:[%s754 + $0x18] sm:$0xf]
      %v1778 = vld [vmem:[%s754 + $0x1c] sm:$0xf]
      %v1779 = vld [vmem:[%s754 + $0x20] sm:$0x1]
      %v1780 = vld [vmem:[%s754 + $0x24] sm:$0xf]
      %v1781 = vld [vmem:[%s754 + $0x28] sm:$0xf]
      %v1782 = vld [vmem:[%s754 + $0x2c] sm:$0x1]
      %v1783 = vld [vmem:[%s754 + $0x30] sm:$0xf]
      %v1784 = vld [vmem:[%s754 + $0x34] sm:$0xf]
      %v1785 = vld [vmem:[%s754 + $0x38] sm:$0x1]
      %v1786 = vld [vmem:[%s754 + $0x3c] sm:$0xf]
      %v1787 = vld [vmem:[%s754 + $0x40] sm:$0xf]
      %v1788 = vld [vmem:[%s754 + $0x44] sm:$0x1]
      %v1789 = vld [vmem:[%s754 + $0x48] sm:$0xf]
      %v1790 = vld [vmem:[%s754 + $0x4c] sm:$0xf]
      %v1791 = vld [vmem:[%s754 + $0x50] sm:$0x1]
      %v1792 = vld [vmem:[%s754 + $0x54] sm:$0xf]
      %v1793 = vld [vmem:[%s754 + $0x58] sm:$0xf]
      %v1794 = vld [vmem:[%s754 + $0x5c] sm:$0x1]
      %v1795 = vld [vmem:[%s754 + $0x60] sm:$0xf]
      %v1796 = vld [vmem:[%s754 + $0x64] sm:$0xf]
      %v1797 = vld [vmem:[%s754 + $0x68] sm:$0x1]
      %v1798 = vld [vmem:[%s754 + $0x6c] sm:$0xf]
      %v1799 = vld [vmem:[%s754 + $0x70] sm:$0xf]
      %v1800 = vld [vmem:[%s754 + $0x74] sm:$0x1]
      %v1801 = vld [vmem:[%s754 + $0x78] sm:$0xf]
      %v1802 = vld [vmem:[%s754 + $0x7c] sm:$0xf]
      %v1803 = vld [vmem:[%s754 + $0x80] sm:$0x1]
      %v1804 = vld [vmem:[%s754 + $0x84] sm:$0xf]
      %v1805 = vld [vmem:[%s754 + $0x88] sm:$0xf]
      %v1806 = vld [vmem:[%s754 + $0x8c] sm:$0x1]
      %v1807 = vld [vmem:[%s754 + $0x90] sm:$0xf]
      %v1808 = vld [vmem:[%s754 + $0x94] sm:$0xf]
      %v1809 = vld [vmem:[%s754 + $0x98] sm:$0x1]
      %v1810 = vld [vmem:[%s754 + $0x9c] sm:$0xf]
      %v1811 = vld [vmem:[%s754 + $0xa0] sm:$0xf]
      %v1812 = vld [vmem:[%s754 + $0xa4] sm:$0x1]
      %v1813 = vld [vmem:[%s754 + $0xa8] sm:$0xf]
      %v1814 = vld [vmem:[%s754 + $0xac] sm:$0xf]
      %v1815 = vld [vmem:[%s754 + $0xb0] sm:$0x1]
      %v1816 = vld [vmem:[%s754 + $0xb4] sm:$0xf]
      %v1817 = vld [vmem:[%s754 + $0xb8] sm:$0xf]
      %v1818 = vld [vmem:[%s754 + $0xbc] sm:$0x1]
      %v1820 = vshrl.u32 %v1771, 16
      %v1822 = vrot.slane %v1820, 4
      %v1823 = vshll.u32 %v1771, 16
      %v1825 = vrot.slane %v1823, 5
      %v1826 = vor.u32 %v1822, %v1825
      %v1827 = vrot.slane %v1826, 4
      %v1829 = vshll.u32 %v1772, 16
      %v1831 = vrot.slane %v1829, 5
      %v1832 = vsel %vm983, %v1827, %v1831
      %v1833 = vshrl.u32 %v1772, 16
      %v1835 = vrot.slane %v1833, 4
      %v1836 = vor.u32 %v1835, %v1831
      %v1837 = vrot.slane %v1836, 4
      %v1839 = vshll.u32 %v1773, 16
      %v1841 = vrot.slane %v1839, 5
      %v1842 = vsel %vm983, %v1837, %v1841
      %v1844 = vshrl.u32 %v1774, 16
      %v1846 = vrot.slane %v1844, 4
      %v1847 = vshll.u32 %v1774, 16
      %v1849 = vrot.slane %v1847, 5
      %v1850 = vor.u32 %v1846, %v1849
      %v1851 = vrot.slane %v1850, 4
      %v1853 = vshll.u32 %v1775, 16
      %v1855 = vrot.slane %v1853, 5
      %v1856 = vsel %vm983, %v1851, %v1855
      %v1857 = vshrl.u32 %v1775, 16
      %v1859 = vrot.slane %v1857, 4
      %v1860 = vor.u32 %v1859, %v1855
      %v1861 = vrot.slane %v1860, 4
      %v1863 = vshll.u32 %v1776, 16
      %v1865 = vrot.slane %v1863, 5
      %v1866 = vsel %vm983, %v1861, %v1865
      %v1868 = vshrl.u32 %v1777, 16
      %v1870 = vrot.slane %v1868, 4
      %v1871 = vshll.u32 %v1777, 16
      %v1873 = vrot.slane %v1871, 5
      %v1874 = vor.u32 %v1870, %v1873
      %v1875 = vrot.slane %v1874, 4
      %v1877 = vshll.u32 %v1778, 16
      %v1879 = vrot.slane %v1877, 5
      %v1880 = vsel %vm983, %v1875, %v1879
      %v1881 = vshrl.u32 %v1778, 16
      %v1883 = vrot.slane %v1881, 4
      %v1884 = vor.u32 %v1883, %v1879
      %v1885 = vrot.slane %v1884, 4
      %v1887 = vshll.u32 %v1779, 16
      %v1889 = vrot.slane %v1887, 5
      %v1890 = vsel %vm983, %v1885, %v1889
      %v1892 = vshrl.u32 %v1780, 16
      %v1894 = vrot.slane %v1892, 4
      %v1895 = vshll.u32 %v1780, 16
      %v1897 = vrot.slane %v1895, 5
      %v1898 = vor.u32 %v1894, %v1897
      %v1899 = vrot.slane %v1898, 4
      %v1901 = vshll.u32 %v1781, 16
      %v1903 = vrot.slane %v1901, 5
      %v1904 = vsel %vm983, %v1899, %v1903
      %v1905 = vshrl.u32 %v1781, 16
      %v1907 = vrot.slane %v1905, 4
      %v1908 = vor.u32 %v1907, %v1903
      %v1909 = vrot.slane %v1908, 4
      %v1911 = vshll.u32 %v1782, 16
      %v1913 = vrot.slane %v1911, 5
      %v1914 = vsel %vm983, %v1909, %v1913
      %v1916 = vshrl.u32 %v1783, 16
      %v1918 = vrot.slane %v1916, 4
      %v1919 = vshll.u32 %v1783, 16
      %v1921 = vrot.slane %v1919, 5
      %v1922 = vor.u32 %v1918, %v1921
      %v1923 = vrot.slane %v1922, 4
      %v1925 = vshll.u32 %v1784, 16
      %v1927 = vrot.slane %v1925, 5
      %v1928 = vsel %vm983, %v1923, %v1927
      %v1929 = vshrl.u32 %v1784, 16
      %v1931 = vrot.slane %v1929, 4
      %v1932 = vor.u32 %v1931, %v1927
      %v1933 = vrot.slane %v1932, 4
      %v1935 = vshll.u32 %v1785, 16
      %v1937 = vrot.slane %v1935, 5
      %v1938 = vsel %vm983, %v1933, %v1937
      %v1940 = vshrl.u32 %v1786, 16
      %v1942 = vrot.slane %v1940, 4
      %v1943 = vshll.u32 %v1786, 16
      %v1945 = vrot.slane %v1943, 5
      %v1946 = vor.u32 %v1942, %v1945
      %v1947 = vrot.slane %v1946, 4
      %v1949 = vshll.u32 %v1787, 16
      %v1951 = vrot.slane %v1949, 5
      %v1952 = vsel %vm983, %v1947, %v1951
      %v1953 = vshrl.u32 %v1787, 16
      %v1955 = vrot.slane %v1953, 4
      %v1956 = vor.u32 %v1955, %v1951
      %v1957 = vrot.slane %v1956, 4
      %v1959 = vshll.u32 %v1788, 16
      %v1961 = vrot.slane %v1959, 5
      %v1962 = vsel %vm983, %v1957, %v1961
      %v1964 = vshrl.u32 %v1789, 16
      %v1966 = vrot.slane %v1964, 4
      %v1967 = vshll.u32 %v1789, 16
      %v1969 = vrot.slane %v1967, 5
      %v1970 = vor.u32 %v1966, %v1969
      %v1971 = vrot.slane %v1970, 4
      %v1973 = vshll.u32 %v1790, 16
      %v1975 = vrot.slane %v1973, 5
      %v1976 = vsel %vm983, %v1971, %v1975
      %v1977 = vshrl.u32 %v1790, 16
      %v1979 = vrot.slane %v1977, 4
      %v1980 = vor.u32 %v1979, %v1975
      %v1981 = vrot.slane %v1980, 4
      %v1983 = vshll.u32 %v1791, 16
      %v1985 = vrot.slane %v1983, 5
      %v1986 = vsel %vm983, %v1981, %v1985
      %v1988 = vshrl.u32 %v1792, 16
      %v1990 = vrot.slane %v1988, 4
      %v1991 = vshll.u32 %v1792, 16
      %v1993 = vrot.slane %v1991, 5
      %v1994 = vor.u32 %v1990, %v1993
      %v1995 = vrot.slane %v1994, 4
      %v1997 = vshll.u32 %v1793, 16
      %v1999 = vrot.slane %v1997, 5
      %v2000 = vsel %vm983, %v1995, %v1999
      %v2001 = vshrl.u32 %v1793, 16
      %v2003 = vrot.slane %v2001, 4
      %v2004 = vor.u32 %v2003, %v1999
      %v2005 = vrot.slane %v2004, 4
      %v2007 = vshll.u32 %v1794, 16
      %v2009 = vrot.slane %v2007, 5
      %v2010 = vsel %vm983, %v2005, %v2009
      %v2012 = vshrl.u32 %v1795, 16
      %v2014 = vrot.slane %v2012, 4
      %v2015 = vshll.u32 %v1795, 16
      %v2017 = vrot.slane %v2015, 5
      %v2018 = vor.u32 %v2014, %v2017
      %v2019 = vrot.slane %v2018, 4
      %v2021 = vshll.u32 %v1796, 16
      %v2023 = vrot.slane %v2021, 5
      %v2024 = vsel %vm983, %v2019, %v2023
      %v2025 = vshrl.u32 %v1796, 16
      %v2027 = vrot.slane %v2025, 4
      %v2028 = vor.u32 %v2027, %v2023
      %v2029 = vrot.slane %v2028, 4
      %v2031 = vshll.u32 %v1797, 16
      %v2033 = vrot.slane %v2031, 5
      %v2034 = vsel %vm983, %v2029, %v2033
      %v2036 = vshrl.u32 %v1798, 16
      %v2038 = vrot.slane %v2036, 4
      %v2039 = vshll.u32 %v1798, 16
      %v2041 = vrot.slane %v2039, 5
      %v2042 = vor.u32 %v2038, %v2041
      %v2043 = vrot.slane %v2042, 4
      %v2045 = vshll.u32 %v1799, 16
      %v2047 = vrot.slane %v2045, 5
      %v2048 = vsel %vm983, %v2043, %v2047
      %v2049 = vshrl.u32 %v1799, 16
      %v2051 = vrot.slane %v2049, 4
      %v2052 = vor.u32 %v2051, %v2047
      %v2053 = vrot.slane %v2052, 4
      %v2055 = vshll.u32 %v1800, 16
      %v2057 = vrot.slane %v2055, 5
      %v2058 = vsel %vm983, %v2053, %v2057
      %v2060 = vshrl.u32 %v1801, 16
      %v2062 = vrot.slane %v2060, 4
      %v2063 = vshll.u32 %v1801, 16
      %v2065 = vrot.slane %v2063, 5
      %v2066 = vor.u32 %v2062, %v2065
      %v2067 = vrot.slane %v2066, 4
      %v2069 = vshll.u32 %v1802, 16
      %v2071 = vrot.slane %v2069, 5
      %v2072 = vsel %vm983, %v2067, %v2071
      %v2073 = vshrl.u32 %v1802, 16
      %v2075 = vrot.slane %v2073, 4
      %v2076 = vor.u32 %v2075, %v2071
      %v2077 = vrot.slane %v2076, 4
      %v2079 = vshll.u32 %v1803, 16
      %v2081 = vrot.slane %v2079, 5
      %v2082 = vsel %vm983, %v2077, %v2081
      %v2084 = vshrl.u32 %v1804, 16
      %v2086 = vrot.slane %v2084, 4
      %v2087 = vshll.u32 %v1804, 16
      %v2089 = vrot.slane %v2087, 5
      %v2090 = vor.u32 %v2086, %v2089
      %v2091 = vrot.slane %v2090, 4
      %v2093 = vshll.u32 %v1805, 16
      %v2095 = vrot.slane %v2093, 5
      %v2096 = vsel %vm983, %v2091, %v2095
      %v2097 = vshrl.u32 %v1805, 16
      %v2099 = vrot.slane %v2097, 4
      %v2100 = vor.u32 %v2099, %v2095
      %v2101 = vrot.slane %v2100, 4
      %v2103 = vshll.u32 %v1806, 16
      %v2105 = vrot.slane %v2103, 5
      %v2106 = vsel %vm983, %v2101, %v2105
      %v2108 = vshrl.u32 %v1807, 16
      %v2110 = vrot.slane %v2108, 4
      %v2111 = vshll.u32 %v1807, 16
      %v2113 = vrot.slane %v2111, 5
      %v2114 = vor.u32 %v2110, %v2113
      %v2115 = vrot.slane %v2114, 4
      %v2117 = vshll.u32 %v1808, 16
      %v2119 = vrot.slane %v2117, 5
      %v2120 = vsel %vm983, %v2115, %v2119
      %v2121 = vshrl.u32 %v1808, 16
      %v2123 = vrot.slane %v2121, 4
      %v2124 = vor.u32 %v2123, %v2119
      %v2125 = vrot.slane %v2124, 4
      %v2127 = vshll.u32 %v1809, 16
      %v2129 = vrot.slane %v2127, 5
      %v2130 = vsel %vm983, %v2125, %v2129
      %v2132 = vshrl.u32 %v1810, 16
      %v2134 = vrot.slane %v2132, 4
      %v2135 = vshll.u32 %v1810, 16
      %v2137 = vrot.slane %v2135, 5
      %v2138 = vor.u32 %v2134, %v2137
      %v2139 = vrot.slane %v2138, 4
      %v2141 = vshll.u32 %v1811, 16
      %v2143 = vrot.slane %v2141, 5
      %v2144 = vsel %vm983, %v2139, %v2143
      %v2145 = vshrl.u32 %v1811, 16
      %v2147 = vrot.slane %v2145, 4
      %v2148 = vor.u32 %v2147, %v2143
      %v2149 = vrot.slane %v2148, 4
      %v2151 = vshll.u32 %v1812, 16
      %v2153 = vrot.slane %v2151, 5
      %v2154 = vsel %vm983, %v2149, %v2153
      %v2156 = vshrl.u32 %v1813, 16
      %v2158 = vrot.slane %v2156, 4
      %v2159 = vshll.u32 %v1813, 16
      %v2161 = vrot.slane %v2159, 5
      %v2162 = vor.u32 %v2158, %v2161
      %v2163 = vrot.slane %v2162, 4
      %v2165 = vshll.u32 %v1814, 16
      %v2167 = vrot.slane %v2165, 5
      %v2168 = vsel %vm983, %v2163, %v2167
      %v2169 = vshrl.u32 %v1814, 16
      %v2171 = vrot.slane %v2169, 4
      %v2172 = vor.u32 %v2171, %v2167
      %v2173 = vrot.slane %v2172, 4
      %v2175 = vshll.u32 %v1815, 16
      %v2177 = vrot.slane %v2175, 5
      %v2178 = vsel %vm983, %v2173, %v2177
      %v2180 = vshrl.u32 %v1816, 16
      %v2182 = vrot.slane %v2180, 4
      %v2183 = vshll.u32 %v1816, 16
      %v2185 = vrot.slane %v2183, 5
      %v2186 = vor.u32 %v2182, %v2185
      %v2187 = vrot.slane %v2186, 4
      %v2189 = vshll.u32 %v1817, 16
      %v2191 = vrot.slane %v2189, 5
      %v2192 = vsel %vm983, %v2187, %v2191
      %v2193 = vshrl.u32 %v1817, 16
      %v2195 = vrot.slane %v2193, 4
      %v2196 = vor.u32 %v2195, %v2191
      %v2197 = vrot.slane %v2196, 4
      %v2199 = vshll.u32 %v1818, 16
      %v2201 = vrot.slane %v2199, 5
      %v2202 = vsel %vm983, %v2197, %v2201
      %2235 = vst [vmem:[#allocation3 + $0x10] sm:$0xf] %v1832
      %2236 = vst [vmem:[#allocation3 + $0x34] sm:$0xf] %v1842
      %2237 = vst [vmem:[#allocation3 + $0x58] sm:$0xf] %v1856
      %2238 = vst [vmem:[#allocation3 + $0x7c] sm:$0xf] %v1866
      %2239 = vst [vmem:[#allocation3 + $0xa0] sm:$0xf] %v1880
      %2240 = vst [vmem:[#allocation3 + $0xc4] sm:$0xf] %v1890
      %2241 = vst [vmem:[#allocation3 + $0xe8] sm:$0xf] %v1904
      %2242 = vst [vmem:[#allocation3 + $0x10c] sm:$0xf] %v1914
      %2243 = vst [vmem:[#allocation3 + $0x130] sm:$0xf] %v1928
      %2244 = vst [vmem:[#allocation3 + $0x154] sm:$0xf] %v1938
      %2245 = vst [vmem:[#allocation3 + $0x178] sm:$0xf] %v1952
      %2246 = vst [vmem:[#allocation3 + $0x19c] sm:$0xf] %v1962
      %2247 = vst [vmem:[#allocation3 + $0x1c0] sm:$0xf] %v1976
      %2248 = vst [vmem:[#allocation3 + $0x1e4] sm:$0xf] %v1986
      %2249 = vst [vmem:[#allocation3 + $0x208] sm:$0xf] %v2000
      %2250 = vst [vmem:[#allocation3 + $0x22c] sm:$0xf] %v2010
      %2251 = vst [vmem:[#allocation3 + $0x250] sm:$0xf] %v2024
      %2252 = vst [vmem:[#allocation3 + $0x274] sm:$0xf] %v2034
      %2253 = vst [vmem:[#allocation3 + $0x298] sm:$0xf] %v2048
      %2254 = vst [vmem:[#allocation3 + $0x2bc] sm:$0xf] %v2058
      %2255 = vst [vmem:[#allocation3 + $0x2e0] sm:$0xf] %v2072
      %2256 = vst [vmem:[#allocation3 + $0x304] sm:$0xf] %v2082
      %2257 = vst [vmem:[#allocation3 + $0x328] sm:$0xf] %v2096
      %2258 = vst [vmem:[#allocation3 + $0x34c] sm:$0xf] %v2106
      %2259 = vst [vmem:[#allocation3 + $0x370] sm:$0xf] %v2120
      %2260 = vst [vmem:[#allocation3 + $0x394] sm:$0xf] %v2130
      %2261 = vst [vmem:[#allocation3 + $0x3b8] sm:$0xf] %v2144
      %2262 = vst [vmem:[#allocation3 + $0x3dc] sm:$0xf] %v2154
      %2263 = vst [vmem:[#allocation3 + $0x400] sm:$0xf] %v2168
      %2264 = vst [vmem:[#allocation3 + $0x424] sm:$0xf] %v2178
      %2265 = vst [vmem:[#allocation3 + $0x448] sm:$0xf] %v2192
      %2266 = vst [vmem:[#allocation3 + $0x46c] sm:$0xf] %v2202
      %v2267 = vld [vmem:[%s754] sm:$0xe]
      %v2268 = vld [vmem:[%s754 + $0x4] sm:$0xf]
      %v2269 = vld [vmem:[%s754 + $0x8] sm:$0x1]
      %v2270 = vld [vmem:[%s754 + $0xc] sm:$0xe]
      %v2271 = vld [vmem:[%s754 + $0x10] sm:$0xf]
      %v2272 = vld [vmem:[%s754 + $0x14] sm:$0x1]
      %v2273 = vld [vmem:[%s754 + $0x18] sm:$0xe]
      %v2274 = vld [vmem:[%s754 + $0x1c] sm:$0xf]
      %v2275 = vld [vmem:[%s754 + $0x20] sm:$0x1]
      %v2276 = vld [vmem:[%s754 + $0x24] sm:$0xe]
      %v2277 = vld [vmem:[%s754 + $0x28] sm:$0xf]
      %v2278 = vld [vmem:[%s754 + $0x2c] sm:$0x1]
      %v2279 = vld [vmem:[%s754 + $0x30] sm:$0xe]
      %v2280 = vld [vmem:[%s754 + $0x34] sm:$0xf]
      %v2281 = vld [vmem:[%s754 + $0x38] sm:$0x1]
      %v2282 = vld [vmem:[%s754 + $0x3c] sm:$0xe]
      %v2283 = vld [vmem:[%s754 + $0x40] sm:$0xf]
      %v2284 = vld [vmem:[%s754 + $0x44] sm:$0x1]
      %v2285 = vld [vmem:[%s754 + $0x48] sm:$0xe]
      %v2286 = vld [vmem:[%s754 + $0x4c] sm:$0xf]
      %v2287 = vld [vmem:[%s754 + $0x50] sm:$0x1]
      %v2288 = vld [vmem:[%s754 + $0x54] sm:$0xe]
      %v2289 = vld [vmem:[%s754 + $0x58] sm:$0xf]
      %v2290 = vld [vmem:[%s754 + $0x5c] sm:$0x1]
      %v2291 = vld [vmem:[%s754 + $0x60] sm:$0xe]
      %v2292 = vld [vmem:[%s754 + $0x64] sm:$0xf]
      %v2293 = vld [vmem:[%s754 + $0x68] sm:$0x1]
      %v2294 = vld [vmem:[%s754 + $0x6c] sm:$0xe]
      %v2295 = vld [vmem:[%s754 + $0x70] sm:$0xf]
      %v2296 = vld [vmem:[%s754 + $0x74] sm:$0x1]
      %v2297 = vld [vmem:[%s754 + $0x78] sm:$0xe]
      %v2298 = vld [vmem:[%s754 + $0x7c] sm:$0xf]
      %v2299 = vld [vmem:[%s754 + $0x80] sm:$0x1]
      %v2300 = vld [vmem:[%s754 + $0x84] sm:$0xe]
      %v2301 = vld [vmem:[%s754 + $0x88] sm:$0xf]
      %v2302 = vld [vmem:[%s754 + $0x8c] sm:$0x1]
      %v2303 = vld [vmem:[%s754 + $0x90] sm:$0xe]
      %v2304 = vld [vmem:[%s754 + $0x94] sm:$0xf]
      %v2305 = vld [vmem:[%s754 + $0x98] sm:$0x1]
      %v2306 = vld [vmem:[%s754 + $0x9c] sm:$0xe]
      %v2307 = vld [vmem:[%s754 + $0xa0] sm:$0xf]
      %v2308 = vld [vmem:[%s754 + $0xa4] sm:$0x1]
      %v2309 = vld [vmem:[%s754 + $0xa8] sm:$0xe]
      %v2310 = vld [vmem:[%s754 + $0xac] sm:$0xf]
      %v2311 = vld [vmem:[%s754 + $0xb0] sm:$0x1]
      %v2312 = vld [vmem:[%s754 + $0xb4] sm:$0xe]
      %v2313 = vld [vmem:[%s754 + $0xb8] sm:$0xf]
      %v2314 = vld [vmem:[%s754 + $0xbc] sm:$0x1]
      %v2363 = vrot.slane %v2267, 5
      %v2364 = vrot.slane %v2363, 4
      %v2365 = vrot.slane %v2268, 5
      %v2366 = vsel %vm1530, %v2364, %v2365
      %v2367 = vrot.slane %v2365, 4
      %v2368 = vrot.slane %v2269, 5
      %v2369 = vsel %vm1530, %v2367, %v2368
      %v2370 = vrot.slane %v2270, 5
      %v2371 = vrot.slane %v2370, 4
      %v2372 = vrot.slane %v2271, 5
      %v2373 = vsel %vm1530, %v2371, %v2372
      %v2374 = vrot.slane %v2372, 4
      %v2375 = vrot.slane %v2272, 5
      %v2376 = vsel %vm1530, %v2374, %v2375
      %v2377 = vrot.slane %v2273, 5
      %v2378 = vrot.slane %v2377, 4
      %v2379 = vrot.slane %v2274, 5
      %v2380 = vsel %vm1530, %v2378, %v2379
      %v2381 = vrot.slane %v2379, 4
      %v2382 = vrot.slane %v2275, 5
      %v2383 = vsel %vm1530, %v2381, %v2382
      %v2384 = vrot.slane %v2276, 5
      %v2385 = vrot.slane %v2384, 4
      %v2386 = vrot.slane %v2277, 5
      %v2387 = vsel %vm1530, %v2385, %v2386
      %v2388 = vrot.slane %v2386, 4
      %v2389 = vrot.slane %v2278, 5
      %v2390 = vsel %vm1530, %v2388, %v2389
      %v2391 = vrot.slane %v2279, 5
      %v2392 = vrot.slane %v2391, 4
      %v2393 = vrot.slane %v2280, 5
      %v2394 = vsel %vm1530, %v2392, %v2393
      %v2395 = vrot.slane %v2393, 4
      %v2396 = vrot.slane %v2281, 5
      %v2397 = vsel %vm1530, %v2395, %v2396
      %v2398 = vrot.slane %v2282, 5
      %v2399 = vrot.slane %v2398, 4
      %v2400 = vrot.slane %v2283, 5
      %v2401 = vsel %vm1530, %v2399, %v2400
      %v2402 = vrot.slane %v2400, 4
      %v2403 = vrot.slane %v2284, 5
      %v2404 = vsel %vm1530, %v2402, %v2403
      %v2405 = vrot.slane %v2285, 5
      %v2406 = vrot.slane %v2405, 4
      %v2407 = vrot.slane %v2286, 5
      %v2408 = vsel %vm1530, %v2406, %v2407
      %v2409 = vrot.slane %v2407, 4
      %v2410 = vrot.slane %v2287, 5
      %v2411 = vsel %vm1530, %v2409, %v2410
      %v2412 = vrot.slane %v2288, 5
      %v2413 = vrot.slane %v2412, 4
      %v2414 = vrot.slane %v2289, 5
      %v2415 = vsel %vm1530, %v2413, %v2414
      %v2416 = vrot.slane %v2414, 4
      %v2417 = vrot.slane %v2290, 5
      %v2418 = vsel %vm1530, %v2416, %v2417
      %v2419 = vrot.slane %v2291, 5
      %v2420 = vrot.slane %v2419, 4
      %v2421 = vrot.slane %v2292, 5
      %v2422 = vsel %vm1530, %v2420, %v2421
      %v2423 = vrot.slane %v2421, 4
      %v2424 = vrot.slane %v2293, 5
      %v2425 = vsel %vm1530, %v2423, %v2424
      %v2426 = vrot.slane %v2294, 5
      %v2427 = vrot.slane %v2426, 4
      %v2428 = vrot.slane %v2295, 5
      %v2429 = vsel %vm1530, %v2427, %v2428
      %v2430 = vrot.slane %v2428, 4
      %v2431 = vrot.slane %v2296, 5
      %v2432 = vsel %vm1530, %v2430, %v2431
      %v2433 = vrot.slane %v2297, 5
      %v2434 = vrot.slane %v2433, 4
      %v2435 = vrot.slane %v2298, 5
      %v2436 = vsel %vm1530, %v2434, %v2435
      %v2437 = vrot.slane %v2435, 4
      %v2438 = vrot.slane %v2299, 5
      %v2439 = vsel %vm1530, %v2437, %v2438
      %v2440 = vrot.slane %v2300, 5
      %v2441 = vrot.slane %v2440, 4
      %v2442 = vrot.slane %v2301, 5
      %v2443 = vsel %vm1530, %v2441, %v2442
      %v2444 = vrot.slane %v2442, 4
      %v2445 = vrot.slane %v2302, 5
      %v2446 = vsel %vm1530, %v2444, %v2445
      %v2447 = vrot.slane %v2303, 5
      %v2448 = vrot.slane %v2447, 4
      %v2449 = vrot.slane %v2304, 5
      %v2450 = vsel %vm1530, %v2448, %v2449
      %v2451 = vrot.slane %v2449, 4
      %v2452 = vrot.slane %v2305, 5
      %v2453 = vsel %vm1530, %v2451, %v2452
      %v2454 = vrot.slane %v2306, 5
      %v2455 = vrot.slane %v2454, 4
      %v2456 = vrot.slane %v2307, 5
      %v2457 = vsel %vm1530, %v2455, %v2456
      %v2458 = vrot.slane %v2456, 4
      %v2459 = vrot.slane %v2308, 5
      %v2460 = vsel %vm1530, %v2458, %v2459
      %v2461 = vrot.slane %v2309, 5
      %v2462 = vrot.slane %v2461, 4
      %v2463 = vrot.slane %v2310, 5
      %v2464 = vsel %vm1530, %v2462, %v2463
      %v2465 = vrot.slane %v2463, 4
      %v2466 = vrot.slane %v2311, 5
      %v2467 = vsel %vm1530, %v2465, %v2466
      %v2468 = vrot.slane %v2312, 5
      %v2469 = vrot.slane %v2468, 4
      %v2470 = vrot.slane %v2313, 5
      %v2471 = vsel %vm1530, %v2469, %v2470
      %v2472 = vrot.slane %v2470, 4
      %v2473 = vrot.slane %v2314, 5
      %v2474 = vsel %vm1530, %v2472, %v2473
      %2507 = vst [vmem:[#allocation3 + $0x14] sm:$0xf] %v2366
      %2508 = vst [vmem:[#allocation3 + $0x38] sm:$0xf] %v2369
      %2509 = vst [vmem:[#allocation3 + $0x5c] sm:$0xf] %v2373
      %2510 = vst [vmem:[#allocation3 + $0x80] sm:$0xf] %v2376
      %2511 = vst [vmem:[#allocation3 + $0xa4] sm:$0xf] %v2380
      %2512 = vst [vmem:[#allocation3 + $0xc8] sm:$0xf] %v2383
      %2513 = vst [vmem:[#allocation3 + $0xec] sm:$0xf] %v2387
      %2514 = vst [vmem:[#allocation3 + $0x110] sm:$0xf] %v2390
      %2515 = vst [vmem:[#allocation3 + $0x134] sm:$0xf] %v2394
      %2516 = vst [vmem:[#allocation3 + $0x158] sm:$0xf] %v2397
      %2517 = vst [vmem:[#allocation3 + $0x17c] sm:$0xf] %v2401
      %2518 = vst [vmem:[#allocation3 + $0x1a0] sm:$0xf] %v2404
      %2519 = vst [vmem:[#allocation3 + $0x1c4] sm:$0xf] %v2408
      %2520 = vst [vmem:[#allocation3 + $0x1e8] sm:$0xf] %v2411
      %2521 = vst [vmem:[#allocation3 + $0x20c] sm:$0xf] %v2415
      %2522 = vst [vmem:[#allocation3 + $0x230] sm:$0xf] %v2418
      %2523 = vst [vmem:[#allocation3 + $0x254] sm:$0xf] %v2422
      %2524 = vst [vmem:[#allocation3 + $0x278] sm:$0xf] %v2425
      %2525 = vst [vmem:[#allocation3 + $0x29c] sm:$0xf] %v2429
      %2526 = vst [vmem:[#allocation3 + $0x2c0] sm:$0xf] %v2432
      %2527 = vst [vmem:[#allocation3 + $0x2e4] sm:$0xf] %v2436
      %2528 = vst [vmem:[#allocation3 + $0x308] sm:$0xf] %v2439
      %2529 = vst [vmem:[#allocation3 + $0x32c] sm:$0xf] %v2443
      %2530 = vst [vmem:[#allocation3 + $0x350] sm:$0xf] %v2446
      %2531 = vst [vmem:[#allocation3 + $0x374] sm:$0xf] %v2450
      %2532 = vst [vmem:[#allocation3 + $0x398] sm:$0xf] %v2453
      %2533 = vst [vmem:[#allocation3 + $0x3bc] sm:$0xf] %v2457
      %2534 = vst [vmem:[#allocation3 + $0x3e0] sm:$0xf] %v2460
      %2535 = vst [vmem:[#allocation3 + $0x404] sm:$0xf] %v2464
      %2536 = vst [vmem:[#allocation3 + $0x428] sm:$0xf] %v2467
      %2537 = vst [vmem:[#allocation3 + $0x44c] sm:$0xf] %v2471
      %2538 = vst [vmem:[#allocation3 + $0x470] sm:$0xf] %v2474
      %s2539 = scalar_lea.vmem [#allocation2], 24
      %v2540 = vld [vmem:[%s2539] sm:$0xf]
      %v2541 = vld [vmem:[%s2539 + $0x4] sm:$0xf]
      %v2542 = vld [vmem:[%s2539 + $0xc] sm:$0xf]
      %v2543 = vld [vmem:[%s2539 + $0x10] sm:$0xf]
      %v2544 = vld [vmem:[%s2539 + $0x18] sm:$0xf]
      %v2545 = vld [vmem:[%s2539 + $0x1c] sm:$0xf]
      %v2546 = vld [vmem:[%s2539 + $0x24] sm:$0xf]
      %v2547 = vld [vmem:[%s2539 + $0x28] sm:$0xf]
      %v2548 = vld [vmem:[%s2539 + $0x30] sm:$0xf]
      %v2549 = vld [vmem:[%s2539 + $0x34] sm:$0xf]
      %v2550 = vld [vmem:[%s2539 + $0x3c] sm:$0xf]
      %v2551 = vld [vmem:[%s2539 + $0x40] sm:$0xf]
      %v2552 = vld [vmem:[%s2539 + $0x48] sm:$0xf]
      %v2553 = vld [vmem:[%s2539 + $0x4c] sm:$0xf]
      %v2554 = vld [vmem:[%s2539 + $0x54] sm:$0xf]
      %v2555 = vld [vmem:[%s2539 + $0x58] sm:$0xf]
      %v2556 = vld [vmem:[%s2539 + $0x60] sm:$0xf]
      %v2557 = vld [vmem:[%s2539 + $0x64] sm:$0xf]
      %v2558 = vld [vmem:[%s2539 + $0x6c] sm:$0xf]
      %v2559 = vld [vmem:[%s2539 + $0x70] sm:$0xf]
      %v2560 = vld [vmem:[%s2539 + $0x78] sm:$0xf]
      %v2561 = vld [vmem:[%s2539 + $0x7c] sm:$0xf]
      %v2562 = vld [vmem:[%s2539 + $0x84] sm:$0xf]
      %v2563 = vld [vmem:[%s2539 + $0x88] sm:$0xf]
      %v2564 = vld [vmem:[%s2539 + $0x90] sm:$0xf]
      %v2565 = vld [vmem:[%s2539 + $0x94] sm:$0xf]
      %v2566 = vld [vmem:[%s2539 + $0x9c] sm:$0xf]
      %v2567 = vld [vmem:[%s2539 + $0xa0] sm:$0xf]
      %v2568 = vld [vmem:[%s2539 + $0xa8] sm:$0xf]
      %v2569 = vld [vmem:[%s2539 + $0xac] sm:$0xf]
      %v2570 = vld [vmem:[%s2539 + $0xb4] sm:$0xf]
      %v2571 = vld [vmem:[%s2539 + $0xb8] sm:$0xf]
      %2572 = vst [vmem:[#allocation3 + $0x18] sm:$0xf] %v2540
      %2573 = vst [vmem:[#allocation3 + $0x3c] sm:$0xf] %v2541
      %2574 = vst [vmem:[#allocation3 + $0x60] sm:$0xf] %v2542
      %2575 = vst [vmem:[#allocation3 + $0x84] sm:$0xf] %v2543
      %2576 = vst [vmem:[#allocation3 + $0xa8] sm:$0xf] %v2544
      %2577 = vst [vmem:[#allocation3 + $0xcc] sm:$0xf] %v2545
      %2578 = vst [vmem:[#allocation3 + $0xf0] sm:$0xf] %v2546
      %2579 = vst [vmem:[#allocation3 + $0x114] sm:$0xf] %v2547
      %2580 = vst [vmem:[#allocation3 + $0x138] sm:$0xf] %v2548
      %2581 = vst [vmem:[#allocation3 + $0x15c] sm:$0xf] %v2549
      %2582 = vst [vmem:[#allocation3 + $0x180] sm:$0xf] %v2550
      %2583 = vst [vmem:[#allocation3 + $0x1a4] sm:$0xf] %v2551
      %2584 = vst [vmem:[#allocation3 + $0x1c8] sm:$0xf] %v2552
      %2585 = vst [vmem:[#allocation3 + $0x1ec] sm:$0xf] %v2553
      %2586 = vst [vmem:[#allocation3 + $0x210] sm:$0xf] %v2554
      %2587 = vst [vmem:[#allocation3 + $0x234] sm:$0xf] %v2555
      %2588 = vst [vmem:[#allocation3 + $0x258] sm:$0xf] %v2556
      %2589 = vst [vmem:[#allocation3 + $0x27c] sm:$0xf] %v2557
      %2590 = vst [vmem:[#allocation3 + $0x2a0] sm:$0xf] %v2558
      %2591 = vst [vmem:[#allocation3 + $0x2c4] sm:$0xf] %v2559
      %2592 = vst [vmem:[#allocation3 + $0x2e8] sm:$0xf] %v2560
      %2593 = vst [vmem:[#allocation3 + $0x30c] sm:$0xf] %v2561
      %2594 = vst [vmem:[#allocation3 + $0x330] sm:$0xf] %v2562
      %2595 = vst [vmem:[#allocation3 + $0x354] sm:$0xf] %v2563
      %2596 = vst [vmem:[#allocation3 + $0x378] sm:$0xf] %v2564
      %2597 = vst [vmem:[#allocation3 + $0x39c] sm:$0xf] %v2565
      %2598 = vst [vmem:[#allocation3 + $0x3c0] sm:$0xf] %v2566
      %2599 = vst [vmem:[#allocation3 + $0x3e4] sm:$0xf] %v2567
      %2600 = vst [vmem:[#allocation3 + $0x408] sm:$0xf] %v2568
      %2601 = vst [vmem:[#allocation3 + $0x42c] sm:$0xf] %v2569
      %2602 = vst [vmem:[#allocation3 + $0x450] sm:$0xf] %v2570
      %2603 = vst [vmem:[#allocation3 + $0x474] sm:$0xf] %v2571
      %v2604 = vld [vmem:[%s2539] sm:$0xf]
      %v2605 = vld [vmem:[%s2539 + $0x4] sm:$0xf]
      %v2606 = vld [vmem:[%s2539 + $0x8] sm:$0x1]
      %v2607 = vld [vmem:[%s2539 + $0xc] sm:$0xf]
      %v2608 = vld [vmem:[%s2539 + $0x10] sm:$0xf]
      %v2609 = vld [vmem:[%s2539 + $0x14] sm:$0x1]
      %v2610 = vld [vmem:[%s2539 + $0x18] sm:$0xf]
      %v2611 = vld [vmem:[%s2539 + $0x1c] sm:$0xf]
      %v2612 = vld [vmem:[%s2539 + $0x20] sm:$0x1]
      %v2613 = vld [vmem:[%s2539 + $0x24] sm:$0xf]
      %v2614 = vld [vmem:[%s2539 + $0x28] sm:$0xf]
      %v2615 = vld [vmem:[%s2539 + $0x2c] sm:$0x1]
      %v2616 = vld [vmem:[%s2539 + $0x30] sm:$0xf]
      %v2617 = vld [vmem:[%s2539 + $0x34] sm:$0xf]
      %v2618 = vld [vmem:[%s2539 + $0x38] sm:$0x1]
      %v2619 = vld [vmem:[%s2539 + $0x3c] sm:$0xf]
      %v2620 = vld [vmem:[%s2539 + $0x40] sm:$0xf]
      %v2621 = vld [vmem:[%s2539 + $0x44] sm:$0x1]
      %v2622 = vld [vmem:[%s2539 + $0x48] sm:$0xf]
      %v2623 = vld [vmem:[%s2539 + $0x4c] sm:$0xf]
      %v2624 = vld [vmem:[%s2539 + $0x50] sm:$0x1]
      %v2625 = vld [vmem:[%s2539 + $0x54] sm:$0xf]
      %v2626 = vld [vmem:[%s2539 + $0x58] sm:$0xf]
      %v2627 = vld [vmem:[%s2539 + $0x5c] sm:$0x1]
      %v2628 = vld [vmem:[%s2539 + $0x60] sm:$0xf]
      %v2629 = vld [vmem:[%s2539 + $0x64] sm:$0xf]
      %v2630 = vld [vmem:[%s2539 + $0x68] sm:$0x1]
      %v2631 = vld [vmem:[%s2539 + $0x6c] sm:$0xf]
      %v2632 = vld [vmem:[%s2539 + $0x70] sm:$0xf]
      %v2633 = vld [vmem:[%s2539 + $0x74] sm:$0x1]
      %v2634 = vld [vmem:[%s2539 + $0x78] sm:$0xf]
      %v2635 = vld [vmem:[%s2539 + $0x7c] sm:$0xf]
      %v2636 = vld [vmem:[%s2539 + $0x80] sm:$0x1]
      %v2637 = vld [vmem:[%s2539 + $0x84] sm:$0xf]
      %v2638 = vld [vmem:[%s2539 + $0x88] sm:$0xf]
      %v2639 = vld [vmem:[%s2539 + $0x8c] sm:$0x1]
      %v2640 = vld [vmem:[%s2539 + $0x90] sm:$0xf]
      %v2641 = vld [vmem:[%s2539 + $0x94] sm:$0xf]
      %v2642 = vld [vmem:[%s2539 + $0x98] sm:$0x1]
      %v2643 = vld [vmem:[%s2539 + $0x9c] sm:$0xf]
      %v2644 = vld [vmem:[%s2539 + $0xa0] sm:$0xf]
      %v2645 = vld [vmem:[%s2539 + $0xa4] sm:$0x1]
      %v2646 = vld [vmem:[%s2539 + $0xa8] sm:$0xf]
      %v2647 = vld [vmem:[%s2539 + $0xac] sm:$0xf]
      %v2648 = vld [vmem:[%s2539 + $0xb0] sm:$0x1]
      %v2649 = vld [vmem:[%s2539 + $0xb4] sm:$0xf]
      %v2650 = vld [vmem:[%s2539 + $0xb8] sm:$0xf]
      %v2651 = vld [vmem:[%s2539 + $0xbc] sm:$0x1]
      %v2653 = vshrl.u32 %v2604, 16
      %v2655 = vrot.slane %v2653, 4
      %v2656 = vshll.u32 %v2604, 16
      %v2658 = vrot.slane %v2656, 5
      %v2659 = vor.u32 %v2655, %v2658
      %v2660 = vrot.slane %v2659, 4
      %v2662 = vshll.u32 %v2605, 16
      %v2664 = vrot.slane %v2662, 5
      %v2665 = vsel %vm983, %v2660, %v2664
      %v2666 = vshrl.u32 %v2605, 16
      %v2668 = vrot.slane %v2666, 4
      %v2669 = vor.u32 %v2668, %v2664
      %v2670 = vrot.slane %v2669, 4
      %v2672 = vshll.u32 %v2606, 16
      %v2674 = vrot.slane %v2672, 5
      %v2675 = vsel %vm983, %v2670, %v2674
      %v2677 = vshrl.u32 %v2607, 16
      %v2679 = vrot.slane %v2677, 4
      %v2680 = vshll.u32 %v2607, 16
      %v2682 = vrot.slane %v2680, 5
      %v2683 = vor.u32 %v2679, %v2682
      %v2684 = vrot.slane %v2683, 4
      %v2686 = vshll.u32 %v2608, 16
      %v2688 = vrot.slane %v2686, 5
      %v2689 = vsel %vm983, %v2684, %v2688
      %v2690 = vshrl.u32 %v2608, 16
      %v2692 = vrot.slane %v2690, 4
      %v2693 = vor.u32 %v2692, %v2688
      %v2694 = vrot.slane %v2693, 4
      %v2696 = vshll.u32 %v2609, 16
      %v2698 = vrot.slane %v2696, 5
      %v2699 = vsel %vm983, %v2694, %v2698
      %v2701 = vshrl.u32 %v2610, 16
      %v2703 = vrot.slane %v2701, 4
      %v2704 = vshll.u32 %v2610, 16
      %v2706 = vrot.slane %v2704, 5
      %v2707 = vor.u32 %v2703, %v2706
      %v2708 = vrot.slane %v2707, 4
      %v2710 = vshll.u32 %v2611, 16
      %v2712 = vrot.slane %v2710, 5
      %v2713 = vsel %vm983, %v2708, %v2712
      %v2714 = vshrl.u32 %v2611, 16
      %v2716 = vrot.slane %v2714, 4
      %v2717 = vor.u32 %v2716, %v2712
      %v2718 = vrot.slane %v2717, 4
      %v2720 = vshll.u32 %v2612, 16
      %v2722 = vrot.slane %v2720, 5
      %v2723 = vsel %vm983, %v2718, %v2722
      %v2725 = vshrl.u32 %v2613, 16
      %v2727 = vrot.slane %v2725, 4
      %v2728 = vshll.u32 %v2613, 16
      %v2730 = vrot.slane %v2728, 5
      %v2731 = vor.u32 %v2727, %v2730
      %v2732 = vrot.slane %v2731, 4
      %v2734 = vshll.u32 %v2614, 16
      %v2736 = vrot.slane %v2734, 5
      %v2737 = vsel %vm983, %v2732, %v2736
      %v2738 = vshrl.u32 %v2614, 16
      %v2740 = vrot.slane %v2738, 4
      %v2741 = vor.u32 %v2740, %v2736
      %v2742 = vrot.slane %v2741, 4
      %v2744 = vshll.u32 %v2615, 16
      %v2746 = vrot.slane %v2744, 5
      %v2747 = vsel %vm983, %v2742, %v2746
      %v2749 = vshrl.u32 %v2616, 16
      %v2751 = vrot.slane %v2749, 4
      %v2752 = vshll.u32 %v2616, 16
      %v2754 = vrot.slane %v2752, 5
      %v2755 = vor.u32 %v2751, %v2754
      %v2756 = vrot.slane %v2755, 4
      %v2758 = vshll.u32 %v2617, 16
      %v2760 = vrot.slane %v2758, 5
      %v2761 = vsel %vm983, %v2756, %v2760
      %v2762 = vshrl.u32 %v2617, 16
      %v2764 = vrot.slane %v2762, 4
      %v2765 = vor.u32 %v2764, %v2760
      %v2766 = vrot.slane %v2765, 4
      %v2768 = vshll.u32 %v2618, 16
      %v2770 = vrot.slane %v2768, 5
      %v2771 = vsel %vm983, %v2766, %v2770
      %v2773 = vshrl.u32 %v2619, 16
      %v2775 = vrot.slane %v2773, 4
      %v2776 = vshll.u32 %v2619, 16
      %v2778 = vrot.slane %v2776, 5
      %v2779 = vor.u32 %v2775, %v2778
      %v2780 = vrot.slane %v2779, 4
      %v2782 = vshll.u32 %v2620, 16
      %v2784 = vrot.slane %v2782, 5
      %v2785 = vsel %vm983, %v2780, %v2784
      %v2786 = vshrl.u32 %v2620, 16
      %v2788 = vrot.slane %v2786, 4
      %v2789 = vor.u32 %v2788, %v2784
      %v2790 = vrot.slane %v2789, 4
      %v2792 = vshll.u32 %v2621, 16
      %v2794 = vrot.slane %v2792, 5
      %v2795 = vsel %vm983, %v2790, %v2794
      %v2797 = vshrl.u32 %v2622, 16
      %v2799 = vrot.slane %v2797, 4
      %v2800 = vshll.u32 %v2622, 16
      %v2802 = vrot.slane %v2800, 5
      %v2803 = vor.u32 %v2799, %v2802
      %v2804 = vrot.slane %v2803, 4
      %v2806 = vshll.u32 %v2623, 16
      %v2808 = vrot.slane %v2806, 5
      %v2809 = vsel %vm983, %v2804, %v2808
      %v2810 = vshrl.u32 %v2623, 16
      %v2812 = vrot.slane %v2810, 4
      %v2813 = vor.u32 %v2812, %v2808
      %v2814 = vrot.slane %v2813, 4
      %v2816 = vshll.u32 %v2624, 16
      %v2818 = vrot.slane %v2816, 5
      %v2819 = vsel %vm983, %v2814, %v2818
      %v2821 = vshrl.u32 %v2625, 16
      %v2823 = vrot.slane %v2821, 4
      %v2824 = vshll.u32 %v2625, 16
      %v2826 = vrot.slane %v2824, 5
      %v2827 = vor.u32 %v2823, %v2826
      %v2828 = vrot.slane %v2827, 4
      %v2830 = vshll.u32 %v2626, 16
      %v2832 = vrot.slane %v2830, 5
      %v2833 = vsel %vm983, %v2828, %v2832
      %v2834 = vshrl.u32 %v2626, 16
      %v2836 = vrot.slane %v2834, 4
      %v2837 = vor.u32 %v2836, %v2832
      %v2838 = vrot.slane %v2837, 4
      %v2840 = vshll.u32 %v2627, 16
      %v2842 = vrot.slane %v2840, 5
      %v2843 = vsel %vm983, %v2838, %v2842
      %v2845 = vshrl.u32 %v2628, 16
      %v2847 = vrot.slane %v2845, 4
      %v2848 = vshll.u32 %v2628, 16
      %v2850 = vrot.slane %v2848, 5
      %v2851 = vor.u32 %v2847, %v2850
      %v2852 = vrot.slane %v2851, 4
      %v2854 = vshll.u32 %v2629, 16
      %v2856 = vrot.slane %v2854, 5
      %v2857 = vsel %vm983, %v2852, %v2856
      %v2858 = vshrl.u32 %v2629, 16
      %v2860 = vrot.slane %v2858, 4
      %v2861 = vor.u32 %v2860, %v2856
      %v2862 = vrot.slane %v2861, 4
      %v2864 = vshll.u32 %v2630, 16
      %v2866 = vrot.slane %v2864, 5
      %v2867 = vsel %vm983, %v2862, %v2866
      %v2869 = vshrl.u32 %v2631, 16
      %v2871 = vrot.slane %v2869, 4
      %v2872 = vshll.u32 %v2631, 16
      %v2874 = vrot.slane %v2872, 5
      %v2875 = vor.u32 %v2871, %v2874
      %v2876 = vrot.slane %v2875, 4
      %v2878 = vshll.u32 %v2632, 16
      %v2880 = vrot.slane %v2878, 5
      %v2881 = vsel %vm983, %v2876, %v2880
      %v2882 = vshrl.u32 %v2632, 16
      %v2884 = vrot.slane %v2882, 4
      %v2885 = vor.u32 %v2884, %v2880
      %v2886 = vrot.slane %v2885, 4
      %v2888 = vshll.u32 %v2633, 16
      %v2890 = vrot.slane %v2888, 5
      %v2891 = vsel %vm983, %v2886, %v2890
      %v2893 = vshrl.u32 %v2634, 16
      %v2895 = vrot.slane %v2893, 4
      %v2896 = vshll.u32 %v2634, 16
      %v2898 = vrot.slane %v2896, 5
      %v2899 = vor.u32 %v2895, %v2898
      %v2900 = vrot.slane %v2899, 4
      %v2902 = vshll.u32 %v2635, 16
      %v2904 = vrot.slane %v2902, 5
      %v2905 = vsel %vm983, %v2900, %v2904
      %v2906 = vshrl.u32 %v2635, 16
      %v2908 = vrot.slane %v2906, 4
      %v2909 = vor.u32 %v2908, %v2904
      %v2910 = vrot.slane %v2909, 4
      %v2912 = vshll.u32 %v2636, 16
      %v2914 = vrot.slane %v2912, 5
      %v2915 = vsel %vm983, %v2910, %v2914
      %v2917 = vshrl.u32 %v2637, 16
      %v2919 = vrot.slane %v2917, 4
      %v2920 = vshll.u32 %v2637, 16
      %v2922 = vrot.slane %v2920, 5
      %v2923 = vor.u32 %v2919, %v2922
      %v2924 = vrot.slane %v2923, 4
      %v2926 = vshll.u32 %v2638, 16
      %v2928 = vrot.slane %v2926, 5
      %v2929 = vsel %vm983, %v2924, %v2928
      %v2930 = vshrl.u32 %v2638, 16
      %v2932 = vrot.slane %v2930, 4
      %v2933 = vor.u32 %v2932, %v2928
      %v2934 = vrot.slane %v2933, 4
      %v2936 = vshll.u32 %v2639, 16
      %v2938 = vrot.slane %v2936, 5
      %v2939 = vsel %vm983, %v2934, %v2938
      %v2941 = vshrl.u32 %v2640, 16
      %v2943 = vrot.slane %v2941, 4
      %v2944 = vshll.u32 %v2640, 16
      %v2946 = vrot.slane %v2944, 5
      %v2947 = vor.u32 %v2943, %v2946
      %v2948 = vrot.slane %v2947, 4
      %v2950 = vshll.u32 %v2641, 16
      %v2952 = vrot.slane %v2950, 5
      %v2953 = vsel %vm983, %v2948, %v2952
      %v2954 = vshrl.u32 %v2641, 16
      %v2956 = vrot.slane %v2954, 4
      %v2957 = vor.u32 %v2956, %v2952
      %v2958 = vrot.slane %v2957, 4
      %v2960 = vshll.u32 %v2642, 16
      %v2962 = vrot.slane %v2960, 5
      %v2963 = vsel %vm983, %v2958, %v2962
      %v2965 = vshrl.u32 %v2643, 16
      %v2967 = vrot.slane %v2965, 4
      %v2968 = vshll.u32 %v2643, 16
      %v2970 = vrot.slane %v2968, 5
      %v2971 = vor.u32 %v2967, %v2970
      %v2972 = vrot.slane %v2971, 4
      %v2974 = vshll.u32 %v2644, 16
      %v2976 = vrot.slane %v2974, 5
      %v2977 = vsel %vm983, %v2972, %v2976
      %v2978 = vshrl.u32 %v2644, 16
      %v2980 = vrot.slane %v2978, 4
      %v2981 = vor.u32 %v2980, %v2976
      %v2982 = vrot.slane %v2981, 4
      %v2984 = vshll.u32 %v2645, 16
      %v2986 = vrot.slane %v2984, 5
      %v2987 = vsel %vm983, %v2982, %v2986
      %v2989 = vshrl.u32 %v2646, 16
      %v2991 = vrot.slane %v2989, 4
      %v2992 = vshll.u32 %v2646, 16
      %v2994 = vrot.slane %v2992, 5
      %v2995 = vor.u32 %v2991, %v2994
      %v2996 = vrot.slane %v2995, 4
      %v2998 = vshll.u32 %v2647, 16
      %v3000 = vrot.slane %v2998, 5
      %v3001 = vsel %vm983, %v2996, %v3000
      %v3002 = vshrl.u32 %v2647, 16
      %v3004 = vrot.slane %v3002, 4
      %v3005 = vor.u32 %v3004, %v3000
      %v3006 = vrot.slane %v3005, 4
      %v3008 = vshll.u32 %v2648, 16
      %v3010 = vrot.slane %v3008, 5
      %v3011 = vsel %vm983, %v3006, %v3010
      %v3013 = vshrl.u32 %v2649, 16
      %v3015 = vrot.slane %v3013, 4
      %v3016 = vshll.u32 %v2649, 16
      %v3018 = vrot.slane %v3016, 5
      %v3019 = vor.u32 %v3015, %v3018
      %v3020 = vrot.slane %v3019, 4
      %v3022 = vshll.u32 %v2650, 16
      %v3024 = vrot.slane %v3022, 5
      %v3025 = vsel %vm983, %v3020, %v3024
      %v3026 = vshrl.u32 %v2650, 16
      %v3028 = vrot.slane %v3026, 4
      %v3029 = vor.u32 %v3028, %v3024
      %v3030 = vrot.slane %v3029, 4
      %v3032 = vshll.u32 %v2651, 16
      %v3034 = vrot.slane %v3032, 5
      %v3035 = vsel %vm983, %v3030, %v3034
      %3068 = vst [vmem:[#allocation3 + $0x1c] sm:$0xf] %v2665
      %3069 = vst [vmem:[#allocation3 + $0x40] sm:$0xf] %v2675
      %3070 = vst [vmem:[#allocation3 + $0x64] sm:$0xf] %v2689
      %3071 = vst [vmem:[#allocation3 + $0x88] sm:$0xf] %v2699
      %3072 = vst [vmem:[#allocation3 + $0xac] sm:$0xf] %v2713
      %3073 = vst [vmem:[#allocation3 + $0xd0] sm:$0xf] %v2723
      %3074 = vst [vmem:[#allocation3 + $0xf4] sm:$0xf] %v2737
      %3075 = vst [vmem:[#allocation3 + $0x118] sm:$0xf] %v2747
      %3076 = vst [vmem:[#allocation3 + $0x13c] sm:$0xf] %v2761
      %3077 = vst [vmem:[#allocation3 + $0x160] sm:$0xf] %v2771
      %3078 = vst [vmem:[#allocation3 + $0x184] sm:$0xf] %v2785
      %3079 = vst [vmem:[#allocation3 + $0x1a8] sm:$0xf] %v2795
      %3080 = vst [vmem:[#allocation3 + $0x1cc] sm:$0xf] %v2809
      %3081 = vst [vmem:[#allocation3 + $0x1f0] sm:$0xf] %v2819
      %3082 = vst [vmem:[#allocation3 + $0x214] sm:$0xf] %v2833
      %3083 = vst [vmem:[#allocation3 + $0x238] sm:$0xf] %v2843
      %3084 = vst [vmem:[#allocation3 + $0x25c] sm:$0xf] %v2857
      %3085 = vst [vmem:[#allocation3 + $0x280] sm:$0xf] %v2867
      %3086 = vst [vmem:[#allocation3 + $0x2a4] sm:$0xf] %v2881
      %3087 = vst [vmem:[#allocation3 + $0x2c8] sm:$0xf] %v2891
      %3088 = vst [vmem:[#allocation3 + $0x2ec] sm:$0xf] %v2905
      %3089 = vst [vmem:[#allocation3 + $0x310] sm:$0xf] %v2915
      %3090 = vst [vmem:[#allocation3 + $0x334] sm:$0xf] %v2929
      %3091 = vst [vmem:[#allocation3 + $0x358] sm:$0xf] %v2939
      %3092 = vst [vmem:[#allocation3 + $0x37c] sm:$0xf] %v2953
      %3093 = vst [vmem:[#allocation3 + $0x3a0] sm:$0xf] %v2963
      %3094 = vst [vmem:[#allocation3 + $0x3c4] sm:$0xf] %v2977
      %3095 = vst [vmem:[#allocation3 + $0x3e8] sm:$0xf] %v2987
      %3096 = vst [vmem:[#allocation3 + $0x40c] sm:$0xf] %v3001
      %3097 = vst [vmem:[#allocation3 + $0x430] sm:$0xf] %v3011
      %3098 = vst [vmem:[#allocation3 + $0x454] sm:$0xf] %v3025
      %3099 = vst [vmem:[#allocation3 + $0x478] sm:$0xf] %v3035
      %v3100 = vld [vmem:[%s2539] sm:$0xe]
      %v3101 = vld [vmem:[%s2539 + $0x4] sm:$0xf]
      %v3102 = vld [vmem:[%s2539 + $0x8] sm:$0x1]
      %v3103 = vld [vmem:[%s2539 + $0xc] sm:$0xe]
      %v3104 = vld [vmem:[%s2539 + $0x10] sm:$0xf]
      %v3105 = vld [vmem:[%s2539 + $0x14] sm:$0x1]
      %v3106 = vld [vmem:[%s2539 + $0x18] sm:$0xe]
      %v3107 = vld [vmem:[%s2539 + $0x1c] sm:$0xf]
      %v3108 = vld [vmem:[%s2539 + $0x20] sm:$0x1]
      %v3109 = vld [vmem:[%s2539 + $0x24] sm:$0xe]
      %v3110 = vld [vmem:[%s2539 + $0x28] sm:$0xf]
      %v3111 = vld [vmem:[%s2539 + $0x2c] sm:$0x1]
      %v3112 = vld [vmem:[%s2539 + $0x30] sm:$0xe]
      %v3113 = vld [vmem:[%s2539 + $0x34] sm:$0xf]
      %v3114 = vld [vmem:[%s2539 + $0x38] sm:$0x1]
      %v3115 = vld [vmem:[%s2539 + $0x3c] sm:$0xe]
      %v3116 = vld [vmem:[%s2539 + $0x40] sm:$0xf]
      %v3117 = vld [vmem:[%s2539 + $0x44] sm:$0x1]
      %v3118 = vld [vmem:[%s2539 + $0x48] sm:$0xe]
      %v3119 = vld [vmem:[%s2539 + $0x4c] sm:$0xf]
      %v3120 = vld [vmem:[%s2539 + $0x50] sm:$0x1]
      %v3121 = vld [vmem:[%s2539 + $0x54] sm:$0xe]
      %v3122 = vld [vmem:[%s2539 + $0x58] sm:$0xf]
      %v3123 = vld [vmem:[%s2539 + $0x5c] sm:$0x1]
      %v3124 = vld [vmem:[%s2539 + $0x60] sm:$0xe]
      %v3125 = vld [vmem:[%s2539 + $0x64] sm:$0xf]
      %v3126 = vld [vmem:[%s2539 + $0x68] sm:$0x1]
      %v3127 = vld [vmem:[%s2539 + $0x6c] sm:$0xe]
      %v3128 = vld [vmem:[%s2539 + $0x70] sm:$0xf]
      %v3129 = vld [vmem:[%s2539 + $0x74] sm:$0x1]
      %v3130 = vld [vmem:[%s2539 + $0x78] sm:$0xe]
      %v3131 = vld [vmem:[%s2539 + $0x7c] sm:$0xf]
      %v3132 = vld [vmem:[%s2539 + $0x80] sm:$0x1]
      %v3133 = vld [vmem:[%s2539 + $0x84] sm:$0xe]
      %v3134 = vld [vmem:[%s2539 + $0x88] sm:$0xf]
      %v3135 = vld [vmem:[%s2539 + $0x8c] sm:$0x1]
      %v3136 = vld [vmem:[%s2539 + $0x90] sm:$0xe]
      %v3137 = vld [vmem:[%s2539 + $0x94] sm:$0xf]
      %v3138 = vld [vmem:[%s2539 + $0x98] sm:$0x1]
      %v3139 = vld [vmem:[%s2539 + $0x9c] sm:$0xe]
      %v3140 = vld [vmem:[%s2539 + $0xa0] sm:$0xf]
      %v3141 = vld [vmem:[%s2539 + $0xa4] sm:$0x1]
      %v3142 = vld [vmem:[%s2539 + $0xa8] sm:$0xe]
      %v3143 = vld [vmem:[%s2539 + $0xac] sm:$0xf]
      %v3144 = vld [vmem:[%s2539 + $0xb0] sm:$0x1]
      %v3145 = vld [vmem:[%s2539 + $0xb4] sm:$0xe]
      %v3146 = vld [vmem:[%s2539 + $0xb8] sm:$0xf]
      %v3147 = vld [vmem:[%s2539 + $0xbc] sm:$0x1]
      %v3196 = vrot.slane %v3100, 5
      %v3197 = vrot.slane %v3196, 4
      %v3198 = vrot.slane %v3101, 5
      %v3199 = vsel %vm1530, %v3197, %v3198
      %v3200 = vrot.slane %v3198, 4
      %v3201 = vrot.slane %v3102, 5
      %v3202 = vsel %vm1530, %v3200, %v3201
      %v3203 = vrot.slane %v3103, 5
      %v3204 = vrot.slane %v3203, 4
      %v3205 = vrot.slane %v3104, 5
      %v3206 = vsel %vm1530, %v3204, %v3205
      %v3207 = vrot.slane %v3205, 4
      %v3208 = vrot.slane %v3105, 5
      %v3209 = vsel %vm1530, %v3207, %v3208
      %v3210 = vrot.slane %v3106, 5
      %v3211 = vrot.slane %v3210, 4
      %v3212 = vrot.slane %v3107, 5
      %v3213 = vsel %vm1530, %v3211, %v3212
      %v3214 = vrot.slane %v3212, 4
      %v3215 = vrot.slane %v3108, 5
      %v3216 = vsel %vm1530, %v3214, %v3215
      %v3217 = vrot.slane %v3109, 5
      %v3218 = vrot.slane %v3217, 4
      %v3219 = vrot.slane %v3110, 5
      %v3220 = vsel %vm1530, %v3218, %v3219
      %v3221 = vrot.slane %v3219, 4
      %v3222 = vrot.slane %v3111, 5
      %v3223 = vsel %vm1530, %v3221, %v3222
      %v3224 = vrot.slane %v3112, 5
      %v3225 = vrot.slane %v3224, 4
      %v3226 = vrot.slane %v3113, 5
      %v3227 = vsel %vm1530, %v3225, %v3226
      %v3228 = vrot.slane %v3226, 4
      %v3229 = vrot.slane %v3114, 5
      %v3230 = vsel %vm1530, %v3228, %v3229
      %v3231 = vrot.slane %v3115, 5
      %v3232 = vrot.slane %v3231, 4
      %v3233 = vrot.slane %v3116, 5
      %v3234 = vsel %vm1530, %v3232, %v3233
      %v3235 = vrot.slane %v3233, 4
      %v3236 = vrot.slane %v3117, 5
      %v3237 = vsel %vm1530, %v3235, %v3236
      %v3238 = vrot.slane %v3118, 5
      %v3239 = vrot.slane %v3238, 4
      %v3240 = vrot.slane %v3119, 5
      %v3241 = vsel %vm1530, %v3239, %v3240
      %v3242 = vrot.slane %v3240, 4
      %v3243 = vrot.slane %v3120, 5
      %v3244 = vsel %vm1530, %v3242, %v3243
      %v3245 = vrot.slane %v3121, 5
      %v3246 = vrot.slane %v3245, 4
      %v3247 = vrot.slane %v3122, 5
      %v3248 = vsel %vm1530, %v3246, %v3247
      %v3249 = vrot.slane %v3247, 4
      %v3250 = vrot.slane %v3123, 5
      %v3251 = vsel %vm1530, %v3249, %v3250
      %v3252 = vrot.slane %v3124, 5
      %v3253 = vrot.slane %v3252, 4
      %v3254 = vrot.slane %v3125, 5
      %v3255 = vsel %vm1530, %v3253, %v3254
      %v3256 = vrot.slane %v3254, 4
      %v3257 = vrot.slane %v3126, 5
      %v3258 = vsel %vm1530, %v3256, %v3257
      %v3259 = vrot.slane %v3127, 5
      %v3260 = vrot.slane %v3259, 4
      %v3261 = vrot.slane %v3128, 5
      %v3262 = vsel %vm1530, %v3260, %v3261
      %v3263 = vrot.slane %v3261, 4
      %v3264 = vrot.slane %v3129, 5
      %v3265 = vsel %vm1530, %v3263, %v3264
      %v3266 = vrot.slane %v3130, 5
      %v3267 = vrot.slane %v3266, 4
      %v3268 = vrot.slane %v3131, 5
      %v3269 = vsel %vm1530, %v3267, %v3268
      %v3270 = vrot.slane %v3268, 4
      %v3271 = vrot.slane %v3132, 5
      %v3272 = vsel %vm1530, %v3270, %v3271
      %v3273 = vrot.slane %v3133, 5
      %v3274 = vrot.slane %v3273, 4
      %v3275 = vrot.slane %v3134, 5
      %v3276 = vsel %vm1530, %v3274, %v3275
      %v3277 = vrot.slane %v3275, 4
      %v3278 = vrot.slane %v3135, 5
      %v3279 = vsel %vm1530, %v3277, %v3278
      %v3280 = vrot.slane %v3136, 5
      %v3281 = vrot.slane %v3280, 4
      %v3282 = vrot.slane %v3137, 5
      %v3283 = vsel %vm1530, %v3281, %v3282
      %v3284 = vrot.slane %v3282, 4
      %v3285 = vrot.slane %v3138, 5
      %v3286 = vsel %vm1530, %v3284, %v3285
      %v3287 = vrot.slane %v3139, 5
      %v3288 = vrot.slane %v3287, 4
      %v3289 = vrot.slane %v3140, 5
      %v3290 = vsel %vm1530, %v3288, %v3289
      %v3291 = vrot.slane %v3289, 4
      %v3292 = vrot.slane %v3141, 5
      %v3293 = vsel %vm1530, %v3291, %v3292
      %v3294 = vrot.slane %v3142, 5
      %v3295 = vrot.slane %v3294, 4
      %v3296 = vrot.slane %v3143, 5
      %v3297 = vsel %vm1530, %v3295, %v3296
      %v3298 = vrot.slane %v3296, 4
      %v3299 = vrot.slane %v3144, 5
      %v3300 = vsel %vm1530, %v3298, %v3299
      %v3301 = vrot.slane %v3145, 5
      %v3302 = vrot.slane %v3301, 4
      %v3303 = vrot.slane %v3146, 5
      %v3304 = vsel %vm1530, %v3302, %v3303
      %v3305 = vrot.slane %v3303, 4
      %v3306 = vrot.slane %v3147, 5
      %v3307 = vsel %vm1530, %v3305, %v3306
      %3340 = vst [vmem:[#allocation3 + $0x20] sm:$0xf] %v3199
      %3341 = vst [vmem:[#allocation3 + $0x44] sm:$0xf] %v3202
      %3342 = vst [vmem:[#allocation3 + $0x68] sm:$0xf] %v3206
      %3343 = vst [vmem:[#allocation3 + $0x8c] sm:$0xf] %v3209
      %3344 = vst [vmem:[#allocation3 + $0xb0] sm:$0xf] %v3213
      %3345 = vst [vmem:[#allocation3 + $0xd4] sm:$0xf] %v3216
      %3346 = vst [vmem:[#allocation3 + $0xf8] sm:$0xf] %v3220
      %3347 = vst [vmem:[#allocation3 + $0x11c] sm:$0xf] %v3223
      %3348 = vst [vmem:[#allocation3 + $0x140] sm:$0xf] %v3227
      %3349 = vst [vmem:[#allocation3 + $0x164] sm:$0xf] %v3230
      %3350 = vst [vmem:[#allocation3 + $0x188] sm:$0xf] %v3234
      %3351 = vst [vmem:[#allocation3 + $0x1ac] sm:$0xf] %v3237
      %3352 = vst [vmem:[#allocation3 + $0x1d0] sm:$0xf] %v3241
      %3353 = vst [vmem:[#allocation3 + $0x1f4] sm:$0xf] %v3244
      %3354 = vst [vmem:[#allocation3 + $0x218] sm:$0xf] %v3248
      %3355 = vst [vmem:[#allocation3 + $0x23c] sm:$0xf] %v3251
      %3356 = vst [vmem:[#allocation3 + $0x260] sm:$0xf] %v3255
      %3357 = vst [vmem:[#allocation3 + $0x284] sm:$0xf] %v3258
      %3358 = vst [vmem:[#allocation3 + $0x2a8] sm:$0xf] %v3262
      %3359 = vst [vmem:[#allocation3 + $0x2cc] sm:$0xf] %v3265
      %3360 = vst [vmem:[#allocation3 + $0x2f0] sm:$0xf] %v3269
      %3361 = vst [vmem:[#allocation3 + $0x314] sm:$0xf] %v3272
      %3362 = vst [vmem:[#allocation3 + $0x338] sm:$0xf] %v3276
      %3363 = vst [vmem:[#allocation3 + $0x35c] sm:$0xf] %v3279
      %3364 = vst [vmem:[#allocation3 + $0x380] sm:$0xf] %v3283
      %3365 = vst [vmem:[#allocation3 + $0x3a4] sm:$0xf] %v3286
      %3366 = vst [vmem:[#allocation3 + $0x3c8] sm:$0xf] %v3290
      %3367 = vst [vmem:[#allocation3 + $0x3ec] sm:$0xf] %v3293
      %3368 = vst [vmem:[#allocation3 + $0x410] sm:$0xf] %v3297
      %3369 = vst [vmem:[#allocation3 + $0x434] sm:$0xf] %v3300
      %3370 = vst [vmem:[#allocation3 + $0x458] sm:$0xf] %v3304
      %3371 = vst [vmem:[#allocation3 + $0x47c] sm:$0xf] %v3307
      %v3372 = vld [vmem:[#allocation3] sm:$0xff]
      %v3373 = vld [vmem:[#allocation3 + $0x8] sm:$0xff]
      %v3374 = vld [vmem:[#allocation3 + $0x10] sm:$0xff]
      %v3375 = vld [vmem:[#allocation3 + $0x18] sm:$0xff]
      %v3376 = vld [vmem:[#allocation3 + $0x20] sm:$0xf]
      %v3377 = vld [vmem:[#allocation3 + $0x24] sm:$0xff]
      %v3378 = vld [vmem:[#allocation3 + $0x2c] sm:$0xff]
      %v3379 = vld [vmem:[#allocation3 + $0x34] sm:$0xff]
      %v3380 = vld [vmem:[#allocation3 + $0x3c] sm:$0xff]
      %v3381 = vld [vmem:[#allocation3 + $0x44] sm:$0xf]
      %v3382 = vld [vmem:[#allocation3 + $0x48] sm:$0xff]
      %v3383 = vld [vmem:[#allocation3 + $0x50] sm:$0xff]
      %v3384 = vld [vmem:[#allocation3 + $0x58] sm:$0xff]
      %v3385 = vld [vmem:[#allocation3 + $0x60] sm:$0xff]
      %v3386 = vld [vmem:[#allocation3 + $0x68] sm:$0xf]
      %v3387 = vld [vmem:[#allocation3 + $0x6c] sm:$0xff]
      %v3388 = vld [vmem:[#allocation3 + $0x74] sm:$0xff]
      %v3389 = vld [vmem:[#allocation3 + $0x7c] sm:$0xff]
      %v3390 = vld [vmem:[#allocation3 + $0x84] sm:$0xff]
      %v3391 = vld [vmem:[#allocation3 + $0x8c] sm:$0xf]
      %v3392 = vld [vmem:[#allocation3 + $0x90] sm:$0xff]
      %v3393 = vld [vmem:[#allocation3 + $0x98] sm:$0xff]
      %v3394 = vld [vmem:[#allocation3 + $0xa0] sm:$0xff]
      %v3395 = vld [vmem:[#allocation3 + $0xa8] sm:$0xff]
      %v3396 = vld [vmem:[#allocation3 + $0xb0] sm:$0xf]
      %v3397 = vld [vmem:[#allocation3 + $0xb4] sm:$0xff]
      %v3398 = vld [vmem:[#allocation3 + $0xbc] sm:$0xff]
      %v3399 = vld [vmem:[#allocation3 + $0xc4] sm:$0xff]
      %v3400 = vld [vmem:[#allocation3 + $0xcc] sm:$0xff]
      %v3401 = vld [vmem:[#allocation3 + $0xd4] sm:$0xf]
      %v3402 = vld [vmem:[#allocation3 + $0xd8] sm:$0xff]
      %v3403 = vld [vmem:[#allocation3 + $0xe0] sm:$0xff]
      %v3404 = vld [vmem:[#allocation3 + $0xe8] sm:$0xff]
      %v3405 = vld [vmem:[#allocation3 + $0xf0] sm:$0xff]
      %v3406 = vld [vmem:[#allocation3 + $0xf8] sm:$0xf]
      %v3407 = vld [vmem:[#allocation3 + $0xfc] sm:$0xff]
      %v3408 = vld [vmem:[#allocation3 + $0x104] sm:$0xff]
      %v3409 = vld [vmem:[#allocation3 + $0x10c] sm:$0xff]
      %v3410 = vld [vmem:[#allocation3 + $0x114] sm:$0xff]
      %v3411 = vld [vmem:[#allocation3 + $0x11c] sm:$0xf]
      %v3412 = vld [vmem:[#allocation3 + $0x120] sm:$0xff]
      %v3413 = vld [vmem:[#allocation3 + $0x128] sm:$0xff]
      %v3414 = vld [vmem:[#allocation3 + $0x130] sm:$0xff]
      %v3415 = vld [vmem:[#allocation3 + $0x138] sm:$0xff]
      %v3416 = vld [vmem:[#allocation3 + $0x140] sm:$0xf]
      %v3417 = vld [vmem:[#allocation3 + $0x144] sm:$0xff]
      %v3418 = vld [vmem:[#allocation3 + $0x14c] sm:$0xff]
      %v3419 = vld [vmem:[#allocation3 + $0x154] sm:$0xff]
      %v3420 = vld [vmem:[#allocation3 + $0x15c] sm:$0xff]
      %v3421 = vld [vmem:[#allocation3 + $0x164] sm:$0xf]
      %v3422 = vld [vmem:[#allocation3 + $0x168] sm:$0xff]
      %v3423 = vld [vmem:[#allocation3 + $0x170] sm:$0xff]
      %v3424 = vld [vmem:[#allocation3 + $0x178] sm:$0xff]
      %v3425 = vld [vmem:[#allocation3 + $0x180] sm:$0xff]
      %v3426 = vld [vmem:[#allocation3 + $0x188] sm:$0xf]
      %v3427 = vld [vmem:[#allocation3 + $0x18c] sm:$0xff]
      %v3428 = vld [vmem:[#allocation3 + $0x194] sm:$0xff]
      %v3429 = vld [vmem:[#allocation3 + $0x19c] sm:$0xff]
      %v3430 = vld [vmem:[#allocation3 + $0x1a4] sm:$0xff]
      %v3431 = vld [vmem:[#allocation3 + $0x1ac] sm:$0xf]
      %v3432 = vld [vmem:[#allocation3 + $0x1b0] sm:$0xff]
      %v3433 = vld [vmem:[#allocation3 + $0x1b8] sm:$0xff]
      %v3434 = vld [vmem:[#allocation3 + $0x1c0] sm:$0xff]
      %v3435 = vld [vmem:[#allocation3 + $0x1c8] sm:$0xff]
      %v3436 = vld [vmem:[#allocation3 + $0x1d0] sm:$0xf]
      %v3437 = vld [vmem:[#allocation3 + $0x1d4] sm:$0xff]
      %v3438 = vld [vmem:[#allocation3 + $0x1dc] sm:$0xff]
      %v3439 = vld [vmem:[#allocation3 + $0x1e4] sm:$0xff]
      %v3440 = vld [vmem:[#allocation3 + $0x1ec] sm:$0xff]
      %v3441 = vld [vmem:[#allocation3 + $0x1f4] sm:$0xf]
      %v3442 = vld [vmem:[#allocation3 + $0x1f8] sm:$0xff]
      %v3443 = vld [vmem:[#allocation3 + $0x200] sm:$0xff]
      %v3444 = vld [vmem:[#allocation3 + $0x208] sm:$0xff]
      %v3445 = vld [vmem:[#allocation3 + $0x210] sm:$0xff]
      %v3446 = vld [vmem:[#allocation3 + $0x218] sm:$0xf]
      %v3447 = vld [vmem:[#allocation3 + $0x21c] sm:$0xff]
      %v3448 = vld [vmem:[#allocation3 + $0x224] sm:$0xff]
      %v3449 = vld [vmem:[#allocation3 + $0x22c] sm:$0xff]
      %v3450 = vld [vmem:[#allocation3 + $0x234] sm:$0xff]
      %v3451 = vld [vmem:[#allocation3 + $0x23c] sm:$0xf]
      %v3452 = vld [vmem:[#allocation3 + $0x240] sm:$0xff]
      %v3453 = vld [vmem:[#allocation3 + $0x248] sm:$0xff]
      %v3454 = vld [vmem:[#allocation3 + $0x250] sm:$0xff]
      %v3455 = vld [vmem:[#allocation3 + $0x258] sm:$0xff]
      %v3456 = vld [vmem:[#allocation3 + $0x260] sm:$0xf]
      %v3457 = vld [vmem:[#allocation3 + $0x264] sm:$0xff]
      %v3458 = vld [vmem:[#allocation3 + $0x26c] sm:$0xff]
      %v3459 = vld [vmem:[#allocation3 + $0x274] sm:$0xff]
      %v3460 = vld [vmem:[#allocation3 + $0x27c] sm:$0xff]
      %v3461 = vld [vmem:[#allocation3 + $0x284] sm:$0xf]
      %v3462 = vld [vmem:[#allocation3 + $0x288] sm:$0xff]
      %v3463 = vld [vmem:[#allocation3 + $0x290] sm:$0xff]
      %v3464 = vld [vmem:[#allocation3 + $0x298] sm:$0xff]
      %v3465 = vld [vmem:[#allocation3 + $0x2a0] sm:$0xff]
      %v3466 = vld [vmem:[#allocation3 + $0x2a8] sm:$0xf]
      %v3467 = vld [vmem:[#allocation3 + $0x2ac] sm:$0xff]
      %v3468 = vld [vmem:[#allocation3 + $0x2b4] sm:$0xff]
      %v3469 = vld [vmem:[#allocation3 + $0x2bc] sm:$0xff]
      %v3470 = vld [vmem:[#allocation3 + $0x2c4] sm:$0xff]
      %v3471 = vld [vmem:[#allocation3 + $0x2cc] sm:$0xf]
      %v3472 = vld [vmem:[#allocation3 + $0x2d0] sm:$0xff]
      %v3473 = vld [vmem:[#allocation3 + $0x2d8] sm:$0xff]
      %v3474 = vld [vmem:[#allocation3 + $0x2e0] sm:$0xff]
      %v3475 = vld [vmem:[#allocation3 + $0x2e8] sm:$0xff]
      %v3476 = vld [vmem:[#allocation3 + $0x2f0] sm:$0xf]
      %v3477 = vld [vmem:[#allocation3 + $0x2f4] sm:$0xff]
      %v3478 = vld [vmem:[#allocation3 + $0x2fc] sm:$0xff]
      %v3479 = vld [vmem:[#allocation3 + $0x304] sm:$0xff]
      %v3480 = vld [vmem:[#allocation3 + $0x30c] sm:$0xff]
      %v3481 = vld [vmem:[#allocation3 + $0x314] sm:$0xf]
      %v3482 = vld [vmem:[#allocation3 + $0x318] sm:$0xff]
      %v3483 = vld [vmem:[#allocation3 + $0x320] sm:$0xff]
      %v3484 = vld [vmem:[#allocation3 + $0x328] sm:$0xff]
      %v3485 = vld [vmem:[#allocation3 + $0x330] sm:$0xff]
      %v3486 = vld [vmem:[#allocation3 + $0x338] sm:$0xf]
      %v3487 = vld [vmem:[#allocation3 + $0x33c] sm:$0xff]
      %v3488 = vld [vmem:[#allocation3 + $0x344] sm:$0xff]
      %v3489 = vld [vmem:[#allocation3 + $0x34c] sm:$0xff]
      %v3490 = vld [vmem:[#allocation3 + $0x354] sm:$0xff]
      %v3491 = vld [vmem:[#allocation3 + $0x35c] sm:$0xf]
      %v3492 = vld [vmem:[#allocation3 + $0x360] sm:$0xff]
      %v3493 = vld [vmem:[#allocation3 + $0x368] sm:$0xff]
      %v3494 = vld [vmem:[#allocation3 + $0x370] sm:$0xff]
      %v3495 = vld [vmem:[#allocation3 + $0x378] sm:$0xff]
      %v3496 = vld [vmem:[#allocation3 + $0x380] sm:$0xf]
      %v3497 = vld [vmem:[#allocation3 + $0x384] sm:$0xff]
      %v3498 = vld [vmem:[#allocation3 + $0x38c] sm:$0xff]
      %v3499 = vld [vmem:[#allocation3 + $0x394] sm:$0xff]
      %v3500 = vld [vmem:[#allocation3 + $0x39c] sm:$0xff]
      %v3501 = vld [vmem:[#allocation3 + $0x3a4] sm:$0xf]
      %v3502 = vld [vmem:[#allocation3 + $0x3a8] sm:$0xff]
      %v3503 = vld [vmem:[#allocation3 + $0x3b0] sm:$0xff]
      %v3504 = vld [vmem:[#allocation3 + $0x3b8] sm:$0xff]
      %v3505 = vld [vmem:[#allocation3 + $0x3c0] sm:$0xff]
      %v3506 = vld [vmem:[#allocation3 + $0x3c8] sm:$0xf]
      %v3507 = vld [vmem:[#allocation3 + $0x3cc] sm:$0xff]
      %v3508 = vld [vmem:[#allocation3 + $0x3d4] sm:$0xff]
      %v3509 = vld [vmem:[#allocation3 + $0x3dc] sm:$0xff]
      %v3510 = vld [vmem:[#allocation3 + $0x3e4] sm:$0xff]
      %v3511 = vld [vmem:[#allocation3 + $0x3ec] sm:$0xf]
      %v3512 = vld [vmem:[#allocation3 + $0x3f0] sm:$0xff]
      %v3513 = vld [vmem:[#allocation3 + $0x3f8] sm:$0xff]
      %v3514 = vld [vmem:[#allocation3 + $0x400] sm:$0xff]
      %v3515 = vld [vmem:[#allocation3 + $0x408] sm:$0xff]
      %v3516 = vld [vmem:[#allocation3 + $0x410] sm:$0xf]
      %v3517 = vld [vmem:[#allocation3 + $0x414] sm:$0xff]
      %v3518 = vld [vmem:[#allocation3 + $0x41c] sm:$0xff]
      %v3519 = vld [vmem:[#allocation3 + $0x424] sm:$0xff]
      %v3520 = vld [vmem:[#allocation3 + $0x42c] sm:$0xff]
      %v3521 = vld [vmem:[#allocation3 + $0x434] sm:$0xf]
      %v3522 = vld [vmem:[#allocation3 + $0x438] sm:$0xff]
      %v3523 = vld [vmem:[#allocation3 + $0x440] sm:$0xff]
      %v3524 = vld [vmem:[#allocation3 + $0x448] sm:$0xff]
      %v3525 = vld [vmem:[#allocation3 + $0x450] sm:$0xff]
      %v3526 = vld [vmem:[#allocation3 + $0x458] sm:$0xf]
      %v3527 = vld [vmem:[#allocation3 + $0x45c] sm:$0xff]
      %v3528 = vld [vmem:[#allocation3 + $0x464] sm:$0xff]
      %v3529 = vld [vmem:[#allocation3 + $0x46c] sm:$0xff]
      %v3530 = vld [vmem:[#allocation3 + $0x474] sm:$0xff]
      %v3531 = vld [vmem:[#allocation3 + $0x47c] sm:$0xf]
      %v3532 = vld [vmem:[%s1] sm:$0xf]
      %v3533 = vld [vmem:[%s1 + $0x4] sm:$0xf]
      %v3534 = vld [vmem:[%s1 + $0x8] sm:$0xf]
      %v3535 = vld [vmem:[%s1 + $0xc] sm:$0xf]
      %v3536 = vld [vmem:[%s1 + $0x10] sm:$0xf]
      %v3537 = vld [vmem:[%s1 + $0x14] sm:$0xf]
      %v3538 = vld [vmem:[%s1 + $0x18] sm:$0xf]
      %v3539 = vld [vmem:[%s1 + $0x1c] sm:$0xf]
      %v3540 = vld [vmem:[%s1 + $0x20] sm:$0xf]
      %v3541 = vld [vmem:[%s1 + $0x24] sm:$0xf]
      %v3542 = vld [vmem:[%s1 + $0x28] sm:$0xf]
      %v3543 = vld [vmem:[%s1 + $0x2c] sm:$0xf]
      %v3544 = vld [vmem:[%s1 + $0x30] sm:$0xf]
      %v3545 = vld [vmem:[%s1 + $0x34] sm:$0xf]
      %v3546 = vld [vmem:[%s1 + $0x38] sm:$0xf]
      %v3547 = vld [vmem:[%s1 + $0x3c] sm:$0xf]
      %v3548 = vld [vmem:[%s1 + $0x40] sm:$0xf]
      %v3549 = vld [vmem:[%s1 + $0x44] sm:$0xf]
      %v3550 = vld [vmem:[%s1 + $0x48] sm:$0xf]
      %v3551 = vld [vmem:[%s1 + $0x4c] sm:$0xf]
      %v3552 = vld [vmem:[%s1 + $0x50] sm:$0xf]
      %v3553 = vld [vmem:[%s1 + $0x54] sm:$0xf]
      %v3554 = vld [vmem:[%s1 + $0x58] sm:$0xf]
      %v3555 = vld [vmem:[%s1 + $0x5c] sm:$0xf]
      %v3556 = vld [vmem:[%s1 + $0x60] sm:$0xf]
      %v3557 = vld [vmem:[%s1 + $0x64] sm:$0xf]
      %v3558 = vld [vmem:[%s1 + $0x68] sm:$0xf]
      %v3559 = vld [vmem:[%s1 + $0x6c] sm:$0xf]
      %v3560 = vld [vmem:[%s1 + $0x70] sm:$0xf]
      %v3561 = vld [vmem:[%s1 + $0x74] sm:$0xf]
      %v3562 = vld [vmem:[%s1 + $0x78] sm:$0xf]
      %v3563 = vld [vmem:[%s1 + $0x7c] sm:$0xf]
      %v3564 = vld [vmem:[%s1 + $0x80] sm:$0xf]
      %v3565 = vld [vmem:[%s1 + $0x84] sm:$0xf]
      %v3566 = vld [vmem:[%s1 + $0x88] sm:$0xf]
      %v3567 = vld [vmem:[%s1 + $0x8c] sm:$0xf]
      %v3568 = vld [vmem:[%s1 + $0x90] sm:$0xf]
      %v3569 = vld [vmem:[%s1 + $0x94] sm:$0xf]
      %v3570 = vld [vmem:[%s1 + $0x98] sm:$0xf]
      %v3571 = vld [vmem:[%s1 + $0x9c] sm:$0xf]
      %v3572 = vld [vmem:[%s1 + $0xa0] sm:$0xf]
      %v3573 = vld [vmem:[%s1 + $0xa4] sm:$0xf]
      %v3574 = vld [vmem:[%s1 + $0xa8] sm:$0xf]
      %v3575 = vld [vmem:[%s1 + $0xac] sm:$0xf]
      %v3576 = vld [vmem:[%s1 + $0xb0] sm:$0xf]
      %v3577 = vld [vmem:[%s1 + $0xb4] sm:$0xf]
      %v3578 = vld [vmem:[%s1 + $0xb8] sm:$0xf]
      %v3579 = vld [vmem:[%s1 + $0xbc] sm:$0xf]
      %v3580 = vld [vmem:[%s1 + $0xc0] sm:$0xf]
      %v3581 = vld [vmem:[%s1 + $0xc4] sm:$0xf]
      %v3582 = vld [vmem:[%s1 + $0xc8] sm:$0xf]
      %v3583 = vld [vmem:[%s1 + $0xcc] sm:$0xf]
      %v3584 = vld [vmem:[%s1 + $0xd0] sm:$0xf]
      %v3585 = vld [vmem:[%s1 + $0xd4] sm:$0xf]
      %v3586 = vld [vmem:[%s1 + $0xd8] sm:$0xf]
      %v3587 = vld [vmem:[%s1 + $0xdc] sm:$0xf]
      %v3588 = vld [vmem:[%s1 + $0xe0] sm:$0xf]
      %v3589 = vld [vmem:[%s1 + $0xe4] sm:$0xf]
      %v3590 = vld [vmem:[%s1 + $0xe8] sm:$0xf]
      %v3591 = vld [vmem:[%s1 + $0xec] sm:$0xf]
      %v3592 = vld [vmem:[%s1 + $0xf0] sm:$0xf]
      %v3593 = vld [vmem:[%s1 + $0xf4] sm:$0xf]
      %v3594 = vld [vmem:[%s1 + $0xf8] sm:$0xf]
      %v3595 = vld [vmem:[%s1 + $0xfc] sm:$0xf]
      %v3596 = vld [vmem:[%s1 + $0x100] sm:$0xf]
      %v3597 = vld [vmem:[%s1 + $0x104] sm:$0xf]
      %v3598 = vld [vmem:[%s1 + $0x108] sm:$0xf]
      %v3599 = vld [vmem:[%s1 + $0x10c] sm:$0xf]
      %v3600 = vld [vmem:[%s1 + $0x110] sm:$0xf]
      %v3601 = vld [vmem:[%s1 + $0x114] sm:$0xf]
      %v3602 = vld [vmem:[%s1 + $0x118] sm:$0xf]
      %v3603 = vld [vmem:[%s1 + $0x11c] sm:$0xf]
      %v3604 = vld [vmem:[%s1 + $0x120] sm:$0xf]
      %v3605 = vld [vmem:[%s1 + $0x124] sm:$0xf]
      %v3606 = vld [vmem:[%s1 + $0x128] sm:$0xf]
      %v3607 = vld [vmem:[%s1 + $0x12c] sm:$0xf]
      %v3608 = vld [vmem:[%s1 + $0x130] sm:$0xf]
      %v3609 = vld [vmem:[%s1 + $0x134] sm:$0xf]
      %v3610 = vld [vmem:[%s1 + $0x138] sm:$0xf]
      %v3611 = vld [vmem:[%s1 + $0x13c] sm:$0xf]
      %v3612 = vld [vmem:[%s1 + $0x140] sm:$0xf]
      %v3613 = vld [vmem:[%s1 + $0x144] sm:$0xf]
      %v3614 = vld [vmem:[%s1 + $0x148] sm:$0xf]
      %v3615 = vld [vmem:[%s1 + $0x14c] sm:$0xf]
      %v3616 = vld [vmem:[%s1 + $0x150] sm:$0xf]
      %v3617 = vld [vmem:[%s1 + $0x154] sm:$0xf]
      %v3618 = vld [vmem:[%s1 + $0x158] sm:$0xf]
      %v3619 = vld [vmem:[%s1 + $0x15c] sm:$0xf]
      %v3620 = vld [vmem:[%s1 + $0x160] sm:$0xf]
      %v3621 = vld [vmem:[%s1 + $0x164] sm:$0xf]
      %v3622 = vld [vmem:[%s1 + $0x168] sm:$0xf]
      %v3623 = vld [vmem:[%s1 + $0x16c] sm:$0xf]
      %v3624 = vld [vmem:[%s1 + $0x170] sm:$0xf]
      %v3625 = vld [vmem:[%s1 + $0x174] sm:$0xf]
      %v3626 = vld [vmem:[%s1 + $0x178] sm:$0xf]
      %v3627 = vld [vmem:[%s1 + $0x17c] sm:$0xf]
      %v3628 = vld [vmem:[%s1 + $0x180] sm:$0xf]
      %v3629 = vld [vmem:[%s1 + $0x184] sm:$0xf]
      %v3630 = vld [vmem:[%s1 + $0x188] sm:$0xf]
      %v3631 = vld [vmem:[%s1 + $0x18c] sm:$0xf]
      %v3632 = vld [vmem:[%s1 + $0x190] sm:$0xf]
      %v3633 = vld [vmem:[%s1 + $0x194] sm:$0xf]
      %v3634 = vld [vmem:[%s1 + $0x198] sm:$0xf]
      %v3635 = vld [vmem:[%s1 + $0x19c] sm:$0xf]
      %v3636 = vld [vmem:[%s1 + $0x1a0] sm:$0xf]
      %v3637 = vld [vmem:[%s1 + $0x1a4] sm:$0xf]
      %v3638 = vld [vmem:[%s1 + $0x1a8] sm:$0xf]
      %v3639 = vld [vmem:[%s1 + $0x1ac] sm:$0xf]
      %v3640 = vld [vmem:[%s1 + $0x1b0] sm:$0xf]
      %v3641 = vld [vmem:[%s1 + $0x1b4] sm:$0xf]
      %v3642 = vld [vmem:[%s1 + $0x1b8] sm:$0xf]
      %v3643 = vld [vmem:[%s1 + $0x1bc] sm:$0xf]
      %v3644 = vld [vmem:[%s1 + $0x1c0] sm:$0xf]
      %v3645 = vld [vmem:[%s1 + $0x1c4] sm:$0xf]
      %v3646 = vld [vmem:[%s1 + $0x1c8] sm:$0xf]
      %v3647 = vld [vmem:[%s1 + $0x1cc] sm:$0xf]
      %v3648 = vld [vmem:[%s1 + $0x1d0] sm:$0xf]
      %v3649 = vld [vmem:[%s1 + $0x1d4] sm:$0xf]
      %v3650 = vld [vmem:[%s1 + $0x1d8] sm:$0xf]
      %v3651 = vld [vmem:[%s1 + $0x1dc] sm:$0xf]
      %v3652 = vld [vmem:[%s1 + $0x1e0] sm:$0xf]
      %v3653 = vld [vmem:[%s1 + $0x1e4] sm:$0xf]
      %v3654 = vld [vmem:[%s1 + $0x1e8] sm:$0xf]
      %v3655 = vld [vmem:[%s1 + $0x1ec] sm:$0xf]
      %v3656 = vld [vmem:[%s1 + $0x1f0] sm:$0xf]
      %v3657 = vld [vmem:[%s1 + $0x1f4] sm:$0xf]
      %v3658 = vld [vmem:[%s1 + $0x1f8] sm:$0xf]
      %v3659 = vld [vmem:[%s1 + $0x1fc] sm:$0xf]
      %v3660 = vld [vmem:[%s1 + $0x200] sm:$0xf]
      %v3661 = vld [vmem:[%s1 + $0x204] sm:$0xf]
      %v3662 = vld [vmem:[%s1 + $0x208] sm:$0xf]
      %v3663 = vld [vmem:[%s1 + $0x20c] sm:$0xf]
      %v3664 = vld [vmem:[%s1 + $0x210] sm:$0xf]
      %v3665 = vld [vmem:[%s1 + $0x214] sm:$0xf]
      %v3666 = vld [vmem:[%s1 + $0x218] sm:$0xf]
      %v3667 = vld [vmem:[%s1 + $0x21c] sm:$0xf]
      %v3668 = vld [vmem:[%s1 + $0x220] sm:$0xf]
      %v3669 = vld [vmem:[%s1 + $0x224] sm:$0xf]
      %v3670 = vld [vmem:[%s1 + $0x228] sm:$0xf]
      %v3671 = vld [vmem:[%s1 + $0x22c] sm:$0xf]
      %v3672 = vld [vmem:[%s1 + $0x230] sm:$0xf]
      %v3673 = vld [vmem:[%s1 + $0x234] sm:$0xf]
      %v3674 = vld [vmem:[%s1 + $0x238] sm:$0xf]
      %v3675 = vld [vmem:[%s1 + $0x23c] sm:$0xf]
      %v3836 = vunpack.c.l.b16 %v3372
      %v3837 = vunpack.c.h.b16 %v3372
      %v3838 = vunpack.c.l.b16 %v3373
      %v3839 = vunpack.c.h.b16 %v3373
      %v3840 = vunpack.c.l.b16 %v3374
      %v3841 = vunpack.c.h.b16 %v3374
      %v3842 = vunpack.c.l.b16 %v3375
      %v3843 = vunpack.c.h.b16 %v3375
      %v3844 = vunpack.c.l.b16 %v3376
      %v3845 = vunpack.c.l.b16 %v3377
      %v3846 = vunpack.c.h.b16 %v3377
      %v3847 = vunpack.c.l.b16 %v3378
      %v3848 = vunpack.c.h.b16 %v3378
      %v3849 = vunpack.c.l.b16 %v3379
      %v3850 = vunpack.c.h.b16 %v3379
      %v3851 = vunpack.c.l.b16 %v3380
      %v3852 = vunpack.c.h.b16 %v3380
      %v3853 = vunpack.c.l.b16 %v3381
      %v3854 = vunpack.c.l.b16 %v3382
      %v3855 = vunpack.c.h.b16 %v3382
      %v3856 = vunpack.c.l.b16 %v3383
      %v3857 = vunpack.c.h.b16 %v3383
      %v3858 = vunpack.c.l.b16 %v3384
      %v3859 = vunpack.c.h.b16 %v3384
      %v3860 = vunpack.c.l.b16 %v3385
      %v3861 = vunpack.c.h.b16 %v3385
      %v3862 = vunpack.c.l.b16 %v3386
      %v3863 = vunpack.c.l.b16 %v3387
      %v3864 = vunpack.c.h.b16 %v3387
      %v3865 = vunpack.c.l.b16 %v3388
      %v3866 = vunpack.c.h.b16 %v3388
      %v3867 = vunpack.c.l.b16 %v3389
      %v3868 = vunpack.c.h.b16 %v3389
      %v3869 = vunpack.c.l.b16 %v3390
      %v3870 = vunpack.c.h.b16 %v3390
      %v3871 = vunpack.c.l.b16 %v3391
      %v3872 = vunpack.c.l.b16 %v3392
      %v3873 = vunpack.c.h.b16 %v3392
      %v3874 = vunpack.c.l.b16 %v3393
      %v3875 = vunpack.c.h.b16 %v3393
      %v3876 = vunpack.c.l.b16 %v3394
      %v3877 = vunpack.c.h.b16 %v3394
      %v3878 = vunpack.c.l.b16 %v3395
      %v3879 = vunpack.c.h.b16 %v3395
      %v3880 = vunpack.c.l.b16 %v3396
      %v3881 = vunpack.c.l.b16 %v3397
      %v3882 = vunpack.c.h.b16 %v3397
      %v3883 = vunpack.c.l.b16 %v3398
      %v3884 = vunpack.c.h.b16 %v3398
      %v3885 = vunpack.c.l.b16 %v3399
      %v3886 = vunpack.c.h.b16 %v3399
      %v3887 = vunpack.c.l.b16 %v3400
      %v3888 = vunpack.c.h.b16 %v3400
      %v3889 = vunpack.c.l.b16 %v3401
      %v3890 = vunpack.c.l.b16 %v3402
      %v3891 = vunpack.c.h.b16 %v3402
      %v3892 = vunpack.c.l.b16 %v3403
      %v3893 = vunpack.c.h.b16 %v3403
      %v3894 = vunpack.c.l.b16 %v3404
      %v3895 = vunpack.c.h.b16 %v3404
      %v3896 = vunpack.c.l.b16 %v3405
      %v3897 = vunpack.c.h.b16 %v3405
      %v3898 = vunpack.c.l.b16 %v3406
      %v3899 = vunpack.c.l.b16 %v3407
      %v3900 = vunpack.c.h.b16 %v3407
      %v3901 = vunpack.c.l.b16 %v3408
      %v3902 = vunpack.c.h.b16 %v3408
      %v3903 = vunpack.c.l.b16 %v3409
      %v3904 = vunpack.c.h.b16 %v3409
      %v3905 = vunpack.c.l.b16 %v3410
      %v3906 = vunpack.c.h.b16 %v3410
      %v3907 = vunpack.c.l.b16 %v3411
      %v3908 = vunpack.c.l.b16 %v3412
      %v3909 = vunpack.c.h.b16 %v3412
      %v3910 = vunpack.c.l.b16 %v3413
      %v3911 = vunpack.c.h.b16 %v3413
      %v3912 = vunpack.c.l.b16 %v3414
      %v3913 = vunpack.c.h.b16 %v3414
      %v3914 = vunpack.c.l.b16 %v3415
      %v3915 = vunpack.c.h.b16 %v3415
      %v3916 = vunpack.c.l.b16 %v3416
      %v3917 = vunpack.c.l.b16 %v3417
      %v3918 = vunpack.c.h.b16 %v3417
      %v3919 = vunpack.c.l.b16 %v3418
      %v3920 = vunpack.c.h.b16 %v3418
      %v3921 = vunpack.c.l.b16 %v3419
      %v3922 = vunpack.c.h.b16 %v3419
      %v3923 = vunpack.c.l.b16 %v3420
      %v3924 = vunpack.c.h.b16 %v3420
      %v3925 = vunpack.c.l.b16 %v3421
      %v3926 = vunpack.c.l.b16 %v3422
      %v3927 = vunpack.c.h.b16 %v3422
      %v3928 = vunpack.c.l.b16 %v3423
      %v3929 = vunpack.c.h.b16 %v3423
      %v3930 = vunpack.c.l.b16 %v3424
      %v3931 = vunpack.c.h.b16 %v3424
      %v3932 = vunpack.c.l.b16 %v3425
      %v3933 = vunpack.c.h.b16 %v3425
      %v3934 = vunpack.c.l.b16 %v3426
      %v3935 = vunpack.c.l.b16 %v3427
      %v3936 = vunpack.c.h.b16 %v3427
      %v3937 = vunpack.c.l.b16 %v3428
      %v3938 = vunpack.c.h.b16 %v3428
      %v3939 = vunpack.c.l.b16 %v3429
      %v3940 = vunpack.c.h.b16 %v3429
      %v3941 = vunpack.c.l.b16 %v3430
      %v3942 = vunpack.c.h.b16 %v3430
      %v3943 = vunpack.c.l.b16 %v3431
      %v3944 = vunpack.c.l.b16 %v3432
      %v3945 = vunpack.c.h.b16 %v3432
      %v3946 = vunpack.c.l.b16 %v3433
      %v3947 = vunpack.c.h.b16 %v3433
      %v3948 = vunpack.c.l.b16 %v3434
      %v3949 = vunpack.c.h.b16 %v3434
      %v3950 = vunpack.c.l.b16 %v3435
      %v3951 = vunpack.c.h.b16 %v3435
      %v3952 = vunpack.c.l.b16 %v3436
      %v3953 = vunpack.c.l.b16 %v3437
      %v3954 = vunpack.c.h.b16 %v3437
      %v3955 = vunpack.c.l.b16 %v3438
      %v3956 = vunpack.c.h.b16 %v3438
      %v3957 = vunpack.c.l.b16 %v3439
      %v3958 = vunpack.c.h.b16 %v3439
      %v3959 = vunpack.c.l.b16 %v3440
      %v3960 = vunpack.c.h.b16 %v3440
      %v3961 = vunpack.c.l.b16 %v3441
      %v3962 = vunpack.c.l.b16 %v3442
      %v3963 = vunpack.c.h.b16 %v3442
      %v3964 = vunpack.c.l.b16 %v3443
      %v3965 = vunpack.c.h.b16 %v3443
      %v3966 = vunpack.c.l.b16 %v3444
      %v3967 = vunpack.c.h.b16 %v3444
      %v3968 = vunpack.c.l.b16 %v3445
      %v3969 = vunpack.c.h.b16 %v3445
      %v3970 = vunpack.c.l.b16 %v3446
      %v3971 = vunpack.c.l.b16 %v3447
      %v3972 = vunpack.c.h.b16 %v3447
      %v3973 = vunpack.c.l.b16 %v3448
      %v3974 = vunpack.c.h.b16 %v3448
      %v3975 = vunpack.c.l.b16 %v3449
      %v3976 = vunpack.c.h.b16 %v3449
      %v3977 = vunpack.c.l.b16 %v3450
      %v3978 = vunpack.c.h.b16 %v3450
      %v3979 = vunpack.c.l.b16 %v3451
      %v3980 = vunpack.c.l.b16 %v3452
      %v3981 = vunpack.c.h.b16 %v3452
      %v3982 = vunpack.c.l.b16 %v3453
      %v3983 = vunpack.c.h.b16 %v3453
      %v3984 = vunpack.c.l.b16 %v3454
      %v3985 = vunpack.c.h.b16 %v3454
      %v3986 = vunpack.c.l.b16 %v3455
      %v3987 = vunpack.c.h.b16 %v3455
      %v3988 = vunpack.c.l.b16 %v3456
      %v3989 = vunpack.c.l.b16 %v3457
      %v3990 = vunpack.c.h.b16 %v3457
      %v3991 = vunpack.c.l.b16 %v3458
      %v3992 = vunpack.c.h.b16 %v3458
      %v3993 = vunpack.c.l.b16 %v3459
      %v3994 = vunpack.c.h.b16 %v3459
      %v3995 = vunpack.c.l.b16 %v3460
      %v3996 = vunpack.c.h.b16 %v3460
      %v3997 = vunpack.c.l.b16 %v3461
      %v3998 = vunpack.c.l.b16 %v3462
      %v3999 = vunpack.c.h.b16 %v3462
      %v4000 = vunpack.c.l.b16 %v3463
      %v4001 = vunpack.c.h.b16 %v3463
      %v4002 = vunpack.c.l.b16 %v3464
      %v4003 = vunpack.c.h.b16 %v3464
      %v4004 = vunpack.c.l.b16 %v3465
      %v4005 = vunpack.c.h.b16 %v3465
      %v4006 = vunpack.c.l.b16 %v3466
      %v4007 = vunpack.c.l.b16 %v3467
      %v4008 = vunpack.c.h.b16 %v3467
      %v4009 = vunpack.c.l.b16 %v3468
      %v4010 = vunpack.c.h.b16 %v3468
      %v4011 = vunpack.c.l.b16 %v3469
      %v4012 = vunpack.c.h.b16 %v3469
      %v4013 = vunpack.c.l.b16 %v3470
      %v4014 = vunpack.c.h.b16 %v3470
      %v4015 = vunpack.c.l.b16 %v3471
      %v4016 = vunpack.c.l.b16 %v3472
      %v4017 = vunpack.c.h.b16 %v3472
      %v4018 = vunpack.c.l.b16 %v3473
      %v4019 = vunpack.c.h.b16 %v3473
      %v4020 = vunpack.c.l.b16 %v3474
      %v4021 = vunpack.c.h.b16 %v3474
      %v4022 = vunpack.c.l.b16 %v3475
      %v4023 = vunpack.c.h.b16 %v3475
      %v4024 = vunpack.c.l.b16 %v3476
      %v4025 = vunpack.c.l.b16 %v3477
      %v4026 = vunpack.c.h.b16 %v3477
      %v4027 = vunpack.c.l.b16 %v3478
      %v4028 = vunpack.c.h.b16 %v3478
      %v4029 = vunpack.c.l.b16 %v3479
      %v4030 = vunpack.c.h.b16 %v3479
      %v4031 = vunpack.c.l.b16 %v3480
      %v4032 = vunpack.c.h.b16 %v3480
      %v4033 = vunpack.c.l.b16 %v3481
      %v4034 = vunpack.c.l.b16 %v3482
      %v4035 = vunpack.c.h.b16 %v3482
      %v4036 = vunpack.c.l.b16 %v3483
      %v4037 = vunpack.c.h.b16 %v3483
      %v4038 = vunpack.c.l.b16 %v3484
      %v4039 = vunpack.c.h.b16 %v3484
      %v4040 = vunpack.c.l.b16 %v3485
      %v4041 = vunpack.c.h.b16 %v3485
      %v4042 = vunpack.c.l.b16 %v3486
      %v4043 = vunpack.c.l.b16 %v3487
      %v4044 = vunpack.c.h.b16 %v3487
      %v4045 = vunpack.c.l.b16 %v3488
      %v4046 = vunpack.c.h.b16 %v3488
      %v4047 = vunpack.c.l.b16 %v3489
      %v4048 = vunpack.c.h.b16 %v3489
      %v4049 = vunpack.c.l.b16 %v3490
      %v4050 = vunpack.c.h.b16 %v3490
      %v4051 = vunpack.c.l.b16 %v3491
      %v4052 = vunpack.c.l.b16 %v3492
      %v4053 = vunpack.c.h.b16 %v3492
      %v4054 = vunpack.c.l.b16 %v3493
      %v4055 = vunpack.c.h.b16 %v3493
      %v4056 = vunpack.c.l.b16 %v3494
      %v4057 = vunpack.c.h.b16 %v3494
      %v4058 = vunpack.c.l.b16 %v3495
      %v4059 = vunpack.c.h.b16 %v3495
      %v4060 = vunpack.c.l.b16 %v3496
      %v4061 = vunpack.c.l.b16 %v3497
      %v4062 = vunpack.c.h.b16 %v3497
      %v4063 = vunpack.c.l.b16 %v3498
      %v4064 = vunpack.c.h.b16 %v3498
      %v4065 = vunpack.c.l.b16 %v3499
      %v4066 = vunpack.c.h.b16 %v3499
      %v4067 = vunpack.c.l.b16 %v3500
      %v4068 = vunpack.c.h.b16 %v3500
      %v4069 = vunpack.c.l.b16 %v3501
      %v4070 = vunpack.c.l.b16 %v3502
      %v4071 = vunpack.c.h.b16 %v3502
      %v4072 = vunpack.c.l.b16 %v3503
      %v4073 = vunpack.c.h.b16 %v3503
      %v4074 = vunpack.c.l.b16 %v3504
      %v4075 = vunpack.c.h.b16 %v3504
      %v4076 = vunpack.c.l.b16 %v3505
      %v4077 = vunpack.c.h.b16 %v3505
      %v4078 = vunpack.c.l.b16 %v3506
      %v4079 = vunpack.c.l.b16 %v3507
      %v4080 = vunpack.c.h.b16 %v3507
      %v4081 = vunpack.c.l.b16 %v3508
      %v4082 = vunpack.c.h.b16 %v3508
      %v4083 = vunpack.c.l.b16 %v3509
      %v4084 = vunpack.c.h.b16 %v3509
      %v4085 = vunpack.c.l.b16 %v3510
      %v4086 = vunpack.c.h.b16 %v3510
      %v4087 = vunpack.c.l.b16 %v3511
      %v4088 = vunpack.c.l.b16 %v3512
      %v4089 = vunpack.c.h.b16 %v3512
      %v4090 = vunpack.c.l.b16 %v3513
      %v4091 = vunpack.c.h.b16 %v3513
      %v4092 = vunpack.c.l.b16 %v3514
      %v4093 = vunpack.c.h.b16 %v3514
      %v4094 = vunpack.c.l.b16 %v3515
      %v4095 = vunpack.c.h.b16 %v3515
      %v4096 = vunpack.c.l.b16 %v3516
      %v4097 = vunpack.c.l.b16 %v3517
      %v4098 = vunpack.c.h.b16 %v3517
      %v4099 = vunpack.c.l.b16 %v3518
      %v4100 = vunpack.c.h.b16 %v3518
      %v4101 = vunpack.c.l.b16 %v3519
      %v4102 = vunpack.c.h.b16 %v3519
      %v4103 = vunpack.c.l.b16 %v3520
      %v4104 = vunpack.c.h.b16 %v3520
      %v4105 = vunpack.c.l.b16 %v3521
      %v4106 = vunpack.c.l.b16 %v3522
      %v4107 = vunpack.c.h.b16 %v3522
      %v4108 = vunpack.c.l.b16 %v3523
      %v4109 = vunpack.c.h.b16 %v3523
      %v4110 = vunpack.c.l.b16 %v3524
      %v4111 = vunpack.c.h.b16 %v3524
      %v4112 = vunpack.c.l.b16 %v3525
      %v4113 = vunpack.c.h.b16 %v3525
      %v4114 = vunpack.c.l.b16 %v3526
      %v4115 = vunpack.c.l.b16 %v3527
      %v4116 = vunpack.c.h.b16 %v3527
      %v4117 = vunpack.c.l.b16 %v3528
      %v4118 = vunpack.c.h.b16 %v3528
      %v4119 = vunpack.c.l.b16 %v3529
      %v4120 = vunpack.c.h.b16 %v3529
      %v4121 = vunpack.c.l.b16 %v3530
      %v4122 = vunpack.c.h.b16 %v3530
      %v4123 = vunpack.c.l.b16 %v3531
      %v4124 = vpack.c.b16 %v3845, %v3836
      %v4125 = vpack.c.b16 %v3846, %v3837
      %v4126 = vpack.c.b16 %v3847, %v3838
      %v4127 = vpack.c.b16 %v3848, %v3839
      %v4128 = vpack.c.b16 %v3849, %v3840
      %v4129 = vpack.c.b16 %v3850, %v3841
      %v4130 = vpack.c.b16 %v3851, %v3842
      %v4131 = vpack.c.b16 %v3852, %v3843
      %v4132 = vpack.c.b16 %v3853, %v3844
      %v4133 = vpack.c.b16 %v3863, %v3854
      %v4134 = vpack.c.b16 %v3864, %v3855
      %v4135 = vpack.c.b16 %v3865, %v3856
      %v4136 = vpack.c.b16 %v3866, %v3857
      %v4137 = vpack.c.b16 %v3867, %v3858
      %v4138 = vpack.c.b16 %v3868, %v3859
      %v4139 = vpack.c.b16 %v3869, %v3860
      %v4140 = vpack.c.b16 %v3870, %v3861
      %v4141 = vpack.c.b16 %v3871, %v3862
      %v4142 = vpack.c.b16 %v3881, %v3872
      %v4143 = vpack.c.b16 %v3882, %v3873
      %v4144 = vpack.c.b16 %v3883, %v3874
      %v4145 = vpack.c.b16 %v3884, %v3875
      %v4146 = vpack.c.b16 %v3885, %v3876
      %v4147 = vpack.c.b16 %v3886, %v3877
      %v4148 = vpack.c.b16 %v3887, %v3878
      %v4149 = vpack.c.b16 %v3888, %v3879
      %v4150 = vpack.c.b16 %v3889, %v3880
      %v4151 = vpack.c.b16 %v3899, %v3890
      %v4152 = vpack.c.b16 %v3900, %v3891
      %v4153 = vpack.c.b16 %v3901, %v3892
      %v4154 = vpack.c.b16 %v3902, %v3893
      %v4155 = vpack.c.b16 %v3903, %v3894
      %v4156 = vpack.c.b16 %v3904, %v3895
      %v4157 = vpack.c.b16 %v3905, %v3896
      %v4158 = vpack.c.b16 %v3906, %v3897
      %v4159 = vpack.c.b16 %v3907, %v3898
      %v4160 = vpack.c.b16 %v3917, %v3908
      %v4161 = vpack.c.b16 %v3918, %v3909
      %v4162 = vpack.c.b16 %v3919, %v3910
      %v4163 = vpack.c.b16 %v3920, %v3911
      %v4164 = vpack.c.b16 %v3921, %v3912
      %v4165 = vpack.c.b16 %v3922, %v3913
      %v4166 = vpack.c.b16 %v3923, %v3914
      %v4167 = vpack.c.b16 %v3924, %v3915
      %v4168 = vpack.c.b16 %v3925, %v3916
      %v4169 = vpack.c.b16 %v3935, %v3926
      %v4170 = vpack.c.b16 %v3936, %v3927
      %v4171 = vpack.c.b16 %v3937, %v3928
      %v4172 = vpack.c.b16 %v3938, %v3929
      %v4173 = vpack.c.b16 %v3939, %v3930
      %v4174 = vpack.c.b16 %v3940, %v3931
      %v4175 = vpack.c.b16 %v3941, %v3932
      %v4176 = vpack.c.b16 %v3942, %v3933
      %v4177 = vpack.c.b16 %v3943, %v3934
      %v4178 = vpack.c.b16 %v3953, %v3944
      %v4179 = vpack.c.b16 %v3954, %v3945
      %v4180 = vpack.c.b16 %v3955, %v3946
      %v4181 = vpack.c.b16 %v3956, %v3947
      %v4182 = vpack.c.b16 %v3957, %v3948
      %v4183 = vpack.c.b16 %v3958, %v3949
      %v4184 = vpack.c.b16 %v3959, %v3950
      %v4185 = vpack.c.b16 %v3960, %v3951
      %v4186 = vpack.c.b16 %v3961, %v3952
      %v4187 = vpack.c.b16 %v3971, %v3962
      %v4188 = vpack.c.b16 %v3972, %v3963
      %v4189 = vpack.c.b16 %v3973, %v3964
      %v4190 = vpack.c.b16 %v3974, %v3965
      %v4191 = vpack.c.b16 %v3975, %v3966
      %v4192 = vpack.c.b16 %v3976, %v3967
      %v4193 = vpack.c.b16 %v3977, %v3968
      %v4194 = vpack.c.b16 %v3978, %v3969
      %v4195 = vpack.c.b16 %v3979, %v3970
      %v4196 = vpack.c.b16 %v3989, %v3980
      %v4197 = vpack.c.b16 %v3990, %v3981
      %v4198 = vpack.c.b16 %v3991, %v3982
      %v4199 = vpack.c.b16 %v3992, %v3983
      %v4200 = vpack.c.b16 %v3993, %v3984
      %v4201 = vpack.c.b16 %v3994, %v3985
      %v4202 = vpack.c.b16 %v3995, %v3986
      %v4203 = vpack.c.b16 %v3996, %v3987
      %v4204 = vpack.c.b16 %v3997, %v3988
      %v4205 = vpack.c.b16 %v4007, %v3998
      %v4206 = vpack.c.b16 %v4008, %v3999
      %v4207 = vpack.c.b16 %v4009, %v4000
      %v4208 = vpack.c.b16 %v4010, %v4001
      %v4209 = vpack.c.b16 %v4011, %v4002
      %v4210 = vpack.c.b16 %v4012, %v4003
      %v4211 = vpack.c.b16 %v4013, %v4004
      %v4212 = vpack.c.b16 %v4014, %v4005
      %v4213 = vpack.c.b16 %v4015, %v4006
      %v4214 = vpack.c.b16 %v4025, %v4016
      %v4215 = vpack.c.b16 %v4026, %v4017
      %v4216 = vpack.c.b16 %v4027, %v4018
      %v4217 = vpack.c.b16 %v4028, %v4019
      %v4218 = vpack.c.b16 %v4029, %v4020
      %v4219 = vpack.c.b16 %v4030, %v4021
      %v4220 = vpack.c.b16 %v4031, %v4022
      %v4221 = vpack.c.b16 %v4032, %v4023
      %v4222 = vpack.c.b16 %v4033, %v4024
      %v4223 = vpack.c.b16 %v4043, %v4034
      %v4224 = vpack.c.b16 %v4044, %v4035
      %v4225 = vpack.c.b16 %v4045, %v4036
      %v4226 = vpack.c.b16 %v4046, %v4037
      %v4227 = vpack.c.b16 %v4047, %v4038
      %v4228 = vpack.c.b16 %v4048, %v4039
      %v4229 = vpack.c.b16 %v4049, %v4040
      %v4230 = vpack.c.b16 %v4050, %v4041
      %v4231 = vpack.c.b16 %v4051, %v4042
      %v4232 = vpack.c.b16 %v4061, %v4052
      %v4233 = vpack.c.b16 %v4062, %v4053
      %v4234 = vpack.c.b16 %v4063, %v4054
      %v4235 = vpack.c.b16 %v4064, %v4055
      %v4236 = vpack.c.b16 %v4065, %v4056
      %v4237 = vpack.c.b16 %v4066, %v4057
      %v4238 = vpack.c.b16 %v4067, %v4058
      %v4239 = vpack.c.b16 %v4068, %v4059
      %v4240 = vpack.c.b16 %v4069, %v4060
      %v4241 = vpack.c.b16 %v4079, %v4070
      %v4242 = vpack.c.b16 %v4080, %v4071
      %v4243 = vpack.c.b16 %v4081, %v4072
      %v4244 = vpack.c.b16 %v4082, %v4073
      %v4245 = vpack.c.b16 %v4083, %v4074
      %v4246 = vpack.c.b16 %v4084, %v4075
      %v4247 = vpack.c.b16 %v4085, %v4076
      %v4248 = vpack.c.b16 %v4086, %v4077
      %v4249 = vpack.c.b16 %v4087, %v4078
      %v4250 = vpack.c.b16 %v4097, %v4088
      %v4251 = vpack.c.b16 %v4098, %v4089
      %v4252 = vpack.c.b16 %v4099, %v4090
      %v4253 = vpack.c.b16 %v4100, %v4091
      %v4254 = vpack.c.b16 %v4101, %v4092
      %v4255 = vpack.c.b16 %v4102, %v4093
      %v4256 = vpack.c.b16 %v4103, %v4094
      %v4257 = vpack.c.b16 %v4104, %v4095
      %v4258 = vpack.c.b16 %v4105, %v4096
      %v4259 = vpack.c.b16 %v4115, %v4106
      %v4260 = vpack.c.b16 %v4116, %v4107
      %v4261 = vpack.c.b16 %v4117, %v4108
      %v4262 = vpack.c.b16 %v4118, %v4109
      %v4263 = vpack.c.b16 %v4119, %v4110
      %v4264 = vpack.c.b16 %v4120, %v4111
      %v4265 = vpack.c.b16 %v4121, %v4112
      %v4266 = vpack.c.b16 %v4122, %v4113
      %v4267 = vpack.c.b16 %v4123, %v4114
      %v4556 = vunpack.c.l.b16 %v3532
      %v4557 = vunpack.c.l.b16 %v3533
      %v4558 = vunpack.c.l.b16 %v3534
      %v4559 = vunpack.c.l.b16 %v3535
      %v4560 = vunpack.c.l.b16 %v3536
      %v4561 = vunpack.c.l.b16 %v3537
      %v4562 = vunpack.c.l.b16 %v3538
      %v4563 = vunpack.c.l.b16 %v3539
      %v4564 = vunpack.c.l.b16 %v3540
      %v4565 = vunpack.c.l.b16 %v3541
      %v4566 = vunpack.c.l.b16 %v3542
      %v4567 = vunpack.c.l.b16 %v3543
      %v4568 = vunpack.c.l.b16 %v3544
      %v4569 = vunpack.c.l.b16 %v3545
      %v4570 = vunpack.c.l.b16 %v3546
      %v4571 = vunpack.c.l.b16 %v3547
      %v4572 = vunpack.c.l.b16 %v3548
      %v4573 = vunpack.c.l.b16 %v3549
      %v4574 = vunpack.c.l.b16 %v3550
      %v4575 = vunpack.c.l.b16 %v3551
      %v4576 = vunpack.c.l.b16 %v3552
      %v4577 = vunpack.c.l.b16 %v3553
      %v4578 = vunpack.c.l.b16 %v3554
      %v4579 = vunpack.c.l.b16 %v3555
      %v4580 = vunpack.c.l.b16 %v3556
      %v4581 = vunpack.c.l.b16 %v3557
      %v4582 = vunpack.c.l.b16 %v3558
      %v4583 = vunpack.c.l.b16 %v3559
      %v4584 = vunpack.c.l.b16 %v3560
      %v4585 = vunpack.c.l.b16 %v3561
      %v4586 = vunpack.c.l.b16 %v3562
      %v4587 = vunpack.c.l.b16 %v3563
      %v4588 = vunpack.c.l.b16 %v3564
      %v4589 = vunpack.c.l.b16 %v3565
      %v4590 = vunpack.c.l.b16 %v3566
      %v4591 = vunpack.c.l.b16 %v3567
      %v4592 = vunpack.c.l.b16 %v3568
      %v4593 = vunpack.c.l.b16 %v3569
      %v4594 = vunpack.c.l.b16 %v3570
      %v4595 = vunpack.c.l.b16 %v3571
      %v4596 = vunpack.c.l.b16 %v3572
      %v4597 = vunpack.c.l.b16 %v3573
      %v4598 = vunpack.c.l.b16 %v3574
      %v4599 = vunpack.c.l.b16 %v3575
      %v4600 = vunpack.c.l.b16 %v3576
      %v4601 = vunpack.c.l.b16 %v3577
      %v4602 = vunpack.c.l.b16 %v3578
      %v4603 = vunpack.c.l.b16 %v3579
      %v4604 = vunpack.c.l.b16 %v3580
      %v4605 = vunpack.c.l.b16 %v3581
      %v4606 = vunpack.c.l.b16 %v3582
      %v4607 = vunpack.c.l.b16 %v3583
      %v4608 = vunpack.c.l.b16 %v3584
      %v4609 = vunpack.c.l.b16 %v3585
      %v4610 = vunpack.c.l.b16 %v3586
      %v4611 = vunpack.c.l.b16 %v3587
      %v4612 = vunpack.c.l.b16 %v3588
      %v4613 = vunpack.c.l.b16 %v3589
      %v4614 = vunpack.c.l.b16 %v3590
      %v4615 = vunpack.c.l.b16 %v3591
      %v4616 = vunpack.c.l.b16 %v3592
      %v4617 = vunpack.c.l.b16 %v3593
      %v4618 = vunpack.c.l.b16 %v3594
      %v4619 = vunpack.c.l.b16 %v3595
      %v4620 = vunpack.c.l.b16 %v3596
      %v4621 = vunpack.c.l.b16 %v3597
      %v4622 = vunpack.c.l.b16 %v3598
      %v4623 = vunpack.c.l.b16 %v3599
      %v4624 = vunpack.c.l.b16 %v3600
      %v4625 = vunpack.c.l.b16 %v3601
      %v4626 = vunpack.c.l.b16 %v3602
      %v4627 = vunpack.c.l.b16 %v3603
      %v4628 = vunpack.c.l.b16 %v3604
      %v4629 = vunpack.c.l.b16 %v3605
      %v4630 = vunpack.c.l.b16 %v3606
      %v4631 = vunpack.c.l.b16 %v3607
      %v4632 = vunpack.c.l.b16 %v3608
      %v4633 = vunpack.c.l.b16 %v3609
      %v4634 = vunpack.c.l.b16 %v3610
      %v4635 = vunpack.c.l.b16 %v3611
      %v4636 = vunpack.c.l.b16 %v3612
      %v4637 = vunpack.c.l.b16 %v3613
      %v4638 = vunpack.c.l.b16 %v3614
      %v4639 = vunpack.c.l.b16 %v3615
      %v4640 = vunpack.c.l.b16 %v3616
      %v4641 = vunpack.c.l.b16 %v3617
      %v4642 = vunpack.c.l.b16 %v3618
      %v4643 = vunpack.c.l.b16 %v3619
      %v4644 = vunpack.c.l.b16 %v3620
      %v4645 = vunpack.c.l.b16 %v3621
      %v4646 = vunpack.c.l.b16 %v3622
      %v4647 = vunpack.c.l.b16 %v3623
      %v4648 = vunpack.c.l.b16 %v3624
      %v4649 = vunpack.c.l.b16 %v3625
      %v4650 = vunpack.c.l.b16 %v3626
      %v4651 = vunpack.c.l.b16 %v3627
      %v4652 = vunpack.c.l.b16 %v3628
      %v4653 = vunpack.c.l.b16 %v3629
      %v4654 = vunpack.c.l.b16 %v3630
      %v4655 = vunpack.c.l.b16 %v3631
      %v4656 = vunpack.c.l.b16 %v3632
      %v4657 = vunpack.c.l.b16 %v3633
      %v4658 = vunpack.c.l.b16 %v3634
      %v4659 = vunpack.c.l.b16 %v3635
      %v4660 = vunpack.c.l.b16 %v3636
      %v4661 = vunpack.c.l.b16 %v3637
      %v4662 = vunpack.c.l.b16 %v3638
      %v4663 = vunpack.c.l.b16 %v3639
      %v4664 = vunpack.c.l.b16 %v3640
      %v4665 = vunpack.c.l.b16 %v3641
      %v4666 = vunpack.c.l.b16 %v3642
      %v4667 = vunpack.c.l.b16 %v3643
      %v4668 = vunpack.c.l.b16 %v3644
      %v4669 = vunpack.c.l.b16 %v3645
      %v4670 = vunpack.c.l.b16 %v3646
      %v4671 = vunpack.c.l.b16 %v3647
      %v4672 = vunpack.c.l.b16 %v3648
      %v4673 = vunpack.c.l.b16 %v3649
      %v4674 = vunpack.c.l.b16 %v3650
      %v4675 = vunpack.c.l.b16 %v3651
      %v4676 = vunpack.c.l.b16 %v3652
      %v4677 = vunpack.c.l.b16 %v3653
      %v4678 = vunpack.c.l.b16 %v3654
      %v4679 = vunpack.c.l.b16 %v3655
      %v4680 = vunpack.c.l.b16 %v3656
      %v4681 = vunpack.c.l.b16 %v3657
      %v4682 = vunpack.c.l.b16 %v3658
      %v4683 = vunpack.c.l.b16 %v3659
      %v4684 = vunpack.c.l.b16 %v3660
      %v4685 = vunpack.c.l.b16 %v3661
      %v4686 = vunpack.c.l.b16 %v3662
      %v4687 = vunpack.c.l.b16 %v3663
      %v4688 = vunpack.c.l.b16 %v3664
      %v4689 = vunpack.c.l.b16 %v3665
      %v4690 = vunpack.c.l.b16 %v3666
      %v4691 = vunpack.c.l.b16 %v3667
      %v4692 = vunpack.c.l.b16 %v3668
      %v4693 = vunpack.c.l.b16 %v3669
      %v4694 = vunpack.c.l.b16 %v3670
      %v4695 = vunpack.c.l.b16 %v3671
      %v4696 = vunpack.c.l.b16 %v3672
      %v4697 = vunpack.c.l.b16 %v3673
      %v4698 = vunpack.c.l.b16 %v3674
      %v4699 = vunpack.c.l.b16 %v3675
      %v4700 = vpack.c.b16 %v4557, %v4556
      %v4701 = vpack.c.b16 %v4559, %v4558
      %v4702 = vpack.c.b16 %v4561, %v4560
      %v4703 = vpack.c.b16 %v4563, %v4562
      %v4704 = vpack.c.b16 %v4565, %v4564
      %v4705 = vpack.c.b16 %v4567, %v4566
      %v4706 = vpack.c.b16 %v4569, %v4568
      %v4707 = vpack.c.b16 %v4571, %v4570
      %v4708 = vpack.c.b16 %v4573, %v4572
      %v4709 = vpack.c.b16 %v4575, %v4574
      %v4710 = vpack.c.b16 %v4577, %v4576
      %v4711 = vpack.c.b16 %v4579, %v4578
      %v4712 = vpack.c.b16 %v4581, %v4580
      %v4713 = vpack.c.b16 %v4583, %v4582
      %v4714 = vpack.c.b16 %v4585, %v4584
      %v4715 = vpack.c.b16 %v4587, %v4586
      %v4716 = vpack.c.b16 %v4589, %v4588
      %v4717 = vpack.c.b16 %v4591, %v4590
      %v4718 = vpack.c.b16 %v4593, %v4592
      %v4719 = vpack.c.b16 %v4595, %v4594
      %v4720 = vpack.c.b16 %v4597, %v4596
      %v4721 = vpack.c.b16 %v4599, %v4598
      %v4722 = vpack.c.b16 %v4601, %v4600
      %v4723 = vpack.c.b16 %v4603, %v4602
      %v4724 = vpack.c.b16 %v4605, %v4604
      %v4725 = vpack.c.b16 %v4607, %v4606
      %v4726 = vpack.c.b16 %v4609, %v4608
      %v4727 = vpack.c.b16 %v4611, %v4610
      %v4728 = vpack.c.b16 %v4613, %v4612
      %v4729 = vpack.c.b16 %v4615, %v4614
      %v4730 = vpack.c.b16 %v4617, %v4616
      %v4731 = vpack.c.b16 %v4619, %v4618
      %v4732 = vpack.c.b16 %v4621, %v4620
      %v4733 = vpack.c.b16 %v4623, %v4622
      %v4734 = vpack.c.b16 %v4625, %v4624
      %v4735 = vpack.c.b16 %v4627, %v4626
      %v4736 = vpack.c.b16 %v4629, %v4628
      %v4737 = vpack.c.b16 %v4631, %v4630
      %v4738 = vpack.c.b16 %v4633, %v4632
      %v4739 = vpack.c.b16 %v4635, %v4634
      %v4740 = vpack.c.b16 %v4637, %v4636
      %v4741 = vpack.c.b16 %v4639, %v4638
      %v4742 = vpack.c.b16 %v4641, %v4640
      %v4743 = vpack.c.b16 %v4643, %v4642
      %v4744 = vpack.c.b16 %v4645, %v4644
      %v4745 = vpack.c.b16 %v4647, %v4646
      %v4746 = vpack.c.b16 %v4649, %v4648
      %v4747 = vpack.c.b16 %v4651, %v4650
      %v4748 = vpack.c.b16 %v4653, %v4652
      %v4749 = vpack.c.b16 %v4655, %v4654
      %v4750 = vpack.c.b16 %v4657, %v4656
      %v4751 = vpack.c.b16 %v4659, %v4658
      %v4752 = vpack.c.b16 %v4661, %v4660
      %v4753 = vpack.c.b16 %v4663, %v4662
      %v4754 = vpack.c.b16 %v4665, %v4664
      %v4755 = vpack.c.b16 %v4667, %v4666
      %v4756 = vpack.c.b16 %v4669, %v4668
      %v4757 = vpack.c.b16 %v4671, %v4670
      %v4758 = vpack.c.b16 %v4673, %v4672
      %v4759 = vpack.c.b16 %v4675, %v4674
      %v4760 = vpack.c.b16 %v4677, %v4676
      %v4761 = vpack.c.b16 %v4679, %v4678
      %v4762 = vpack.c.b16 %v4681, %v4680
      %v4763 = vpack.c.b16 %v4683, %v4682
      %v4764 = vpack.c.b16 %v4685, %v4684
      %v4765 = vpack.c.b16 %v4687, %v4686
      %v4766 = vpack.c.b16 %v4689, %v4688
      %v4767 = vpack.c.b16 %v4691, %v4690
      %v4768 = vpack.c.b16 %v4693, %v4692
      %v4769 = vpack.c.b16 %v4695, %v4694
      %v4770 = vpack.c.b16 %v4697, %v4696
      %v4771 = vpack.c.b16 %v4699, %v4698
      %4844 = vmatprep.subr.bf16.mxu0 0
      %4845 = vmatpush1.bf16.msra.mxu0 %v4707
      %4846 = vmatprep.subr.bf16.mxu0 0
      %4847 = vmatpush1.bf16.msra.mxu0 %v4706
      %4848 = vmatprep.subr.bf16.mxu0 0
      %4849 = vmatpush1.bf16.msra.mxu0 %v4705
      %4850 = vmatprep.subr.bf16.mxu0 0
      %4851 = vmatpush1.bf16.msra.mxu0 %v4704
      %4852 = vmatprep.subr.bf16.mxu0 0
      %4853 = vmatpush1.bf16.msra.mxu0 %v4703
      %4854 = vmatprep.subr.bf16.mxu0 0
      %4855 = vmatpush1.bf16.msra.mxu0 %v4702
      %4856 = vmatprep.subr.bf16.mxu0 0
      %4857 = vmatpush1.bf16.msra.mxu0 %v4701
      %4858 = vmatprep.subr.bf16.mxu0 0
      %4859 = vmatpush1.bf16.msra.mxu0 %v4700
      %4860 = vmatprep.subr.bf16.mxu0 0
      %4861 = vmatpush2.bf16.msra.mxu0 %v4715
      %4862 = vmatprep.subr.bf16.mxu0 0
      %4863 = vmatpush2.bf16.msra.mxu0 %v4714
      %4864 = vmatprep.subr.bf16.mxu0 0
      %4865 = vmatpush2.bf16.msra.mxu0 %v4713
      %4866 = vmatprep.subr.bf16.mxu0 0
      %4867 = vmatpush2.bf16.msra.mxu0 %v4712
      %4868 = vmatprep.subr.bf16.mxu0 0
      %4869 = vmatpush2.bf16.msra.mxu0 %v4711
      %4870 = vmatprep.subr.bf16.mxu0 0
      %4871 = vmatpush2.bf16.msra.mxu0 %v4710
      %4872 = vmatprep.subr.bf16.mxu0 0
      %4873 = vmatpush2.bf16.msra.mxu0 %v4709
      %4874 = vmatprep.subr.bf16.mxu0 0
      %4875 = vmatpush2.bf16.msra.mxu0 %v4708
      %4876 = vmatprep.mubr.bf16.mxu0 %v4125
      %4877 = vmatmul.mubr.bf16.gmra.mxu0 %v4124
      %v4878 = vpop.f32.mrf.mxu0
      %v4879 = vadd.f32 0.0, %v4878
      %v4880 = vpop.f32.mrf.mxu0
      %v4881 = vpop.f32.mrf.mxu0
      %v4882 = vadd.f32 0.0, %v4881
      %v4883 = vpop.f32.mrf.mxu0
      %4884 = vmatprep.mubr.bf16.mxu0 %v4134
      %4885 = vmatmul.mubr.bf16.gmra.mxu0 %v4133
      %v4886 = vpop.f32.mrf.mxu0
      %v4887 = vadd.f32 0.0, %v4886
      %v4888 = vpop.f32.mrf.mxu0
      %v4889 = vpop.f32.mrf.mxu0
      %v4890 = vadd.f32 0.0, %v4889
      %v4891 = vpop.f32.mrf.mxu0
      %4892 = vmatprep.mubr.bf16.mxu0 %v4143
      %4893 = vmatmul.mubr.bf16.gmra.mxu0 %v4142
      %v4894 = vpop.f32.mrf.mxu0
      %v4895 = vadd.f32 0.0, %v4894
      %v4896 = vpop.f32.mrf.mxu0
      %v4897 = vpop.f32.mrf.mxu0
      %v4898 = vadd.f32 0.0, %v4897
      %v4899 = vpop.f32.mrf.mxu0
      %4900 = vmatprep.mubr.bf16.mxu0 %v4152
      %4901 = vmatmul.mubr.bf16.gmra.mxu0 %v4151
      %v4902 = vpop.f32.mrf.mxu0
      %v4903 = vadd.f32 0.0, %v4902
      %v4904 = vpop.f32.mrf.mxu0
      %v4905 = vpop.f32.mrf.mxu0
      %v4906 = vadd.f32 0.0, %v4905
      %v4907 = vpop.f32.mrf.mxu0
      %4908 = vmatprep.mubr.bf16.mxu0 %v4161
      %4909 = vmatmul.mubr.bf16.gmra.mxu0 %v4160
      %v4910 = vpop.f32.mrf.mxu0
      %v4911 = vadd.f32 0.0, %v4910
      %v4912 = vpop.f32.mrf.mxu0
      %v4913 = vpop.f32.mrf.mxu0
      %v4914 = vadd.f32 0.0, %v4913
      %v4915 = vpop.f32.mrf.mxu0
      %4916 = vmatprep.mubr.bf16.mxu0 %v4170
      %4917 = vmatmul.mubr.bf16.gmra.mxu0 %v4169
      %v4918 = vpop.f32.mrf.mxu0
      %v4919 = vadd.f32 0.0, %v4918
      %v4920 = vpop.f32.mrf.mxu0
      %v4921 = vpop.f32.mrf.mxu0
      %v4922 = vadd.f32 0.0, %v4921
      %v4923 = vpop.f32.mrf.mxu0
      %4924 = vmatprep.mubr.bf16.mxu0 %v4179
      %4925 = vmatmul.mubr.bf16.gmra.mxu0 %v4178
      %v4926 = vpop.f32.mrf.mxu0
      %v4927 = vadd.f32 0.0, %v4926
      %v4928 = vpop.f32.mrf.mxu0
      %v4929 = vpop.f32.mrf.mxu0
      %v4930 = vadd.f32 0.0, %v4929
      %v4931 = vpop.f32.mrf.mxu0
      %4932 = vmatprep.mubr.bf16.mxu0 %v4188
      %4933 = vmatmul.mubr.bf16.gmra.mxu0 %v4187
      %v4934 = vpop.f32.mrf.mxu0
      %v4935 = vadd.f32 0.0, %v4934
      %v4936 = vpop.f32.mrf.mxu0
      %v4937 = vpop.f32.mrf.mxu0
      %v4938 = vadd.f32 0.0, %v4937
      %v4939 = vpop.f32.mrf.mxu0
      %4940 = vmatprep.mubr.bf16.mxu0 %v4197
      %4941 = vmatmul.mubr.bf16.gmra.mxu0 %v4196
      %v4942 = vpop.f32.mrf.mxu0
      %v4943 = vadd.f32 0.0, %v4942
      %v4944 = vpop.f32.mrf.mxu0
      %v4945 = vpop.f32.mrf.mxu0
      %v4946 = vadd.f32 0.0, %v4945
      %v4947 = vpop.f32.mrf.mxu0
      %4948 = vmatprep.mubr.bf16.mxu0 %v4206
      %4949 = vmatmul.mubr.bf16.gmra.mxu0 %v4205
      %v4950 = vpop.f32.mrf.mxu0
      %v4951 = vadd.f32 0.0, %v4950
      %v4952 = vpop.f32.mrf.mxu0
      %v4953 = vpop.f32.mrf.mxu0
      %v4954 = vadd.f32 0.0, %v4953
      %v4955 = vpop.f32.mrf.mxu0
      %4956 = vmatprep.mubr.bf16.mxu0 %v4215
      %4957 = vmatmul.mubr.bf16.gmra.mxu0 %v4214
      %v4958 = vpop.f32.mrf.mxu0
      %v4959 = vadd.f32 0.0, %v4958
      %v4960 = vpop.f32.mrf.mxu0
      %v4961 = vpop.f32.mrf.mxu0
      %v4962 = vadd.f32 0.0, %v4961
      %v4963 = vpop.f32.mrf.mxu0
      %4964 = vmatprep.mubr.bf16.mxu0 %v4224
      %4965 = vmatmul.mubr.bf16.gmra.mxu0 %v4223
      %v4966 = vpop.f32.mrf.mxu0
      %v4967 = vadd.f32 0.0, %v4966
      %v4968 = vpop.f32.mrf.mxu0
      %v4969 = vpop.f32.mrf.mxu0
      %v4970 = vadd.f32 0.0, %v4969
      %v4971 = vpop.f32.mrf.mxu0
      %4972 = vmatprep.mubr.bf16.mxu0 %v4233
      %4973 = vmatmul.mubr.bf16.gmra.mxu0 %v4232
      %v4974 = vpop.f32.mrf.mxu0
      %v4975 = vadd.f32 0.0, %v4974
      %v4976 = vpop.f32.mrf.mxu0
      %v4977 = vpop.f32.mrf.mxu0
      %v4978 = vadd.f32 0.0, %v4977
      %v4979 = vpop.f32.mrf.mxu0
      %4980 = vmatprep.mubr.bf16.mxu0 %v4242
      %4981 = vmatmul.mubr.bf16.gmra.mxu0 %v4241
      %v4982 = vpop.f32.mrf.mxu0
      %v4983 = vadd.f32 0.0, %v4982
      %v4984 = vpop.f32.mrf.mxu0
      %v4985 = vpop.f32.mrf.mxu0
      %v4986 = vadd.f32 0.0, %v4985
      %v4987 = vpop.f32.mrf.mxu0
      %4988 = vmatprep.mubr.bf16.mxu0 %v4251
      %4989 = vmatmul.mubr.bf16.gmra.mxu0 %v4250
      %v4990 = vpop.f32.mrf.mxu0
      %v4991 = vadd.f32 0.0, %v4990
      %v4992 = vpop.f32.mrf.mxu0
      %v4993 = vpop.f32.mrf.mxu0
      %v4994 = vadd.f32 0.0, %v4993
      %v4995 = vpop.f32.mrf.mxu0
      %4996 = vmatprep.mubr.bf16.mxu0 %v4260
      %4997 = vmatmul.mubr.bf16.gmra.mxu0 %v4259
      %v4998 = vpop.f32.mrf.mxu0
      %v4999 = vadd.f32 0.0, %v4998
      %v5000 = vpop.f32.mrf.mxu0
      %v5001 = vpop.f32.mrf.mxu0
      %v5002 = vadd.f32 0.0, %v5001
      %v5003 = vpop.f32.mrf.mxu0
      %5004 = vdwg.mxu0
      %5005 = vmatprep.subr.bf16.mxu0 0
      %5006 = vmatpush1.bf16.msra.mxu0 %v4723
      %5007 = vmatprep.subr.bf16.mxu0 0
      %5008 = vmatpush1.bf16.msra.mxu0 %v4722
      %5009 = vmatprep.subr.bf16.mxu0 0
      %5010 = vmatpush1.bf16.msra.mxu0 %v4721
      %5011 = vmatprep.subr.bf16.mxu0 0
      %5012 = vmatpush1.bf16.msra.mxu0 %v4720
      %5013 = vmatprep.subr.bf16.mxu0 0
      %5014 = vmatpush1.bf16.msra.mxu0 %v4719
      %5015 = vmatprep.subr.bf16.mxu0 0
      %5016 = vmatpush1.bf16.msra.mxu0 %v4718
      %5017 = vmatprep.subr.bf16.mxu0 0
      %5018 = vmatpush1.bf16.msra.mxu0 %v4717
      %5019 = vmatprep.subr.bf16.mxu0 0
      %5020 = vmatpush1.bf16.msra.mxu0 %v4716
      %5021 = vmatprep.subr.bf16.mxu0 0
      %5022 = vmatpush2.bf16.msra.mxu0 %v4731
      %5023 = vmatprep.subr.bf16.mxu0 0
      %5024 = vmatpush2.bf16.msra.mxu0 %v4730
      %5025 = vmatprep.subr.bf16.mxu0 0
      %5026 = vmatpush2.bf16.msra.mxu0 %v4729
      %5027 = vmatprep.subr.bf16.mxu0 0
      %5028 = vmatpush2.bf16.msra.mxu0 %v4728
      %5029 = vmatprep.subr.bf16.mxu0 0
      %5030 = vmatpush2.bf16.msra.mxu0 %v4727
      %5031 = vmatprep.subr.bf16.mxu0 0
      %5032 = vmatpush2.bf16.msra.mxu0 %v4726
      %5033 = vmatprep.subr.bf16.mxu0 0
      %5034 = vmatpush2.bf16.msra.mxu0 %v4725
      %5035 = vmatprep.subr.bf16.mxu0 0
      %5036 = vmatpush2.bf16.msra.mxu0 %v4724
      %5037 = vmatprep.mubr.bf16.mxu0 %v4127
      %5038 = vmatmul.mubr.bf16.gmra.mxu0 %v4126
      %v5039 = vpop.f32.mrf.mxu0
      %v5040 = vadd.f32 %v4879, %v5039
      %v5041 = vpop.f32.mrf.mxu0
      %v5042 = vpop.f32.mrf.mxu0
      %v5043 = vadd.f32 %v4882, %v5042
      %v5044 = vpop.f32.mrf.mxu0
      %5045 = vmatprep.mubr.bf16.mxu0 %v4136
      %5046 = vmatmul.mubr.bf16.gmra.mxu0 %v4135
      %v5047 = vpop.f32.mrf.mxu0
      %v5048 = vadd.f32 %v4887, %v5047
      %v5049 = vpop.f32.mrf.mxu0
      %v5050 = vpop.f32.mrf.mxu0
      %v5051 = vadd.f32 %v4890, %v5050
      %v5052 = vpop.f32.mrf.mxu0
      %5053 = vmatprep.mubr.bf16.mxu0 %v4145
      %5054 = vmatmul.mubr.bf16.gmra.mxu0 %v4144
      %v5055 = vpop.f32.mrf.mxu0
      %v5056 = vadd.f32 %v4895, %v5055
      %v5057 = vpop.f32.mrf.mxu0
      %v5058 = vpop.f32.mrf.mxu0
      %v5059 = vadd.f32 %v4898, %v5058
      %v5060 = vpop.f32.mrf.mxu0
      %5061 = vmatprep.mubr.bf16.mxu0 %v4154
      %5062 = vmatmul.mubr.bf16.gmra.mxu0 %v4153
      %v5063 = vpop.f32.mrf.mxu0
      %v5064 = vadd.f32 %v4903, %v5063
      %v5065 = vpop.f32.mrf.mxu0
      %v5066 = vpop.f32.mrf.mxu0
      %v5067 = vadd.f32 %v4906, %v5066
      %v5068 = vpop.f32.mrf.mxu0
      %5069 = vmatprep.mubr.bf16.mxu0 %v4163
      %5070 = vmatmul.mubr.bf16.gmra.mxu0 %v4162
      %v5071 = vpop.f32.mrf.mxu0
      %v5072 = vadd.f32 %v4911, %v5071
      %v5073 = vpop.f32.mrf.mxu0
      %v5074 = vpop.f32.mrf.mxu0
      %v5075 = vadd.f32 %v4914, %v5074
      %v5076 = vpop.f32.mrf.mxu0
      %5077 = vmatprep.mubr.bf16.mxu0 %v4172
      %5078 = vmatmul.mubr.bf16.gmra.mxu0 %v4171
      %v5079 = vpop.f32.mrf.mxu0
      %v5080 = vadd.f32 %v4919, %v5079
      %v5081 = vpop.f32.mrf.mxu0
      %v5082 = vpop.f32.mrf.mxu0
      %v5083 = vadd.f32 %v4922, %v5082
      %v5084 = vpop.f32.mrf.mxu0
      %5085 = vmatprep.mubr.bf16.mxu0 %v4181
      %5086 = vmatmul.mubr.bf16.gmra.mxu0 %v4180
      %v5087 = vpop.f32.mrf.mxu0
      %v5088 = vadd.f32 %v4927, %v5087
      %v5089 = vpop.f32.mrf.mxu0
      %v5090 = vpop.f32.mrf.mxu0
      %v5091 = vadd.f32 %v4930, %v5090
      %v5092 = vpop.f32.mrf.mxu0
      %5093 = vmatprep.mubr.bf16.mxu0 %v4190
      %5094 = vmatmul.mubr.bf16.gmra.mxu0 %v4189
      %v5095 = vpop.f32.mrf.mxu0
      %v5096 = vadd.f32 %v4935, %v5095
      %v5097 = vpop.f32.mrf.mxu0
      %v5098 = vpop.f32.mrf.mxu0
      %v5099 = vadd.f32 %v4938, %v5098
      %v5100 = vpop.f32.mrf.mxu0
      %5101 = vmatprep.mubr.bf16.mxu0 %v4199
      %5102 = vmatmul.mubr.bf16.gmra.mxu0 %v4198
      %v5103 = vpop.f32.mrf.mxu0
      %v5104 = vadd.f32 %v4943, %v5103
      %v5105 = vpop.f32.mrf.mxu0
      %v5106 = vpop.f32.mrf.mxu0
      %v5107 = vadd.f32 %v4946, %v5106
      %v5108 = vpop.f32.mrf.mxu0
      %5109 = vmatprep.mubr.bf16.mxu0 %v4208
      %5110 = vmatmul.mubr.bf16.gmra.mxu0 %v4207
      %v5111 = vpop.f32.mrf.mxu0
      %v5112 = vadd.f32 %v4951, %v5111
      %v5113 = vpop.f32.mrf.mxu0
      %v5114 = vpop.f32.mrf.mxu0
      %v5115 = vadd.f32 %v4954, %v5114
      %v5116 = vpop.f32.mrf.mxu0
      %5117 = vmatprep.mubr.bf16.mxu0 %v4217
      %5118 = vmatmul.mubr.bf16.gmra.mxu0 %v4216
      %v5119 = vpop.f32.mrf.mxu0
      %v5120 = vadd.f32 %v4959, %v5119
      %v5121 = vpop.f32.mrf.mxu0
      %v5122 = vpop.f32.mrf.mxu0
      %v5123 = vadd.f32 %v4962, %v5122
      %v5124 = vpop.f32.mrf.mxu0
      %5125 = vmatprep.mubr.bf16.mxu0 %v4226
      %5126 = vmatmul.mubr.bf16.gmra.mxu0 %v4225
      %v5127 = vpop.f32.mrf.mxu0
      %v5128 = vadd.f32 %v4967, %v5127
      %v5129 = vpop.f32.mrf.mxu0
      %v5130 = vpop.f32.mrf.mxu0
      %v5131 = vadd.f32 %v4970, %v5130
      %v5132 = vpop.f32.mrf.mxu0
      %5133 = vmatprep.mubr.bf16.mxu0 %v4235
      %5134 = vmatmul.mubr.bf16.gmra.mxu0 %v4234
      %v5135 = vpop.f32.mrf.mxu0
      %v5136 = vadd.f32 %v4975, %v5135
      %v5137 = vpop.f32.mrf.mxu0
      %v5138 = vpop.f32.mrf.mxu0
      %v5139 = vadd.f32 %v4978, %v5138
      %v5140 = vpop.f32.mrf.mxu0
      %5141 = vmatprep.mubr.bf16.mxu0 %v4244
      %5142 = vmatmul.mubr.bf16.gmra.mxu0 %v4243
      %v5143 = vpop.f32.mrf.mxu0
      %v5144 = vadd.f32 %v4983, %v5143
      %v5145 = vpop.f32.mrf.mxu0
      %v5146 = vpop.f32.mrf.mxu0
      %v5147 = vadd.f32 %v4986, %v5146
      %v5148 = vpop.f32.mrf.mxu0
      %5149 = vmatprep.mubr.bf16.mxu0 %v4253
      %5150 = vmatmul.mubr.bf16.gmra.mxu0 %v4252
      %v5151 = vpop.f32.mrf.mxu0
      %v5152 = vadd.f32 %v4991, %v5151
      %v5153 = vpop.f32.mrf.mxu0
      %v5154 = vpop.f32.mrf.mxu0
      %v5155 = vadd.f32 %v4994, %v5154
      %v5156 = vpop.f32.mrf.mxu0
      %5157 = vmatprep.mubr.bf16.mxu0 %v4262
      %5158 = vmatmul.mubr.bf16.gmra.mxu0 %v4261
      %v5159 = vpop.f32.mrf.mxu0
      %v5160 = vadd.f32 %v4999, %v5159
      %v5161 = vpop.f32.mrf.mxu0
      %v5162 = vpop.f32.mrf.mxu0
      %v5163 = vadd.f32 %v5002, %v5162
      %v5164 = vpop.f32.mrf.mxu0
      %5165 = vdwg.mxu0
      %5166 = vmatprep.subr.bf16.mxu0 0
      %5167 = vmatpush1.bf16.msra.mxu0 %v4739
      %5168 = vmatprep.subr.bf16.mxu0 0
      %5169 = vmatpush1.bf16.msra.mxu0 %v4738
      %5170 = vmatprep.subr.bf16.mxu0 0
      %5171 = vmatpush1.bf16.msra.mxu0 %v4737
      %5172 = vmatprep.subr.bf16.mxu0 0
      %5173 = vmatpush1.bf16.msra.mxu0 %v4736
      %5174 = vmatprep.subr.bf16.mxu0 0
      %5175 = vmatpush1.bf16.msra.mxu0 %v4735
      %5176 = vmatprep.subr.bf16.mxu0 0
      %5177 = vmatpush1.bf16.msra.mxu0 %v4734
      %5178 = vmatprep.subr.bf16.mxu0 0
      %5179 = vmatpush1.bf16.msra.mxu0 %v4733
      %5180 = vmatprep.subr.bf16.mxu0 0
      %5181 = vmatpush1.bf16.msra.mxu0 %v4732
      %5182 = vmatprep.subr.bf16.mxu0 0
      %5183 = vmatpush2.bf16.msra.mxu0 %v4747
      %5184 = vmatprep.subr.bf16.mxu0 0
      %5185 = vmatpush2.bf16.msra.mxu0 %v4746
      %5186 = vmatprep.subr.bf16.mxu0 0
      %5187 = vmatpush2.bf16.msra.mxu0 %v4745
      %5188 = vmatprep.subr.bf16.mxu0 0
      %5189 = vmatpush2.bf16.msra.mxu0 %v4744
      %5190 = vmatprep.subr.bf16.mxu0 0
      %5191 = vmatpush2.bf16.msra.mxu0 %v4743
      %5192 = vmatprep.subr.bf16.mxu0 0
      %5193 = vmatpush2.bf16.msra.mxu0 %v4742
      %5194 = vmatprep.subr.bf16.mxu0 0
      %5195 = vmatpush2.bf16.msra.mxu0 %v4741
      %5196 = vmatprep.subr.bf16.mxu0 0
      %5197 = vmatpush2.bf16.msra.mxu0 %v4740
      %5198 = vmatprep.mubr.bf16.mxu0 %v4129
      %5199 = vmatmul.mubr.bf16.gmra.mxu0 %v4128
      %v5200 = vpop.f32.mrf.mxu0
      %v5201 = vadd.f32 %v5040, %v5200
      %v5202 = vpop.f32.mrf.mxu0
      %v5203 = vpop.f32.mrf.mxu0
      %v5204 = vadd.f32 %v5043, %v5203
      %v5205 = vpop.f32.mrf.mxu0
      %5206 = vmatprep.mubr.bf16.mxu0 %v4138
      %5207 = vmatmul.mubr.bf16.gmra.mxu0 %v4137
      %v5208 = vpop.f32.mrf.mxu0
      %v5209 = vadd.f32 %v5048, %v5208
      %v5210 = vpop.f32.mrf.mxu0
      %v5211 = vpop.f32.mrf.mxu0
      %v5212 = vadd.f32 %v5051, %v5211
      %v5213 = vpop.f32.mrf.mxu0
      %5214 = vmatprep.mubr.bf16.mxu0 %v4147
      %5215 = vmatmul.mubr.bf16.gmra.mxu0 %v4146
      %v5216 = vpop.f32.mrf.mxu0
      %v5217 = vadd.f32 %v5056, %v5216
      %v5218 = vpop.f32.mrf.mxu0
      %v5219 = vpop.f32.mrf.mxu0
      %v5220 = vadd.f32 %v5059, %v5219
      %v5221 = vpop.f32.mrf.mxu0
      %5222 = vmatprep.mubr.bf16.mxu0 %v4156
      %5223 = vmatmul.mubr.bf16.gmra.mxu0 %v4155
      %v5224 = vpop.f32.mrf.mxu0
      %v5225 = vadd.f32 %v5064, %v5224
      %v5226 = vpop.f32.mrf.mxu0
      %v5227 = vpop.f32.mrf.mxu0
      %v5228 = vadd.f32 %v5067, %v5227
      %v5229 = vpop.f32.mrf.mxu0
      %5230 = vmatprep.mubr.bf16.mxu0 %v4165
      %5231 = vmatmul.mubr.bf16.gmra.mxu0 %v4164
      %v5232 = vpop.f32.mrf.mxu0
      %v5233 = vadd.f32 %v5072, %v5232
      %v5234 = vpop.f32.mrf.mxu0
      %v5235 = vpop.f32.mrf.mxu0
      %v5236 = vadd.f32 %v5075, %v5235
      %v5237 = vpop.f32.mrf.mxu0
      %5238 = vmatprep.mubr.bf16.mxu0 %v4174
      %5239 = vmatmul.mubr.bf16.gmra.mxu0 %v4173
      %v5240 = vpop.f32.mrf.mxu0
      %v5241 = vadd.f32 %v5080, %v5240
      %v5242 = vpop.f32.mrf.mxu0
      %v5243 = vpop.f32.mrf.mxu0
      %v5244 = vadd.f32 %v5083, %v5243
      %v5245 = vpop.f32.mrf.mxu0
      %5246 = vmatprep.mubr.bf16.mxu0 %v4183
      %5247 = vmatmul.mubr.bf16.gmra.mxu0 %v4182
      %v5248 = vpop.f32.mrf.mxu0
      %v5249 = vadd.f32 %v5088, %v5248
      %v5250 = vpop.f32.mrf.mxu0
      %v5251 = vpop.f32.mrf.mxu0
      %v5252 = vadd.f32 %v5091, %v5251
      %v5253 = vpop.f32.mrf.mxu0
      %5254 = vmatprep.mubr.bf16.mxu0 %v4192
      %5255 = vmatmul.mubr.bf16.gmra.mxu0 %v4191
      %v5256 = vpop.f32.mrf.mxu0
      %v5257 = vadd.f32 %v5096, %v5256
      %v5258 = vpop.f32.mrf.mxu0
      %v5259 = vpop.f32.mrf.mxu0
      %v5260 = vadd.f32 %v5099, %v5259
      %v5261 = vpop.f32.mrf.mxu0
      %5262 = vmatprep.mubr.bf16.mxu0 %v4201
      %5263 = vmatmul.mubr.bf16.gmra.mxu0 %v4200
      %v5264 = vpop.f32.mrf.mxu0
      %v5265 = vadd.f32 %v5104, %v5264
      %v5266 = vpop.f32.mrf.mxu0
      %v5267 = vpop.f32.mrf.mxu0
      %v5268 = vadd.f32 %v5107, %v5267
      %v5269 = vpop.f32.mrf.mxu0
      %5270 = vmatprep.mubr.bf16.mxu0 %v4210
      %5271 = vmatmul.mubr.bf16.gmra.mxu0 %v4209
      %v5272 = vpop.f32.mrf.mxu0
      %v5273 = vadd.f32 %v5112, %v5272
      %v5274 = vpop.f32.mrf.mxu0
      %v5275 = vpop.f32.mrf.mxu0
      %v5276 = vadd.f32 %v5115, %v5275
      %v5277 = vpop.f32.mrf.mxu0
      %5278 = vmatprep.mubr.bf16.mxu0 %v4219
      %5279 = vmatmul.mubr.bf16.gmra.mxu0 %v4218
      %v5280 = vpop.f32.mrf.mxu0
      %v5281 = vadd.f32 %v5120, %v5280
      %v5282 = vpop.f32.mrf.mxu0
      %v5283 = vpop.f32.mrf.mxu0
      %v5284 = vadd.f32 %v5123, %v5283
      %v5285 = vpop.f32.mrf.mxu0
      %5286 = vmatprep.mubr.bf16.mxu0 %v4228
      %5287 = vmatmul.mubr.bf16.gmra.mxu0 %v4227
      %v5288 = vpop.f32.mrf.mxu0
      %v5289 = vadd.f32 %v5128, %v5288
      %v5290 = vpop.f32.mrf.mxu0
      %v5291 = vpop.f32.mrf.mxu0
      %v5292 = vadd.f32 %v5131, %v5291
      %v5293 = vpop.f32.mrf.mxu0
      %5294 = vmatprep.mubr.bf16.mxu0 %v4237
      %5295 = vmatmul.mubr.bf16.gmra.mxu0 %v4236
      %v5296 = vpop.f32.mrf.mxu0
      %v5297 = vadd.f32 %v5136, %v5296
      %v5298 = vpop.f32.mrf.mxu0
      %v5299 = vpop.f32.mrf.mxu0
      %v5300 = vadd.f32 %v5139, %v5299
      %v5301 = vpop.f32.mrf.mxu0
      %5302 = vmatprep.mubr.bf16.mxu0 %v4246
      %5303 = vmatmul.mubr.bf16.gmra.mxu0 %v4245
      %v5304 = vpop.f32.mrf.mxu0
      %v5305 = vadd.f32 %v5144, %v5304
      %v5306 = vpop.f32.mrf.mxu0
      %v5307 = vpop.f32.mrf.mxu0
      %v5308 = vadd.f32 %v5147, %v5307
      %v5309 = vpop.f32.mrf.mxu0
      %5310 = vmatprep.mubr.bf16.mxu0 %v4255
      %5311 = vmatmul.mubr.bf16.gmra.mxu0 %v4254
      %v5312 = vpop.f32.mrf.mxu0
      %v5313 = vadd.f32 %v5152, %v5312
      %v5314 = vpop.f32.mrf.mxu0
      %v5315 = vpop.f32.mrf.mxu0
      %v5316 = vadd.f32 %v5155, %v5315
      %v5317 = vpop.f32.mrf.mxu0
      %5318 = vmatprep.mubr.bf16.mxu0 %v4264
      %5319 = vmatmul.mubr.bf16.gmra.mxu0 %v4263
      %v5320 = vpop.f32.mrf.mxu0
      %v5321 = vadd.f32 %v5160, %v5320
      %v5322 = vpop.f32.mrf.mxu0
      %v5323 = vpop.f32.mrf.mxu0
      %v5324 = vadd.f32 %v5163, %v5323
      %v5325 = vpop.f32.mrf.mxu0
      %5326 = vdwg.mxu0
      %5327 = vmatprep.subr.bf16.mxu0 0
      %5328 = vmatpush1.bf16.msra.mxu0 %v4755
      %5329 = vmatprep.subr.bf16.mxu0 0
      %5330 = vmatpush1.bf16.msra.mxu0 %v4754
      %5331 = vmatprep.subr.bf16.mxu0 0
      %5332 = vmatpush1.bf16.msra.mxu0 %v4753
      %5333 = vmatprep.subr.bf16.mxu0 0
      %5334 = vmatpush1.bf16.msra.mxu0 %v4752
      %5335 = vmatprep.subr.bf16.mxu0 0
      %5336 = vmatpush1.bf16.msra.mxu0 %v4751
      %5337 = vmatprep.subr.bf16.mxu0 0
      %5338 = vmatpush1.bf16.msra.mxu0 %v4750
      %5339 = vmatprep.subr.bf16.mxu0 0
      %5340 = vmatpush1.bf16.msra.mxu0 %v4749
      %5341 = vmatprep.subr.bf16.mxu0 0
      %5342 = vmatpush1.bf16.msra.mxu0 %v4748
      %5343 = vmatprep.subr.bf16.mxu0 0
      %5344 = vmatpush2.bf16.msra.mxu0 %v4763
      %5345 = vmatprep.subr.bf16.mxu0 0
      %5346 = vmatpush2.bf16.msra.mxu0 %v4762
      %5347 = vmatprep.subr.bf16.mxu0 0
      %5348 = vmatpush2.bf16.msra.mxu0 %v4761
      %5349 = vmatprep.subr.bf16.mxu0 0
      %5350 = vmatpush2.bf16.msra.mxu0 %v4760
      %5351 = vmatprep.subr.bf16.mxu0 0
      %5352 = vmatpush2.bf16.msra.mxu0 %v4759
      %5353 = vmatprep.subr.bf16.mxu0 0
      %5354 = vmatpush2.bf16.msra.mxu0 %v4758
      %5355 = vmatprep.subr.bf16.mxu0 0
      %5356 = vmatpush2.bf16.msra.mxu0 %v4757
      %5357 = vmatprep.subr.bf16.mxu0 0
      %5358 = vmatpush2.bf16.msra.mxu0 %v4756
      %5359 = vmatprep.mubr.bf16.mxu0 %v4131
      %5360 = vmatmul.mubr.bf16.gmra.mxu0 %v4130
      %v5361 = vpop.f32.mrf.mxu0
      %v5362 = vadd.f32 %v5201, %v5361
      %v5363 = vpop.f32.mrf.mxu0
      %v5364 = vpop.f32.mrf.mxu0
      %v5365 = vadd.f32 %v5204, %v5364
      %v5366 = vpop.f32.mrf.mxu0
      %5367 = vmatprep.mubr.bf16.mxu0 %v4140
      %5368 = vmatmul.mubr.bf16.gmra.mxu0 %v4139
      %v5369 = vpop.f32.mrf.mxu0
      %v5370 = vadd.f32 %v5209, %v5369
      %v5371 = vpop.f32.mrf.mxu0
      %v5372 = vpop.f32.mrf.mxu0
      %v5373 = vadd.f32 %v5212, %v5372
      %v5374 = vpop.f32.mrf.mxu0
      %5375 = vmatprep.mubr.bf16.mxu0 %v4149
      %5376 = vmatmul.mubr.bf16.gmra.mxu0 %v4148
      %v5377 = vpop.f32.mrf.mxu0
      %v5378 = vadd.f32 %v5217, %v5377
      %v5379 = vpop.f32.mrf.mxu0
      %v5380 = vpop.f32.mrf.mxu0
      %v5381 = vadd.f32 %v5220, %v5380
      %v5382 = vpop.f32.mrf.mxu0
      %5383 = vmatprep.mubr.bf16.mxu0 %v4158
      %5384 = vmatmul.mubr.bf16.gmra.mxu0 %v4157
      %v5385 = vpop.f32.mrf.mxu0
      %v5386 = vadd.f32 %v5225, %v5385
      %v5387 = vpop.f32.mrf.mxu0
      %v5388 = vpop.f32.mrf.mxu0
      %v5389 = vadd.f32 %v5228, %v5388
      %v5390 = vpop.f32.mrf.mxu0
      %5391 = vmatprep.mubr.bf16.mxu0 %v4167
      %5392 = vmatmul.mubr.bf16.gmra.mxu0 %v4166
      %v5393 = vpop.f32.mrf.mxu0
      %v5394 = vadd.f32 %v5233, %v5393
      %v5395 = vpop.f32.mrf.mxu0
      %v5396 = vpop.f32.mrf.mxu0
      %v5397 = vadd.f32 %v5236, %v5396
      %v5398 = vpop.f32.mrf.mxu0
      %5399 = vmatprep.mubr.bf16.mxu0 %v4176
      %5400 = vmatmul.mubr.bf16.gmra.mxu0 %v4175
      %v5401 = vpop.f32.mrf.mxu0
      %v5402 = vadd.f32 %v5241, %v5401
      %v5403 = vpop.f32.mrf.mxu0
      %v5404 = vpop.f32.mrf.mxu0
      %v5405 = vadd.f32 %v5244, %v5404
      %v5406 = vpop.f32.mrf.mxu0
      %5407 = vmatprep.mubr.bf16.mxu0 %v4185
      %5408 = vmatmul.mubr.bf16.gmra.mxu0 %v4184
      %v5409 = vpop.f32.mrf.mxu0
      %v5410 = vadd.f32 %v5249, %v5409
      %v5411 = vpop.f32.mrf.mxu0
      %v5412 = vpop.f32.mrf.mxu0
      %v5413 = vadd.f32 %v5252, %v5412
      %v5414 = vpop.f32.mrf.mxu0
      %5415 = vmatprep.mubr.bf16.mxu0 %v4194
      %5416 = vmatmul.mubr.bf16.gmra.mxu0 %v4193
      %v5417 = vpop.f32.mrf.mxu0
      %v5418 = vadd.f32 %v5257, %v5417
      %v5419 = vpop.f32.mrf.mxu0
      %v5420 = vpop.f32.mrf.mxu0
      %v5421 = vadd.f32 %v5260, %v5420
      %v5422 = vpop.f32.mrf.mxu0
      %5423 = vmatprep.mubr.bf16.mxu0 %v4203
      %5424 = vmatmul.mubr.bf16.gmra.mxu0 %v4202
      %v5425 = vpop.f32.mrf.mxu0
      %v5426 = vadd.f32 %v5265, %v5425
      %v5427 = vpop.f32.mrf.mxu0
      %v5428 = vpop.f32.mrf.mxu0
      %v5429 = vadd.f32 %v5268, %v5428
      %v5430 = vpop.f32.mrf.mxu0
      %5431 = vmatprep.mubr.bf16.mxu0 %v4212
      %5432 = vmatmul.mubr.bf16.gmra.mxu0 %v4211
      %v5433 = vpop.f32.mrf.mxu0
      %v5434 = vadd.f32 %v5273, %v5433
      %v5435 = vpop.f32.mrf.mxu0
      %v5436 = vpop.f32.mrf.mxu0
      %v5437 = vadd.f32 %v5276, %v5436
      %v5438 = vpop.f32.mrf.mxu0
      %5439 = vmatprep.mubr.bf16.mxu0 %v4221
      %5440 = vmatmul.mubr.bf16.gmra.mxu0 %v4220
      %v5441 = vpop.f32.mrf.mxu0
      %v5442 = vadd.f32 %v5281, %v5441
      %v5443 = vpop.f32.mrf.mxu0
      %v5444 = vpop.f32.mrf.mxu0
      %v5445 = vadd.f32 %v5284, %v5444
      %v5446 = vpop.f32.mrf.mxu0
      %5447 = vmatprep.mubr.bf16.mxu0 %v4230
      %5448 = vmatmul.mubr.bf16.gmra.mxu0 %v4229
      %v5449 = vpop.f32.mrf.mxu0
      %v5450 = vadd.f32 %v5289, %v5449
      %v5451 = vpop.f32.mrf.mxu0
      %v5452 = vpop.f32.mrf.mxu0
      %v5453 = vadd.f32 %v5292, %v5452
      %v5454 = vpop.f32.mrf.mxu0
      %5455 = vmatprep.mubr.bf16.mxu0 %v4239
      %5456 = vmatmul.mubr.bf16.gmra.mxu0 %v4238
      %v5457 = vpop.f32.mrf.mxu0
      %v5458 = vadd.f32 %v5297, %v5457
      %v5459 = vpop.f32.mrf.mxu0
      %v5460 = vpop.f32.mrf.mxu0
      %v5461 = vadd.f32 %v5300, %v5460
      %v5462 = vpop.f32.mrf.mxu0
      %5463 = vmatprep.mubr.bf16.mxu0 %v4248
      %5464 = vmatmul.mubr.bf16.gmra.mxu0 %v4247
      %v5465 = vpop.f32.mrf.mxu0
      %v5466 = vadd.f32 %v5305, %v5465
      %v5467 = vpop.f32.mrf.mxu0
      %v5468 = vpop.f32.mrf.mxu0
      %v5469 = vadd.f32 %v5308, %v5468
      %v5470 = vpop.f32.mrf.mxu0
      %5471 = vmatprep.mubr.bf16.mxu0 %v4257
      %5472 = vmatmul.mubr.bf16.gmra.mxu0 %v4256
      %v5473 = vpop.f32.mrf.mxu0
      %v5474 = vadd.f32 %v5313, %v5473
      %v5475 = vpop.f32.mrf.mxu0
      %v5476 = vpop.f32.mrf.mxu0
      %v5477 = vadd.f32 %v5316, %v5476
      %v5478 = vpop.f32.mrf.mxu0
      %5479 = vmatprep.mubr.bf16.mxu0 %v4266
      %5480 = vmatmul.mubr.bf16.gmra.mxu0 %v4265
      %v5481 = vpop.f32.mrf.mxu0
      %v5482 = vadd.f32 %v5321, %v5481
      %v5483 = vpop.f32.mrf.mxu0
      %v5484 = vpop.f32.mrf.mxu0
      %v5485 = vadd.f32 %v5324, %v5484
      %v5486 = vpop.f32.mrf.mxu0
      %5487 = vdwg.mxu0
      %5488 = vmatprep.subr.bf16.mxu0 0
      %5489 = vmatpush1.bf16.msra.mxu0 %v4771
      %5490 = vmatprep.subr.bf16.mxu0 0
      %5491 = vmatpush1.bf16.msra.mxu0 %v4770
      %5492 = vmatprep.subr.bf16.mxu0 0
      %5493 = vmatpush1.bf16.msra.mxu0 %v4769
      %5494 = vmatprep.subr.bf16.mxu0 0
      %5495 = vmatpush1.bf16.msra.mxu0 %v4768
      %5496 = vmatprep.subr.bf16.mxu0 0
      %5497 = vmatpush1.bf16.msra.mxu0 %v4767
      %5498 = vmatprep.subr.bf16.mxu0 0
      %5499 = vmatpush1.bf16.msra.mxu0 %v4766
      %5500 = vmatprep.subr.bf16.mxu0 0
      %5501 = vmatpush1.bf16.msra.mxu0 %v4765
      %5502 = vmatprep.subr.bf16.mxu0 0
      %5503 = vmatpush1.bf16.msra.mxu0 %v4764
      %5504 = vmatprep.subr.bf16.mxu0 0
      %5505 = vmatpush2.bf16.msra.mxu0 0
      %5506 = vmatprep.subr.bf16.mxu0 0
      %5507 = vmatpush2.bf16.msra.mxu0 0
      %5508 = vmatprep.subr.bf16.mxu0 0
      %5509 = vmatpush2.bf16.msra.mxu0 0
      %5510 = vmatprep.subr.bf16.mxu0 0
      %5511 = vmatpush2.bf16.msra.mxu0 0
      %5512 = vmatprep.subr.bf16.mxu0 0
      %5513 = vmatpush2.bf16.msra.mxu0 0
      %5514 = vmatprep.subr.bf16.mxu0 0
      %5515 = vmatpush2.bf16.msra.mxu0 0
      %5516 = vmatprep.subr.bf16.mxu0 0
      %5517 = vmatpush2.bf16.msra.mxu0 0
      %5518 = vmatprep.subr.bf16.mxu0 0
      %5519 = vmatpush2.bf16.msra.mxu0 0
      %5520 = vmatprep.mubr.bf16.mxu0 0
      %5521 = vmatmul.mubr.bf16.gmra.mxu0 %v4132
      %v5522 = vpop.f32.mrf.mxu0
      %v5523 = vadd.f32 %v5362, %v5522
      %v5524 = vpop.f32.mrf.mxu0
      %v5525 = vpop.f32.mrf.mxu0
      %v5526 = vadd.f32 %v5365, %v5525
      %v5527 = vpop.f32.mrf.mxu0
      %5528 = vmatprep.mubr.bf16.mxu0 0
      %5529 = vmatmul.mubr.bf16.gmra.mxu0 %v4141
      %v5530 = vpop.f32.mrf.mxu0
      %v5531 = vadd.f32 %v5370, %v5530
      %v5532 = vpop.f32.mrf.mxu0
      %v5533 = vpop.f32.mrf.mxu0
      %v5534 = vadd.f32 %v5373, %v5533
      %v5535 = vpop.f32.mrf.mxu0
      %5536 = vmatprep.mubr.bf16.mxu0 0
      %5537 = vmatmul.mubr.bf16.gmra.mxu0 %v4150
      %v5538 = vpop.f32.mrf.mxu0
      %v5539 = vadd.f32 %v5378, %v5538
      %v5540 = vpop.f32.mrf.mxu0
      %v5541 = vpop.f32.mrf.mxu0
      %v5542 = vadd.f32 %v5381, %v5541
      %v5543 = vpop.f32.mrf.mxu0
      %5544 = vmatprep.mubr.bf16.mxu0 0
      %5545 = vmatmul.mubr.bf16.gmra.mxu0 %v4159
      %v5546 = vpop.f32.mrf.mxu0
      %v5547 = vadd.f32 %v5386, %v5546
      %v5548 = vpop.f32.mrf.mxu0
      %v5549 = vpop.f32.mrf.mxu0
      %v5550 = vadd.f32 %v5389, %v5549
      %v5551 = vpop.f32.mrf.mxu0
      %5552 = vmatprep.mubr.bf16.mxu0 0
      %5553 = vmatmul.mubr.bf16.gmra.mxu0 %v4168
      %v5554 = vpop.f32.mrf.mxu0
      %v5555 = vadd.f32 %v5394, %v5554
      %v5556 = vpop.f32.mrf.mxu0
      %v5557 = vpop.f32.mrf.mxu0
      %v5558 = vadd.f32 %v5397, %v5557
      %v5559 = vpop.f32.mrf.mxu0
      %5560 = vmatprep.mubr.bf16.mxu0 0
      %5561 = vmatmul.mubr.bf16.gmra.mxu0 %v4177
      %v5562 = vpop.f32.mrf.mxu0
      %v5563 = vadd.f32 %v5402, %v5562
      %v5564 = vpop.f32.mrf.mxu0
      %v5565 = vpop.f32.mrf.mxu0
      %v5566 = vadd.f32 %v5405, %v5565
      %v5567 = vpop.f32.mrf.mxu0
      %5568 = vmatprep.mubr.bf16.mxu0 0
      %5569 = vmatmul.mubr.bf16.gmra.mxu0 %v4186
      %v5570 = vpop.f32.mrf.mxu0
      %v5571 = vadd.f32 %v5410, %v5570
      %v5572 = vpop.f32.mrf.mxu0
      %v5573 = vpop.f32.mrf.mxu0
      %v5574 = vadd.f32 %v5413, %v5573
      %v5575 = vpop.f32.mrf.mxu0
      %5576 = vmatprep.mubr.bf16.mxu0 0
      %5577 = vmatmul.mubr.bf16.gmra.mxu0 %v4195
      %v5578 = vpop.f32.mrf.mxu0
      %v5579 = vadd.f32 %v5418, %v5578
      %v5580 = vpop.f32.mrf.mxu0
      %v5581 = vpop.f32.mrf.mxu0
      %v5582 = vadd.f32 %v5421, %v5581
      %v5583 = vpop.f32.mrf.mxu0
      %5584 = vmatprep.mubr.bf16.mxu0 0
      %5585 = vmatmul.mubr.bf16.gmra.mxu0 %v4204
      %v5586 = vpop.f32.mrf.mxu0
      %v5587 = vadd.f32 %v5426, %v5586
      %v5588 = vpop.f32.mrf.mxu0
      %v5589 = vpop.f32.mrf.mxu0
      %v5590 = vadd.f32 %v5429, %v5589
      %v5591 = vpop.f32.mrf.mxu0
      %5592 = vmatprep.mubr.bf16.mxu0 0
      %5593 = vmatmul.mubr.bf16.gmra.mxu0 %v4213
      %v5594 = vpop.f32.mrf.mxu0
      %v5595 = vadd.f32 %v5434, %v5594
      %v5596 = vpop.f32.mrf.mxu0
      %v5597 = vpop.f32.mrf.mxu0
      %v5598 = vadd.f32 %v5437, %v5597
      %v5599 = vpop.f32.mrf.mxu0
      %5600 = vmatprep.mubr.bf16.mxu0 0
      %5601 = vmatmul.mubr.bf16.gmra.mxu0 %v4222
      %v5602 = vpop.f32.mrf.mxu0
      %v5603 = vadd.f32 %v5442, %v5602
      %v5604 = vpop.f32.mrf.mxu0
      %v5605 = vpop.f32.mrf.mxu0
      %v5606 = vadd.f32 %v5445, %v5605
      %v5607 = vpop.f32.mrf.mxu0
      %5608 = vmatprep.mubr.bf16.mxu0 0
      %5609 = vmatmul.mubr.bf16.gmra.mxu0 %v4231
      %v5610 = vpop.f32.mrf.mxu0
      %v5611 = vadd.f32 %v5450, %v5610
      %v5612 = vpop.f32.mrf.mxu0
      %v5613 = vpop.f32.mrf.mxu0
      %v5614 = vadd.f32 %v5453, %v5613
      %v5615 = vpop.f32.mrf.mxu0
      %5616 = vmatprep.mubr.bf16.mxu0 0
      %5617 = vmatmul.mubr.bf16.gmra.mxu0 %v4240
      %v5618 = vpop.f32.mrf.mxu0
      %v5619 = vadd.f32 %v5458, %v5618
      %v5620 = vpop.f32.mrf.mxu0
      %v5621 = vpop.f32.mrf.mxu0
      %v5622 = vadd.f32 %v5461, %v5621
      %v5623 = vpop.f32.mrf.mxu0
      %5624 = vmatprep.mubr.bf16.mxu0 0
      %5625 = vmatmul.mubr.bf16.gmra.mxu0 %v4249
      %v5626 = vpop.f32.mrf.mxu0
      %v5627 = vadd.f32 %v5466, %v5626
      %v5628 = vpop.f32.mrf.mxu0
      %v5629 = vpop.f32.mrf.mxu0
      %v5630 = vadd.f32 %v5469, %v5629
      %v5631 = vpop.f32.mrf.mxu0
      %5632 = vmatprep.mubr.bf16.mxu0 0
      %5633 = vmatmul.mubr.bf16.gmra.mxu0 %v4258
      %v5634 = vpop.f32.mrf.mxu0
      %v5635 = vadd.f32 %v5474, %v5634
      %v5636 = vpop.f32.mrf.mxu0
      %v5637 = vpop.f32.mrf.mxu0
      %v5638 = vadd.f32 %v5477, %v5637
      %v5639 = vpop.f32.mrf.mxu0
      %5640 = vmatprep.mubr.bf16.mxu0 0
      %5641 = vmatmul.mubr.bf16.gmra.mxu0 %v4267
      %v5642 = vpop.f32.mrf.mxu0
      %v5643 = vadd.f32 %v5482, %v5642
      %v5644 = vpop.f32.mrf.mxu0
      %v5645 = vpop.f32.mrf.mxu0
      %v5646 = vadd.f32 %v5485, %v5645
      %v5647 = vpop.f32.mrf.mxu0
      %5648 = vdwg.mxu0
      %v5649 = vld [vmem:[%s2] sm:$0x1]
      %v5651 = vlaneseq
      %v5652 = vshrl.u32 %v5651, 7
      %v5653 = vsub.s32 0, %v5652
      %v5654 = vrot.slane %v5649, %v5653
      %v5656 = vmul.f32 %v5523, %v5654
      %v5657 = vmul.f32 %v5526, %v5654
      %v5658 = vmul.f32 %v5531, %v5654
      %v5659 = vmul.f32 %v5534, %v5654
      %v5660 = vmul.f32 %v5539, %v5654
      %v5661 = vmul.f32 %v5542, %v5654
      %v5662 = vmul.f32 %v5547, %v5654
      %v5663 = vmul.f32 %v5550, %v5654
      %v5664 = vmul.f32 %v5555, %v5654
      %v5665 = vmul.f32 %v5558, %v5654
      %v5666 = vmul.f32 %v5563, %v5654
      %v5667 = vmul.f32 %v5566, %v5654
      %v5668 = vmul.f32 %v5571, %v5654
      %v5669 = vmul.f32 %v5574, %v5654
      %v5670 = vmul.f32 %v5579, %v5654
      %v5671 = vmul.f32 %v5582, %v5654
      %v5672 = vmul.f32 %v5587, %v5654
      %v5673 = vmul.f32 %v5590, %v5654
      %v5674 = vmul.f32 %v5595, %v5654
      %v5675 = vmul.f32 %v5598, %v5654
      %v5676 = vmul.f32 %v5603, %v5654
      %v5677 = vmul.f32 %v5606, %v5654
      %v5678 = vmul.f32 %v5611, %v5654
      %v5679 = vmul.f32 %v5614, %v5654
      %v5680 = vmul.f32 %v5619, %v5654
      %v5681 = vmul.f32 %v5622, %v5654
      %v5682 = vmul.f32 %v5627, %v5654
      %v5683 = vmul.f32 %v5630, %v5654
      %v5684 = vmul.f32 %v5635, %v5654
      %v5685 = vmul.f32 %v5638, %v5654
      %v5686 = vmul.f32 %v5643, %v5654
      %v5687 = vmul.f32 %v5646, %v5654
      %v5688 = vld [vmem:[%s3] sm:$0x1]
      %v5690 = vlaneseq
      %v5691 = vshrl.u32 %v5690, 7
      %v5692 = vsub.s32 0, %v5691
      %v5693 = vrot.slane %v5688, %v5692
      %v5695 = vadd.f32 %v5656, %v5693
      %v5696 = vadd.f32 %v5657, %v5693
      %v5697 = vadd.f32 %v5658, %v5693
      %v5698 = vadd.f32 %v5659, %v5693
      %v5699 = vadd.f32 %v5660, %v5693
      %v5700 = vadd.f32 %v5661, %v5693
      %v5701 = vadd.f32 %v5662, %v5693
      %v5702 = vadd.f32 %v5663, %v5693
      %v5703 = vadd.f32 %v5664, %v5693
      %v5704 = vadd.f32 %v5665, %v5693
      %v5705 = vadd.f32 %v5666, %v5693
      %v5706 = vadd.f32 %v5667, %v5693
      %v5707 = vadd.f32 %v5668, %v5693
      %v5708 = vadd.f32 %v5669, %v5693
      %v5709 = vadd.f32 %v5670, %v5693
      %v5710 = vadd.f32 %v5671, %v5693
      %v5711 = vadd.f32 %v5672, %v5693
      %v5712 = vadd.f32 %v5673, %v5693
      %v5713 = vadd.f32 %v5674, %v5693
      %v5714 = vadd.f32 %v5675, %v5693
      %v5715 = vadd.f32 %v5676, %v5693
      %v5716 = vadd.f32 %v5677, %v5693
      %v5717 = vadd.f32 %v5678, %v5693
      %v5718 = vadd.f32 %v5679, %v5693
      %v5719 = vadd.f32 %v5680, %v5693
      %v5720 = vadd.f32 %v5681, %v5693
      %v5721 = vadd.f32 %v5682, %v5693
      %v5722 = vadd.f32 %v5683, %v5693
      %v5723 = vadd.f32 %v5684, %v5693
      %v5724 = vadd.f32 %v5685, %v5693
      %v5725 = vadd.f32 %v5686, %v5693
      %v5726 = vadd.f32 %v5687, %v5693
      %v5727 = vmax.f32 %v5695, 0.0
      %v5728 = vmax.f32 %v5696, 0.0
      %v5729 = vmax.f32 %v5697, 0.0
      %v5730 = vmax.f32 %v5698, 0.0
      %v5731 = vmax.f32 %v5699, 0.0
      %v5732 = vmax.f32 %v5700, 0.0
      %v5733 = vmax.f32 %v5701, 0.0
      %v5734 = vmax.f32 %v5702, 0.0
      %v5735 = vmax.f32 %v5703, 0.0
      %v5736 = vmax.f32 %v5704, 0.0
      %v5737 = vmax.f32 %v5705, 0.0
      %v5738 = vmax.f32 %v5706, 0.0
      %v5739 = vmax.f32 %v5707, 0.0
      %v5740 = vmax.f32 %v5708, 0.0
      %v5741 = vmax.f32 %v5709, 0.0
      %v5742 = vmax.f32 %v5710, 0.0
      %v5743 = vmax.f32 %v5711, 0.0
      %v5744 = vmax.f32 %v5712, 0.0
      %v5745 = vmax.f32 %v5713, 0.0
      %v5746 = vmax.f32 %v5714, 0.0
      %v5747 = vmax.f32 %v5715, 0.0
      %v5748 = vmax.f32 %v5716, 0.0
      %v5749 = vmax.f32 %v5717, 0.0
      %v5750 = vmax.f32 %v5718, 0.0
      %v5751 = vmax.f32 %v5719, 0.0
      %v5752 = vmax.f32 %v5720, 0.0
      %v5753 = vmax.f32 %v5721, 0.0
      %v5754 = vmax.f32 %v5722, 0.0
      %v5755 = vmax.f32 %v5723, 0.0
      %v5756 = vmax.f32 %v5724, 0.0
      %v5757 = vmax.f32 %v5725, 0.0
      %v5758 = vmax.f32 %v5726, 0.0
      %v5759 = vpack.c.bf16 %v5728, %v5727
      %v5760 = vpack.c.bf16 %v5730, %v5729
      %v5761 = vpack.c.bf16 %v5732, %v5731
      %v5762 = vpack.c.bf16 %v5734, %v5733
      %v5763 = vpack.c.bf16 %v5736, %v5735
      %v5764 = vpack.c.bf16 %v5738, %v5737
      %v5765 = vpack.c.bf16 %v5740, %v5739
      %v5766 = vpack.c.bf16 %v5742, %v5741
      %v5767 = vpack.c.bf16 %v5744, %v5743
      %v5768 = vpack.c.bf16 %v5746, %v5745
      %v5769 = vpack.c.bf16 %v5748, %v5747
      %v5770 = vpack.c.bf16 %v5750, %v5749
      %v5771 = vpack.c.bf16 %v5752, %v5751
      %v5772 = vpack.c.bf16 %v5754, %v5753
      %v5773 = vpack.c.bf16 %v5756, %v5755
      %v5774 = vpack.c.bf16 %v5758, %v5757
      %v5791 = vunpack.c.l.b16 %v5759
      %v5792 = vunpack.c.h.b16 %v5759
      %v5793 = vunpack.c.l.b16 %v5760
      %v5794 = vunpack.c.h.b16 %v5760
      %v5795 = vunpack.c.l.b16 %v5761
      %v5796 = vunpack.c.h.b16 %v5761
      %v5797 = vunpack.c.l.b16 %v5762
      %v5798 = vunpack.c.h.b16 %v5762
      %v5799 = vunpack.c.l.b16 %v5763
      %v5800 = vunpack.c.h.b16 %v5763
      %v5801 = vunpack.c.l.b16 %v5764
      %v5802 = vunpack.c.h.b16 %v5764
      %v5803 = vunpack.c.l.b16 %v5765
      %v5804 = vunpack.c.h.b16 %v5765
      %v5805 = vunpack.c.l.b16 %v5766
      %v5806 = vunpack.c.h.b16 %v5766
      %v5807 = vunpack.c.l.b16 %v5767
      %v5808 = vunpack.c.h.b16 %v5767
      %v5809 = vunpack.c.l.b16 %v5768
      %v5810 = vunpack.c.h.b16 %v5768
      %v5811 = vunpack.c.l.b16 %v5769
      %v5812 = vunpack.c.h.b16 %v5769
      %v5813 = vunpack.c.l.b16 %v5770
      %v5814 = vunpack.c.h.b16 %v5770
      %v5815 = vunpack.c.l.b16 %v5771
      %v5816 = vunpack.c.h.b16 %v5771
      %v5817 = vunpack.c.l.b16 %v5772
      %v5818 = vunpack.c.h.b16 %v5772
      %v5819 = vunpack.c.l.b16 %v5773
      %v5820 = vunpack.c.h.b16 %v5773
      %v5821 = vunpack.c.l.b16 %v5774
      %v5822 = vunpack.c.h.b16 %v5774
      %v5823 = vpack.c.b16 %v5791, %v5791
      %v5824 = vpack.c.b16 %v5792, %v5792
      %v5825 = vpack.c.b16 %v5793, %v5793
      %v5826 = vpack.c.b16 %v5794, %v5794
      %v5827 = vpack.c.b16 %v5795, %v5795
      %v5828 = vpack.c.b16 %v5796, %v5796
      %v5829 = vpack.c.b16 %v5797, %v5797
      %v5830 = vpack.c.b16 %v5798, %v5798
      %v5831 = vpack.c.b16 %v5799, %v5799
      %v5832 = vpack.c.b16 %v5800, %v5800
      %v5833 = vpack.c.b16 %v5801, %v5801
      %v5834 = vpack.c.b16 %v5802, %v5802
      %v5835 = vpack.c.b16 %v5803, %v5803
      %v5836 = vpack.c.b16 %v5804, %v5804
      %v5837 = vpack.c.b16 %v5805, %v5805
      %v5838 = vpack.c.b16 %v5806, %v5806
      %v5839 = vpack.c.b16 %v5807, %v5807
      %v5840 = vpack.c.b16 %v5808, %v5808
      %v5841 = vpack.c.b16 %v5809, %v5809
      %v5842 = vpack.c.b16 %v5810, %v5810
      %v5843 = vpack.c.b16 %v5811, %v5811
      %v5844 = vpack.c.b16 %v5812, %v5812
      %v5845 = vpack.c.b16 %v5813, %v5813
      %v5846 = vpack.c.b16 %v5814, %v5814
      %v5847 = vpack.c.b16 %v5815, %v5815
      %v5848 = vpack.c.b16 %v5816, %v5816
      %v5849 = vpack.c.b16 %v5817, %v5817
      %v5850 = vpack.c.b16 %v5818, %v5818
      %v5851 = vpack.c.b16 %v5819, %v5819
      %v5852 = vpack.c.b16 %v5820, %v5820
      %v5853 = vpack.c.b16 %v5821, %v5821
      %v5854 = vpack.c.b16 %v5822, %v5822
      %v5856 = vshrl.u32 %v5823, 16
      %v5858 = vrot.slane %v5856, 7
      %v5859 = vshll.u32 %v5823, 16
      %v5861 = vor.u32 %v5858, %v5859
      %v5862 = vrot.slane %v5858, 4
      %v5864 = vshrl.u32 %v5824, 16
      %v5866 = vrot.slane %v5864, 7
      %v5867 = vshll.u32 %v5824, 16
      %v5869 = vor.u32 %v5866, %v5867
      %v5870 = vsel %vm433, %v5862, %v5869
      %v5871 = vrot.slane %v5866, 4
      %v5873 = vshrl.u32 %v5825, 16
      %v5875 = vrot.slane %v5873, 7
      %v5876 = vshll.u32 %v5825, 16
      %v5878 = vor.u32 %v5875, %v5876
      %v5879 = vrot.slane %v5875, 4
      %v5881 = vshrl.u32 %v5826, 16
      %v5883 = vrot.slane %v5881, 7
      %v5884 = vshll.u32 %v5826, 16
      %v5886 = vor.u32 %v5883, %v5884
      %v5887 = vsel %vm433, %v5879, %v5886
      %v5888 = vrot.slane %v5883, 4
      %v5890 = vshrl.u32 %v5827, 16
      %v5892 = vrot.slane %v5890, 7
      %v5893 = vshll.u32 %v5827, 16
      %v5895 = vor.u32 %v5892, %v5893
      %v5896 = vrot.slane %v5892, 4
      %v5898 = vshrl.u32 %v5828, 16
      %v5900 = vrot.slane %v5898, 7
      %v5901 = vshll.u32 %v5828, 16
      %v5903 = vor.u32 %v5900, %v5901
      %v5904 = vsel %vm433, %v5896, %v5903
      %v5905 = vrot.slane %v5900, 4
      %v5907 = vshrl.u32 %v5829, 16
      %v5909 = vrot.slane %v5907, 7
      %v5910 = vshll.u32 %v5829, 16
      %v5912 = vor.u32 %v5909, %v5910
      %v5913 = vrot.slane %v5909, 4
      %v5915 = vshrl.u32 %v5830, 16
      %v5917 = vrot.slane %v5915, 7
      %v5918 = vshll.u32 %v5830, 16
      %v5920 = vor.u32 %v5917, %v5918
      %v5921 = vsel %vm433, %v5913, %v5920
      %v5922 = vrot.slane %v5917, 4
      %v5924 = vshrl.u32 %v5831, 16
      %v5926 = vrot.slane %v5924, 7
      %v5927 = vshll.u32 %v5831, 16
      %v5929 = vor.u32 %v5926, %v5927
      %v5930 = vrot.slane %v5926, 4
      %v5932 = vshrl.u32 %v5832, 16
      %v5934 = vrot.slane %v5932, 7
      %v5935 = vshll.u32 %v5832, 16
      %v5937 = vor.u32 %v5934, %v5935
      %v5938 = vsel %vm433, %v5930, %v5937
      %v5939 = vrot.slane %v5934, 4
      %v5941 = vshrl.u32 %v5833, 16
      %v5943 = vrot.slane %v5941, 7
      %v5944 = vshll.u32 %v5833, 16
      %v5946 = vor.u32 %v5943, %v5944
      %v5947 = vrot.slane %v5943, 4
      %v5949 = vshrl.u32 %v5834, 16
      %v5951 = vrot.slane %v5949, 7
      %v5952 = vshll.u32 %v5834, 16
      %v5954 = vor.u32 %v5951, %v5952
      %v5955 = vsel %vm433, %v5947, %v5954
      %v5956 = vrot.slane %v5951, 4
      %v5958 = vshrl.u32 %v5835, 16
      %v5960 = vrot.slane %v5958, 7
      %v5961 = vshll.u32 %v5835, 16
      %v5963 = vor.u32 %v5960, %v5961
      %v5964 = vrot.slane %v5960, 4
      %v5966 = vshrl.u32 %v5836, 16
      %v5968 = vrot.slane %v5966, 7
      %v5969 = vshll.u32 %v5836, 16
      %v5971 = vor.u32 %v5968, %v5969
      %v5972 = vsel %vm433, %v5964, %v5971
      %v5973 = vrot.slane %v5968, 4
      %v5975 = vshrl.u32 %v5837, 16
      %v5977 = vrot.slane %v5975, 7
      %v5978 = vshll.u32 %v5837, 16
      %v5980 = vor.u32 %v5977, %v5978
      %v5981 = vrot.slane %v5977, 4
      %v5983 = vshrl.u32 %v5838, 16
      %v5985 = vrot.slane %v5983, 7
      %v5986 = vshll.u32 %v5838, 16
      %v5988 = vor.u32 %v5985, %v5986
      %v5989 = vsel %vm433, %v5981, %v5988
      %v5990 = vrot.slane %v5985, 4
      %v5992 = vshrl.u32 %v5839, 16
      %v5994 = vrot.slane %v5992, 7
      %v5995 = vshll.u32 %v5839, 16
      %v5997 = vor.u32 %v5994, %v5995
      %v5998 = vrot.slane %v5994, 4
      %v6000 = vshrl.u32 %v5840, 16
      %v6002 = vrot.slane %v6000, 7
      %v6003 = vshll.u32 %v5840, 16
      %v6005 = vor.u32 %v6002, %v6003
      %v6006 = vsel %vm433, %v5998, %v6005
      %v6007 = vrot.slane %v6002, 4
      %v6009 = vshrl.u32 %v5841, 16
      %v6011 = vrot.slane %v6009, 7
      %v6012 = vshll.u32 %v5841, 16
      %v6014 = vor.u32 %v6011, %v6012
      %v6015 = vrot.slane %v6011, 4
      %v6017 = vshrl.u32 %v5842, 16
      %v6019 = vrot.slane %v6017, 7
      %v6020 = vshll.u32 %v5842, 16
      %v6022 = vor.u32 %v6019, %v6020
      %v6023 = vsel %vm433, %v6015, %v6022
      %v6024 = vrot.slane %v6019, 4
      %v6026 = vshrl.u32 %v5843, 16
      %v6028 = vrot.slane %v6026, 7
      %v6029 = vshll.u32 %v5843, 16
      %v6031 = vor.u32 %v6028, %v6029
      %v6032 = vrot.slane %v6028, 4
      %v6034 = vshrl.u32 %v5844, 16
      %v6036 = vrot.slane %v6034, 7
      %v6037 = vshll.u32 %v5844, 16
      %v6039 = vor.u32 %v6036, %v6037
      %v6040 = vsel %vm433, %v6032, %v6039
      %v6041 = vrot.slane %v6036, 4
      %v6043 = vshrl.u32 %v5845, 16
      %v6045 = vrot.slane %v6043, 7
      %v6046 = vshll.u32 %v5845, 16
      %v6048 = vor.u32 %v6045, %v6046
      %v6049 = vrot.slane %v6045, 4
      %v6051 = vshrl.u32 %v5846, 16
      %v6053 = vrot.slane %v6051, 7
      %v6054 = vshll.u32 %v5846, 16
      %v6056 = vor.u32 %v6053, %v6054
      %v6057 = vsel %vm433, %v6049, %v6056
      %v6058 = vrot.slane %v6053, 4
      %v6060 = vshrl.u32 %v5847, 16
      %v6062 = vrot.slane %v6060, 7
      %v6063 = vshll.u32 %v5847, 16
      %v6065 = vor.u32 %v6062, %v6063
      %v6066 = vrot.slane %v6062, 4
      %v6068 = vshrl.u32 %v5848, 16
      %v6070 = vrot.slane %v6068, 7
      %v6071 = vshll.u32 %v5848, 16
      %v6073 = vor.u32 %v6070, %v6071
      %v6074 = vsel %vm433, %v6066, %v6073
      %v6075 = vrot.slane %v6070, 4
      %v6077 = vshrl.u32 %v5849, 16
      %v6079 = vrot.slane %v6077, 7
      %v6080 = vshll.u32 %v5849, 16
      %v6082 = vor.u32 %v6079, %v6080
      %v6083 = vrot.slane %v6079, 4
      %v6085 = vshrl.u32 %v5850, 16
      %v6087 = vrot.slane %v6085, 7
      %v6088 = vshll.u32 %v5850, 16
      %v6090 = vor.u32 %v6087, %v6088
      %v6091 = vsel %vm433, %v6083, %v6090
      %v6092 = vrot.slane %v6087, 4
      %v6094 = vshrl.u32 %v5851, 16
      %v6096 = vrot.slane %v6094, 7
      %v6097 = vshll.u32 %v5851, 16
      %v6099 = vor.u32 %v6096, %v6097
      %v6100 = vrot.slane %v6096, 4
      %v6102 = vshrl.u32 %v5852, 16
      %v6104 = vrot.slane %v6102, 7
      %v6105 = vshll.u32 %v5852, 16
      %v6107 = vor.u32 %v6104, %v6105
      %v6108 = vsel %vm433, %v6100, %v6107
      %v6109 = vrot.slane %v6104, 4
      %v6111 = vshrl.u32 %v5853, 16
      %v6113 = vrot.slane %v6111, 7
      %v6114 = vshll.u32 %v5853, 16
      %v6116 = vor.u32 %v6113, %v6114
      %v6117 = vrot.slane %v6113, 4
      %v6119 = vshrl.u32 %v5854, 16
      %v6121 = vrot.slane %v6119, 7
      %v6122 = vshll.u32 %v5854, 16
      %v6124 = vor.u32 %v6121, %v6122
      %v6125 = vsel %vm433, %v6117, %v6124
      %v6126 = vrot.slane %v6121, 4
      %v6175 = vld [vmem:[%s754] sm:$0xf]
      %v6176 = vsel %vm756, %v5861, %v6175
      %6177 = vst [vmem:[%s754] sm:$0xf] %v6176
      %6178 = vst [vmem:[%s754 + $0x4] sm:$0xf] %v5870
      %v6179 = vld [vmem:[%s754 + $0x8] sm:$0x1]
      %v6180 = vsel %vm289, %v5871, %v6179
      %6181 = vst [vmem:[%s754 + $0x8] sm:$0x1] %v6180
      %v6182 = vld [vmem:[%s754 + $0xc] sm:$0xf]
      %v6183 = vsel %vm756, %v5878, %v6182
      %6184 = vst [vmem:[%s754 + $0xc] sm:$0xf] %v6183
      %6185 = vst [vmem:[%s754 + $0x10] sm:$0xf] %v5887
      %v6186 = vld [vmem:[%s754 + $0x14] sm:$0x1]
      %v6187 = vsel %vm289, %v5888, %v6186
      %6188 = vst [vmem:[%s754 + $0x14] sm:$0x1] %v6187
      %v6189 = vld [vmem:[%s754 + $0x18] sm:$0xf]
      %v6190 = vsel %vm756, %v5895, %v6189
      %6191 = vst [vmem:[%s754 + $0x18] sm:$0xf] %v6190
      %6192 = vst [vmem:[%s754 + $0x1c] sm:$0xf] %v5904
      %v6193 = vld [vmem:[%s754 + $0x20] sm:$0x1]
      %v6194 = vsel %vm289, %v5905, %v6193
      %6195 = vst [vmem:[%s754 + $0x20] sm:$0x1] %v6194
      %v6196 = vld [vmem:[%s754 + $0x24] sm:$0xf]
      %v6197 = vsel %vm756, %v5912, %v6196
      %6198 = vst [vmem:[%s754 + $0x24] sm:$0xf] %v6197
      %6199 = vst [vmem:[%s754 + $0x28] sm:$0xf] %v5921
      %v6200 = vld [vmem:[%s754 + $0x2c] sm:$0x1]
      %v6201 = vsel %vm289, %v5922, %v6200
      %6202 = vst [vmem:[%s754 + $0x2c] sm:$0x1] %v6201
      %v6203 = vld [vmem:[%s754 + $0x30] sm:$0xf]
      %v6204 = vsel %vm756, %v5929, %v6203
      %6205 = vst [vmem:[%s754 + $0x30] sm:$0xf] %v6204
      %6206 = vst [vmem:[%s754 + $0x34] sm:$0xf] %v5938
      %v6207 = vld [vmem:[%s754 + $0x38] sm:$0x1]
      %v6208 = vsel %vm289, %v5939, %v6207
      %6209 = vst [vmem:[%s754 + $0x38] sm:$0x1] %v6208
      %v6210 = vld [vmem:[%s754 + $0x3c] sm:$0xf]
      %v6211 = vsel %vm756, %v5946, %v6210
      %6212 = vst [vmem:[%s754 + $0x3c] sm:$0xf] %v6211
      %6213 = vst [vmem:[%s754 + $0x40] sm:$0xf] %v5955
      %v6214 = vld [vmem:[%s754 + $0x44] sm:$0x1]
      %v6215 = vsel %vm289, %v5956, %v6214
      %6216 = vst [vmem:[%s754 + $0x44] sm:$0x1] %v6215
      %v6217 = vld [vmem:[%s754 + $0x48] sm:$0xf]
      %v6218 = vsel %vm756, %v5963, %v6217
      %6219 = vst [vmem:[%s754 + $0x48] sm:$0xf] %v6218
      %6220 = vst [vmem:[%s754 + $0x4c] sm:$0xf] %v5972
      %v6221 = vld [vmem:[%s754 + $0x50] sm:$0x1]
      %v6222 = vsel %vm289, %v5973, %v6221
      %6223 = vst [vmem:[%s754 + $0x50] sm:$0x1] %v6222
      %v6224 = vld [vmem:[%s754 + $0x54] sm:$0xf]
      %v6225 = vsel %vm756, %v5980, %v6224
      %6226 = vst [vmem:[%s754 + $0x54] sm:$0xf] %v6225
      %6227 = vst [vmem:[%s754 + $0x58] sm:$0xf] %v5989
      %v6228 = vld [vmem:[%s754 + $0x5c] sm:$0x1]
      %v6229 = vsel %vm289, %v5990, %v6228
      %6230 = vst [vmem:[%s754 + $0x5c] sm:$0x1] %v6229
      %v6231 = vld [vmem:[%s754 + $0x60] sm:$0xf]
      %v6232 = vsel %vm756, %v5997, %v6231
      %6233 = vst [vmem:[%s754 + $0x60] sm:$0xf] %v6232
      %6234 = vst [vmem:[%s754 + $0x64] sm:$0xf] %v6006
      %v6235 = vld [vmem:[%s754 + $0x68] sm:$0x1]
      %v6236 = vsel %vm289, %v6007, %v6235
      %6237 = vst [vmem:[%s754 + $0x68] sm:$0x1] %v6236
      %v6238 = vld [vmem:[%s754 + $0x6c] sm:$0xf]
      %v6239 = vsel %vm756, %v6014, %v6238
      %6240 = vst [vmem:[%s754 + $0x6c] sm:$0xf] %v6239
      %6241 = vst [vmem:[%s754 + $0x70] sm:$0xf] %v6023
      %v6242 = vld [vmem:[%s754 + $0x74] sm:$0x1]
      %v6243 = vsel %vm289, %v6024, %v6242
      %6244 = vst [vmem:[%s754 + $0x74] sm:$0x1] %v6243
      %v6245 = vld [vmem:[%s754 + $0x78] sm:$0xf]
      %v6246 = vsel %vm756, %v6031, %v6245
      %6247 = vst [vmem:[%s754 + $0x78] sm:$0xf] %v6246
      %6248 = vst [vmem:[%s754 + $0x7c] sm:$0xf] %v6040
      %v6249 = vld [vmem:[%s754 + $0x80] sm:$0x1]
      %v6250 = vsel %vm289, %v6041, %v6249
      %6251 = vst [vmem:[%s754 + $0x80] sm:$0x1] %v6250
      %v6252 = vld [vmem:[%s754 + $0x84] sm:$0xf]
      %v6253 = vsel %vm756, %v6048, %v6252
      %6254 = vst [vmem:[%s754 + $0x84] sm:$0xf] %v6253
      %6255 = vst [vmem:[%s754 + $0x88] sm:$0xf] %v6057
      %v6256 = vld [vmem:[%s754 + $0x8c] sm:$0x1]
      %v6257 = vsel %vm289, %v6058, %v6256
      %6258 = vst [vmem:[%s754 + $0x8c] sm:$0x1] %v6257
      %v6259 = vld [vmem:[%s754 + $0x90] sm:$0xf]
      %v6260 = vsel %vm756, %v6065, %v6259
      %6261 = vst [vmem:[%s754 + $0x90] sm:$0xf] %v6260
      %6262 = vst [vmem:[%s754 + $0x94] sm:$0xf] %v6074
      %v6263 = vld [vmem:[%s754 + $0x98] sm:$0x1]
      %v6264 = vsel %vm289, %v6075, %v6263
      %6265 = vst [vmem:[%s754 + $0x98] sm:$0x1] %v6264
      %v6266 = vld [vmem:[%s754 + $0x9c] sm:$0xf]
      %v6267 = vsel %vm756, %v6082, %v6266
      %6268 = vst [vmem:[%s754 + $0x9c] sm:$0xf] %v6267
      %6269 = vst [vmem:[%s754 + $0xa0] sm:$0xf] %v6091
      %v6270 = vld [vmem:[%s754 + $0xa4] sm:$0x1]
      %v6271 = vsel %vm289, %v6092, %v6270
      %6272 = vst [vmem:[%s754 + $0xa4] sm:$0x1] %v6271
      %v6273 = vld [vmem:[%s754 + $0xa8] sm:$0xf]
      %v6274 = vsel %vm756, %v6099, %v6273
      %6275 = vst [vmem:[%s754 + $0xa8] sm:$0xf] %v6274
      %6276 = vst [vmem:[%s754 + $0xac] sm:$0xf] %v6108
      %v6277 = vld [vmem:[%s754 + $0xb0] sm:$0x1]
      %v6278 = vsel %vm289, %v6109, %v6277
      %6279 = vst [vmem:[%s754 + $0xb0] sm:$0x1] %v6278
      %v6280 = vld [vmem:[%s754 + $0xb4] sm:$0xf]
      %v6281 = vsel %vm756, %v6116, %v6280
      %6282 = vst [vmem:[%s754 + $0xb4] sm:$0xf] %v6281
      %6283 = vst [vmem:[%s754 + $0xb8] sm:$0xf] %v6125
      %v6284 = vld [vmem:[%s754 + $0xbc] sm:$0x1]
      %v6285 = vsel %vm289, %v6126, %v6284
      %6286 = vst [vmem:[%s754 + $0xbc] sm:$0x1] %v6285
      %v6287 = vld [vmem:[#allocation2] sm:$0xf]
      %v6288 = vld [vmem:[#allocation2 + $0x4] sm:$0xf]
      %v6289 = vld [vmem:[#allocation2 + $0xc] sm:$0xf]
      %v6290 = vld [vmem:[#allocation2 + $0x10] sm:$0xf]
      %v6291 = vld [vmem:[#allocation2 + $0x18] sm:$0xf]
      %v6292 = vld [vmem:[#allocation2 + $0x1c] sm:$0xf]
      %v6293 = vld [vmem:[#allocation2 + $0x24] sm:$0xf]
      %v6294 = vld [vmem:[#allocation2 + $0x28] sm:$0xf]
      %v6295 = vld [vmem:[#allocation2 + $0x30] sm:$0xf]
      %v6296 = vld [vmem:[#allocation2 + $0x34] sm:$0xf]
      %v6297 = vld [vmem:[#allocation2 + $0x3c] sm:$0xf]
      %v6298 = vld [vmem:[#allocation2 + $0x40] sm:$0xf]
      %v6299 = vld [vmem:[#allocation2 + $0x48] sm:$0xf]
      %v6300 = vld [vmem:[#allocation2 + $0x4c] sm:$0xf]
      %v6301 = vld [vmem:[#allocation2 + $0x54] sm:$0xf]
      %v6302 = vld [vmem:[#allocation2 + $0x58] sm:$0xf]
      %v6303 = vld [vmem:[#allocation2 + $0x60] sm:$0xf]
      %v6304 = vld [vmem:[#allocation2 + $0x64] sm:$0xf]
      %v6305 = vld [vmem:[#allocation2 + $0x6c] sm:$0xf]
      %v6306 = vld [vmem:[#allocation2 + $0x70] sm:$0xf]
      %v6307 = vld [vmem:[#allocation2 + $0x78] sm:$0xf]
      %v6308 = vld [vmem:[#allocation2 + $0x7c] sm:$0xf]
      %v6309 = vld [vmem:[#allocation2 + $0x84] sm:$0xf]
      %v6310 = vld [vmem:[#allocation2 + $0x88] sm:$0xf]
      %v6311 = vld [vmem:[#allocation2 + $0x90] sm:$0xf]
      %v6312 = vld [vmem:[#allocation2 + $0x94] sm:$0xf]
      %v6313 = vld [vmem:[#allocation2 + $0x9c] sm:$0xf]
      %v6314 = vld [vmem:[#allocation2 + $0xa0] sm:$0xf]
      %v6315 = vld [vmem:[#allocation2 + $0xa8] sm:$0xf]
      %v6316 = vld [vmem:[#allocation2 + $0xac] sm:$0xf]
      %v6317 = vld [vmem:[#allocation2 + $0xb4] sm:$0xf]
      %v6318 = vld [vmem:[#allocation2 + $0xb8] sm:$0xf]
      %6319 = vst [vmem:[#allocation3] sm:$0xf] %v6287
      %6320 = vst [vmem:[#allocation3 + $0x24] sm:$0xf] %v6288
      %6321 = vst [vmem:[#allocation3 + $0x48] sm:$0xf] %v6289
      %6322 = vst [vmem:[#allocation3 + $0x6c] sm:$0xf] %v6290
      %6323 = vst [vmem:[#allocation3 + $0x90] sm:$0xf] %v6291
      %6324 = vst [vmem:[#allocation3 + $0xb4] sm:$0xf] %v6292
      %6325 = vst [vmem:[#allocation3 + $0xd8] sm:$0xf] %v6293
      %6326 = vst [vmem:[#allocation3 + $0xfc] sm:$0xf] %v6294
      %6327 = vst [vmem:[#allocation3 + $0x120] sm:$0xf] %v6295
      %6328 = vst [vmem:[#allocation3 + $0x144] sm:$0xf] %v6296
      %6329 = vst [vmem:[#allocation3 + $0x168] sm:$0xf] %v6297
      %6330 = vst [vmem:[#allocation3 + $0x18c] sm:$0xf] %v6298
      %6331 = vst [vmem:[#allocation3 + $0x1b0] sm:$0xf] %v6299
      %6332 = vst [vmem:[#allocation3 + $0x1d4] sm:$0xf] %v6300
      %6333 = vst [vmem:[#allocation3 + $0x1f8] sm:$0xf] %v6301
      %6334 = vst [vmem:[#allocation3 + $0x21c] sm:$0xf] %v6302
      %6335 = vst [vmem:[#allocation3 + $0x240] sm:$0xf] %v6303
      %6336 = vst [vmem:[#allocation3 + $0x264] sm:$0xf] %v6304
      %6337 = vst [vmem:[#allocation3 + $0x288] sm:$0xf] %v6305
      %6338 = vst [vmem:[#allocation3 + $0x2ac] sm:$0xf] %v6306
      %6339 = vst [vmem:[#allocation3 + $0x2d0] sm:$0xf] %v6307
      %6340 = vst [vmem:[#allocation3 + $0x2f4] sm:$0xf] %v6308
      %6341 = vst [vmem:[#allocation3 + $0x318] sm:$0xf] %v6309
      %6342 = vst [vmem:[#allocation3 + $0x33c] sm:$0xf] %v6310
      %6343 = vst [vmem:[#allocation3 + $0x360] sm:$0xf] %v6311
      %6344 = vst [vmem:[#allocation3 + $0x384] sm:$0xf] %v6312
      %6345 = vst [vmem:[#allocation3 + $0x3a8] sm:$0xf] %v6313
      %6346 = vst [vmem:[#allocation3 + $0x3cc] sm:$0xf] %v6314
      %6347 = vst [vmem:[#allocation3 + $0x3f0] sm:$0xf] %v6315
      %6348 = vst [vmem:[#allocation3 + $0x414] sm:$0xf] %v6316
      %6349 = vst [vmem:[#allocation3 + $0x438] sm:$0xf] %v6317
      %6350 = vst [vmem:[#allocation3 + $0x45c] sm:$0xf] %v6318
      %v6351 = vld [vmem:[#allocation2] sm:$0xf]
      %v6352 = vld [vmem:[#allocation2 + $0x4] sm:$0xf]
      %v6353 = vld [vmem:[#allocation2 + $0x8] sm:$0x1]
      %v6354 = vld [vmem:[#allocation2 + $0xc] sm:$0xf]
      %v6355 = vld [vmem:[#allocation2 + $0x10] sm:$0xf]
      %v6356 = vld [vmem:[#allocation2 + $0x14] sm:$0x1]
      %v6357 = vld [vmem:[#allocation2 + $0x18] sm:$0xf]
      %v6358 = vld [vmem:[#allocation2 + $0x1c] sm:$0xf]
      %v6359 = vld [vmem:[#allocation2 + $0x20] sm:$0x1]
      %v6360 = vld [vmem:[#allocation2 + $0x24] sm:$0xf]
      %v6361 = vld [vmem:[#allocation2 + $0x28] sm:$0xf]
      %v6362 = vld [vmem:[#allocation2 + $0x2c] sm:$0x1]
      %v6363 = vld [vmem:[#allocation2 + $0x30] sm:$0xf]
      %v6364 = vld [vmem:[#allocation2 + $0x34] sm:$0xf]
      %v6365 = vld [vmem:[#allocation2 + $0x38] sm:$0x1]
      %v6366 = vld [vmem:[#allocation2 + $0x3c] sm:$0xf]
      %v6367 = vld [vmem:[#allocation2 + $0x40] sm:$0xf]
      %v6368 = vld [vmem:[#allocation2 + $0x44] sm:$0x1]
      %v6369 = vld [vmem:[#allocation2 + $0x48] sm:$0xf]
      %v6370 = vld [vmem:[#allocation2 + $0x4c] sm:$0xf]
      %v6371 = vld [vmem:[#allocation2 + $0x50] sm:$0x1]
      %v6372 = vld [vmem:[#allocation2 + $0x54] sm:$0xf]
      %v6373 = vld [vmem:[#allocation2 + $0x58] sm:$0xf]
      %v6374 = vld [vmem:[#allocation2 + $0x5c] sm:$0x1]
      %v6375 = vld [vmem:[#allocation2 + $0x60] sm:$0xf]
      %v6376 = vld [vmem:[#allocation2 + $0x64] sm:$0xf]
      %v6377 = vld [vmem:[#allocation2 + $0x68] sm:$0x1]
      %v6378 = vld [vmem:[#allocation2 + $0x6c] sm:$0xf]
      %v6379 = vld [vmem:[#allocation2 + $0x70] sm:$0xf]
      %v6380 = vld [vmem:[#allocation2 + $0x74] sm:$0x1]
      %v6381 = vld [vmem:[#allocation2 + $0x78] sm:$0xf]
      %v6382 = vld [vmem:[#allocation2 + $0x7c] sm:$0xf]
      %v6383 = vld [vmem:[#allocation2 + $0x80] sm:$0x1]
      %v6384 = vld [vmem:[#allocation2 + $0x84] sm:$0xf]
      %v6385 = vld [vmem:[#allocation2 + $0x88] sm:$0xf]
      %v6386 = vld [vmem:[#allocation2 + $0x8c] sm:$0x1]
      %v6387 = vld [vmem:[#allocation2 + $0x90] sm:$0xf]
      %v6388 = vld [vmem:[#allocation2 + $0x94] sm:$0xf]
      %v6389 = vld [vmem:[#allocation2 + $0x98] sm:$0x1]
      %v6390 = vld [vmem:[#allocation2 + $0x9c] sm:$0xf]
      %v6391 = vld [vmem:[#allocation2 + $0xa0] sm:$0xf]
      %v6392 = vld [vmem:[#allocation2 + $0xa4] sm:$0x1]
      %v6393 = vld [vmem:[#allocation2 + $0xa8] sm:$0xf]
      %v6394 = vld [vmem:[#allocation2 + $0xac] sm:$0xf]
      %v6395 = vld [vmem:[#allocation2 + $0xb0] sm:$0x1]
      %v6396 = vld [vmem:[#allocation2 + $0xb4] sm:$0xf]
      %v6397 = vld [vmem:[#allocation2 + $0xb8] sm:$0xf]
      %v6398 = vld [vmem:[#allocation2 + $0xbc] sm:$0x1]
      %v6400 = vshrl.u32 %v6351, 16
      %v6402 = vrot.slane %v6400, 4
      %v6403 = vshll.u32 %v6351, 16
      %v6405 = vrot.slane %v6403, 5
      %v6406 = vor.u32 %v6402, %v6405
      %v6407 = vrot.slane %v6406, 4
      %v6409 = vshll.u32 %v6352, 16
      %v6411 = vrot.slane %v6409, 5
      %v6412 = vsel %vm983, %v6407, %v6411
      %v6413 = vshrl.u32 %v6352, 16
      %v6415 = vrot.slane %v6413, 4
      %v6416 = vor.u32 %v6415, %v6411
      %v6417 = vrot.slane %v6416, 4
      %v6419 = vshll.u32 %v6353, 16
      %v6421 = vrot.slane %v6419, 5
      %v6422 = vsel %vm983, %v6417, %v6421
      %v6424 = vshrl.u32 %v6354, 16
      %v6426 = vrot.slane %v6424, 4
      %v6427 = vshll.u32 %v6354, 16
      %v6429 = vrot.slane %v6427, 5
      %v6430 = vor.u32 %v6426, %v6429
      %v6431 = vrot.slane %v6430, 4
      %v6433 = vshll.u32 %v6355, 16
      %v6435 = vrot.slane %v6433, 5
      %v6436 = vsel %vm983, %v6431, %v6435
      %v6437 = vshrl.u32 %v6355, 16
      %v6439 = vrot.slane %v6437, 4
      %v6440 = vor.u32 %v6439, %v6435
      %v6441 = vrot.slane %v6440, 4
      %v6443 = vshll.u32 %v6356, 16
      %v6445 = vrot.slane %v6443, 5
      %v6446 = vsel %vm983, %v6441, %v6445
      %v6448 = vshrl.u32 %v6357, 16
      %v6450 = vrot.slane %v6448, 4
      %v6451 = vshll.u32 %v6357, 16
      %v6453 = vrot.slane %v6451, 5
      %v6454 = vor.u32 %v6450, %v6453
      %v6455 = vrot.slane %v6454, 4
      %v6457 = vshll.u32 %v6358, 16
      %v6459 = vrot.slane %v6457, 5
      %v6460 = vsel %vm983, %v6455, %v6459
      %v6461 = vshrl.u32 %v6358, 16
      %v6463 = vrot.slane %v6461, 4
      %v6464 = vor.u32 %v6463, %v6459
      %v6465 = vrot.slane %v6464, 4
      %v6467 = vshll.u32 %v6359, 16
      %v6469 = vrot.slane %v6467, 5
      %v6470 = vsel %vm983, %v6465, %v6469
      %v6472 = vshrl.u32 %v6360, 16
      %v6474 = vrot.slane %v6472, 4
      %v6475 = vshll.u32 %v6360, 16
      %v6477 = vrot.slane %v6475, 5
      %v6478 = vor.u32 %v6474, %v6477
      %v6479 = vrot.slane %v6478, 4
      %v6481 = vshll.u32 %v6361, 16
      %v6483 = vrot.slane %v6481, 5
      %v6484 = vsel %vm983, %v6479, %v6483
      %v6485 = vshrl.u32 %v6361, 16
      %v6487 = vrot.slane %v6485, 4
      %v6488 = vor.u32 %v6487, %v6483
      %v6489 = vrot.slane %v6488, 4
      %v6491 = vshll.u32 %v6362, 16
      %v6493 = vrot.slane %v6491, 5
      %v6494 = vsel %vm983, %v6489, %v6493
      %v6496 = vshrl.u32 %v6363, 16
      %v6498 = vrot.slane %v6496, 4
      %v6499 = vshll.u32 %v6363, 16
      %v6501 = vrot.slane %v6499, 5
      %v6502 = vor.u32 %v6498, %v6501
      %v6503 = vrot.slane %v6502, 4
      %v6505 = vshll.u32 %v6364, 16
      %v6507 = vrot.slane %v6505, 5
      %v6508 = vsel %vm983, %v6503, %v6507
      %v6509 = vshrl.u32 %v6364, 16
      %v6511 = vrot.slane %v6509, 4
      %v6512 = vor.u32 %v6511, %v6507
      %v6513 = vrot.slane %v6512, 4
      %v6515 = vshll.u32 %v6365, 16
      %v6517 = vrot.slane %v6515, 5
      %v6518 = vsel %vm983, %v6513, %v6517
      %v6520 = vshrl.u32 %v6366, 16
      %v6522 = vrot.slane %v6520, 4
      %v6523 = vshll.u32 %v6366, 16
      %v6525 = vrot.slane %v6523, 5
      %v6526 = vor.u32 %v6522, %v6525
      %v6527 = vrot.slane %v6526, 4
      %v6529 = vshll.u32 %v6367, 16
      %v6531 = vrot.slane %v6529, 5
      %v6532 = vsel %vm983, %v6527, %v6531
      %v6533 = vshrl.u32 %v6367, 16
      %v6535 = vrot.slane %v6533, 4
      %v6536 = vor.u32 %v6535, %v6531
      %v6537 = vrot.slane %v6536, 4
      %v6539 = vshll.u32 %v6368, 16
      %v6541 = vrot.slane %v6539, 5
      %v6542 = vsel %vm983, %v6537, %v6541
      %v6544 = vshrl.u32 %v6369, 16
      %v6546 = vrot.slane %v6544, 4
      %v6547 = vshll.u32 %v6369, 16
      %v6549 = vrot.slane %v6547, 5
      %v6550 = vor.u32 %v6546, %v6549
      %v6551 = vrot.slane %v6550, 4
      %v6553 = vshll.u32 %v6370, 16
      %v6555 = vrot.slane %v6553, 5
      %v6556 = vsel %vm983, %v6551, %v6555
      %v6557 = vshrl.u32 %v6370, 16
      %v6559 = vrot.slane %v6557, 4
      %v6560 = vor.u32 %v6559, %v6555
      %v6561 = vrot.slane %v6560, 4
      %v6563 = vshll.u32 %v6371, 16
      %v6565 = vrot.slane %v6563, 5
      %v6566 = vsel %vm983, %v6561, %v6565
      %v6568 = vshrl.u32 %v6372, 16
      %v6570 = vrot.slane %v6568, 4
      %v6571 = vshll.u32 %v6372, 16
      %v6573 = vrot.slane %v6571, 5
      %v6574 = vor.u32 %v6570, %v6573
      %v6575 = vrot.slane %v6574, 4
      %v6577 = vshll.u32 %v6373, 16
      %v6579 = vrot.slane %v6577, 5
      %v6580 = vsel %vm983, %v6575, %v6579
      %v6581 = vshrl.u32 %v6373, 16
      %v6583 = vrot.slane %v6581, 4
      %v6584 = vor.u32 %v6583, %v6579
      %v6585 = vrot.slane %v6584, 4
      %v6587 = vshll.u32 %v6374, 16
      %v6589 = vrot.slane %v6587, 5
      %v6590 = vsel %vm983, %v6585, %v6589
      %v6592 = vshrl.u32 %v6375, 16
      %v6594 = vrot.slane %v6592, 4
      %v6595 = vshll.u32 %v6375, 16
      %v6597 = vrot.slane %v6595, 5
      %v6598 = vor.u32 %v6594, %v6597
      %v6599 = vrot.slane %v6598, 4
      %v6601 = vshll.u32 %v6376, 16
      %v6603 = vrot.slane %v6601, 5
      %v6604 = vsel %vm983, %v6599, %v6603
      %v6605 = vshrl.u32 %v6376, 16
      %v6607 = vrot.slane %v6605, 4
      %v6608 = vor.u32 %v6607, %v6603
      %v6609 = vrot.slane %v6608, 4
      %v6611 = vshll.u32 %v6377, 16
      %v6613 = vrot.slane %v6611, 5
      %v6614 = vsel %vm983, %v6609, %v6613
      %v6616 = vshrl.u32 %v6378, 16
      %v6618 = vrot.slane %v6616, 4
      %v6619 = vshll.u32 %v6378, 16
      %v6621 = vrot.slane %v6619, 5
      %v6622 = vor.u32 %v6618, %v6621
      %v6623 = vrot.slane %v6622, 4
      %v6625 = vshll.u32 %v6379, 16
      %v6627 = vrot.slane %v6625, 5
      %v6628 = vsel %vm983, %v6623, %v6627
      %v6629 = vshrl.u32 %v6379, 16
      %v6631 = vrot.slane %v6629, 4
      %v6632 = vor.u32 %v6631, %v6627
      %v6633 = vrot.slane %v6632, 4
      %v6635 = vshll.u32 %v6380, 16
      %v6637 = vrot.slane %v6635, 5
      %v6638 = vsel %vm983, %v6633, %v6637
      %v6640 = vshrl.u32 %v6381, 16
      %v6642 = vrot.slane %v6640, 4
      %v6643 = vshll.u32 %v6381, 16
      %v6645 = vrot.slane %v6643, 5
      %v6646 = vor.u32 %v6642, %v6645
      %v6647 = vrot.slane %v6646, 4
      %v6649 = vshll.u32 %v6382, 16
      %v6651 = vrot.slane %v6649, 5
      %v6652 = vsel %vm983, %v6647, %v6651
      %v6653 = vshrl.u32 %v6382, 16
      %v6655 = vrot.slane %v6653, 4
      %v6656 = vor.u32 %v6655, %v6651
      %v6657 = vrot.slane %v6656, 4
      %v6659 = vshll.u32 %v6383, 16
      %v6661 = vrot.slane %v6659, 5
      %v6662 = vsel %vm983, %v6657, %v6661
      %v6664 = vshrl.u32 %v6384, 16
      %v6666 = vrot.slane %v6664, 4
      %v6667 = vshll.u32 %v6384, 16
      %v6669 = vrot.slane %v6667, 5
      %v6670 = vor.u32 %v6666, %v6669
      %v6671 = vrot.slane %v6670, 4
      %v6673 = vshll.u32 %v6385, 16
      %v6675 = vrot.slane %v6673, 5
      %v6676 = vsel %vm983, %v6671, %v6675
      %v6677 = vshrl.u32 %v6385, 16
      %v6679 = vrot.slane %v6677, 4
      %v6680 = vor.u32 %v6679, %v6675
      %v6681 = vrot.slane %v6680, 4
      %v6683 = vshll.u32 %v6386, 16
      %v6685 = vrot.slane %v6683, 5
      %v6686 = vsel %vm983, %v6681, %v6685
      %v6688 = vshrl.u32 %v6387, 16
      %v6690 = vrot.slane %v6688, 4
      %v6691 = vshll.u32 %v6387, 16
      %v6693 = vrot.slane %v6691, 5
      %v6694 = vor.u32 %v6690, %v6693
      %v6695 = vrot.slane %v6694, 4
      %v6697 = vshll.u32 %v6388, 16
      %v6699 = vrot.slane %v6697, 5
      %v6700 = vsel %vm983, %v6695, %v6699
      %v6701 = vshrl.u32 %v6388, 16
      %v6703 = vrot.slane %v6701, 4
      %v6704 = vor.u32 %v6703, %v6699
      %v6705 = vrot.slane %v6704, 4
      %v6707 = vshll.u32 %v6389, 16
      %v6709 = vrot.slane %v6707, 5
      %v6710 = vsel %vm983, %v6705, %v6709
      %v6712 = vshrl.u32 %v6390, 16
      %v6714 = vrot.slane %v6712, 4
      %v6715 = vshll.u32 %v6390, 16
      %v6717 = vrot.slane %v6715, 5
      %v6718 = vor.u32 %v6714, %v6717
      %v6719 = vrot.slane %v6718, 4
      %v6721 = vshll.u32 %v6391, 16
      %v6723 = vrot.slane %v6721, 5
      %v6724 = vsel %vm983, %v6719, %v6723
      %v6725 = vshrl.u32 %v6391, 16
      %v6727 = vrot.slane %v6725, 4
      %v6728 = vor.u32 %v6727, %v6723
      %v6729 = vrot.slane %v6728, 4
      %v6731 = vshll.u32 %v6392, 16
      %v6733 = vrot.slane %v6731, 5
      %v6734 = vsel %vm983, %v6729, %v6733
      %v6736 = vshrl.u32 %v6393, 16
      %v6738 = vrot.slane %v6736, 4
      %v6739 = vshll.u32 %v6393, 16
      %v6741 = vrot.slane %v6739, 5
      %v6742 = vor.u32 %v6738, %v6741
      %v6743 = vrot.slane %v6742, 4
      %v6745 = vshll.u32 %v6394, 16
      %v6747 = vrot.slane %v6745, 5
      %v6748 = vsel %vm983, %v6743, %v6747
      %v6749 = vshrl.u32 %v6394, 16
      %v6751 = vrot.slane %v6749, 4
      %v6752 = vor.u32 %v6751, %v6747
      %v6753 = vrot.slane %v6752, 4
      %v6755 = vshll.u32 %v6395, 16
      %v6757 = vrot.slane %v6755, 5
      %v6758 = vsel %vm983, %v6753, %v6757
      %v6760 = vshrl.u32 %v6396, 16
      %v6762 = vrot.slane %v6760, 4
      %v6763 = vshll.u32 %v6396, 16
      %v6765 = vrot.slane %v6763, 5
      %v6766 = vor.u32 %v6762, %v6765
      %v6767 = vrot.slane %v6766, 4
      %v6769 = vshll.u32 %v6397, 16
      %v6771 = vrot.slane %v6769, 5
      %v6772 = vsel %vm983, %v6767, %v6771
      %v6773 = vshrl.u32 %v6397, 16
      %v6775 = vrot.slane %v6773, 4
      %v6776 = vor.u32 %v6775, %v6771
      %v6777 = vrot.slane %v6776, 4
      %v6779 = vshll.u32 %v6398, 16
      %v6781 = vrot.slane %v6779, 5
      %v6782 = vsel %vm983, %v6777, %v6781
      %6815 = vst [vmem:[#allocation3 + $0x4] sm:$0xf] %v6412
      %6816 = vst [vmem:[#allocation3 + $0x28] sm:$0xf] %v6422
      %6817 = vst [vmem:[#allocation3 + $0x4c] sm:$0xf] %v6436
      %6818 = vst [vmem:[#allocation3 + $0x70] sm:$0xf] %v6446
      %6819 = vst [vmem:[#allocation3 + $0x94] sm:$0xf] %v6460
      %6820 = vst [vmem:[#allocation3 + $0xb8] sm:$0xf] %v6470
      %6821 = vst [vmem:[#allocation3 + $0xdc] sm:$0xf] %v6484
      %6822 = vst [vmem:[#allocation3 + $0x100] sm:$0xf] %v6494
      %6823 = vst [vmem:[#allocation3 + $0x124] sm:$0xf] %v6508
      %6824 = vst [vmem:[#allocation3 + $0x148] sm:$0xf] %v6518
      %6825 = vst [vmem:[#allocation3 + $0x16c] sm:$0xf] %v6532
      %6826 = vst [vmem:[#allocation3 + $0x190] sm:$0xf] %v6542
      %6827 = vst [vmem:[#allocation3 + $0x1b4] sm:$0xf] %v6556
      %6828 = vst [vmem:[#allocation3 + $0x1d8] sm:$0xf] %v6566
      %6829 = vst [vmem:[#allocation3 + $0x1fc] sm:$0xf] %v6580
      %6830 = vst [vmem:[#allocation3 + $0x220] sm:$0xf] %v6590
      %6831 = vst [vmem:[#allocation3 + $0x244] sm:$0xf] %v6604
      %6832 = vst [vmem:[#allocation3 + $0x268] sm:$0xf] %v6614
      %6833 = vst [vmem:[#allocation3 + $0x28c] sm:$0xf] %v6628
      %6834 = vst [vmem:[#allocation3 + $0x2b0] sm:$0xf] %v6638
      %6835 = vst [vmem:[#allocation3 + $0x2d4] sm:$0xf] %v6652
      %6836 = vst [vmem:[#allocation3 + $0x2f8] sm:$0xf] %v6662
      %6837 = vst [vmem:[#allocation3 + $0x31c] sm:$0xf] %v6676
      %6838 = vst [vmem:[#allocation3 + $0x340] sm:$0xf] %v6686
      %6839 = vst [vmem:[#allocation3 + $0x364] sm:$0xf] %v6700
      %6840 = vst [vmem:[#allocation3 + $0x388] sm:$0xf] %v6710
      %6841 = vst [vmem:[#allocation3 + $0x3ac] sm:$0xf] %v6724
      %6842 = vst [vmem:[#allocation3 + $0x3d0] sm:$0xf] %v6734
      %6843 = vst [vmem:[#allocation3 + $0x3f4] sm:$0xf] %v6748
      %6844 = vst [vmem:[#allocation3 + $0x418] sm:$0xf] %v6758
      %6845 = vst [vmem:[#allocation3 + $0x43c] sm:$0xf] %v6772
      %6846 = vst [vmem:[#allocation3 + $0x460] sm:$0xf] %v6782
      %v6847 = vld [vmem:[#allocation2] sm:$0xe]
      %v6848 = vld [vmem:[#allocation2 + $0x4] sm:$0xf]
      %v6849 = vld [vmem:[#allocation2 + $0x8] sm:$0x1]
      %v6850 = vld [vmem:[#allocation2 + $0xc] sm:$0xe]
      %v6851 = vld [vmem:[#allocation2 + $0x10] sm:$0xf]
      %v6852 = vld [vmem:[#allocation2 + $0x14] sm:$0x1]
      %v6853 = vld [vmem:[#allocation2 + $0x18] sm:$0xe]
      %v6854 = vld [vmem:[#allocation2 + $0x1c] sm:$0xf]
      %v6855 = vld [vmem:[#allocation2 + $0x20] sm:$0x1]
      %v6856 = vld [vmem:[#allocation2 + $0x24] sm:$0xe]
      %v6857 = vld [vmem:[#allocation2 + $0x28] sm:$0xf]
      %v6858 = vld [vmem:[#allocation2 + $0x2c] sm:$0x1]
      %v6859 = vld [vmem:[#allocation2 + $0x30] sm:$0xe]
      %v6860 = vld [vmem:[#allocation2 + $0x34] sm:$0xf]
      %v6861 = vld [vmem:[#allocation2 + $0x38] sm:$0x1]
      %v6862 = vld [vmem:[#allocation2 + $0x3c] sm:$0xe]
      %v6863 = vld [vmem:[#allocation2 + $0x40] sm:$0xf]
      %v6864 = vld [vmem:[#allocation2 + $0x44] sm:$0x1]
      %v6865 = vld [vmem:[#allocation2 + $0x48] sm:$0xe]
      %v6866 = vld [vmem:[#allocation2 + $0x4c] sm:$0xf]
      %v6867 = vld [vmem:[#allocation2 + $0x50] sm:$0x1]
      %v6868 = vld [vmem:[#allocation2 + $0x54] sm:$0xe]
      %v6869 = vld [vmem:[#allocation2 + $0x58] sm:$0xf]
      %v6870 = vld [vmem:[#allocation2 + $0x5c] sm:$0x1]
      %v6871 = vld [vmem:[#allocation2 + $0x60] sm:$0xe]
      %v6872 = vld [vmem:[#allocation2 + $0x64] sm:$0xf]
      %v6873 = vld [vmem:[#allocation2 + $0x68] sm:$0x1]
      %v6874 = vld [vmem:[#allocation2 + $0x6c] sm:$0xe]
      %v6875 = vld [vmem:[#allocation2 + $0x70] sm:$0xf]
      %v6876 = vld [vmem:[#allocation2 + $0x74] sm:$0x1]
      %v6877 = vld [vmem:[#allocation2 + $0x78] sm:$0xe]
      %v6878 = vld [vmem:[#allocation2 + $0x7c] sm:$0xf]
      %v6879 = vld [vmem:[#allocation2 + $0x80] sm:$0x1]
      %v6880 = vld [vmem:[#allocation2 + $0x84] sm:$0xe]
      %v6881 = vld [vmem:[#allocation2 + $0x88] sm:$0xf]
      %v6882 = vld [vmem:[#allocation2 + $0x8c] sm:$0x1]
      %v6883 = vld [vmem:[#allocation2 + $0x90] sm:$0xe]
      %v6884 = vld [vmem:[#allocation2 + $0x94] sm:$0xf]
      %v6885 = vld [vmem:[#allocation2 + $0x98] sm:$0x1]
      %v6886 = vld [vmem:[#allocation2 + $0x9c] sm:$0xe]
      %v6887 = vld [vmem:[#allocation2 + $0xa0] sm:$0xf]
      %v6888 = vld [vmem:[#allocation2 + $0xa4] sm:$0x1]
      %v6889 = vld [vmem:[#allocation2 + $0xa8] sm:$0xe]
      %v6890 = vld [vmem:[#allocation2 + $0xac] sm:$0xf]
      %v6891 = vld [vmem:[#allocation2 + $0xb0] sm:$0x1]
      %v6892 = vld [vmem:[#allocation2 + $0xb4] sm:$0xe]
      %v6893 = vld [vmem:[#allocation2 + $0xb8] sm:$0xf]
      %v6894 = vld [vmem:[#allocation2 + $0xbc] sm:$0x1]
      %v6943 = vrot.slane %v6847, 5
      %v6944 = vrot.slane %v6943, 4
      %v6945 = vrot.slane %v6848, 5
      %v6946 = vsel %vm1530, %v6944, %v6945
      %v6947 = vrot.slane %v6945, 4
      %v6948 = vrot.slane %v6849, 5
      %v6949 = vsel %vm1530, %v6947, %v6948
      %v6950 = vrot.slane %v6850, 5
      %v6951 = vrot.slane %v6950, 4
      %v6952 = vrot.slane %v6851, 5
      %v6953 = vsel %vm1530, %v6951, %v6952
      %v6954 = vrot.slane %v6952, 4
      %v6955 = vrot.slane %v6852, 5
      %v6956 = vsel %vm1530, %v6954, %v6955
      %v6957 = vrot.slane %v6853, 5
      %v6958 = vrot.slane %v6957, 4
      %v6959 = vrot.slane %v6854, 5
      %v6960 = vsel %vm1530, %v6958, %v6959
      %v6961 = vrot.slane %v6959, 4
      %v6962 = vrot.slane %v6855, 5
      %v6963 = vsel %vm1530, %v6961, %v6962
      %v6964 = vrot.slane %v6856, 5
      %v6965 = vrot.slane %v6964, 4
      %v6966 = vrot.slane %v6857, 5
      %v6967 = vsel %vm1530, %v6965, %v6966
      %v6968 = vrot.slane %v6966, 4
      %v6969 = vrot.slane %v6858, 5
      %v6970 = vsel %vm1530, %v6968, %v6969
      %v6971 = vrot.slane %v6859, 5
      %v6972 = vrot.slane %v6971, 4
      %v6973 = vrot.slane %v6860, 5
      %v6974 = vsel %vm1530, %v6972, %v6973
      %v6975 = vrot.slane %v6973, 4
      %v6976 = vrot.slane %v6861, 5
      %v6977 = vsel %vm1530, %v6975, %v6976
      %v6978 = vrot.slane %v6862, 5
      %v6979 = vrot.slane %v6978, 4
      %v6980 = vrot.slane %v6863, 5
      %v6981 = vsel %vm1530, %v6979, %v6980
      %v6982 = vrot.slane %v6980, 4
      %v6983 = vrot.slane %v6864, 5
      %v6984 = vsel %vm1530, %v6982, %v6983
      %v6985 = vrot.slane %v6865, 5
      %v6986 = vrot.slane %v6985, 4
      %v6987 = vrot.slane %v6866, 5
      %v6988 = vsel %vm1530, %v6986, %v6987
      %v6989 = vrot.slane %v6987, 4
      %v6990 = vrot.slane %v6867, 5
      %v6991 = vsel %vm1530, %v6989, %v6990
      %v6992 = vrot.slane %v6868, 5
      %v6993 = vrot.slane %v6992, 4
      %v6994 = vrot.slane %v6869, 5
      %v6995 = vsel %vm1530, %v6993, %v6994
      %v6996 = vrot.slane %v6994, 4
      %v6997 = vrot.slane %v6870, 5
      %v6998 = vsel %vm1530, %v6996, %v6997
      %v6999 = vrot.slane %v6871, 5
      %v7000 = vrot.slane %v6999, 4
      %v7001 = vrot.slane %v6872, 5
      %v7002 = vsel %vm1530, %v7000, %v7001
      %v7003 = vrot.slane %v7001, 4
      %v7004 = vrot.slane %v6873, 5
      %v7005 = vsel %vm1530, %v7003, %v7004
      %v7006 = vrot.slane %v6874, 5
      %v7007 = vrot.slane %v7006, 4
      %v7008 = vrot.slane %v6875, 5
      %v7009 = vsel %vm1530, %v7007, %v7008
      %v7010 = vrot.slane %v7008, 4
      %v7011 = vrot.slane %v6876, 5
      %v7012 = vsel %vm1530, %v7010, %v7011
      %v7013 = vrot.slane %v6877, 5
      %v7014 = vrot.slane %v7013, 4
      %v7015 = vrot.slane %v6878, 5
      %v7016 = vsel %vm1530, %v7014, %v7015
      %v7017 = vrot.slane %v7015, 4
      %v7018 = vrot.slane %v6879, 5
      %v7019 = vsel %vm1530, %v7017, %v7018
      %v7020 = vrot.slane %v6880, 5
      %v7021 = vrot.slane %v7020, 4
      %v7022 = vrot.slane %v6881, 5
      %v7023 = vsel %vm1530, %v7021, %v7022
      %v7024 = vrot.slane %v7022, 4
      %v7025 = vrot.slane %v6882, 5
      %v7026 = vsel %vm1530, %v7024, %v7025
      %v7027 = vrot.slane %v6883, 5
      %v7028 = vrot.slane %v7027, 4
      %v7029 = vrot.slane %v6884, 5
      %v7030 = vsel %vm1530, %v7028, %v7029
      %v7031 = vrot.slane %v7029, 4
      %v7032 = vrot.slane %v6885, 5
      %v7033 = vsel %vm1530, %v7031, %v7032
      %v7034 = vrot.slane %v6886, 5
      %v7035 = vrot.slane %v7034, 4
      %v7036 = vrot.slane %v6887, 5
      %v7037 = vsel %vm1530, %v7035, %v7036
      %v7038 = vrot.slane %v7036, 4
      %v7039 = vrot.slane %v6888, 5
      %v7040 = vsel %vm1530, %v7038, %v7039
      %v7041 = vrot.slane %v6889, 5
      %v7042 = vrot.slane %v7041, 4
      %v7043 = vrot.slane %v6890, 5
      %v7044 = vsel %vm1530, %v7042, %v7043
      %v7045 = vrot.slane %v7043, 4
      %v7046 = vrot.slane %v6891, 5
      %v7047 = vsel %vm1530, %v7045, %v7046
      %v7048 = vrot.slane %v6892, 5
      %v7049 = vrot.slane %v7048, 4
      %v7050 = vrot.slane %v6893, 5
      %v7051 = vsel %vm1530, %v7049, %v7050
      %v7052 = vrot.slane %v7050, 4
      %v7053 = vrot.slane %v6894, 5
      %v7054 = vsel %vm1530, %v7052, %v7053
      %7087 = vst [vmem:[#allocation3 + $0x8] sm:$0xf] %v6946
      %7088 = vst [vmem:[#allocation3 + $0x2c] sm:$0xf] %v6949
      %7089 = vst [vmem:[#allocation3 + $0x50] sm:$0xf] %v6953
      %7090 = vst [vmem:[#allocation3 + $0x74] sm:$0xf] %v6956
      %7091 = vst [vmem:[#allocation3 + $0x98] sm:$0xf] %v6960
      %7092 = vst [vmem:[#allocation3 + $0xbc] sm:$0xf] %v6963
      %7093 = vst [vmem:[#allocation3 + $0xe0] sm:$0xf] %v6967
      %7094 = vst [vmem:[#allocation3 + $0x104] sm:$0xf] %v6970
      %7095 = vst [vmem:[#allocation3 + $0x128] sm:$0xf] %v6974
      %7096 = vst [vmem:[#allocation3 + $0x14c] sm:$0xf] %v6977
      %7097 = vst [vmem:[#allocation3 + $0x170] sm:$0xf] %v6981
      %7098 = vst [vmem:[#allocation3 + $0x194] sm:$0xf] %v6984
      %7099 = vst [vmem:[#allocation3 + $0x1b8] sm:$0xf] %v6988
      %7100 = vst [vmem:[#allocation3 + $0x1dc] sm:$0xf] %v6991
      %7101 = vst [vmem:[#allocation3 + $0x200] sm:$0xf] %v6995
      %7102 = vst [vmem:[#allocation3 + $0x224] sm:$0xf] %v6998
      %7103 = vst [vmem:[#allocation3 + $0x248] sm:$0xf] %v7002
      %7104 = vst [vmem:[#allocation3 + $0x26c] sm:$0xf] %v7005
      %7105 = vst [vmem:[#allocation3 + $0x290] sm:$0xf] %v7009
      %7106 = vst [vmem:[#allocation3 + $0x2b4] sm:$0xf] %v7012
      %7107 = vst [vmem:[#allocation3 + $0x2d8] sm:$0xf] %v7016
      %7108 = vst [vmem:[#allocation3 + $0x2fc] sm:$0xf] %v7019
      %7109 = vst [vmem:[#allocation3 + $0x320] sm:$0xf] %v7023
      %7110 = vst [vmem:[#allocation3 + $0x344] sm:$0xf] %v7026
      %7111 = vst [vmem:[#allocation3 + $0x368] sm:$0xf] %v7030
      %7112 = vst [vmem:[#allocation3 + $0x38c] sm:$0xf] %v7033
      %7113 = vst [vmem:[#allocation3 + $0x3b0] sm:$0xf] %v7037
      %7114 = vst [vmem:[#allocation3 + $0x3d4] sm:$0xf] %v7040
      %7115 = vst [vmem:[#allocation3 + $0x3f8] sm:$0xf] %v7044
      %7116 = vst [vmem:[#allocation3 + $0x41c] sm:$0xf] %v7047
      %7117 = vst [vmem:[#allocation3 + $0x440] sm:$0xf] %v7051
      %7118 = vst [vmem:[#allocation3 + $0x464] sm:$0xf] %v7054
      %v7119 = vld [vmem:[%s754] sm:$0xf]
      %v7120 = vld [vmem:[%s754 + $0x4] sm:$0xf]
      %v7121 = vld [vmem:[%s754 + $0xc] sm:$0xf]
      %v7122 = vld [vmem:[%s754 + $0x10] sm:$0xf]
      %v7123 = vld [vmem:[%s754 + $0x18] sm:$0xf]
      %v7124 = vld [vmem:[%s754 + $0x1c] sm:$0xf]
      %v7125 = vld [vmem:[%s754 + $0x24] sm:$0xf]
      %v7126 = vld [vmem:[%s754 + $0x28] sm:$0xf]
      %v7127 = vld [vmem:[%s754 + $0x30] sm:$0xf]
      %v7128 = vld [vmem:[%s754 + $0x34] sm:$0xf]
      %v7129 = vld [vmem:[%s754 + $0x3c] sm:$0xf]
      %v7130 = vld [vmem:[%s754 + $0x40] sm:$0xf]
      %v7131 = vld [vmem:[%s754 + $0x48] sm:$0xf]
      %v7132 = vld [vmem:[%s754 + $0x4c] sm:$0xf]
      %v7133 = vld [vmem:[%s754 + $0x54] sm:$0xf]
      %v7134 = vld [vmem:[%s754 + $0x58] sm:$0xf]
      %v7135 = vld [vmem:[%s754 + $0x60] sm:$0xf]
      %v7136 = vld [vmem:[%s754 + $0x64] sm:$0xf]
      %v7137 = vld [vmem:[%s754 + $0x6c] sm:$0xf]
      %v7138 = vld [vmem:[%s754 + $0x70] sm:$0xf]
      %v7139 = vld [vmem:[%s754 + $0x78] sm:$0xf]
      %v7140 = vld [vmem:[%s754 + $0x7c] sm:$0xf]
      %v7141 = vld [vmem:[%s754 + $0x84] sm:$0xf]
      %v7142 = vld [vmem:[%s754 + $0x88] sm:$0xf]
      %v7143 = vld [vmem:[%s754 + $0x90] sm:$0xf]
      %v7144 = vld [vmem:[%s754 + $0x94] sm:$0xf]
      %v7145 = vld [vmem:[%s754 + $0x9c] sm:$0xf]
      %v7146 = vld [vmem:[%s754 + $0xa0] sm:$0xf]
      %v7147 = vld [vmem:[%s754 + $0xa8] sm:$0xf]
      %v7148 = vld [vmem:[%s754 + $0xac] sm:$0xf]
      %v7149 = vld [vmem:[%s754 + $0xb4] sm:$0xf]
      %v7150 = vld [vmem:[%s754 + $0xb8] sm:$0xf]
      %7151 = vst [vmem:[#allocation3 + $0xc] sm:$0xf] %v7119
      %7152 = vst [vmem:[#allocation3 + $0x30] sm:$0xf] %v7120
      %7153 = vst [vmem:[#allocation3 + $0x54] sm:$0xf] %v7121
      %7154 = vst [vmem:[#allocation3 + $0x78] sm:$0xf] %v7122
      %7155 = vst [vmem:[#allocation3 + $0x9c] sm:$0xf] %v7123
      %7156 = vst [vmem:[#allocation3 + $0xc0] sm:$0xf] %v7124
      %7157 = vst [vmem:[#allocation3 + $0xe4] sm:$0xf] %v7125
      %7158 = vst [vmem:[#allocation3 + $0x108] sm:$0xf] %v7126
      %7159 = vst [vmem:[#allocation3 + $0x12c] sm:$0xf] %v7127
      %7160 = vst [vmem:[#allocation3 + $0x150] sm:$0xf] %v7128
      %7161 = vst [vmem:[#allocation3 + $0x174] sm:$0xf] %v7129
      %7162 = vst [vmem:[#allocation3 + $0x198] sm:$0xf] %v7130
      %7163 = vst [vmem:[#allocation3 + $0x1bc] sm:$0xf] %v7131
      %7164 = vst [vmem:[#allocation3 + $0x1e0] sm:$0xf] %v7132
      %7165 = vst [vmem:[#allocation3 + $0x204] sm:$0xf] %v7133
      %7166 = vst [vmem:[#allocation3 + $0x228] sm:$0xf] %v7134
      %7167 = vst [vmem:[#allocation3 + $0x24c] sm:$0xf] %v7135
      %7168 = vst [vmem:[#allocation3 + $0x270] sm:$0xf] %v7136
      %7169 = vst [vmem:[#allocation3 + $0x294] sm:$0xf] %v7137
      %7170 = vst [vmem:[#allocation3 + $0x2b8] sm:$0xf] %v7138
      %7171 = vst [vmem:[#allocation3 + $0x2dc] sm:$0xf] %v7139
      %7172 = vst [vmem:[#allocation3 + $0x300] sm:$0xf] %v7140
      %7173 = vst [vmem:[#allocation3 + $0x324] sm:$0xf] %v7141
      %7174 = vst [vmem:[#allocation3 + $0x348] sm:$0xf] %v7142
      %7175 = vst [vmem:[#allocation3 + $0x36c] sm:$0xf] %v7143
      %7176 = vst [vmem:[#allocation3 + $0x390] sm:$0xf] %v7144
      %7177 = vst [vmem:[#allocation3 + $0x3b4] sm:$0xf] %v7145
      %7178 = vst [vmem:[#allocation3 + $0x3d8] sm:$0xf] %v7146
      %7179 = vst [vmem:[#allocation3 + $0x3fc] sm:$0xf] %v7147
      %7180 = vst [vmem:[#allocation3 + $0x420] sm:$0xf] %v7148
      %7181 = vst [vmem:[#allocation3 + $0x444] sm:$0xf] %v7149
      %7182 = vst [vmem:[#allocation3 + $0x468] sm:$0xf] %v7150
      %v7183 = vld [vmem:[%s754] sm:$0xf]
      %v7184 = vld [vmem:[%s754 + $0x4] sm:$0xf]
      %v7185 = vld [vmem:[%s754 + $0x8] sm:$0x1]
      %v7186 = vld [vmem:[%s754 + $0xc] sm:$0xf]
      %v7187 = vld [vmem:[%s754 + $0x10] sm:$0xf]
      %v7188 = vld [vmem:[%s754 + $0x14] sm:$0x1]
      %v7189 = vld [vmem:[%s754 + $0x18] sm:$0xf]
      %v7190 = vld [vmem:[%s754 + $0x1c] sm:$0xf]
      %v7191 = vld [vmem:[%s754 + $0x20] sm:$0x1]
      %v7192 = vld [vmem:[%s754 + $0x24] sm:$0xf]
      %v7193 = vld [vmem:[%s754 + $0x28] sm:$0xf]
      %v7194 = vld [vmem:[%s754 + $0x2c] sm:$0x1]
      %v7195 = vld [vmem:[%s754 + $0x30] sm:$0xf]
      %v7196 = vld [vmem:[%s754 + $0x34] sm:$0xf]
      %v7197 = vld [vmem:[%s754 + $0x38] sm:$0x1]
      %v7198 = vld [vmem:[%s754 + $0x3c] sm:$0xf]
      %v7199 = vld [vmem:[%s754 + $0x40] sm:$0xf]
      %v7200 = vld [vmem:[%s754 + $0x44] sm:$0x1]
      %v7201 = vld [vmem:[%s754 + $0x48] sm:$0xf]
      %v7202 = vld [vmem:[%s754 + $0x4c] sm:$0xf]
      %v7203 = vld [vmem:[%s754 + $0x50] sm:$0x1]
      %v7204 = vld [vmem:[%s754 + $0x54] sm:$0xf]
      %v7205 = vld [vmem:[%s754 + $0x58] sm:$0xf]
      %v7206 = vld [vmem:[%s754 + $0x5c] sm:$0x1]
      %v7207 = vld [vmem:[%s754 + $0x60] sm:$0xf]
      %v7208 = vld [vmem:[%s754 + $0x64] sm:$0xf]
      %v7209 = vld [vmem:[%s754 + $0x68] sm:$0x1]
      %v7210 = vld [vmem:[%s754 + $0x6c] sm:$0xf]
      %v7211 = vld [vmem:[%s754 + $0x70] sm:$0xf]
      %v7212 = vld [vmem:[%s754 + $0x74] sm:$0x1]
      %v7213 = vld [vmem:[%s754 + $0x78] sm:$0xf]
      %v7214 = vld [vmem:[%s754 + $0x7c] sm:$0xf]
      %v7215 = vld [vmem:[%s754 + $0x80] sm:$0x1]
      %v7216 = vld [vmem:[%s754 + $0x84] sm:$0xf]
      %v7217 = vld [vmem:[%s754 + $0x88] sm:$0xf]
      %v7218 = vld [vmem:[%s754 + $0x8c] sm:$0x1]
      %v7219 = vld [vmem:[%s754 + $0x90] sm:$0xf]
      %v7220 = vld [vmem:[%s754 + $0x94] sm:$0xf]
      %v7221 = vld [vmem:[%s754 + $0x98] sm:$0x1]
      %v7222 = vld [vmem:[%s754 + $0x9c] sm:$0xf]
      %v7223 = vld [vmem:[%s754 + $0xa0] sm:$0xf]
      %v7224 = vld [vmem:[%s754 + $0xa4] sm:$0x1]
      %v7225 = vld [vmem:[%s754 + $0xa8] sm:$0xf]
      %v7226 = vld [vmem:[%s754 + $0xac] sm:$0xf]
      %v7227 = vld [vmem:[%s754 + $0xb0] sm:$0x1]
      %v7228 = vld [vmem:[%s754 + $0xb4] sm:$0xf]
      %v7229 = vld [vmem:[%s754 + $0xb8] sm:$0xf]
      %v7230 = vld [vmem:[%s754 + $0xbc] sm:$0x1]
      %v7232 = vshrl.u32 %v7183, 16
      %v7234 = vrot.slane %v7232, 4
      %v7235 = vshll.u32 %v7183, 16
      %v7237 = vrot.slane %v7235, 5
      %v7238 = vor.u32 %v7234, %v7237
      %v7239 = vrot.slane %v7238, 4
      %v7241 = vshll.u32 %v7184, 16
      %v7243 = vrot.slane %v7241, 5
      %v7244 = vsel %vm983, %v7239, %v7243
      %v7245 = vshrl.u32 %v7184, 16
      %v7247 = vrot.slane %v7245, 4
      %v7248 = vor.u32 %v7247, %v7243
      %v7249 = vrot.slane %v7248, 4
      %v7251 = vshll.u32 %v7185, 16
      %v7253 = vrot.slane %v7251, 5
      %v7254 = vsel %vm983, %v7249, %v7253
      %v7256 = vshrl.u32 %v7186, 16
      %v7258 = vrot.slane %v7256, 4
      %v7259 = vshll.u32 %v7186, 16
      %v7261 = vrot.slane %v7259, 5
      %v7262 = vor.u32 %v7258, %v7261
      %v7263 = vrot.slane %v7262, 4
      %v7265 = vshll.u32 %v7187, 16
      %v7267 = vrot.slane %v7265, 5
      %v7268 = vsel %vm983, %v7263, %v7267
      %v7269 = vshrl.u32 %v7187, 16
      %v7271 = vrot.slane %v7269, 4
      %v7272 = vor.u32 %v7271, %v7267
      %v7273 = vrot.slane %v7272, 4
      %v7275 = vshll.u32 %v7188, 16
      %v7277 = vrot.slane %v7275, 5
      %v7278 = vsel %vm983, %v7273, %v7277
      %v7280 = vshrl.u32 %v7189, 16
      %v7282 = vrot.slane %v7280, 4
      %v7283 = vshll.u32 %v7189, 16
      %v7285 = vrot.slane %v7283, 5
      %v7286 = vor.u32 %v7282, %v7285
      %v7287 = vrot.slane %v7286, 4
      %v7289 = vshll.u32 %v7190, 16
      %v7291 = vrot.slane %v7289, 5
      %v7292 = vsel %vm983, %v7287, %v7291
      %v7293 = vshrl.u32 %v7190, 16
      %v7295 = vrot.slane %v7293, 4
      %v7296 = vor.u32 %v7295, %v7291
      %v7297 = vrot.slane %v7296, 4
      %v7299 = vshll.u32 %v7191, 16
      %v7301 = vrot.slane %v7299, 5
      %v7302 = vsel %vm983, %v7297, %v7301
      %v7304 = vshrl.u32 %v7192, 16
      %v7306 = vrot.slane %v7304, 4
      %v7307 = vshll.u32 %v7192, 16
      %v7309 = vrot.slane %v7307, 5
      %v7310 = vor.u32 %v7306, %v7309
      %v7311 = vrot.slane %v7310, 4
      %v7313 = vshll.u32 %v7193, 16
      %v7315 = vrot.slane %v7313, 5
      %v7316 = vsel %vm983, %v7311, %v7315
      %v7317 = vshrl.u32 %v7193, 16
      %v7319 = vrot.slane %v7317, 4
      %v7320 = vor.u32 %v7319, %v7315
      %v7321 = vrot.slane %v7320, 4
      %v7323 = vshll.u32 %v7194, 16
      %v7325 = vrot.slane %v7323, 5
      %v7326 = vsel %vm983, %v7321, %v7325
      %v7328 = vshrl.u32 %v7195, 16
      %v7330 = vrot.slane %v7328, 4
      %v7331 = vshll.u32 %v7195, 16
      %v7333 = vrot.slane %v7331, 5
      %v7334 = vor.u32 %v7330, %v7333
      %v7335 = vrot.slane %v7334, 4
      %v7337 = vshll.u32 %v7196, 16
      %v7339 = vrot.slane %v7337, 5
      %v7340 = vsel %vm983, %v7335, %v7339
      %v7341 = vshrl.u32 %v7196, 16
      %v7343 = vrot.slane %v7341, 4
      %v7344 = vor.u32 %v7343, %v7339
      %v7345 = vrot.slane %v7344, 4
      %v7347 = vshll.u32 %v7197, 16
      %v7349 = vrot.slane %v7347, 5
      %v7350 = vsel %vm983, %v7345, %v7349
      %v7352 = vshrl.u32 %v7198, 16
      %v7354 = vrot.slane %v7352, 4
      %v7355 = vshll.u32 %v7198, 16
      %v7357 = vrot.slane %v7355, 5
      %v7358 = vor.u32 %v7354, %v7357
      %v7359 = vrot.slane %v7358, 4
      %v7361 = vshll.u32 %v7199, 16
      %v7363 = vrot.slane %v7361, 5
      %v7364 = vsel %vm983, %v7359, %v7363
      %v7365 = vshrl.u32 %v7199, 16
      %v7367 = vrot.slane %v7365, 4
      %v7368 = vor.u32 %v7367, %v7363
      %v7369 = vrot.slane %v7368, 4
      %v7371 = vshll.u32 %v7200, 16
      %v7373 = vrot.slane %v7371, 5
      %v7374 = vsel %vm983, %v7369, %v7373
      %v7376 = vshrl.u32 %v7201, 16
      %v7378 = vrot.slane %v7376, 4
      %v7379 = vshll.u32 %v7201, 16
      %v7381 = vrot.slane %v7379, 5
      %v7382 = vor.u32 %v7378, %v7381
      %v7383 = vrot.slane %v7382, 4
      %v7385 = vshll.u32 %v7202, 16
      %v7387 = vrot.slane %v7385, 5
      %v7388 = vsel %vm983, %v7383, %v7387
      %v7389 = vshrl.u32 %v7202, 16
      %v7391 = vrot.slane %v7389, 4
      %v7392 = vor.u32 %v7391, %v7387
      %v7393 = vrot.slane %v7392, 4
      %v7395 = vshll.u32 %v7203, 16
      %v7397 = vrot.slane %v7395, 5
      %v7398 = vsel %vm983, %v7393, %v7397
      %v7400 = vshrl.u32 %v7204, 16
      %v7402 = vrot.slane %v7400, 4
      %v7403 = vshll.u32 %v7204, 16
      %v7405 = vrot.slane %v7403, 5
      %v7406 = vor.u32 %v7402, %v7405
      %v7407 = vrot.slane %v7406, 4
      %v7409 = vshll.u32 %v7205, 16
      %v7411 = vrot.slane %v7409, 5
      %v7412 = vsel %vm983, %v7407, %v7411
      %v7413 = vshrl.u32 %v7205, 16
      %v7415 = vrot.slane %v7413, 4
      %v7416 = vor.u32 %v7415, %v7411
      %v7417 = vrot.slane %v7416, 4
      %v7419 = vshll.u32 %v7206, 16
      %v7421 = vrot.slane %v7419, 5
      %v7422 = vsel %vm983, %v7417, %v7421
      %v7424 = vshrl.u32 %v7207, 16
      %v7426 = vrot.slane %v7424, 4
      %v7427 = vshll.u32 %v7207, 16
      %v7429 = vrot.slane %v7427, 5
      %v7430 = vor.u32 %v7426, %v7429
      %v7431 = vrot.slane %v7430, 4
      %v7433 = vshll.u32 %v7208, 16
      %v7435 = vrot.slane %v7433, 5
      %v7436 = vsel %vm983, %v7431, %v7435
      %v7437 = vshrl.u32 %v7208, 16
      %v7439 = vrot.slane %v7437, 4
      %v7440 = vor.u32 %v7439, %v7435
      %v7441 = vrot.slane %v7440, 4
      %v7443 = vshll.u32 %v7209, 16
      %v7445 = vrot.slane %v7443, 5
      %v7446 = vsel %vm983, %v7441, %v7445
      %v7448 = vshrl.u32 %v7210, 16
      %v7450 = vrot.slane %v7448, 4
      %v7451 = vshll.u32 %v7210, 16
      %v7453 = vrot.slane %v7451, 5
      %v7454 = vor.u32 %v7450, %v7453
      %v7455 = vrot.slane %v7454, 4
      %v7457 = vshll.u32 %v7211, 16
      %v7459 = vrot.slane %v7457, 5
      %v7460 = vsel %vm983, %v7455, %v7459
      %v7461 = vshrl.u32 %v7211, 16
      %v7463 = vrot.slane %v7461, 4
      %v7464 = vor.u32 %v7463, %v7459
      %v7465 = vrot.slane %v7464, 4
      %v7467 = vshll.u32 %v7212, 16
      %v7469 = vrot.slane %v7467, 5
      %v7470 = vsel %vm983, %v7465, %v7469
      %v7472 = vshrl.u32 %v7213, 16
      %v7474 = vrot.slane %v7472, 4
      %v7475 = vshll.u32 %v7213, 16
      %v7477 = vrot.slane %v7475, 5
      %v7478 = vor.u32 %v7474, %v7477
      %v7479 = vrot.slane %v7478, 4
      %v7481 = vshll.u32 %v7214, 16
      %v7483 = vrot.slane %v7481, 5
      %v7484 = vsel %vm983, %v7479, %v7483
      %v7485 = vshrl.u32 %v7214, 16
      %v7487 = vrot.slane %v7485, 4
      %v7488 = vor.u32 %v7487, %v7483
      %v7489 = vrot.slane %v7488, 4
      %v7491 = vshll.u32 %v7215, 16
      %v7493 = vrot.slane %v7491, 5
      %v7494 = vsel %vm983, %v7489, %v7493
      %v7496 = vshrl.u32 %v7216, 16
      %v7498 = vrot.slane %v7496, 4
      %v7499 = vshll.u32 %v7216, 16
      %v7501 = vrot.slane %v7499, 5
      %v7502 = vor.u32 %v7498, %v7501
      %v7503 = vrot.slane %v7502, 4
      %v7505 = vshll.u32 %v7217, 16
      %v7507 = vrot.slane %v7505, 5
      %v7508 = vsel %vm983, %v7503, %v7507
      %v7509 = vshrl.u32 %v7217, 16
      %v7511 = vrot.slane %v7509, 4
      %v7512 = vor.u32 %v7511, %v7507
      %v7513 = vrot.slane %v7512, 4
      %v7515 = vshll.u32 %v7218, 16
      %v7517 = vrot.slane %v7515, 5
      %v7518 = vsel %vm983, %v7513, %v7517
      %v7520 = vshrl.u32 %v7219, 16
      %v7522 = vrot.slane %v7520, 4
      %v7523 = vshll.u32 %v7219, 16
      %v7525 = vrot.slane %v7523, 5
      %v7526 = vor.u32 %v7522, %v7525
      %v7527 = vrot.slane %v7526, 4
      %v7529 = vshll.u32 %v7220, 16
      %v7531 = vrot.slane %v7529, 5
      %v7532 = vsel %vm983, %v7527, %v7531
      %v7533 = vshrl.u32 %v7220, 16
      %v7535 = vrot.slane %v7533, 4
      %v7536 = vor.u32 %v7535, %v7531
      %v7537 = vrot.slane %v7536, 4
      %v7539 = vshll.u32 %v7221, 16
      %v7541 = vrot.slane %v7539, 5
      %v7542 = vsel %vm983, %v7537, %v7541
      %v7544 = vshrl.u32 %v7222, 16
      %v7546 = vrot.slane %v7544, 4
      %v7547 = vshll.u32 %v7222, 16
      %v7549 = vrot.slane %v7547, 5
      %v7550 = vor.u32 %v7546, %v7549
      %v7551 = vrot.slane %v7550, 4
      %v7553 = vshll.u32 %v7223, 16
      %v7555 = vrot.slane %v7553, 5
      %v7556 = vsel %vm983, %v7551, %v7555
      %v7557 = vshrl.u32 %v7223, 16
      %v7559 = vrot.slane %v7557, 4
      %v7560 = vor.u32 %v7559, %v7555
      %v7561 = vrot.slane %v7560, 4
      %v7563 = vshll.u32 %v7224, 16
      %v7565 = vrot.slane %v7563, 5
      %v7566 = vsel %vm983, %v7561, %v7565
      %v7568 = vshrl.u32 %v7225, 16
      %v7570 = vrot.slane %v7568, 4
      %v7571 = vshll.u32 %v7225, 16
      %v7573 = vrot.slane %v7571, 5
      %v7574 = vor.u32 %v7570, %v7573
      %v7575 = vrot.slane %v7574, 4
      %v7577 = vshll.u32 %v7226, 16
      %v7579 = vrot.slane %v7577, 5
      %v7580 = vsel %vm983, %v7575, %v7579
      %v7581 = vshrl.u32 %v7226, 16
      %v7583 = vrot.slane %v7581, 4
      %v7584 = vor.u32 %v7583, %v7579
      %v7585 = vrot.slane %v7584, 4
      %v7587 = vshll.u32 %v7227, 16
      %v7589 = vrot.slane %v7587, 5
      %v7590 = vsel %vm983, %v7585, %v7589
      %v7592 = vshrl.u32 %v7228, 16
      %v7594 = vrot.slane %v7592, 4
      %v7595 = vshll.u32 %v7228, 16
      %v7597 = vrot.slane %v7595, 5
      %v7598 = vor.u32 %v7594, %v7597
      %v7599 = vrot.slane %v7598, 4
      %v7601 = vshll.u32 %v7229, 16
      %v7603 = vrot.slane %v7601, 5
      %v7604 = vsel %vm983, %v7599, %v7603
      %v7605 = vshrl.u32 %v7229, 16
      %v7607 = vrot.slane %v7605, 4
      %v7608 = vor.u32 %v7607, %v7603
      %v7609 = vrot.slane %v7608, 4
      %v7611 = vshll.u32 %v7230, 16
      %v7613 = vrot.slane %v7611, 5
      %v7614 = vsel %vm983, %v7609, %v7613
      %7647 = vst [vmem:[#allocation3 + $0x10] sm:$0xf] %v7244
      %7648 = vst [vmem:[#allocation3 + $0x34] sm:$0xf] %v7254
      %7649 = vst [vmem:[#allocation3 + $0x58] sm:$0xf] %v7268
      %7650 = vst [vmem:[#allocation3 + $0x7c] sm:$0xf] %v7278
      %7651 = vst [vmem:[#allocation3 + $0xa0] sm:$0xf] %v7292
      %7652 = vst [vmem:[#allocation3 + $0xc4] sm:$0xf] %v7302
      %7653 = vst [vmem:[#allocation3 + $0xe8] sm:$0xf] %v7316
      %7654 = vst [vmem:[#allocation3 + $0x10c] sm:$0xf] %v7326
      %7655 = vst [vmem:[#allocation3 + $0x130] sm:$0xf] %v7340
      %7656 = vst [vmem:[#allocation3 + $0x154] sm:$0xf] %v7350
      %7657 = vst [vmem:[#allocation3 + $0x178] sm:$0xf] %v7364
      %7658 = vst [vmem:[#allocation3 + $0x19c] sm:$0xf] %v7374
      %7659 = vst [vmem:[#allocation3 + $0x1c0] sm:$0xf] %v7388
      %7660 = vst [vmem:[#allocation3 + $0x1e4] sm:$0xf] %v7398
      %7661 = vst [vmem:[#allocation3 + $0x208] sm:$0xf] %v7412
      %7662 = vst [vmem:[#allocation3 + $0x22c] sm:$0xf] %v7422
      %7663 = vst [vmem:[#allocation3 + $0x250] sm:$0xf] %v7436
      %7664 = vst [vmem:[#allocation3 + $0x274] sm:$0xf] %v7446
      %7665 = vst [vmem:[#allocation3 + $0x298] sm:$0xf] %v7460
      %7666 = vst [vmem:[#allocation3 + $0x2bc] sm:$0xf] %v7470
      %7667 = vst [vmem:[#allocation3 + $0x2e0] sm:$0xf] %v7484
      %7668 = vst [vmem:[#allocation3 + $0x304] sm:$0xf] %v7494
      %7669 = vst [vmem:[#allocation3 + $0x328] sm:$0xf] %v7508
      %7670 = vst [vmem:[#allocation3 + $0x34c] sm:$0xf] %v7518
      %7671 = vst [vmem:[#allocation3 + $0x370] sm:$0xf] %v7532
      %7672 = vst [vmem:[#allocation3 + $0x394] sm:$0xf] %v7542
      %7673 = vst [vmem:[#allocation3 + $0x3b8] sm:$0xf] %v7556
      %7674 = vst [vmem:[#allocation3 + $0x3dc] sm:$0xf] %v7566
      %7675 = vst [vmem:[#allocation3 + $0x400] sm:$0xf] %v7580
      %7676 = vst [vmem:[#allocation3 + $0x424] sm:$0xf] %v7590
      %7677 = vst [vmem:[#allocation3 + $0x448] sm:$0xf] %v7604
      %7678 = vst [vmem:[#allocation3 + $0x46c] sm:$0xf] %v7614
      %v7679 = vld [vmem:[%s754] sm:$0xe]
      %v7680 = vld [vmem:[%s754 + $0x4] sm:$0xf]
      %v7681 = vld [vmem:[%s754 + $0x8] sm:$0x1]
      %v7682 = vld [vmem:[%s754 + $0xc] sm:$0xe]
      %v7683 = vld [vmem:[%s754 + $0x10] sm:$0xf]
      %v7684 = vld [vmem:[%s754 + $0x14] sm:$0x1]
      %v7685 = vld [vmem:[%s754 + $0x18] sm:$0xe]
      %v7686 = vld [vmem:[%s754 + $0x1c] sm:$0xf]
      %v7687 = vld [vmem:[%s754 + $0x20] sm:$0x1]
      %v7688 = vld [vmem:[%s754 + $0x24] sm:$0xe]
      %v7689 = vld [vmem:[%s754 + $0x28] sm:$0xf]
      %v7690 = vld [vmem:[%s754 + $0x2c] sm:$0x1]
      %v7691 = vld [vmem:[%s754 + $0x30] sm:$0xe]
      %v7692 = vld [vmem:[%s754 + $0x34] sm:$0xf]
      %v7693 = vld [vmem:[%s754 + $0x38] sm:$0x1]
      %v7694 = vld [vmem:[%s754 + $0x3c] sm:$0xe]
      %v7695 = vld [vmem:[%s754 + $0x40] sm:$0xf]
      %v7696 = vld [vmem:[%s754 + $0x44] sm:$0x1]
      %v7697 = vld [vmem:[%s754 + $0x48] sm:$0xe]
      %v7698 = vld [vmem:[%s754 + $0x4c] sm:$0xf]
      %v7699 = vld [vmem:[%s754 + $0x50] sm:$0x1]
      %v7700 = vld [vmem:[%s754 + $0x54] sm:$0xe]
      %v7701 = vld [vmem:[%s754 + $0x58] sm:$0xf]
      %v7702 = vld [vmem:[%s754 + $0x5c] sm:$0x1]
      %v7703 = vld [vmem:[%s754 + $0x60] sm:$0xe]
      %v7704 = vld [vmem:[%s754 + $0x64] sm:$0xf]
      %v7705 = vld [vmem:[%s754 + $0x68] sm:$0x1]
      %v7706 = vld [vmem:[%s754 + $0x6c] sm:$0xe]
      %v7707 = vld [vmem:[%s754 + $0x70] sm:$0xf]
      %v7708 = vld [vmem:[%s754 + $0x74] sm:$0x1]
      %v7709 = vld [vmem:[%s754 + $0x78] sm:$0xe]
      %v7710 = vld [vmem:[%s754 + $0x7c] sm:$0xf]
      %v7711 = vld [vmem:[%s754 + $0x80] sm:$0x1]
      %v7712 = vld [vmem:[%s754 + $0x84] sm:$0xe]
      %v7713 = vld [vmem:[%s754 + $0x88] sm:$0xf]
      %v7714 = vld [vmem:[%s754 + $0x8c] sm:$0x1]
      %v7715 = vld [vmem:[%s754 + $0x90] sm:$0xe]
      %v7716 = vld [vmem:[%s754 + $0x94] sm:$0xf]
      %v7717 = vld [vmem:[%s754 + $0x98] sm:$0x1]
      %v7718 = vld [vmem:[%s754 + $0x9c] sm:$0xe]
      %v7719 = vld [vmem:[%s754 + $0xa0] sm:$0xf]
      %v7720 = vld [vmem:[%s754 + $0xa4] sm:$0x1]
      %v7721 = vld [vmem:[%s754 + $0xa8] sm:$0xe]
      %v7722 = vld [vmem:[%s754 + $0xac] sm:$0xf]
      %v7723 = vld [vmem:[%s754 + $0xb0] sm:$0x1]
      %v7724 = vld [vmem:[%s754 + $0xb4] sm:$0xe]
      %v7725 = vld [vmem:[%s754 + $0xb8] sm:$0xf]
      %v7726 = vld [vmem:[%s754 + $0xbc] sm:$0x1]
      %v7775 = vrot.slane %v7679, 5
      %v7776 = vrot.slane %v7775, 4
      %v7777 = vrot.slane %v7680, 5
      %v7778 = vsel %vm1530, %v7776, %v7777
      %v7779 = vrot.slane %v7777, 4
      %v7780 = vrot.slane %v7681, 5
      %v7781 = vsel %vm1530, %v7779, %v7780
      %v7782 = vrot.slane %v7682, 5
      %v7783 = vrot.slane %v7782, 4
      %v7784 = vrot.slane %v7683, 5
      %v7785 = vsel %vm1530, %v7783, %v7784
      %v7786 = vrot.slane %v7784, 4
      %v7787 = vrot.slane %v7684, 5
      %v7788 = vsel %vm1530, %v7786, %v7787
      %v7789 = vrot.slane %v7685, 5
      %v7790 = vrot.slane %v7789, 4
      %v7791 = vrot.slane %v7686, 5
      %v7792 = vsel %vm1530, %v7790, %v7791
      %v7793 = vrot.slane %v7791, 4
      %v7794 = vrot.slane %v7687, 5
      %v7795 = vsel %vm1530, %v7793, %v7794
      %v7796 = vrot.slane %v7688, 5
      %v7797 = vrot.slane %v7796, 4
      %v7798 = vrot.slane %v7689, 5
      %v7799 = vsel %vm1530, %v7797, %v7798
      %v7800 = vrot.slane %v7798, 4
      %v7801 = vrot.slane %v7690, 5
      %v7802 = vsel %vm1530, %v7800, %v7801
      %v7803 = vrot.slane %v7691, 5
      %v7804 = vrot.slane %v7803, 4
      %v7805 = vrot.slane %v7692, 5
      %v7806 = vsel %vm1530, %v7804, %v7805
      %v7807 = vrot.slane %v7805, 4
      %v7808 = vrot.slane %v7693, 5
      %v7809 = vsel %vm1530, %v7807, %v7808
      %v7810 = vrot.slane %v7694, 5
      %v7811 = vrot.slane %v7810, 4
      %v7812 = vrot.slane %v7695, 5
      %v7813 = vsel %vm1530, %v7811, %v7812
      %v7814 = vrot.slane %v7812, 4
      %v7815 = vrot.slane %v7696, 5
      %v7816 = vsel %vm1530, %v7814, %v7815
      %v7817 = vrot.slane %v7697, 5
      %v7818 = vrot.slane %v7817, 4
      %v7819 = vrot.slane %v7698, 5
      %v7820 = vsel %vm1530, %v7818, %v7819
      %v7821 = vrot.slane %v7819, 4
      %v7822 = vrot.slane %v7699, 5
      %v7823 = vsel %vm1530, %v7821, %v7822
      %v7824 = vrot.slane %v7700, 5
      %v7825 = vrot.slane %v7824, 4
      %v7826 = vrot.slane %v7701, 5
      %v7827 = vsel %vm1530, %v7825, %v7826
      %v7828 = vrot.slane %v7826, 4
      %v7829 = vrot.slane %v7702, 5
      %v7830 = vsel %vm1530, %v7828, %v7829
      %v7831 = vrot.slane %v7703, 5
      %v7832 = vrot.slane %v7831, 4
      %v7833 = vrot.slane %v7704, 5
      %v7834 = vsel %vm1530, %v7832, %v7833
      %v7835 = vrot.slane %v7833, 4
      %v7836 = vrot.slane %v7705, 5
      %v7837 = vsel %vm1530, %v7835, %v7836
      %v7838 = vrot.slane %v7706, 5
      %v7839 = vrot.slane %v7838, 4
      %v7840 = vrot.slane %v7707, 5
      %v7841 = vsel %vm1530, %v7839, %v7840
      %v7842 = vrot.slane %v7840, 4
      %v7843 = vrot.slane %v7708, 5
      %v7844 = vsel %vm1530, %v7842, %v7843
      %v7845 = vrot.slane %v7709, 5
      %v7846 = vrot.slane %v7845, 4
      %v7847 = vrot.slane %v7710, 5
      %v7848 = vsel %vm1530, %v7846, %v7847
      %v7849 = vrot.slane %v7847, 4
      %v7850 = vrot.slane %v7711, 5
      %v7851 = vsel %vm1530, %v7849, %v7850
      %v7852 = vrot.slane %v7712, 5
      %v7853 = vrot.slane %v7852, 4
      %v7854 = vrot.slane %v7713, 5
      %v7855 = vsel %vm1530, %v7853, %v7854
      %v7856 = vrot.slane %v7854, 4
      %v7857 = vrot.slane %v7714, 5
      %v7858 = vsel %vm1530, %v7856, %v7857
      %v7859 = vrot.slane %v7715, 5
      %v7860 = vrot.slane %v7859, 4
      %v7861 = vrot.slane %v7716, 5
      %v7862 = vsel %vm1530, %v7860, %v7861
      %v7863 = vrot.slane %v7861, 4
      %v7864 = vrot.slane %v7717, 5
      %v7865 = vsel %vm1530, %v7863, %v7864
      %v7866 = vrot.slane %v7718, 5
      %v7867 = vrot.slane %v7866, 4
      %v7868 = vrot.slane %v7719, 5
      %v7869 = vsel %vm1530, %v7867, %v7868
      %v7870 = vrot.slane %v7868, 4
      %v7871 = vrot.slane %v7720, 5
      %v7872 = vsel %vm1530, %v7870, %v7871
      %v7873 = vrot.slane %v7721, 5
      %v7874 = vrot.slane %v7873, 4
      %v7875 = vrot.slane %v7722, 5
      %v7876 = vsel %vm1530, %v7874, %v7875
      %v7877 = vrot.slane %v7875, 4
      %v7878 = vrot.slane %v7723, 5
      %v7879 = vsel %vm1530, %v7877, %v7878
      %v7880 = vrot.slane %v7724, 5
      %v7881 = vrot.slane %v7880, 4
      %v7882 = vrot.slane %v7725, 5
      %v7883 = vsel %vm1530, %v7881, %v7882
      %v7884 = vrot.slane %v7882, 4
      %v7885 = vrot.slane %v7726, 5
      %v7886 = vsel %vm1530, %v7884, %v7885
      %7919 = vst [vmem:[#allocation3 + $0x14] sm:$0xf] %v7778
      %7920 = vst [vmem:[#allocation3 + $0x38] sm:$0xf] %v7781
      %7921 = vst [vmem:[#allocation3 + $0x5c] sm:$0xf] %v7785
      %7922 = vst [vmem:[#allocation3 + $0x80] sm:$0xf] %v7788
      %7923 = vst [vmem:[#allocation3 + $0xa4] sm:$0xf] %v7792
      %7924 = vst [vmem:[#allocation3 + $0xc8] sm:$0xf] %v7795
      %7925 = vst [vmem:[#allocation3 + $0xec] sm:$0xf] %v7799
      %7926 = vst [vmem:[#allocation3 + $0x110] sm:$0xf] %v7802
      %7927 = vst [vmem:[#allocation3 + $0x134] sm:$0xf] %v7806
      %7928 = vst [vmem:[#allocation3 + $0x158] sm:$0xf] %v7809
      %7929 = vst [vmem:[#allocation3 + $0x17c] sm:$0xf] %v7813
      %7930 = vst [vmem:[#allocation3 + $0x1a0] sm:$0xf] %v7816
      %7931 = vst [vmem:[#allocation3 + $0x1c4] sm:$0xf] %v7820
      %7932 = vst [vmem:[#allocation3 + $0x1e8] sm:$0xf] %v7823
      %7933 = vst [vmem:[#allocation3 + $0x20c] sm:$0xf] %v7827
      %7934 = vst [vmem:[#allocation3 + $0x230] sm:$0xf] %v7830
      %7935 = vst [vmem:[#allocation3 + $0x254] sm:$0xf] %v7834
      %7936 = vst [vmem:[#allocation3 + $0x278] sm:$0xf] %v7837
      %7937 = vst [vmem:[#allocation3 + $0x29c] sm:$0xf] %v7841
      %7938 = vst [vmem:[#allocation3 + $0x2c0] sm:$0xf] %v7844
      %7939 = vst [vmem:[#allocation3 + $0x2e4] sm:$0xf] %v7848
      %7940 = vst [vmem:[#allocation3 + $0x308] sm:$0xf] %v7851
      %7941 = vst [vmem:[#allocation3 + $0x32c] sm:$0xf] %v7855
      %7942 = vst [vmem:[#allocation3 + $0x350] sm:$0xf] %v7858
      %7943 = vst [vmem:[#allocation3 + $0x374] sm:$0xf] %v7862
      %7944 = vst [vmem:[#allocation3 + $0x398] sm:$0xf] %v7865
      %7945 = vst [vmem:[#allocation3 + $0x3bc] sm:$0xf] %v7869
      %7946 = vst [vmem:[#allocation3 + $0x3e0] sm:$0xf] %v7872
      %7947 = vst [vmem:[#allocation3 + $0x404] sm:$0xf] %v7876
      %7948 = vst [vmem:[#allocation3 + $0x428] sm:$0xf] %v7879
      %7949 = vst [vmem:[#allocation3 + $0x44c] sm:$0xf] %v7883
      %7950 = vst [vmem:[#allocation3 + $0x470] sm:$0xf] %v7886
      %v7951 = vld [vmem:[%s2539] sm:$0xf]
      %v7952 = vld [vmem:[%s2539 + $0x4] sm:$0xf]
      %v7953 = vld [vmem:[%s2539 + $0xc] sm:$0xf]
      %v7954 = vld [vmem:[%s2539 + $0x10] sm:$0xf]
      %v7955 = vld [vmem:[%s2539 + $0x18] sm:$0xf]
      %v7956 = vld [vmem:[%s2539 + $0x1c] sm:$0xf]
      %v7957 = vld [vmem:[%s2539 + $0x24] sm:$0xf]
      %v7958 = vld [vmem:[%s2539 + $0x28] sm:$0xf]
      %v7959 = vld [vmem:[%s2539 + $0x30] sm:$0xf]
      %v7960 = vld [vmem:[%s2539 + $0x34] sm:$0xf]
      %v7961 = vld [vmem:[%s2539 + $0x3c] sm:$0xf]
      %v7962 = vld [vmem:[%s2539 + $0x40] sm:$0xf]
      %v7963 = vld [vmem:[%s2539 + $0x48] sm:$0xf]
      %v7964 = vld [vmem:[%s2539 + $0x4c] sm:$0xf]
      %v7965 = vld [vmem:[%s2539 + $0x54] sm:$0xf]
      %v7966 = vld [vmem:[%s2539 + $0x58] sm:$0xf]
      %v7967 = vld [vmem:[%s2539 + $0x60] sm:$0xf]
      %v7968 = vld [vmem:[%s2539 + $0x64] sm:$0xf]
      %v7969 = vld [vmem:[%s2539 + $0x6c] sm:$0xf]
      %v7970 = vld [vmem:[%s2539 + $0x70] sm:$0xf]
      %v7971 = vld [vmem:[%s2539 + $0x78] sm:$0xf]
      %v7972 = vld [vmem:[%s2539 + $0x7c] sm:$0xf]
      %v7973 = vld [vmem:[%s2539 + $0x84] sm:$0xf]
      %v7974 = vld [vmem:[%s2539 + $0x88] sm:$0xf]
      %v7975 = vld [vmem:[%s2539 + $0x90] sm:$0xf]
      %v7976 = vld [vmem:[%s2539 + $0x94] sm:$0xf]
      %v7977 = vld [vmem:[%s2539 + $0x9c] sm:$0xf]
      %v7978 = vld [vmem:[%s2539 + $0xa0] sm:$0xf]
      %v7979 = vld [vmem:[%s2539 + $0xa8] sm:$0xf]
      %v7980 = vld [vmem:[%s2539 + $0xac] sm:$0xf]
      %v7981 = vld [vmem:[%s2539 + $0xb4] sm:$0xf]
      %v7982 = vld [vmem:[%s2539 + $0xb8] sm:$0xf]
      %7983 = vst [vmem:[#allocation3 + $0x18] sm:$0xf] %v7951
      %7984 = vst [vmem:[#allocation3 + $0x3c] sm:$0xf] %v7952
      %7985 = vst [vmem:[#allocation3 + $0x60] sm:$0xf] %v7953
      %7986 = vst [vmem:[#allocation3 + $0x84] sm:$0xf] %v7954
      %7987 = vst [vmem:[#allocation3 + $0xa8] sm:$0xf] %v7955
      %7988 = vst [vmem:[#allocation3 + $0xcc] sm:$0xf] %v7956
      %7989 = vst [vmem:[#allocation3 + $0xf0] sm:$0xf] %v7957
      %7990 = vst [vmem:[#allocation3 + $0x114] sm:$0xf] %v7958
      %7991 = vst [vmem:[#allocation3 + $0x138] sm:$0xf] %v7959
      %7992 = vst [vmem:[#allocation3 + $0x15c] sm:$0xf] %v7960
      %7993 = vst [vmem:[#allocation3 + $0x180] sm:$0xf] %v7961
      %7994 = vst [vmem:[#allocation3 + $0x1a4] sm:$0xf] %v7962
      %7995 = vst [vmem:[#allocation3 + $0x1c8] sm:$0xf] %v7963
      %7996 = vst [vmem:[#allocation3 + $0x1ec] sm:$0xf] %v7964
      %7997 = vst [vmem:[#allocation3 + $0x210] sm:$0xf] %v7965
      %7998 = vst [vmem:[#allocation3 + $0x234] sm:$0xf] %v7966
      %7999 = vst [vmem:[#allocation3 + $0x258] sm:$0xf] %v7967
      %8000 = vst [vmem:[#allocation3 + $0x27c] sm:$0xf] %v7968
      %8001 = vst [vmem:[#allocation3 + $0x2a0] sm:$0xf] %v7969
      %8002 = vst [vmem:[#allocation3 + $0x2c4] sm:$0xf] %v7970
      %8003 = vst [vmem:[#allocation3 + $0x2e8] sm:$0xf] %v7971
      %8004 = vst [vmem:[#allocation3 + $0x30c] sm:$0xf] %v7972
      %8005 = vst [vmem:[#allocation3 + $0x330] sm:$0xf] %v7973
      %8006 = vst [vmem:[#allocation3 + $0x354] sm:$0xf] %v7974
      %8007 = vst [vmem:[#allocation3 + $0x378] sm:$0xf] %v7975
      %8008 = vst [vmem:[#allocation3 + $0x39c] sm:$0xf] %v7976
      %8009 = vst [vmem:[#allocation3 + $0x3c0] sm:$0xf] %v7977
      %8010 = vst [vmem:[#allocation3 + $0x3e4] sm:$0xf] %v7978
      %8011 = vst [vmem:[#allocation3 + $0x408] sm:$0xf] %v7979
      %8012 = vst [vmem:[#allocation3 + $0x42c] sm:$0xf] %v7980
      %8013 = vst [vmem:[#allocation3 + $0x450] sm:$0xf] %v7981
      %8014 = vst [vmem:[#allocation3 + $0x474] sm:$0xf] %v7982
      %v8015 = vld [vmem:[%s2539] sm:$0xf]
      %v8016 = vld [vmem:[%s2539 + $0x4] sm:$0xf]
      %v8017 = vld [vmem:[%s2539 + $0x8] sm:$0x1]
      %v8018 = vld [vmem:[%s2539 + $0xc] sm:$0xf]
      %v8019 = vld [vmem:[%s2539 + $0x10] sm:$0xf]
      %v8020 = vld [vmem:[%s2539 + $0x14] sm:$0x1]
      %v8021 = vld [vmem:[%s2539 + $0x18] sm:$0xf]
      %v8022 = vld [vmem:[%s2539 + $0x1c] sm:$0xf]
      %v8023 = vld [vmem:[%s2539 + $0x20] sm:$0x1]
      %v8024 = vld [vmem:[%s2539 + $0x24] sm:$0xf]
      %v8025 = vld [vmem:[%s2539 + $0x28] sm:$0xf]
      %v8026 = vld [vmem:[%s2539 + $0x2c] sm:$0x1]
      %v8027 = vld [vmem:[%s2539 + $0x30] sm:$0xf]
      %v8028 = vld [vmem:[%s2539 + $0x34] sm:$0xf]
      %v8029 = vld [vmem:[%s2539 + $0x38] sm:$0x1]
      %v8030 = vld [vmem:[%s2539 + $0x3c] sm:$0xf]
      %v8031 = vld [vmem:[%s2539 + $0x40] sm:$0xf]
      %v8032 = vld [vmem:[%s2539 + $0x44] sm:$0x1]
      %v8033 = vld [vmem:[%s2539 + $0x48] sm:$0xf]
      %v8034 = vld [vmem:[%s2539 + $0x4c] sm:$0xf]
      %v8035 = vld [vmem:[%s2539 + $0x50] sm:$0x1]
      %v8036 = vld [vmem:[%s2539 + $0x54] sm:$0xf]
      %v8037 = vld [vmem:[%s2539 + $0x58] sm:$0xf]
      %v8038 = vld [vmem:[%s2539 + $0x5c] sm:$0x1]
      %v8039 = vld [vmem:[%s2539 + $0x60] sm:$0xf]
      %v8040 = vld [vmem:[%s2539 + $0x64] sm:$0xf]
      %v8041 = vld [vmem:[%s2539 + $0x68] sm:$0x1]
      %v8042 = vld [vmem:[%s2539 + $0x6c] sm:$0xf]
      %v8043 = vld [vmem:[%s2539 + $0x70] sm:$0xf]
      %v8044 = vld [vmem:[%s2539 + $0x74] sm:$0x1]
      %v8045 = vld [vmem:[%s2539 + $0x78] sm:$0xf]
      %v8046 = vld [vmem:[%s2539 + $0x7c] sm:$0xf]
      %v8047 = vld [vmem:[%s2539 + $0x80] sm:$0x1]
      %v8048 = vld [vmem:[%s2539 + $0x84] sm:$0xf]
      %v8049 = vld [vmem:[%s2539 + $0x88] sm:$0xf]
      %v8050 = vld [vmem:[%s2539 + $0x8c] sm:$0x1]
      %v8051 = vld [vmem:[%s2539 + $0x90] sm:$0xf]
      %v8052 = vld [vmem:[%s2539 + $0x94] sm:$0xf]
      %v8053 = vld [vmem:[%s2539 + $0x98] sm:$0x1]
      %v8054 = vld [vmem:[%s2539 + $0x9c] sm:$0xf]
      %v8055 = vld [vmem:[%s2539 + $0xa0] sm:$0xf]
      %v8056 = vld [vmem:[%s2539 + $0xa4] sm:$0x1]
      %v8057 = vld [vmem:[%s2539 + $0xa8] sm:$0xf]
      %v8058 = vld [vmem:[%s2539 + $0xac] sm:$0xf]
      %v8059 = vld [vmem:[%s2539 + $0xb0] sm:$0x1]
      %v8060 = vld [vmem:[%s2539 + $0xb4] sm:$0xf]
      %v8061 = vld [vmem:[%s2539 + $0xb8] sm:$0xf]
      %v8062 = vld [vmem:[%s2539 + $0xbc] sm:$0x1]
      %v8064 = vshrl.u32 %v8015, 16
      %v8066 = vrot.slane %v8064, 4
      %v8067 = vshll.u32 %v8015, 16
      %v8069 = vrot.slane %v8067, 5
      %v8070 = vor.u32 %v8066, %v8069
      %v8071 = vrot.slane %v8070, 4
      %v8073 = vshll.u32 %v8016, 16
      %v8075 = vrot.slane %v8073, 5
      %v8076 = vsel %vm983, %v8071, %v8075
      %v8077 = vshrl.u32 %v8016, 16
      %v8079 = vrot.slane %v8077, 4
      %v8080 = vor.u32 %v8079, %v8075
      %v8081 = vrot.slane %v8080, 4
      %v8083 = vshll.u32 %v8017, 16
      %v8085 = vrot.slane %v8083, 5
      %v8086 = vsel %vm983, %v8081, %v8085
      %v8088 = vshrl.u32 %v8018, 16
      %v8090 = vrot.slane %v8088, 4
      %v8091 = vshll.u32 %v8018, 16
      %v8093 = vrot.slane %v8091, 5
      %v8094 = vor.u32 %v8090, %v8093
      %v8095 = vrot.slane %v8094, 4
      %v8097 = vshll.u32 %v8019, 16
      %v8099 = vrot.slane %v8097, 5
      %v8100 = vsel %vm983, %v8095, %v8099
      %v8101 = vshrl.u32 %v8019, 16
      %v8103 = vrot.slane %v8101, 4
      %v8104 = vor.u32 %v8103, %v8099
      %v8105 = vrot.slane %v8104, 4
      %v8107 = vshll.u32 %v8020, 16
      %v8109 = vrot.slane %v8107, 5
      %v8110 = vsel %vm983, %v8105, %v8109
      %v8112 = vshrl.u32 %v8021, 16
      %v8114 = vrot.slane %v8112, 4
      %v8115 = vshll.u32 %v8021, 16
      %v8117 = vrot.slane %v8115, 5
      %v8118 = vor.u32 %v8114, %v8117
      %v8119 = vrot.slane %v8118, 4
      %v8121 = vshll.u32 %v8022, 16
      %v8123 = vrot.slane %v8121, 5
      %v8124 = vsel %vm983, %v8119, %v8123
      %v8125 = vshrl.u32 %v8022, 16
      %v8127 = vrot.slane %v8125, 4
      %v8128 = vor.u32 %v8127, %v8123
      %v8129 = vrot.slane %v8128, 4
      %v8131 = vshll.u32 %v8023, 16
      %v8133 = vrot.slane %v8131, 5
      %v8134 = vsel %vm983, %v8129, %v8133
      %v8136 = vshrl.u32 %v8024, 16
      %v8138 = vrot.slane %v8136, 4
      %v8139 = vshll.u32 %v8024, 16
      %v8141 = vrot.slane %v8139, 5
      %v8142 = vor.u32 %v8138, %v8141
      %v8143 = vrot.slane %v8142, 4
      %v8145 = vshll.u32 %v8025, 16
      %v8147 = vrot.slane %v8145, 5
      %v8148 = vsel %vm983, %v8143, %v8147
      %v8149 = vshrl.u32 %v8025, 16
      %v8151 = vrot.slane %v8149, 4
      %v8152 = vor.u32 %v8151, %v8147
      %v8153 = vrot.slane %v8152, 4
      %v8155 = vshll.u32 %v8026, 16
      %v8157 = vrot.slane %v8155, 5
      %v8158 = vsel %vm983, %v8153, %v8157
      %v8160 = vshrl.u32 %v8027, 16
      %v8162 = vrot.slane %v8160, 4
      %v8163 = vshll.u32 %v8027, 16
      %v8165 = vrot.slane %v8163, 5
      %v8166 = vor.u32 %v8162, %v8165
      %v8167 = vrot.slane %v8166, 4
      %v8169 = vshll.u32 %v8028, 16
      %v8171 = vrot.slane %v8169, 5
      %v8172 = vsel %vm983, %v8167, %v8171
      %v8173 = vshrl.u32 %v8028, 16
      %v8175 = vrot.slane %v8173, 4
      %v8176 = vor.u32 %v8175, %v8171
      %v8177 = vrot.slane %v8176, 4
      %v8179 = vshll.u32 %v8029, 16
      %v8181 = vrot.slane %v8179, 5
      %v8182 = vsel %vm983, %v8177, %v8181
      %v8184 = vshrl.u32 %v8030, 16
      %v8186 = vrot.slane %v8184, 4
      %v8187 = vshll.u32 %v8030, 16
      %v8189 = vrot.slane %v8187, 5
      %v8190 = vor.u32 %v8186, %v8189
      %v8191 = vrot.slane %v8190, 4
      %v8193 = vshll.u32 %v8031, 16
      %v8195 = vrot.slane %v8193, 5
      %v8196 = vsel %vm983, %v8191, %v8195
      %v8197 = vshrl.u32 %v8031, 16
      %v8199 = vrot.slane %v8197, 4
      %v8200 = vor.u32 %v8199, %v8195
      %v8201 = vrot.slane %v8200, 4
      %v8203 = vshll.u32 %v8032, 16
      %v8205 = vrot.slane %v8203, 5
      %v8206 = vsel %vm983, %v8201, %v8205
      %v8208 = vshrl.u32 %v8033, 16
      %v8210 = vrot.slane %v8208, 4
      %v8211 = vshll.u32 %v8033, 16
      %v8213 = vrot.slane %v8211, 5
      %v8214 = vor.u32 %v8210, %v8213
      %v8215 = vrot.slane %v8214, 4
      %v8217 = vshll.u32 %v8034, 16
      %v8219 = vrot.slane %v8217, 5
      %v8220 = vsel %vm983, %v8215, %v8219
      %v8221 = vshrl.u32 %v8034, 16
      %v8223 = vrot.slane %v8221, 4
      %v8224 = vor.u32 %v8223, %v8219
      %v8225 = vrot.slane %v8224, 4
      %v8227 = vshll.u32 %v8035, 16
      %v8229 = vrot.slane %v8227, 5
      %v8230 = vsel %vm983, %v8225, %v8229
      %v8232 = vshrl.u32 %v8036, 16
      %v8234 = vrot.slane %v8232, 4
      %v8235 = vshll.u32 %v8036, 16
      %v8237 = vrot.slane %v8235, 5
      %v8238 = vor.u32 %v8234, %v8237
      %v8239 = vrot.slane %v8238, 4
      %v8241 = vshll.u32 %v8037, 16
      %v8243 = vrot.slane %v8241, 5
      %v8244 = vsel %vm983, %v8239, %v8243
      %v8245 = vshrl.u32 %v8037, 16
      %v8247 = vrot.slane %v8245, 4
      %v8248 = vor.u32 %v8247, %v8243
      %v8249 = vrot.slane %v8248, 4
      %v8251 = vshll.u32 %v8038, 16
      %v8253 = vrot.slane %v8251, 5
      %v8254 = vsel %vm983, %v8249, %v8253
      %v8256 = vshrl.u32 %v8039, 16
      %v8258 = vrot.slane %v8256, 4
      %v8259 = vshll.u32 %v8039, 16
      %v8261 = vrot.slane %v8259, 5
      %v8262 = vor.u32 %v8258, %v8261
      %v8263 = vrot.slane %v8262, 4
      %v8265 = vshll.u32 %v8040, 16
      %v8267 = vrot.slane %v8265, 5
      %v8268 = vsel %vm983, %v8263, %v8267
      %v8269 = vshrl.u32 %v8040, 16
      %v8271 = vrot.slane %v8269, 4
      %v8272 = vor.u32 %v8271, %v8267
      %v8273 = vrot.slane %v8272, 4
      %v8275 = vshll.u32 %v8041, 16
      %v8277 = vrot.slane %v8275, 5
      %v8278 = vsel %vm983, %v8273, %v8277
      %v8280 = vshrl.u32 %v8042, 16
      %v8282 = vrot.slane %v8280, 4
      %v8283 = vshll.u32 %v8042, 16
      %v8285 = vrot.slane %v8283, 5
      %v8286 = vor.u32 %v8282, %v8285
      %v8287 = vrot.slane %v8286, 4
      %v8289 = vshll.u32 %v8043, 16
      %v8291 = vrot.slane %v8289, 5
      %v8292 = vsel %vm983, %v8287, %v8291
      %v8293 = vshrl.u32 %v8043, 16
      %v8295 = vrot.slane %v8293, 4
      %v8296 = vor.u32 %v8295, %v8291
      %v8297 = vrot.slane %v8296, 4
      %v8299 = vshll.u32 %v8044, 16
      %v8301 = vrot.slane %v8299, 5
      %v8302 = vsel %vm983, %v8297, %v8301
      %v8304 = vshrl.u32 %v8045, 16
      %v8306 = vrot.slane %v8304, 4
      %v8307 = vshll.u32 %v8045, 16
      %v8309 = vrot.slane %v8307, 5
      %v8310 = vor.u32 %v8306, %v8309
      %v8311 = vrot.slane %v8310, 4
      %v8313 = vshll.u32 %v8046, 16
      %v8315 = vrot.slane %v8313, 5
      %v8316 = vsel %vm983, %v8311, %v8315
      %v8317 = vshrl.u32 %v8046, 16
      %v8319 = vrot.slane %v8317, 4
      %v8320 = vor.u32 %v8319, %v8315
      %v8321 = vrot.slane %v8320, 4
      %v8323 = vshll.u32 %v8047, 16
      %v8325 = vrot.slane %v8323, 5
      %v8326 = vsel %vm983, %v8321, %v8325
      %v8328 = vshrl.u32 %v8048, 16
      %v8330 = vrot.slane %v8328, 4
      %v8331 = vshll.u32 %v8048, 16
      %v8333 = vrot.slane %v8331, 5
      %v8334 = vor.u32 %v8330, %v8333
      %v8335 = vrot.slane %v8334, 4
      %v8337 = vshll.u32 %v8049, 16
      %v8339 = vrot.slane %v8337, 5
      %v8340 = vsel %vm983, %v8335, %v8339
      %v8341 = vshrl.u32 %v8049, 16
      %v8343 = vrot.slane %v8341, 4
      %v8344 = vor.u32 %v8343, %v8339
      %v8345 = vrot.slane %v8344, 4
      %v8347 = vshll.u32 %v8050, 16
      %v8349 = vrot.slane %v8347, 5
      %v8350 = vsel %vm983, %v8345, %v8349
      %v8352 = vshrl.u32 %v8051, 16
      %v8354 = vrot.slane %v8352, 4
      %v8355 = vshll.u32 %v8051, 16
      %v8357 = vrot.slane %v8355, 5
      %v8358 = vor.u32 %v8354, %v8357
      %v8359 = vrot.slane %v8358, 4
      %v8361 = vshll.u32 %v8052, 16
      %v8363 = vrot.slane %v8361, 5
      %v8364 = vsel %vm983, %v8359, %v8363
      %v8365 = vshrl.u32 %v8052, 16
      %v8367 = vrot.slane %v8365, 4
      %v8368 = vor.u32 %v8367, %v8363
      %v8369 = vrot.slane %v8368, 4
      %v8371 = vshll.u32 %v8053, 16
      %v8373 = vrot.slane %v8371, 5
      %v8374 = vsel %vm983, %v8369, %v8373
      %v8376 = vshrl.u32 %v8054, 16
      %v8378 = vrot.slane %v8376, 4
      %v8379 = vshll.u32 %v8054, 16
      %v8381 = vrot.slane %v8379, 5
      %v8382 = vor.u32 %v8378, %v8381
      %v8383 = vrot.slane %v8382, 4
      %v8385 = vshll.u32 %v8055, 16
      %v8387 = vrot.slane %v8385, 5
      %v8388 = vsel %vm983, %v8383, %v8387
      %v8389 = vshrl.u32 %v8055, 16
      %v8391 = vrot.slane %v8389, 4
      %v8392 = vor.u32 %v8391, %v8387
      %v8393 = vrot.slane %v8392, 4
      %v8395 = vshll.u32 %v8056, 16
      %v8397 = vrot.slane %v8395, 5
      %v8398 = vsel %vm983, %v8393, %v8397
      %v8400 = vshrl.u32 %v8057, 16
      %v8402 = vrot.slane %v8400, 4
      %v8403 = vshll.u32 %v8057, 16
      %v8405 = vrot.slane %v8403, 5
      %v8406 = vor.u32 %v8402, %v8405
      %v8407 = vrot.slane %v8406, 4
      %v8409 = vshll.u32 %v8058, 16
      %v8411 = vrot.slane %v8409, 5
      %v8412 = vsel %vm983, %v8407, %v8411
      %v8413 = vshrl.u32 %v8058, 16
      %v8415 = vrot.slane %v8413, 4
      %v8416 = vor.u32 %v8415, %v8411
      %v8417 = vrot.slane %v8416, 4
      %v8419 = vshll.u32 %v8059, 16
      %v8421 = vrot.slane %v8419, 5
      %v8422 = vsel %vm983, %v8417, %v8421
      %v8424 = vshrl.u32 %v8060, 16
      %v8426 = vrot.slane %v8424, 4
      %v8427 = vshll.u32 %v8060, 16
      %v8429 = vrot.slane %v8427, 5
      %v8430 = vor.u32 %v8426, %v8429
      %v8431 = vrot.slane %v8430, 4
      %v8433 = vshll.u32 %v8061, 16
      %v8435 = vrot.slane %v8433, 5
      %v8436 = vsel %vm983, %v8431, %v8435
      %v8437 = vshrl.u32 %v8061, 16
      %v8439 = vrot.slane %v8437, 4
      %v8440 = vor.u32 %v8439, %v8435
      %v8441 = vrot.slane %v8440, 4
      %v8443 = vshll.u32 %v8062, 16
      %v8445 = vrot.slane %v8443, 5
      %v8446 = vsel %vm983, %v8441, %v8445
      %8479 = vst [vmem:[#allocation3 + $0x1c] sm:$0xf] %v8076
      %8480 = vst [vmem:[#allocation3 + $0x40] sm:$0xf] %v8086
      %8481 = vst [vmem:[#allocation3 + $0x64] sm:$0xf] %v8100
      %8482 = vst [vmem:[#allocation3 + $0x88] sm:$0xf] %v8110
      %8483 = vst [vmem:[#allocation3 + $0xac] sm:$0xf] %v8124
      %8484 = vst [vmem:[#allocation3 + $0xd0] sm:$0xf] %v8134
      %8485 = vst [vmem:[#allocation3 + $0xf4] sm:$0xf] %v8148
      %8486 = vst [vmem:[#allocation3 + $0x118] sm:$0xf] %v8158
      %8487 = vst [vmem:[#allocation3 + $0x13c] sm:$0xf] %v8172
      %8488 = vst [vmem:[#allocation3 + $0x160] sm:$0xf] %v8182
      %8489 = vst [vmem:[#allocation3 + $0x184] sm:$0xf] %v8196
      %8490 = vst [vmem:[#allocation3 + $0x1a8] sm:$0xf] %v8206
      %8491 = vst [vmem:[#allocation3 + $0x1cc] sm:$0xf] %v8220
      %8492 = vst [vmem:[#allocation3 + $0x1f0] sm:$0xf] %v8230
      %8493 = vst [vmem:[#allocation3 + $0x214] sm:$0xf] %v8244
      %8494 = vst [vmem:[#allocation3 + $0x238] sm:$0xf] %v8254
      %8495 = vst [vmem:[#allocation3 + $0x25c] sm:$0xf] %v8268
      %8496 = vst [vmem:[#allocation3 + $0x280] sm:$0xf] %v8278
      %8497 = vst [vmem:[#allocation3 + $0x2a4] sm:$0xf] %v8292
      %8498 = vst [vmem:[#allocation3 + $0x2c8] sm:$0xf] %v8302
      %8499 = vst [vmem:[#allocation3 + $0x2ec] sm:$0xf] %v8316
      %8500 = vst [vmem:[#allocation3 + $0x310] sm:$0xf] %v8326
      %8501 = vst [vmem:[#allocation3 + $0x334] sm:$0xf] %v8340
      %8502 = vst [vmem:[#allocation3 + $0x358] sm:$0xf] %v8350
      %8503 = vst [vmem:[#allocation3 + $0x37c] sm:$0xf] %v8364
      %8504 = vst [vmem:[#allocation3 + $0x3a0] sm:$0xf] %v8374
      %8505 = vst [vmem:[#allocation3 + $0x3c4] sm:$0xf] %v8388
      %8506 = vst [vmem:[#allocation3 + $0x3e8] sm:$0xf] %v8398
      %8507 = vst [vmem:[#allocation3 + $0x40c] sm:$0xf] %v8412
      %8508 = vst [vmem:[#allocation3 + $0x430] sm:$0xf] %v8422
      %8509 = vst [vmem:[#allocation3 + $0x454] sm:$0xf] %v8436
      %8510 = vst [vmem:[#allocation3 + $0x478] sm:$0xf] %v8446
      %v8511 = vld [vmem:[%s2539] sm:$0xe]
      %v8512 = vld [vmem:[%s2539 + $0x4] sm:$0xf]
      %v8513 = vld [vmem:[%s2539 + $0x8] sm:$0x1]
      %v8514 = vld [vmem:[%s2539 + $0xc] sm:$0xe]
      %v8515 = vld [vmem:[%s2539 + $0x10] sm:$0xf]
      %v8516 = vld [vmem:[%s2539 + $0x14] sm:$0x1]
      %v8517 = vld [vmem:[%s2539 + $0x18] sm:$0xe]
      %v8518 = vld [vmem:[%s2539 + $0x1c] sm:$0xf]
      %v8519 = vld [vmem:[%s2539 + $0x20] sm:$0x1]
      %v8520 = vld [vmem:[%s2539 + $0x24] sm:$0xe]
      %v8521 = vld [vmem:[%s2539 + $0x28] sm:$0xf]
      %v8522 = vld [vmem:[%s2539 + $0x2c] sm:$0x1]
      %v8523 = vld [vmem:[%s2539 + $0x30] sm:$0xe]
      %v8524 = vld [vmem:[%s2539 + $0x34] sm:$0xf]
      %v8525 = vld [vmem:[%s2539 + $0x38] sm:$0x1]
      %v8526 = vld [vmem:[%s2539 + $0x3c] sm:$0xe]
      %v8527 = vld [vmem:[%s2539 + $0x40] sm:$0xf]
      %v8528 = vld [vmem:[%s2539 + $0x44] sm:$0x1]
      %v8529 = vld [vmem:[%s2539 + $0x48] sm:$0xe]
      %v8530 = vld [vmem:[%s2539 + $0x4c] sm:$0xf]
      %v8531 = vld [vmem:[%s2539 + $0x50] sm:$0x1]
      %v8532 = vld [vmem:[%s2539 + $0x54] sm:$0xe]
      %v8533 = vld [vmem:[%s2539 + $0x58] sm:$0xf]
      %v8534 = vld [vmem:[%s2539 + $0x5c] sm:$0x1]
      %v8535 = vld [vmem:[%s2539 + $0x60] sm:$0xe]
      %v8536 = vld [vmem:[%s2539 + $0x64] sm:$0xf]
      %v8537 = vld [vmem:[%s2539 + $0x68] sm:$0x1]
      %v8538 = vld [vmem:[%s2539 + $0x6c] sm:$0xe]
      %v8539 = vld [vmem:[%s2539 + $0x70] sm:$0xf]
      %v8540 = vld [vmem:[%s2539 + $0x74] sm:$0x1]
      %v8541 = vld [vmem:[%s2539 + $0x78] sm:$0xe]
      %v8542 = vld [vmem:[%s2539 + $0x7c] sm:$0xf]
      %v8543 = vld [vmem:[%s2539 + $0x80] sm:$0x1]
      %v8544 = vld [vmem:[%s2539 + $0x84] sm:$0xe]
      %v8545 = vld [vmem:[%s2539 + $0x88] sm:$0xf]
      %v8546 = vld [vmem:[%s2539 + $0x8c] sm:$0x1]
      %v8547 = vld [vmem:[%s2539 + $0x90] sm:$0xe]
      %v8548 = vld [vmem:[%s2539 + $0x94] sm:$0xf]
      %v8549 = vld [vmem:[%s2539 + $0x98] sm:$0x1]
      %v8550 = vld [vmem:[%s2539 + $0x9c] sm:$0xe]
      %v8551 = vld [vmem:[%s2539 + $0xa0] sm:$0xf]
      %v8552 = vld [vmem:[%s2539 + $0xa4] sm:$0x1]
      %v8553 = vld [vmem:[%s2539 + $0xa8] sm:$0xe]
      %v8554 = vld [vmem:[%s2539 + $0xac] sm:$0xf]
      %v8555 = vld [vmem:[%s2539 + $0xb0] sm:$0x1]
      %v8556 = vld [vmem:[%s2539 + $0xb4] sm:$0xe]
      %v8557 = vld [vmem:[%s2539 + $0xb8] sm:$0xf]
      %v8558 = vld [vmem:[%s2539 + $0xbc] sm:$0x1]
      %v8607 = vrot.slane %v8511, 5
      %v8608 = vrot.slane %v8607, 4
      %v8609 = vrot.slane %v8512, 5
      %v8610 = vsel %vm1530, %v8608, %v8609
      %v8611 = vrot.slane %v8609, 4
      %v8612 = vrot.slane %v8513, 5
      %v8613 = vsel %vm1530, %v8611, %v8612
      %v8614 = vrot.slane %v8514, 5
      %v8615 = vrot.slane %v8614, 4
      %v8616 = vrot.slane %v8515, 5
      %v8617 = vsel %vm1530, %v8615, %v8616
      %v8618 = vrot.slane %v8616, 4
      %v8619 = vrot.slane %v8516, 5
      %v8620 = vsel %vm1530, %v8618, %v8619
      %v8621 = vrot.slane %v8517, 5
      %v8622 = vrot.slane %v8621, 4
      %v8623 = vrot.slane %v8518, 5
      %v8624 = vsel %vm1530, %v8622, %v8623
      %v8625 = vrot.slane %v8623, 4
      %v8626 = vrot.slane %v8519, 5
      %v8627 = vsel %vm1530, %v8625, %v8626
      %v8628 = vrot.slane %v8520, 5
      %v8629 = vrot.slane %v8628, 4
      %v8630 = vrot.slane %v8521, 5
      %v8631 = vsel %vm1530, %v8629, %v8630
      %v8632 = vrot.slane %v8630, 4
      %v8633 = vrot.slane %v8522, 5
      %v8634 = vsel %vm1530, %v8632, %v8633
      %v8635 = vrot.slane %v8523, 5
      %v8636 = vrot.slane %v8635, 4
      %v8637 = vrot.slane %v8524, 5
      %v8638 = vsel %vm1530, %v8636, %v8637
      %v8639 = vrot.slane %v8637, 4
      %v8640 = vrot.slane %v8525, 5
      %v8641 = vsel %vm1530, %v8639, %v8640
      %v8642 = vrot.slane %v8526, 5
      %v8643 = vrot.slane %v8642, 4
      %v8644 = vrot.slane %v8527, 5
      %v8645 = vsel %vm1530, %v8643, %v8644
      %v8646 = vrot.slane %v8644, 4
      %v8647 = vrot.slane %v8528, 5
      %v8648 = vsel %vm1530, %v8646, %v8647
      %v8649 = vrot.slane %v8529, 5
      %v8650 = vrot.slane %v8649, 4
      %v8651 = vrot.slane %v8530, 5
      %v8652 = vsel %vm1530, %v8650, %v8651
      %v8653 = vrot.slane %v8651, 4
      %v8654 = vrot.slane %v8531, 5
      %v8655 = vsel %vm1530, %v8653, %v8654
      %v8656 = vrot.slane %v8532, 5
      %v8657 = vrot.slane %v8656, 4
      %v8658 = vrot.slane %v8533, 5
      %v8659 = vsel %vm1530, %v8657, %v8658
      %v8660 = vrot.slane %v8658, 4
      %v8661 = vrot.slane %v8534, 5
      %v8662 = vsel %vm1530, %v8660, %v8661
      %v8663 = vrot.slane %v8535, 5
      %v8664 = vrot.slane %v8663, 4
      %v8665 = vrot.slane %v8536, 5
      %v8666 = vsel %vm1530, %v8664, %v8665
      %v8667 = vrot.slane %v8665, 4
      %v8668 = vrot.slane %v8537, 5
      %v8669 = vsel %vm1530, %v8667, %v8668
      %v8670 = vrot.slane %v8538, 5
      %v8671 = vrot.slane %v8670, 4
      %v8672 = vrot.slane %v8539, 5
      %v8673 = vsel %vm1530, %v8671, %v8672
      %v8674 = vrot.slane %v8672, 4
      %v8675 = vrot.slane %v8540, 5
      %v8676 = vsel %vm1530, %v8674, %v8675
      %v8677 = vrot.slane %v8541, 5
      %v8678 = vrot.slane %v8677, 4
      %v8679 = vrot.slane %v8542, 5
      %v8680 = vsel %vm1530, %v8678, %v8679
      %v8681 = vrot.slane %v8679, 4
      %v8682 = vrot.slane %v8543, 5
      %v8683 = vsel %vm1530, %v8681, %v8682
      %v8684 = vrot.slane %v8544, 5
      %v8685 = vrot.slane %v8684, 4
      %v8686 = vrot.slane %v8545, 5
      %v8687 = vsel %vm1530, %v8685, %v8686
      %v8688 = vrot.slane %v8686, 4
      %v8689 = vrot.slane %v8546, 5
      %v8690 = vsel %vm1530, %v8688, %v8689
      %v8691 = vrot.slane %v8547, 5
      %v8692 = vrot.slane %v8691, 4
      %v8693 = vrot.slane %v8548, 5
      %v8694 = vsel %vm1530, %v8692, %v8693
      %v8695 = vrot.slane %v8693, 4
      %v8696 = vrot.slane %v8549, 5
      %v8697 = vsel %vm1530, %v8695, %v8696
      %v8698 = vrot.slane %v8550, 5
      %v8699 = vrot.slane %v8698, 4
      %v8700 = vrot.slane %v8551, 5
      %v8701 = vsel %vm1530, %v8699, %v8700
      %v8702 = vrot.slane %v8700, 4
      %v8703 = vrot.slane %v8552, 5
      %v8704 = vsel %vm1530, %v8702, %v8703
      %v8705 = vrot.slane %v8553, 5
      %v8706 = vrot.slane %v8705, 4
      %v8707 = vrot.slane %v8554, 5
      %v8708 = vsel %vm1530, %v8706, %v8707
      %v8709 = vrot.slane %v8707, 4
      %v8710 = vrot.slane %v8555, 5
      %v8711 = vsel %vm1530, %v8709, %v8710
      %v8712 = vrot.slane %v8556, 5
      %v8713 = vrot.slane %v8712, 4
      %v8714 = vrot.slane %v8557, 5
      %v8715 = vsel %vm1530, %v8713, %v8714
      %v8716 = vrot.slane %v8714, 4
      %v8717 = vrot.slane %v8558, 5
      %v8718 = vsel %vm1530, %v8716, %v8717
      %8751 = vst [vmem:[#allocation3 + $0x20] sm:$0xf] %v8610
      %8752 = vst [vmem:[#allocation3 + $0x44] sm:$0xf] %v8613
      %8753 = vst [vmem:[#allocation3 + $0x68] sm:$0xf] %v8617
      %8754 = vst [vmem:[#allocation3 + $0x8c] sm:$0xf] %v8620
      %8755 = vst [vmem:[#allocation3 + $0xb0] sm:$0xf] %v8624
      %8756 = vst [vmem:[#allocation3 + $0xd4] sm:$0xf] %v8627
      %8757 = vst [vmem:[#allocation3 + $0xf8] sm:$0xf] %v8631
      %8758 = vst [vmem:[#allocation3 + $0x11c] sm:$0xf] %v8634
      %8759 = vst [vmem:[#allocation3 + $0x140] sm:$0xf] %v8638
      %8760 = vst [vmem:[#allocation3 + $0x164] sm:$0xf] %v8641
      %8761 = vst [vmem:[#allocation3 + $0x188] sm:$0xf] %v8645
      %8762 = vst [vmem:[#allocation3 + $0x1ac] sm:$0xf] %v8648
      %8763 = vst [vmem:[#allocation3 + $0x1d0] sm:$0xf] %v8652
      %8764 = vst [vmem:[#allocation3 + $0x1f4] sm:$0xf] %v8655
      %8765 = vst [vmem:[#allocation3 + $0x218] sm:$0xf] %v8659
      %8766 = vst [vmem:[#allocation3 + $0x23c] sm:$0xf] %v8662
      %8767 = vst [vmem:[#allocation3 + $0x260] sm:$0xf] %v8666
      %8768 = vst [vmem:[#allocation3 + $0x284] sm:$0xf] %v8669
      %8769 = vst [vmem:[#allocation3 + $0x2a8] sm:$0xf] %v8673
      %8770 = vst [vmem:[#allocation3 + $0x2cc] sm:$0xf] %v8676
      %8771 = vst [vmem:[#allocation3 + $0x2f0] sm:$0xf] %v8680
      %8772 = vst [vmem:[#allocation3 + $0x314] sm:$0xf] %v8683
      %8773 = vst [vmem:[#allocation3 + $0x338] sm:$0xf] %v8687
      %8774 = vst [vmem:[#allocation3 + $0x35c] sm:$0xf] %v8690
      %8775 = vst [vmem:[#allocation3 + $0x380] sm:$0xf] %v8694
      %8776 = vst [vmem:[#allocation3 + $0x3a4] sm:$0xf] %v8697
      %8777 = vst [vmem:[#allocation3 + $0x3c8] sm:$0xf] %v8701
      %8778 = vst [vmem:[#allocation3 + $0x3ec] sm:$0xf] %v8704
      %8779 = vst [vmem:[#allocation3 + $0x410] sm:$0xf] %v8708
      %8780 = vst [vmem:[#allocation3 + $0x434] sm:$0xf] %v8711
      %8781 = vst [vmem:[#allocation3 + $0x458] sm:$0xf] %v8715
      %8782 = vst [vmem:[#allocation3 + $0x47c] sm:$0xf] %v8718
      %v8783 = vld [vmem:[#allocation3] sm:$0xff]
      %v8784 = vld [vmem:[#allocation3 + $0x8] sm:$0xff]
      %v8785 = vld [vmem:[#allocation3 + $0x10] sm:$0xff]
      %v8786 = vld [vmem:[#allocation3 + $0x18] sm:$0xff]
      %v8787 = vld [vmem:[#allocation3 + $0x20] sm:$0xf]
      %v8788 = vld [vmem:[#allocation3 + $0x24] sm:$0xff]
      %v8789 = vld [vmem:[#allocation3 + $0x2c] sm:$0xff]
      %v8790 = vld [vmem:[#allocation3 + $0x34] sm:$0xff]
      %v8791 = vld [vmem:[#allocation3 + $0x3c] sm:$0xff]
      %v8792 = vld [vmem:[#allocation3 + $0x44] sm:$0xf]
      %v8793 = vld [vmem:[#allocation3 + $0x48] sm:$0xff]
      %v8794 = vld [vmem:[#allocation3 + $0x50] sm:$0xff]
      %v8795 = vld [vmem:[#allocation3 + $0x58] sm:$0xff]
      %v8796 = vld [vmem:[#allocation3 + $0x60] sm:$0xff]
      %v8797 = vld [vmem:[#allocation3 + $0x68] sm:$0xf]
      %v8798 = vld [vmem:[#allocation3 + $0x6c] sm:$0xff]
      %v8799 = vld [vmem:[#allocation3 + $0x74] sm:$0xff]
      %v8800 = vld [vmem:[#allocation3 + $0x7c] sm:$0xff]
      %v8801 = vld [vmem:[#allocation3 + $0x84] sm:$0xff]
      %v8802 = vld [vmem:[#allocation3 + $0x8c] sm:$0xf]
      %v8803 = vld [vmem:[#allocation3 + $0x90] sm:$0xff]
      %v8804 = vld [vmem:[#allocation3 + $0x98] sm:$0xff]
      %v8805 = vld [vmem:[#allocation3 + $0xa0] sm:$0xff]
      %v8806 = vld [vmem:[#allocation3 + $0xa8] sm:$0xff]
      %v8807 = vld [vmem:[#allocation3 + $0xb0] sm:$0xf]
      %v8808 = vld [vmem:[#allocation3 + $0xb4] sm:$0xff]
      %v8809 = vld [vmem:[#allocation3 + $0xbc] sm:$0xff]
      %v8810 = vld [vmem:[#allocation3 + $0xc4] sm:$0xff]
      %v8811 = vld [vmem:[#allocation3 + $0xcc] sm:$0xff]
      %v8812 = vld [vmem:[#allocation3 + $0xd4] sm:$0xf]
      %v8813 = vld [vmem:[#allocation3 + $0xd8] sm:$0xff]
      %v8814 = vld [vmem:[#allocation3 + $0xe0] sm:$0xff]
      %v8815 = vld [vmem:[#allocation3 + $0xe8] sm:$0xff]
      %v8816 = vld [vmem:[#allocation3 + $0xf0] sm:$0xff]
      %v8817 = vld [vmem:[#allocation3 + $0xf8] sm:$0xf]
      %v8818 = vld [vmem:[#allocation3 + $0xfc] sm:$0xff]
      %v8819 = vld [vmem:[#allocation3 + $0x104] sm:$0xff]
      %v8820 = vld [vmem:[#allocation3 + $0x10c] sm:$0xff]
      %v8821 = vld [vmem:[#allocation3 + $0x114] sm:$0xff]
      %v8822 = vld [vmem:[#allocation3 + $0x11c] sm:$0xf]
      %v8823 = vld [vmem:[#allocation3 + $0x120] sm:$0xff]
      %v8824 = vld [vmem:[#allocation3 + $0x128] sm:$0xff]
      %v8825 = vld [vmem:[#allocation3 + $0x130] sm:$0xff]
      %v8826 = vld [vmem:[#allocation3 + $0x138] sm:$0xff]
      %v8827 = vld [vmem:[#allocation3 + $0x140] sm:$0xf]
      %v8828 = vld [vmem:[#allocation3 + $0x144] sm:$0xff]
      %v8829 = vld [vmem:[#allocation3 + $0x14c] sm:$0xff]
      %v8830 = vld [vmem:[#allocation3 + $0x154] sm:$0xff]
      %v8831 = vld [vmem:[#allocation3 + $0x15c] sm:$0xff]
      %v8832 = vld [vmem:[#allocation3 + $0x164] sm:$0xf]
      %v8833 = vld [vmem:[#allocation3 + $0x168] sm:$0xff]
      %v8834 = vld [vmem:[#allocation3 + $0x170] sm:$0xff]
      %v8835 = vld [vmem:[#allocation3 + $0x178] sm:$0xff]
      %v8836 = vld [vmem:[#allocation3 + $0x180] sm:$0xff]
      %v8837 = vld [vmem:[#allocation3 + $0x188] sm:$0xf]
      %v8838 = vld [vmem:[#allocation3 + $0x18c] sm:$0xff]
      %v8839 = vld [vmem:[#allocation3 + $0x194] sm:$0xff]
      %v8840 = vld [vmem:[#allocation3 + $0x19c] sm:$0xff]
      %v8841 = vld [vmem:[#allocation3 + $0x1a4] sm:$0xff]
      %v8842 = vld [vmem:[#allocation3 + $0x1ac] sm:$0xf]
      %v8843 = vld [vmem:[#allocation3 + $0x1b0] sm:$0xff]
      %v8844 = vld [vmem:[#allocation3 + $0x1b8] sm:$0xff]
      %v8845 = vld [vmem:[#allocation3 + $0x1c0] sm:$0xff]
      %v8846 = vld [vmem:[#allocation3 + $0x1c8] sm:$0xff]
      %v8847 = vld [vmem:[#allocation3 + $0x1d0] sm:$0xf]
      %v8848 = vld [vmem:[#allocation3 + $0x1d4] sm:$0xff]
      %v8849 = vld [vmem:[#allocation3 + $0x1dc] sm:$0xff]
      %v8850 = vld [vmem:[#allocation3 + $0x1e4] sm:$0xff]
      %v8851 = vld [vmem:[#allocation3 + $0x1ec] sm:$0xff]
      %v8852 = vld [vmem:[#allocation3 + $0x1f4] sm:$0xf]
      %v8853 = vld [vmem:[#allocation3 + $0x1f8] sm:$0xff]
      %v8854 = vld [vmem:[#allocation3 + $0x200] sm:$0xff]
      %v8855 = vld [vmem:[#allocation3 + $0x208] sm:$0xff]
      %v8856 = vld [vmem:[#allocation3 + $0x210] sm:$0xff]
      %v8857 = vld [vmem:[#allocation3 + $0x218] sm:$0xf]
      %v8858 = vld [vmem:[#allocation3 + $0x21c] sm:$0xff]
      %v8859 = vld [vmem:[#allocation3 + $0x224] sm:$0xff]
      %v8860 = vld [vmem:[#allocation3 + $0x22c] sm:$0xff]
      %v8861 = vld [vmem:[#allocation3 + $0x234] sm:$0xff]
      %v8862 = vld [vmem:[#allocation3 + $0x23c] sm:$0xf]
      %v8863 = vld [vmem:[#allocation3 + $0x240] sm:$0xff]
      %v8864 = vld [vmem:[#allocation3 + $0x248] sm:$0xff]
      %v8865 = vld [vmem:[#allocation3 + $0x250] sm:$0xff]
      %v8866 = vld [vmem:[#allocation3 + $0x258] sm:$0xff]
      %v8867 = vld [vmem:[#allocation3 + $0x260] sm:$0xf]
      %v8868 = vld [vmem:[#allocation3 + $0x264] sm:$0xff]
      %v8869 = vld [vmem:[#allocation3 + $0x26c] sm:$0xff]
      %v8870 = vld [vmem:[#allocation3 + $0x274] sm:$0xff]
      %v8871 = vld [vmem:[#allocation3 + $0x27c] sm:$0xff]
      %v8872 = vld [vmem:[#allocation3 + $0x284] sm:$0xf]
      %v8873 = vld [vmem:[#allocation3 + $0x288] sm:$0xff]
      %v8874 = vld [vmem:[#allocation3 + $0x290] sm:$0xff]
      %v8875 = vld [vmem:[#allocation3 + $0x298] sm:$0xff]
      %v8876 = vld [vmem:[#allocation3 + $0x2a0] sm:$0xff]
      %v8877 = vld [vmem:[#allocation3 + $0x2a8] sm:$0xf]
      %v8878 = vld [vmem:[#allocation3 + $0x2ac] sm:$0xff]
      %v8879 = vld [vmem:[#allocation3 + $0x2b4] sm:$0xff]
      %v8880 = vld [vmem:[#allocation3 + $0x2bc] sm:$0xff]
      %v8881 = vld [vmem:[#allocation3 + $0x2c4] sm:$0xff]
      %v8882 = vld [vmem:[#allocation3 + $0x2cc] sm:$0xf]
      %v8883 = vld [vmem:[#allocation3 + $0x2d0] sm:$0xff]
      %v8884 = vld [vmem:[#allocation3 + $0x2d8] sm:$0xff]
      %v8885 = vld [vmem:[#allocation3 + $0x2e0] sm:$0xff]
      %v8886 = vld [vmem:[#allocation3 + $0x2e8] sm:$0xff]
      %v8887 = vld [vmem:[#allocation3 + $0x2f0] sm:$0xf]
      %v8888 = vld [vmem:[#allocation3 + $0x2f4] sm:$0xff]
      %v8889 = vld [vmem:[#allocation3 + $0x2fc] sm:$0xff]
      %v8890 = vld [vmem:[#allocation3 + $0x304] sm:$0xff]
      %v8891 = vld [vmem:[#allocation3 + $0x30c] sm:$0xff]
      %v8892 = vld [vmem:[#allocation3 + $0x314] sm:$0xf]
      %v8893 = vld [vmem:[#allocation3 + $0x318] sm:$0xff]
      %v8894 = vld [vmem:[#allocation3 + $0x320] sm:$0xff]
      %v8895 = vld [vmem:[#allocation3 + $0x328] sm:$0xff]
      %v8896 = vld [vmem:[#allocation3 + $0x330] sm:$0xff]
      %v8897 = vld [vmem:[#allocation3 + $0x338] sm:$0xf]
      %v8898 = vld [vmem:[#allocation3 + $0x33c] sm:$0xff]
      %v8899 = vld [vmem:[#allocation3 + $0x344] sm:$0xff]
      %v8900 = vld [vmem:[#allocation3 + $0x34c] sm:$0xff]
      %v8901 = vld [vmem:[#allocation3 + $0x354] sm:$0xff]
      %v8902 = vld [vmem:[#allocation3 + $0x35c] sm:$0xf]
      %v8903 = vld [vmem:[#allocation3 + $0x360] sm:$0xff]
      %v8904 = vld [vmem:[#allocation3 + $0x368] sm:$0xff]
      %v8905 = vld [vmem:[#allocation3 + $0x370] sm:$0xff]
      %v8906 = vld [vmem:[#allocation3 + $0x378] sm:$0xff]
      %v8907 = vld [vmem:[#allocation3 + $0x380] sm:$0xf]
      %v8908 = vld [vmem:[#allocation3 + $0x384] sm:$0xff]
      %v8909 = vld [vmem:[#allocation3 + $0x38c] sm:$0xff]
      %v8910 = vld [vmem:[#allocation3 + $0x394] sm:$0xff]
      %v8911 = vld [vmem:[#allocation3 + $0x39c] sm:$0xff]
      %v8912 = vld [vmem:[#allocation3 + $0x3a4] sm:$0xf]
      %v8913 = vld [vmem:[#allocation3 + $0x3a8] sm:$0xff]
      %v8914 = vld [vmem:[#allocation3 + $0x3b0] sm:$0xff]
      %v8915 = vld [vmem:[#allocation3 + $0x3b8] sm:$0xff]
      %v8916 = vld [vmem:[#allocation3 + $0x3c0] sm:$0xff]
      %v8917 = vld [vmem:[#allocation3 + $0x3c8] sm:$0xf]
      %v8918 = vld [vmem:[#allocation3 + $0x3cc] sm:$0xff]
      %v8919 = vld [vmem:[#allocation3 + $0x3d4] sm:$0xff]
      %v8920 = vld [vmem:[#allocation3 + $0x3dc] sm:$0xff]
      %v8921 = vld [vmem:[#allocation3 + $0x3e4] sm:$0xff]
      %v8922 = vld [vmem:[#allocation3 + $0x3ec] sm:$0xf]
      %v8923 = vld [vmem:[#allocation3 + $0x3f0] sm:$0xff]
      %v8924 = vld [vmem:[#allocation3 + $0x3f8] sm:$0xff]
      %v8925 = vld [vmem:[#allocation3 + $0x400] sm:$0xff]
      %v8926 = vld [vmem:[#allocation3 + $0x408] sm:$0xff]
      %v8927 = vld [vmem:[#allocation3 + $0x410] sm:$0xf]
      %v8928 = vld [vmem:[#allocation3 + $0x414] sm:$0xff]
      %v8929 = vld [vmem:[#allocation3 + $0x41c] sm:$0xff]
      %v8930 = vld [vmem:[#allocation3 + $0x424] sm:$0xff]
      %v8931 = vld [vmem:[#allocation3 + $0x42c] sm:$0xff]
      %v8932 = vld [vmem:[#allocation3 + $0x434] sm:$0xf]
      %v8933 = vld [vmem:[#allocation3 + $0x438] sm:$0xff]
      %v8934 = vld [vmem:[#allocation3 + $0x440] sm:$0xff]
      %v8935 = vld [vmem:[#allocation3 + $0x448] sm:$0xff]
      %v8936 = vld [vmem:[#allocation3 + $0x450] sm:$0xff]
      %v8937 = vld [vmem:[#allocation3 + $0x458] sm:$0xf]
      %v8938 = vld [vmem:[#allocation3 + $0x45c] sm:$0xff]
      %v8939 = vld [vmem:[#allocation3 + $0x464] sm:$0xff]
      %v8940 = vld [vmem:[#allocation3 + $0x46c] sm:$0xff]
      %v8941 = vld [vmem:[#allocation3 + $0x474] sm:$0xff]
      %v8942 = vld [vmem:[#allocation3 + $0x47c] sm:$0xf]
      %v8943 = vld [vmem:[%s4] sm:$0xf]
      %v8944 = vld [vmem:[%s4 + $0x4] sm:$0xf]
      %v8945 = vld [vmem:[%s4 + $0x8] sm:$0xf]
      %v8946 = vld [vmem:[%s4 + $0xc] sm:$0xf]
      %v8947 = vld [vmem:[%s4 + $0x10] sm:$0xf]
      %v8948 = vld [vmem:[%s4 + $0x14] sm:$0xf]
      %v8949 = vld [vmem:[%s4 + $0x18] sm:$0xf]
      %v8950 = vld [vmem:[%s4 + $0x1c] sm:$0xf]
      %v8951 = vld [vmem:[%s4 + $0x20] sm:$0xf]
      %v8952 = vld [vmem:[%s4 + $0x24] sm:$0xf]
      %v8953 = vld [vmem:[%s4 + $0x28] sm:$0xf]
      %v8954 = vld [vmem:[%s4 + $0x2c] sm:$0xf]
      %v8955 = vld [vmem:[%s4 + $0x30] sm:$0xf]
      %v8956 = vld [vmem:[%s4 + $0x34] sm:$0xf]
      %v8957 = vld [vmem:[%s4 + $0x38] sm:$0xf]
      %v8958 = vld [vmem:[%s4 + $0x3c] sm:$0xf]
      %v8959 = vld [vmem:[%s4 + $0x40] sm:$0xf]
      %v8960 = vld [vmem:[%s4 + $0x44] sm:$0xf]
      %v8961 = vld [vmem:[%s4 + $0x48] sm:$0xf]
      %v8962 = vld [vmem:[%s4 + $0x4c] sm:$0xf]
      %v8963 = vld [vmem:[%s4 + $0x50] sm:$0xf]
      %v8964 = vld [vmem:[%s4 + $0x54] sm:$0xf]
      %v8965 = vld [vmem:[%s4 + $0x58] sm:$0xf]
      %v8966 = vld [vmem:[%s4 + $0x5c] sm:$0xf]
      %v8967 = vld [vmem:[%s4 + $0x60] sm:$0xf]
      %v8968 = vld [vmem:[%s4 + $0x64] sm:$0xf]
      %v8969 = vld [vmem:[%s4 + $0x68] sm:$0xf]
      %v8970 = vld [vmem:[%s4 + $0x6c] sm:$0xf]
      %v8971 = vld [vmem:[%s4 + $0x70] sm:$0xf]
      %v8972 = vld [vmem:[%s4 + $0x74] sm:$0xf]
      %v8973 = vld [vmem:[%s4 + $0x78] sm:$0xf]
      %v8974 = vld [vmem:[%s4 + $0x7c] sm:$0xf]
      %v8975 = vld [vmem:[%s4 + $0x80] sm:$0xf]
      %v8976 = vld [vmem:[%s4 + $0x84] sm:$0xf]
      %v8977 = vld [vmem:[%s4 + $0x88] sm:$0xf]
      %v8978 = vld [vmem:[%s4 + $0x8c] sm:$0xf]
      %v8979 = vld [vmem:[%s4 + $0x90] sm:$0xf]
      %v8980 = vld [vmem:[%s4 + $0x94] sm:$0xf]
      %v8981 = vld [vmem:[%s4 + $0x98] sm:$0xf]
      %v8982 = vld [vmem:[%s4 + $0x9c] sm:$0xf]
      %v8983 = vld [vmem:[%s4 + $0xa0] sm:$0xf]
      %v8984 = vld [vmem:[%s4 + $0xa4] sm:$0xf]
      %v8985 = vld [vmem:[%s4 + $0xa8] sm:$0xf]
      %v8986 = vld [vmem:[%s4 + $0xac] sm:$0xf]
      %v8987 = vld [vmem:[%s4 + $0xb0] sm:$0xf]
      %v8988 = vld [vmem:[%s4 + $0xb4] sm:$0xf]
      %v8989 = vld [vmem:[%s4 + $0xb8] sm:$0xf]
      %v8990 = vld [vmem:[%s4 + $0xbc] sm:$0xf]
      %v8991 = vld [vmem:[%s4 + $0xc0] sm:$0xf]
      %v8992 = vld [vmem:[%s4 + $0xc4] sm:$0xf]
      %v8993 = vld [vmem:[%s4 + $0xc8] sm:$0xf]
      %v8994 = vld [vmem:[%s4 + $0xcc] sm:$0xf]
      %v8995 = vld [vmem:[%s4 + $0xd0] sm:$0xf]
      %v8996 = vld [vmem:[%s4 + $0xd4] sm:$0xf]
      %v8997 = vld [vmem:[%s4 + $0xd8] sm:$0xf]
      %v8998 = vld [vmem:[%s4 + $0xdc] sm:$0xf]
      %v8999 = vld [vmem:[%s4 + $0xe0] sm:$0xf]
      %v9000 = vld [vmem:[%s4 + $0xe4] sm:$0xf]
      %v9001 = vld [vmem:[%s4 + $0xe8] sm:$0xf]
      %v9002 = vld [vmem:[%s4 + $0xec] sm:$0xf]
      %v9003 = vld [vmem:[%s4 + $0xf0] sm:$0xf]
      %v9004 = vld [vmem:[%s4 + $0xf4] sm:$0xf]
      %v9005 = vld [vmem:[%s4 + $0xf8] sm:$0xf]
      %v9006 = vld [vmem:[%s4 + $0xfc] sm:$0xf]
      %v9007 = vld [vmem:[%s4 + $0x100] sm:$0xf]
      %v9008 = vld [vmem:[%s4 + $0x104] sm:$0xf]
      %v9009 = vld [vmem:[%s4 + $0x108] sm:$0xf]
      %v9010 = vld [vmem:[%s4 + $0x10c] sm:$0xf]
      %v9011 = vld [vmem:[%s4 + $0x110] sm:$0xf]
      %v9012 = vld [vmem:[%s4 + $0x114] sm:$0xf]
      %v9013 = vld [vmem:[%s4 + $0x118] sm:$0xf]
      %v9014 = vld [vmem:[%s4 + $0x11c] sm:$0xf]
      %v9015 = vld [vmem:[%s4 + $0x120] sm:$0xf]
      %v9016 = vld [vmem:[%s4 + $0x124] sm:$0xf]
      %v9017 = vld [vmem:[%s4 + $0x128] sm:$0xf]
      %v9018 = vld [vmem:[%s4 + $0x12c] sm:$0xf]
      %v9019 = vld [vmem:[%s4 + $0x130] sm:$0xf]
      %v9020 = vld [vmem:[%s4 + $0x134] sm:$0xf]
      %v9021 = vld [vmem:[%s4 + $0x138] sm:$0xf]
      %v9022 = vld [vmem:[%s4 + $0x13c] sm:$0xf]
      %v9023 = vld [vmem:[%s4 + $0x140] sm:$0xf]
      %v9024 = vld [vmem:[%s4 + $0x144] sm:$0xf]
      %v9025 = vld [vmem:[%s4 + $0x148] sm:$0xf]
      %v9026 = vld [vmem:[%s4 + $0x14c] sm:$0xf]
      %v9027 = vld [vmem:[%s4 + $0x150] sm:$0xf]
      %v9028 = vld [vmem:[%s4 + $0x154] sm:$0xf]
      %v9029 = vld [vmem:[%s4 + $0x158] sm:$0xf]
      %v9030 = vld [vmem:[%s4 + $0x15c] sm:$0xf]
      %v9031 = vld [vmem:[%s4 + $0x160] sm:$0xf]
      %v9032 = vld [vmem:[%s4 + $0x164] sm:$0xf]
      %v9033 = vld [vmem:[%s4 + $0x168] sm:$0xf]
      %v9034 = vld [vmem:[%s4 + $0x16c] sm:$0xf]
      %v9035 = vld [vmem:[%s4 + $0x170] sm:$0xf]
      %v9036 = vld [vmem:[%s4 + $0x174] sm:$0xf]
      %v9037 = vld [vmem:[%s4 + $0x178] sm:$0xf]
      %v9038 = vld [vmem:[%s4 + $0x17c] sm:$0xf]
      %v9039 = vld [vmem:[%s4 + $0x180] sm:$0xf]
      %v9040 = vld [vmem:[%s4 + $0x184] sm:$0xf]
      %v9041 = vld [vmem:[%s4 + $0x188] sm:$0xf]
      %v9042 = vld [vmem:[%s4 + $0x18c] sm:$0xf]
      %v9043 = vld [vmem:[%s4 + $0x190] sm:$0xf]
      %v9044 = vld [vmem:[%s4 + $0x194] sm:$0xf]
      %v9045 = vld [vmem:[%s4 + $0x198] sm:$0xf]
      %v9046 = vld [vmem:[%s4 + $0x19c] sm:$0xf]
      %v9047 = vld [vmem:[%s4 + $0x1a0] sm:$0xf]
      %v9048 = vld [vmem:[%s4 + $0x1a4] sm:$0xf]
      %v9049 = vld [vmem:[%s4 + $0x1a8] sm:$0xf]
      %v9050 = vld [vmem:[%s4 + $0x1ac] sm:$0xf]
      %v9051 = vld [vmem:[%s4 + $0x1b0] sm:$0xf]
      %v9052 = vld [vmem:[%s4 + $0x1b4] sm:$0xf]
      %v9053 = vld [vmem:[%s4 + $0x1b8] sm:$0xf]
      %v9054 = vld [vmem:[%s4 + $0x1bc] sm:$0xf]
      %v9055 = vld [vmem:[%s4 + $0x1c0] sm:$0xf]
      %v9056 = vld [vmem:[%s4 + $0x1c4] sm:$0xf]
      %v9057 = vld [vmem:[%s4 + $0x1c8] sm:$0xf]
      %v9058 = vld [vmem:[%s4 + $0x1cc] sm:$0xf]
      %v9059 = vld [vmem:[%s4 + $0x1d0] sm:$0xf]
      %v9060 = vld [vmem:[%s4 + $0x1d4] sm:$0xf]
      %v9061 = vld [vmem:[%s4 + $0x1d8] sm:$0xf]
      %v9062 = vld [vmem:[%s4 + $0x1dc] sm:$0xf]
      %v9063 = vld [vmem:[%s4 + $0x1e0] sm:$0xf]
      %v9064 = vld [vmem:[%s4 + $0x1e4] sm:$0xf]
      %v9065 = vld [vmem:[%s4 + $0x1e8] sm:$0xf]
      %v9066 = vld [vmem:[%s4 + $0x1ec] sm:$0xf]
      %v9067 = vld [vmem:[%s4 + $0x1f0] sm:$0xf]
      %v9068 = vld [vmem:[%s4 + $0x1f4] sm:$0xf]
      %v9069 = vld [vmem:[%s4 + $0x1f8] sm:$0xf]
      %v9070 = vld [vmem:[%s4 + $0x1fc] sm:$0xf]
      %v9071 = vld [vmem:[%s4 + $0x200] sm:$0xf]
      %v9072 = vld [vmem:[%s4 + $0x204] sm:$0xf]
      %v9073 = vld [vmem:[%s4 + $0x208] sm:$0xf]
      %v9074 = vld [vmem:[%s4 + $0x20c] sm:$0xf]
      %v9075 = vld [vmem:[%s4 + $0x210] sm:$0xf]
      %v9076 = vld [vmem:[%s4 + $0x214] sm:$0xf]
      %v9077 = vld [vmem:[%s4 + $0x218] sm:$0xf]
      %v9078 = vld [vmem:[%s4 + $0x21c] sm:$0xf]
      %v9079 = vld [vmem:[%s4 + $0x220] sm:$0xf]
      %v9080 = vld [vmem:[%s4 + $0x224] sm:$0xf]
      %v9081 = vld [vmem:[%s4 + $0x228] sm:$0xf]
      %v9082 = vld [vmem:[%s4 + $0x22c] sm:$0xf]
      %v9083 = vld [vmem:[%s4 + $0x230] sm:$0xf]
      %v9084 = vld [vmem:[%s4 + $0x234] sm:$0xf]
      %v9085 = vld [vmem:[%s4 + $0x238] sm:$0xf]
      %v9086 = vld [vmem:[%s4 + $0x23c] sm:$0xf]
      %v9247 = vunpack.c.l.b16 %v8783
      %v9248 = vunpack.c.h.b16 %v8783
      %v9249 = vunpack.c.l.b16 %v8784
      %v9250 = vunpack.c.h.b16 %v8784
      %v9251 = vunpack.c.l.b16 %v8785
      %v9252 = vunpack.c.h.b16 %v8785
      %v9253 = vunpack.c.l.b16 %v8786
      %v9254 = vunpack.c.h.b16 %v8786
      %v9255 = vunpack.c.l.b16 %v8787
      %v9256 = vunpack.c.l.b16 %v8788
      %v9257 = vunpack.c.h.b16 %v8788
      %v9258 = vunpack.c.l.b16 %v8789
      %v9259 = vunpack.c.h.b16 %v8789
      %v9260 = vunpack.c.l.b16 %v8790
      %v9261 = vunpack.c.h.b16 %v8790
      %v9262 = vunpack.c.l.b16 %v8791
      %v9263 = vunpack.c.h.b16 %v8791
      %v9264 = vunpack.c.l.b16 %v8792
      %v9265 = vunpack.c.l.b16 %v8793
      %v9266 = vunpack.c.h.b16 %v8793
      %v9267 = vunpack.c.l.b16 %v8794
      %v9268 = vunpack.c.h.b16 %v8794
      %v9269 = vunpack.c.l.b16 %v8795
      %v9270 = vunpack.c.h.b16 %v8795
      %v9271 = vunpack.c.l.b16 %v8796
      %v9272 = vunpack.c.h.b16 %v8796
      %v9273 = vunpack.c.l.b16 %v8797
      %v9274 = vunpack.c.l.b16 %v8798
      %v9275 = vunpack.c.h.b16 %v8798
      %v9276 = vunpack.c.l.b16 %v8799
      %v9277 = vunpack.c.h.b16 %v8799
      %v9278 = vunpack.c.l.b16 %v8800
      %v9279 = vunpack.c.h.b16 %v8800
      %v9280 = vunpack.c.l.b16 %v8801
      %v9281 = vunpack.c.h.b16 %v8801
      %v9282 = vunpack.c.l.b16 %v8802
      %v9283 = vunpack.c.l.b16 %v8803
      %v9284 = vunpack.c.h.b16 %v8803
      %v9285 = vunpack.c.l.b16 %v8804
      %v9286 = vunpack.c.h.b16 %v8804
      %v9287 = vunpack.c.l.b16 %v8805
      %v9288 = vunpack.c.h.b16 %v8805
      %v9289 = vunpack.c.l.b16 %v8806
      %v9290 = vunpack.c.h.b16 %v8806
      %v9291 = vunpack.c.l.b16 %v8807
      %v9292 = vunpack.c.l.b16 %v8808
      %v9293 = vunpack.c.h.b16 %v8808
      %v9294 = vunpack.c.l.b16 %v8809
      %v9295 = vunpack.c.h.b16 %v8809
      %v9296 = vunpack.c.l.b16 %v8810
      %v9297 = vunpack.c.h.b16 %v8810
      %v9298 = vunpack.c.l.b16 %v8811
      %v9299 = vunpack.c.h.b16 %v8811
      %v9300 = vunpack.c.l.b16 %v8812
      %v9301 = vunpack.c.l.b16 %v8813
      %v9302 = vunpack.c.h.b16 %v8813
      %v9303 = vunpack.c.l.b16 %v8814
      %v9304 = vunpack.c.h.b16 %v8814
      %v9305 = vunpack.c.l.b16 %v8815
      %v9306 = vunpack.c.h.b16 %v8815
      %v9307 = vunpack.c.l.b16 %v8816
      %v9308 = vunpack.c.h.b16 %v8816
      %v9309 = vunpack.c.l.b16 %v8817
      %v9310 = vunpack.c.l.b16 %v8818
      %v9311 = vunpack.c.h.b16 %v8818
      %v9312 = vunpack.c.l.b16 %v8819
      %v9313 = vunpack.c.h.b16 %v8819
      %v9314 = vunpack.c.l.b16 %v8820
      %v9315 = vunpack.c.h.b16 %v8820
      %v9316 = vunpack.c.l.b16 %v8821
      %v9317 = vunpack.c.h.b16 %v8821
      %v9318 = vunpack.c.l.b16 %v8822
      %v9319 = vunpack.c.l.b16 %v8823
      %v9320 = vunpack.c.h.b16 %v8823
      %v9321 = vunpack.c.l.b16 %v8824
      %v9322 = vunpack.c.h.b16 %v8824
      %v9323 = vunpack.c.l.b16 %v8825
      %v9324 = vunpack.c.h.b16 %v8825
      %v9325 = vunpack.c.l.b16 %v8826
      %v9326 = vunpack.c.h.b16 %v8826
      %v9327 = vunpack.c.l.b16 %v8827
      %v9328 = vunpack.c.l.b16 %v8828
      %v9329 = vunpack.c.h.b16 %v8828
      %v9330 = vunpack.c.l.b16 %v8829
      %v9331 = vunpack.c.h.b16 %v8829
      %v9332 = vunpack.c.l.b16 %v8830
      %v9333 = vunpack.c.h.b16 %v8830
      %v9334 = vunpack.c.l.b16 %v8831
      %v9335 = vunpack.c.h.b16 %v8831
      %v9336 = vunpack.c.l.b16 %v8832
      %v9337 = vunpack.c.l.b16 %v8833
      %v9338 = vunpack.c.h.b16 %v8833
      %v9339 = vunpack.c.l.b16 %v8834
      %v9340 = vunpack.c.h.b16 %v8834
      %v9341 = vunpack.c.l.b16 %v8835
      %v9342 = vunpack.c.h.b16 %v8835
      %v9343 = vunpack.c.l.b16 %v8836
      %v9344 = vunpack.c.h.b16 %v8836
      %v9345 = vunpack.c.l.b16 %v8837
      %v9346 = vunpack.c.l.b16 %v8838
      %v9347 = vunpack.c.h.b16 %v8838
      %v9348 = vunpack.c.l.b16 %v8839
      %v9349 = vunpack.c.h.b16 %v8839
      %v9350 = vunpack.c.l.b16 %v8840
      %v9351 = vunpack.c.h.b16 %v8840
      %v9352 = vunpack.c.l.b16 %v8841
      %v9353 = vunpack.c.h.b16 %v8841
      %v9354 = vunpack.c.l.b16 %v8842
      %v9355 = vunpack.c.l.b16 %v8843
      %v9356 = vunpack.c.h.b16 %v8843
      %v9357 = vunpack.c.l.b16 %v8844
      %v9358 = vunpack.c.h.b16 %v8844
      %v9359 = vunpack.c.l.b16 %v8845
      %v9360 = vunpack.c.h.b16 %v8845
      %v9361 = vunpack.c.l.b16 %v8846
      %v9362 = vunpack.c.h.b16 %v8846
      %v9363 = vunpack.c.l.b16 %v8847
      %v9364 = vunpack.c.l.b16 %v8848
      %v9365 = vunpack.c.h.b16 %v8848
      %v9366 = vunpack.c.l.b16 %v8849
      %v9367 = vunpack.c.h.b16 %v8849
      %v9368 = vunpack.c.l.b16 %v8850
      %v9369 = vunpack.c.h.b16 %v8850
      %v9370 = vunpack.c.l.b16 %v8851
      %v9371 = vunpack.c.h.b16 %v8851
      %v9372 = vunpack.c.l.b16 %v8852
      %v9373 = vunpack.c.l.b16 %v8853
      %v9374 = vunpack.c.h.b16 %v8853
      %v9375 = vunpack.c.l.b16 %v8854
      %v9376 = vunpack.c.h.b16 %v8854
      %v9377 = vunpack.c.l.b16 %v8855
      %v9378 = vunpack.c.h.b16 %v8855
      %v9379 = vunpack.c.l.b16 %v8856
      %v9380 = vunpack.c.h.b16 %v8856
      %v9381 = vunpack.c.l.b16 %v8857
      %v9382 = vunpack.c.l.b16 %v8858
      %v9383 = vunpack.c.h.b16 %v8858
      %v9384 = vunpack.c.l.b16 %v8859
      %v9385 = vunpack.c.h.b16 %v8859
      %v9386 = vunpack.c.l.b16 %v8860
      %v9387 = vunpack.c.h.b16 %v8860
      %v9388 = vunpack.c.l.b16 %v8861
      %v9389 = vunpack.c.h.b16 %v8861
      %v9390 = vunpack.c.l.b16 %v8862
      %v9391 = vunpack.c.l.b16 %v8863
      %v9392 = vunpack.c.h.b16 %v8863
      %v9393 = vunpack.c.l.b16 %v8864
      %v9394 = vunpack.c.h.b16 %v8864
      %v9395 = vunpack.c.l.b16 %v8865
      %v9396 = vunpack.c.h.b16 %v8865
      %v9397 = vunpack.c.l.b16 %v8866
      %v9398 = vunpack.c.h.b16 %v8866
      %v9399 = vunpack.c.l.b16 %v8867
      %v9400 = vunpack.c.l.b16 %v8868
      %v9401 = vunpack.c.h.b16 %v8868
      %v9402 = vunpack.c.l.b16 %v8869
      %v9403 = vunpack.c.h.b16 %v8869
      %v9404 = vunpack.c.l.b16 %v8870
      %v9405 = vunpack.c.h.b16 %v8870
      %v9406 = vunpack.c.l.b16 %v8871
      %v9407 = vunpack.c.h.b16 %v8871
      %v9408 = vunpack.c.l.b16 %v8872
      %v9409 = vunpack.c.l.b16 %v8873
      %v9410 = vunpack.c.h.b16 %v8873
      %v9411 = vunpack.c.l.b16 %v8874
      %v9412 = vunpack.c.h.b16 %v8874
      %v9413 = vunpack.c.l.b16 %v8875
      %v9414 = vunpack.c.h.b16 %v8875
      %v9415 = vunpack.c.l.b16 %v8876
      %v9416 = vunpack.c.h.b16 %v8876
      %v9417 = vunpack.c.l.b16 %v8877
      %v9418 = vunpack.c.l.b16 %v8878
      %v9419 = vunpack.c.h.b16 %v8878
      %v9420 = vunpack.c.l.b16 %v8879
      %v9421 = vunpack.c.h.b16 %v8879
      %v9422 = vunpack.c.l.b16 %v8880
      %v9423 = vunpack.c.h.b16 %v8880
      %v9424 = vunpack.c.l.b16 %v8881
      %v9425 = vunpack.c.h.b16 %v8881
      %v9426 = vunpack.c.l.b16 %v8882
      %v9427 = vunpack.c.l.b16 %v8883
      %v9428 = vunpack.c.h.b16 %v8883
      %v9429 = vunpack.c.l.b16 %v8884
      %v9430 = vunpack.c.h.b16 %v8884
      %v9431 = vunpack.c.l.b16 %v8885
      %v9432 = vunpack.c.h.b16 %v8885
      %v9433 = vunpack.c.l.b16 %v8886
      %v9434 = vunpack.c.h.b16 %v8886
      %v9435 = vunpack.c.l.b16 %v8887
      %v9436 = vunpack.c.l.b16 %v8888
      %v9437 = vunpack.c.h.b16 %v8888
      %v9438 = vunpack.c.l.b16 %v8889
      %v9439 = vunpack.c.h.b16 %v8889
      %v9440 = vunpack.c.l.b16 %v8890
      %v9441 = vunpack.c.h.b16 %v8890
      %v9442 = vunpack.c.l.b16 %v8891
      %v9443 = vunpack.c.h.b16 %v8891
      %v9444 = vunpack.c.l.b16 %v8892
      %v9445 = vunpack.c.l.b16 %v8893
      %v9446 = vunpack.c.h.b16 %v8893
      %v9447 = vunpack.c.l.b16 %v8894
      %v9448 = vunpack.c.h.b16 %v8894
      %v9449 = vunpack.c.l.b16 %v8895
      %v9450 = vunpack.c.h.b16 %v8895
      %v9451 = vunpack.c.l.b16 %v8896
      %v9452 = vunpack.c.h.b16 %v8896
      %v9453 = vunpack.c.l.b16 %v8897
      %v9454 = vunpack.c.l.b16 %v8898
      %v9455 = vunpack.c.h.b16 %v8898
      %v9456 = vunpack.c.l.b16 %v8899
      %v9457 = vunpack.c.h.b16 %v8899
      %v9458 = vunpack.c.l.b16 %v8900
      %v9459 = vunpack.c.h.b16 %v8900
      %v9460 = vunpack.c.l.b16 %v8901
      %v9461 = vunpack.c.h.b16 %v8901
      %v9462 = vunpack.c.l.b16 %v8902
      %v9463 = vunpack.c.l.b16 %v8903
      %v9464 = vunpack.c.h.b16 %v8903
      %v9465 = vunpack.c.l.b16 %v8904
      %v9466 = vunpack.c.h.b16 %v8904
      %v9467 = vunpack.c.l.b16 %v8905
      %v9468 = vunpack.c.h.b16 %v8905
      %v9469 = vunpack.c.l.b16 %v8906
      %v9470 = vunpack.c.h.b16 %v8906
      %v9471 = vunpack.c.l.b16 %v8907
      %v9472 = vunpack.c.l.b16 %v8908
      %v9473 = vunpack.c.h.b16 %v8908
      %v9474 = vunpack.c.l.b16 %v8909
      %v9475 = vunpack.c.h.b16 %v8909
      %v9476 = vunpack.c.l.b16 %v8910
      %v9477 = vunpack.c.h.b16 %v8910
      %v9478 = vunpack.c.l.b16 %v8911
      %v9479 = vunpack.c.h.b16 %v8911
      %v9480 = vunpack.c.l.b16 %v8912
      %v9481 = vunpack.c.l.b16 %v8913
      %v9482 = vunpack.c.h.b16 %v8913
      %v9483 = vunpack.c.l.b16 %v8914
      %v9484 = vunpack.c.h.b16 %v8914
      %v9485 = vunpack.c.l.b16 %v8915
      %v9486 = vunpack.c.h.b16 %v8915
      %v9487 = vunpack.c.l.b16 %v8916
      %v9488 = vunpack.c.h.b16 %v8916
      %v9489 = vunpack.c.l.b16 %v8917
      %v9490 = vunpack.c.l.b16 %v8918
      %v9491 = vunpack.c.h.b16 %v8918
      %v9492 = vunpack.c.l.b16 %v8919
      %v9493 = vunpack.c.h.b16 %v8919
      %v9494 = vunpack.c.l.b16 %v8920
      %v9495 = vunpack.c.h.b16 %v8920
      %v9496 = vunpack.c.l.b16 %v8921
      %v9497 = vunpack.c.h.b16 %v8921
      %v9498 = vunpack.c.l.b16 %v8922
      %v9499 = vunpack.c.l.b16 %v8923
      %v9500 = vunpack.c.h.b16 %v8923
      %v9501 = vunpack.c.l.b16 %v8924
      %v9502 = vunpack.c.h.b16 %v8924
      %v9503 = vunpack.c.l.b16 %v8925
      %v9504 = vunpack.c.h.b16 %v8925
      %v9505 = vunpack.c.l.b16 %v8926
      %v9506 = vunpack.c.h.b16 %v8926
      %v9507 = vunpack.c.l.b16 %v8927
      %v9508 = vunpack.c.l.b16 %v8928
      %v9509 = vunpack.c.h.b16 %v8928
      %v9510 = vunpack.c.l.b16 %v8929
      %v9511 = vunpack.c.h.b16 %v8929
      %v9512 = vunpack.c.l.b16 %v8930
      %v9513 = vunpack.c.h.b16 %v8930
      %v9514 = vunpack.c.l.b16 %v8931
      %v9515 = vunpack.c.h.b16 %v8931
      %v9516 = vunpack.c.l.b16 %v8932
      %v9517 = vunpack.c.l.b16 %v8933
      %v9518 = vunpack.c.h.b16 %v8933
      %v9519 = vunpack.c.l.b16 %v8934
      %v9520 = vunpack.c.h.b16 %v8934
      %v9521 = vunpack.c.l.b16 %v8935
      %v9522 = vunpack.c.h.b16 %v8935
      %v9523 = vunpack.c.l.b16 %v8936
      %v9524 = vunpack.c.h.b16 %v8936
      %v9525 = vunpack.c.l.b16 %v8937
      %v9526 = vunpack.c.l.b16 %v8938
      %v9527 = vunpack.c.h.b16 %v8938
      %v9528 = vunpack.c.l.b16 %v8939
      %v9529 = vunpack.c.h.b16 %v8939
      %v9530 = vunpack.c.l.b16 %v8940
      %v9531 = vunpack.c.h.b16 %v8940
      %v9532 = vunpack.c.l.b16 %v8941
      %v9533 = vunpack.c.h.b16 %v8941
      %v9534 = vunpack.c.l.b16 %v8942
      %v9535 = vpack.c.b16 %v9256, %v9247
      %v9536 = vpack.c.b16 %v9257, %v9248
      %v9537 = vpack.c.b16 %v9258, %v9249
      %v9538 = vpack.c.b16 %v9259, %v9250
      %v9539 = vpack.c.b16 %v9260, %v9251
      %v9540 = vpack.c.b16 %v9261, %v9252
      %v9541 = vpack.c.b16 %v9262, %v9253
      %v9542 = vpack.c.b16 %v9263, %v9254
      %v9543 = vpack.c.b16 %v9264, %v9255
      %v9544 = vpack.c.b16 %v9274, %v9265
      %v9545 = vpack.c.b16 %v9275, %v9266
      %v9546 = vpack.c.b16 %v9276, %v9267
      %v9547 = vpack.c.b16 %v9277, %v9268
      %v9548 = vpack.c.b16 %v9278, %v9269
      %v9549 = vpack.c.b16 %v9279, %v9270
      %v9550 = vpack.c.b16 %v9280, %v9271
      %v9551 = vpack.c.b16 %v9281, %v9272
      %v9552 = vpack.c.b16 %v9282, %v9273
      %v9553 = vpack.c.b16 %v9292, %v9283
      %v9554 = vpack.c.b16 %v9293, %v9284
      %v9555 = vpack.c.b16 %v9294, %v9285
      %v9556 = vpack.c.b16 %v9295, %v9286
      %v9557 = vpack.c.b16 %v9296, %v9287
      %v9558 = vpack.c.b16 %v9297, %v9288
      %v9559 = vpack.c.b16 %v9298, %v9289
      %v9560 = vpack.c.b16 %v9299, %v9290
      %v9561 = vpack.c.b16 %v9300, %v9291
      %v9562 = vpack.c.b16 %v9310, %v9301
      %v9563 = vpack.c.b16 %v9311, %v9302
      %v9564 = vpack.c.b16 %v9312, %v9303
      %v9565 = vpack.c.b16 %v9313, %v9304
      %v9566 = vpack.c.b16 %v9314, %v9305
      %v9567 = vpack.c.b16 %v9315, %v9306
      %v9568 = vpack.c.b16 %v9316, %v9307
      %v9569 = vpack.c.b16 %v9317, %v9308
      %v9570 = vpack.c.b16 %v9318, %v9309
      %v9571 = vpack.c.b16 %v9328, %v9319
      %v9572 = vpack.c.b16 %v9329, %v9320
      %v9573 = vpack.c.b16 %v9330, %v9321
      %v9574 = vpack.c.b16 %v9331, %v9322
      %v9575 = vpack.c.b16 %v9332, %v9323
      %v9576 = vpack.c.b16 %v9333, %v9324
      %v9577 = vpack.c.b16 %v9334, %v9325
      %v9578 = vpack.c.b16 %v9335, %v9326
      %v9579 = vpack.c.b16 %v9336, %v9327
      %v9580 = vpack.c.b16 %v9346, %v9337
      %v9581 = vpack.c.b16 %v9347, %v9338
      %v9582 = vpack.c.b16 %v9348, %v9339
      %v9583 = vpack.c.b16 %v9349, %v9340
      %v9584 = vpack.c.b16 %v9350, %v9341
      %v9585 = vpack.c.b16 %v9351, %v9342
      %v9586 = vpack.c.b16 %v9352, %v9343
      %v9587 = vpack.c.b16 %v9353, %v9344
      %v9588 = vpack.c.b16 %v9354, %v9345
      %v9589 = vpack.c.b16 %v9364, %v9355
      %v9590 = vpack.c.b16 %v9365, %v9356
      %v9591 = vpack.c.b16 %v9366, %v9357
      %v9592 = vpack.c.b16 %v9367, %v9358
      %v9593 = vpack.c.b16 %v9368, %v9359
      %v9594 = vpack.c.b16 %v9369, %v9360
      %v9595 = vpack.c.b16 %v9370, %v9361
      %v9596 = vpack.c.b16 %v9371, %v9362
      %v9597 = vpack.c.b16 %v9372, %v9363
      %v9598 = vpack.c.b16 %v9382, %v9373
      %v9599 = vpack.c.b16 %v9383, %v9374
      %v9600 = vpack.c.b16 %v9384, %v9375
      %v9601 = vpack.c.b16 %v9385, %v9376
      %v9602 = vpack.c.b16 %v9386, %v9377
      %v9603 = vpack.c.b16 %v9387, %v9378
      %v9604 = vpack.c.b16 %v9388, %v9379
      %v9605 = vpack.c.b16 %v9389, %v9380
      %v9606 = vpack.c.b16 %v9390, %v9381
      %v9607 = vpack.c.b16 %v9400, %v9391
      %v9608 = vpack.c.b16 %v9401, %v9392
      %v9609 = vpack.c.b16 %v9402, %v9393
      %v9610 = vpack.c.b16 %v9403, %v9394
      %v9611 = vpack.c.b16 %v9404, %v9395
      %v9612 = vpack.c.b16 %v9405, %v9396
      %v9613 = vpack.c.b16 %v9406, %v9397
      %v9614 = vpack.c.b16 %v9407, %v9398
      %v9615 = vpack.c.b16 %v9408, %v9399
      %v9616 = vpack.c.b16 %v9418, %v9409
      %v9617 = vpack.c.b16 %v9419, %v9410
      %v9618 = vpack.c.b16 %v9420, %v9411
      %v9619 = vpack.c.b16 %v9421, %v9412
      %v9620 = vpack.c.b16 %v9422, %v9413
      %v9621 = vpack.c.b16 %v9423, %v9414
      %v9622 = vpack.c.b16 %v9424, %v9415
      %v9623 = vpack.c.b16 %v9425, %v9416
      %v9624 = vpack.c.b16 %v9426, %v9417
      %v9625 = vpack.c.b16 %v9436, %v9427
      %v9626 = vpack.c.b16 %v9437, %v9428
      %v9627 = vpack.c.b16 %v9438, %v9429
      %v9628 = vpack.c.b16 %v9439, %v9430
      %v9629 = vpack.c.b16 %v9440, %v9431
      %v9630 = vpack.c.b16 %v9441, %v9432
      %v9631 = vpack.c.b16 %v9442, %v9433
      %v9632 = vpack.c.b16 %v9443, %v9434
      %v9633 = vpack.c.b16 %v9444, %v9435
      %v9634 = vpack.c.b16 %v9454, %v9445
      %v9635 = vpack.c.b16 %v9455, %v9446
      %v9636 = vpack.c.b16 %v9456, %v9447
      %v9637 = vpack.c.b16 %v9457, %v9448
      %v9638 = vpack.c.b16 %v9458, %v9449
      %v9639 = vpack.c.b16 %v9459, %v9450
      %v9640 = vpack.c.b16 %v9460, %v9451
      %v9641 = vpack.c.b16 %v9461, %v9452
      %v9642 = vpack.c.b16 %v9462, %v9453
      %v9643 = vpack.c.b16 %v9472, %v9463
      %v9644 = vpack.c.b16 %v9473, %v9464
      %v9645 = vpack.c.b16 %v9474, %v9465
      %v9646 = vpack.c.b16 %v9475, %v9466
      %v9647 = vpack.c.b16 %v9476, %v9467
      %v9648 = vpack.c.b16 %v9477, %v9468
      %v9649 = vpack.c.b16 %v9478, %v9469
      %v9650 = vpack.c.b16 %v9479, %v9470
      %v9651 = vpack.c.b16 %v9480, %v9471
      %v9652 = vpack.c.b16 %v9490, %v9481
      %v9653 = vpack.c.b16 %v9491, %v9482
      %v9654 = vpack.c.b16 %v9492, %v9483
      %v9655 = vpack.c.b16 %v9493, %v9484
      %v9656 = vpack.c.b16 %v9494, %v9485
      %v9657 = vpack.c.b16 %v9495, %v9486
      %v9658 = vpack.c.b16 %v9496, %v9487
      %v9659 = vpack.c.b16 %v9497, %v9488
      %v9660 = vpack.c.b16 %v9498, %v9489
      %v9661 = vpack.c.b16 %v9508, %v9499
      %v9662 = vpack.c.b16 %v9509, %v9500
      %v9663 = vpack.c.b16 %v9510, %v9501
      %v9664 = vpack.c.b16 %v9511, %v9502
      %v9665 = vpack.c.b16 %v9512, %v9503
      %v9666 = vpack.c.b16 %v9513, %v9504
      %v9667 = vpack.c.b16 %v9514, %v9505
      %v9668 = vpack.c.b16 %v9515, %v9506
      %v9669 = vpack.c.b16 %v9516, %v9507
      %v9670 = vpack.c.b16 %v9526, %v9517
      %v9671 = vpack.c.b16 %v9527, %v9518
      %v9672 = vpack.c.b16 %v9528, %v9519
      %v9673 = vpack.c.b16 %v9529, %v9520
      %v9674 = vpack.c.b16 %v9530, %v9521
      %v9675 = vpack.c.b16 %v9531, %v9522
      %v9676 = vpack.c.b16 %v9532, %v9523
      %v9677 = vpack.c.b16 %v9533, %v9524
      %v9678 = vpack.c.b16 %v9534, %v9525
      %v9967 = vunpack.c.l.b16 %v8943
      %v9968 = vunpack.c.l.b16 %v8944
      %v9969 = vunpack.c.l.b16 %v8945
      %v9970 = vunpack.c.l.b16 %v8946
      %v9971 = vunpack.c.l.b16 %v8947
      %v9972 = vunpack.c.l.b16 %v8948
      %v9973 = vunpack.c.l.b16 %v8949
      %v9974 = vunpack.c.l.b16 %v8950
      %v9975 = vunpack.c.l.b16 %v8951
      %v9976 = vunpack.c.l.b16 %v8952
      %v9977 = vunpack.c.l.b16 %v8953
      %v9978 = vunpack.c.l.b16 %v8954
      %v9979 = vunpack.c.l.b16 %v8955
      %v9980 = vunpack.c.l.b16 %v8956
      %v9981 = vunpack.c.l.b16 %v8957
      %v9982 = vunpack.c.l.b16 %v8958
      %v9983 = vunpack.c.l.b16 %v8959
      %v9984 = vunpack.c.l.b16 %v8960
      %v9985 = vunpack.c.l.b16 %v8961
      %v9986 = vunpack.c.l.b16 %v8962
      %v9987 = vunpack.c.l.b16 %v8963
      %v9988 = vunpack.c.l.b16 %v8964
      %v9989 = vunpack.c.l.b16 %v8965
      %v9990 = vunpack.c.l.b16 %v8966
      %v9991 = vunpack.c.l.b16 %v8967
      %v9992 = vunpack.c.l.b16 %v8968
      %v9993 = vunpack.c.l.b16 %v8969
      %v9994 = vunpack.c.l.b16 %v8970
      %v9995 = vunpack.c.l.b16 %v8971
      %v9996 = vunpack.c.l.b16 %v8972
      %v9997 = vunpack.c.l.b16 %v8973
      %v9998 = vunpack.c.l.b16 %v8974
      %v9999 = vunpack.c.l.b16 %v8975
      %v10000 = vunpack.c.l.b16 %v8976
      %v10001 = vunpack.c.l.b16 %v8977
      %v10002 = vunpack.c.l.b16 %v8978
      %v10003 = vunpack.c.l.b16 %v8979
      %v10004 = vunpack.c.l.b16 %v8980
      %v10005 = vunpack.c.l.b16 %v8981
      %v10006 = vunpack.c.l.b16 %v8982
      %v10007 = vunpack.c.l.b16 %v8983
      %v10008 = vunpack.c.l.b16 %v8984
      %v10009 = vunpack.c.l.b16 %v8985
      %v10010 = vunpack.c.l.b16 %v8986
      %v10011 = vunpack.c.l.b16 %v8987
      %v10012 = vunpack.c.l.b16 %v8988
      %v10013 = vunpack.c.l.b16 %v8989
      %v10014 = vunpack.c.l.b16 %v8990
      %v10015 = vunpack.c.l.b16 %v8991
      %v10016 = vunpack.c.l.b16 %v8992
      %v10017 = vunpack.c.l.b16 %v8993
      %v10018 = vunpack.c.l.b16 %v8994
      %v10019 = vunpack.c.l.b16 %v8995
      %v10020 = vunpack.c.l.b16 %v8996
      %v10021 = vunpack.c.l.b16 %v8997
      %v10022 = vunpack.c.l.b16 %v8998
      %v10023 = vunpack.c.l.b16 %v8999
      %v10024 = vunpack.c.l.b16 %v9000
      %v10025 = vunpack.c.l.b16 %v9001
      %v10026 = vunpack.c.l.b16 %v9002
      %v10027 = vunpack.c.l.b16 %v9003
      %v10028 = vunpack.c.l.b16 %v9004
      %v10029 = vunpack.c.l.b16 %v9005
      %v10030 = vunpack.c.l.b16 %v9006
      %v10031 = vunpack.c.l.b16 %v9007
      %v10032 = vunpack.c.l.b16 %v9008
      %v10033 = vunpack.c.l.b16 %v9009
      %v10034 = vunpack.c.l.b16 %v9010
      %v10035 = vunpack.c.l.b16 %v9011
      %v10036 = vunpack.c.l.b16 %v9012
      %v10037 = vunpack.c.l.b16 %v9013
      %v10038 = vunpack.c.l.b16 %v9014
      %v10039 = vunpack.c.l.b16 %v9015
      %v10040 = vunpack.c.l.b16 %v9016
      %v10041 = vunpack.c.l.b16 %v9017
      %v10042 = vunpack.c.l.b16 %v9018
      %v10043 = vunpack.c.l.b16 %v9019
      %v10044 = vunpack.c.l.b16 %v9020
      %v10045 = vunpack.c.l.b16 %v9021
      %v10046 = vunpack.c.l.b16 %v9022
      %v10047 = vunpack.c.l.b16 %v9023
      %v10048 = vunpack.c.l.b16 %v9024
      %v10049 = vunpack.c.l.b16 %v9025
      %v10050 = vunpack.c.l.b16 %v9026
      %v10051 = vunpack.c.l.b16 %v9027
      %v10052 = vunpack.c.l.b16 %v9028
      %v10053 = vunpack.c.l.b16 %v9029
      %v10054 = vunpack.c.l.b16 %v9030
      %v10055 = vunpack.c.l.b16 %v9031
      %v10056 = vunpack.c.l.b16 %v9032
      %v10057 = vunpack.c.l.b16 %v9033
      %v10058 = vunpack.c.l.b16 %v9034
      %v10059 = vunpack.c.l.b16 %v9035
      %v10060 = vunpack.c.l.b16 %v9036
      %v10061 = vunpack.c.l.b16 %v9037
      %v10062 = vunpack.c.l.b16 %v9038
      %v10063 = vunpack.c.l.b16 %v9039
      %v10064 = vunpack.c.l.b16 %v9040
      %v10065 = vunpack.c.l.b16 %v9041
      %v10066 = vunpack.c.l.b16 %v9042
      %v10067 = vunpack.c.l.b16 %v9043
      %v10068 = vunpack.c.l.b16 %v9044
      %v10069 = vunpack.c.l.b16 %v9045
      %v10070 = vunpack.c.l.b16 %v9046
      %v10071 = vunpack.c.l.b16 %v9047
      %v10072 = vunpack.c.l.b16 %v9048
      %v10073 = vunpack.c.l.b16 %v9049
      %v10074 = vunpack.c.l.b16 %v9050
      %v10075 = vunpack.c.l.b16 %v9051
      %v10076 = vunpack.c.l.b16 %v9052
      %v10077 = vunpack.c.l.b16 %v9053
      %v10078 = vunpack.c.l.b16 %v9054
      %v10079 = vunpack.c.l.b16 %v9055
      %v10080 = vunpack.c.l.b16 %v9056
      %v10081 = vunpack.c.l.b16 %v9057
      %v10082 = vunpack.c.l.b16 %v9058
      %v10083 = vunpack.c.l.b16 %v9059
      %v10084 = vunpack.c.l.b16 %v9060
      %v10085 = vunpack.c.l.b16 %v9061
      %v10086 = vunpack.c.l.b16 %v9062
      %v10087 = vunpack.c.l.b16 %v9063
      %v10088 = vunpack.c.l.b16 %v9064
      %v10089 = vunpack.c.l.b16 %v9065
      %v10090 = vunpack.c.l.b16 %v9066
      %v10091 = vunpack.c.l.b16 %v9067
      %v10092 = vunpack.c.l.b16 %v9068
      %v10093 = vunpack.c.l.b16 %v9069
      %v10094 = vunpack.c.l.b16 %v9070
      %v10095 = vunpack.c.l.b16 %v9071
      %v10096 = vunpack.c.l.b16 %v9072
      %v10097 = vunpack.c.l.b16 %v9073
      %v10098 = vunpack.c.l.b16 %v9074
      %v10099 = vunpack.c.l.b16 %v9075
      %v10100 = vunpack.c.l.b16 %v9076
      %v10101 = vunpack.c.l.b16 %v9077
      %v10102 = vunpack.c.l.b16 %v9078
      %v10103 = vunpack.c.l.b16 %v9079
      %v10104 = vunpack.c.l.b16 %v9080
      %v10105 = vunpack.c.l.b16 %v9081
      %v10106 = vunpack.c.l.b16 %v9082
      %v10107 = vunpack.c.l.b16 %v9083
      %v10108 = vunpack.c.l.b16 %v9084
      %v10109 = vunpack.c.l.b16 %v9085
      %v10110 = vunpack.c.l.b16 %v9086
      %v10111 = vpack.c.b16 %v9968, %v9967
      %v10112 = vpack.c.b16 %v9970, %v9969
      %v10113 = vpack.c.b16 %v9972, %v9971
      %v10114 = vpack.c.b16 %v9974, %v9973
      %v10115 = vpack.c.b16 %v9976, %v9975
      %v10116 = vpack.c.b16 %v9978, %v9977
      %v10117 = vpack.c.b16 %v9980, %v9979
      %v10118 = vpack.c.b16 %v9982, %v9981
      %v10119 = vpack.c.b16 %v9984, %v9983
      %v10120 = vpack.c.b16 %v9986, %v9985
      %v10121 = vpack.c.b16 %v9988, %v9987
      %v10122 = vpack.c.b16 %v9990, %v9989
      %v10123 = vpack.c.b16 %v9992, %v9991
      %v10124 = vpack.c.b16 %v9994, %v9993
      %v10125 = vpack.c.b16 %v9996, %v9995
      %v10126 = vpack.c.b16 %v9998, %v9997
      %v10127 = vpack.c.b16 %v10000, %v9999
      %v10128 = vpack.c.b16 %v10002, %v10001
      %v10129 = vpack.c.b16 %v10004, %v10003
      %v10130 = vpack.c.b16 %v10006, %v10005
      %v10131 = vpack.c.b16 %v10008, %v10007
      %v10132 = vpack.c.b16 %v10010, %v10009
      %v10133 = vpack.c.b16 %v10012, %v10011
      %v10134 = vpack.c.b16 %v10014, %v10013
      %v10135 = vpack.c.b16 %v10016, %v10015
      %v10136 = vpack.c.b16 %v10018, %v10017
      %v10137 = vpack.c.b16 %v10020, %v10019
      %v10138 = vpack.c.b16 %v10022, %v10021
      %v10139 = vpack.c.b16 %v10024, %v10023
      %v10140 = vpack.c.b16 %v10026, %v10025
      %v10141 = vpack.c.b16 %v10028, %v10027
      %v10142 = vpack.c.b16 %v10030, %v10029
      %v10143 = vpack.c.b16 %v10032, %v10031
      %v10144 = vpack.c.b16 %v10034, %v10033
      %v10145 = vpack.c.b16 %v10036, %v10035
      %v10146 = vpack.c.b16 %v10038, %v10037
      %v10147 = vpack.c.b16 %v10040, %v10039
      %v10148 = vpack.c.b16 %v10042, %v10041
      %v10149 = vpack.c.b16 %v10044, %v10043
      %v10150 = vpack.c.b16 %v10046, %v10045
      %v10151 = vpack.c.b16 %v10048, %v10047
      %v10152 = vpack.c.b16 %v10050, %v10049
      %v10153 = vpack.c.b16 %v10052, %v10051
      %v10154 = vpack.c.b16 %v10054, %v10053
      %v10155 = vpack.c.b16 %v10056, %v10055
      %v10156 = vpack.c.b16 %v10058, %v10057
      %v10157 = vpack.c.b16 %v10060, %v10059
      %v10158 = vpack.c.b16 %v10062, %v10061
      %v10159 = vpack.c.b16 %v10064, %v10063
      %v10160 = vpack.c.b16 %v10066, %v10065
      %v10161 = vpack.c.b16 %v10068, %v10067
      %v10162 = vpack.c.b16 %v10070, %v10069
      %v10163 = vpack.c.b16 %v10072, %v10071
      %v10164 = vpack.c.b16 %v10074, %v10073
      %v10165 = vpack.c.b16 %v10076, %v10075
      %v10166 = vpack.c.b16 %v10078, %v10077
      %v10167 = vpack.c.b16 %v10080, %v10079
      %v10168 = vpack.c.b16 %v10082, %v10081
      %v10169 = vpack.c.b16 %v10084, %v10083
      %v10170 = vpack.c.b16 %v10086, %v10085
      %v10171 = vpack.c.b16 %v10088, %v10087
      %v10172 = vpack.c.b16 %v10090, %v10089
      %v10173 = vpack.c.b16 %v10092, %v10091
      %v10174 = vpack.c.b16 %v10094, %v10093
      %v10175 = vpack.c.b16 %v10096, %v10095
      %v10176 = vpack.c.b16 %v10098, %v10097
      %v10177 = vpack.c.b16 %v10100, %v10099
      %v10178 = vpack.c.b16 %v10102, %v10101
      %v10179 = vpack.c.b16 %v10104, %v10103
      %v10180 = vpack.c.b16 %v10106, %v10105
      %v10181 = vpack.c.b16 %v10108, %v10107
      %v10182 = vpack.c.b16 %v10110, %v10109
      %10255 = vmatprep.subr.bf16.mxu0 0
      %10256 = vmatpush1.bf16.msra.mxu0 %v10118
      %10257 = vmatprep.subr.bf16.mxu0 0
      %10258 = vmatpush1.bf16.msra.mxu0 %v10117
      %10259 = vmatprep.subr.bf16.mxu0 0
      %10260 = vmatpush1.bf16.msra.mxu0 %v10116
      %10261 = vmatprep.subr.bf16.mxu0 0
      %10262 = vmatpush1.bf16.msra.mxu0 %v10115
      %10263 = vmatprep.subr.bf16.mxu0 0
      %10264 = vmatpush1.bf16.msra.mxu0 %v10114
      %10265 = vmatprep.subr.bf16.mxu0 0
      %10266 = vmatpush1.bf16.msra.mxu0 %v10113
      %10267 = vmatprep.subr.bf16.mxu0 0
      %10268 = vmatpush1.bf16.msra.mxu0 %v10112
      %10269 = vmatprep.subr.bf16.mxu0 0
      %10270 = vmatpush1.bf16.msra.mxu0 %v10111
      %10271 = vmatprep.subr.bf16.mxu0 0
      %10272 = vmatpush2.bf16.msra.mxu0 %v10126
      %10273 = vmatprep.subr.bf16.mxu0 0
      %10274 = vmatpush2.bf16.msra.mxu0 %v10125
      %10275 = vmatprep.subr.bf16.mxu0 0
      %10276 = vmatpush2.bf16.msra.mxu0 %v10124
      %10277 = vmatprep.subr.bf16.mxu0 0
      %10278 = vmatpush2.bf16.msra.mxu0 %v10123
      %10279 = vmatprep.subr.bf16.mxu0 0
      %10280 = vmatpush2.bf16.msra.mxu0 %v10122
      %10281 = vmatprep.subr.bf16.mxu0 0
      %10282 = vmatpush2.bf16.msra.mxu0 %v10121
      %10283 = vmatprep.subr.bf16.mxu0 0
      %10284 = vmatpush2.bf16.msra.mxu0 %v10120
      %10285 = vmatprep.subr.bf16.mxu0 0
      %10286 = vmatpush2.bf16.msra.mxu0 %v10119
      %10287 = vmatprep.mubr.bf16.mxu0 %v9536
      %10288 = vmatmul.mubr.bf16.gmra.mxu0 %v9535
      %v10289 = vpop.f32.mrf.mxu0
      %v10290 = vadd.f32 0.0, %v10289
      %v10291 = vpop.f32.mrf.mxu0
      %v10292 = vpop.f32.mrf.mxu0
      %v10293 = vadd.f32 0.0, %v10292
      %v10294 = vpop.f32.mrf.mxu0
      %10295 = vmatprep.mubr.bf16.mxu0 %v9545
      %10296 = vmatmul.mubr.bf16.gmra.mxu0 %v9544
      %v10297 = vpop.f32.mrf.mxu0
      %v10298 = vadd.f32 0.0, %v10297
      %v10299 = vpop.f32.mrf.mxu0
      %v10300 = vpop.f32.mrf.mxu0
      %v10301 = vadd.f32 0.0, %v10300
      %v10302 = vpop.f32.mrf.mxu0
      %10303 = vmatprep.mubr.bf16.mxu0 %v9554
      %10304 = vmatmul.mubr.bf16.gmra.mxu0 %v9553
      %v10305 = vpop.f32.mrf.mxu0
      %v10306 = vadd.f32 0.0, %v10305
      %v10307 = vpop.f32.mrf.mxu0
      %v10308 = vpop.f32.mrf.mxu0
      %v10309 = vadd.f32 0.0, %v10308
      %v10310 = vpop.f32.mrf.mxu0
      %10311 = vmatprep.mubr.bf16.mxu0 %v9563
      %10312 = vmatmul.mubr.bf16.gmra.mxu0 %v9562
      %v10313 = vpop.f32.mrf.mxu0
      %v10314 = vadd.f32 0.0, %v10313
      %v10315 = vpop.f32.mrf.mxu0
      %v10316 = vpop.f32.mrf.mxu0
      %v10317 = vadd.f32 0.0, %v10316
      %v10318 = vpop.f32.mrf.mxu0
      %10319 = vmatprep.mubr.bf16.mxu0 %v9572
      %10320 = vmatmul.mubr.bf16.gmra.mxu0 %v9571
      %v10321 = vpop.f32.mrf.mxu0
      %v10322 = vadd.f32 0.0, %v10321
      %v10323 = vpop.f32.mrf.mxu0
      %v10324 = vpop.f32.mrf.mxu0
      %v10325 = vadd.f32 0.0, %v10324
      %v10326 = vpop.f32.mrf.mxu0
      %10327 = vmatprep.mubr.bf16.mxu0 %v9581
      %10328 = vmatmul.mubr.bf16.gmra.mxu0 %v9580
      %v10329 = vpop.f32.mrf.mxu0
      %v10330 = vadd.f32 0.0, %v10329
      %v10331 = vpop.f32.mrf.mxu0
      %v10332 = vpop.f32.mrf.mxu0
      %v10333 = vadd.f32 0.0, %v10332
      %v10334 = vpop.f32.mrf.mxu0
      %10335 = vmatprep.mubr.bf16.mxu0 %v9590
      %10336 = vmatmul.mubr.bf16.gmra.mxu0 %v9589
      %v10337 = vpop.f32.mrf.mxu0
      %v10338 = vadd.f32 0.0, %v10337
      %v10339 = vpop.f32.mrf.mxu0
      %v10340 = vpop.f32.mrf.mxu0
      %v10341 = vadd.f32 0.0, %v10340
      %v10342 = vpop.f32.mrf.mxu0
      %10343 = vmatprep.mubr.bf16.mxu0 %v9599
      %10344 = vmatmul.mubr.bf16.gmra.mxu0 %v9598
      %v10345 = vpop.f32.mrf.mxu0
      %v10346 = vadd.f32 0.0, %v10345
      %v10347 = vpop.f32.mrf.mxu0
      %v10348 = vpop.f32.mrf.mxu0
      %v10349 = vadd.f32 0.0, %v10348
      %v10350 = vpop.f32.mrf.mxu0
      %10351 = vmatprep.mubr.bf16.mxu0 %v9608
      %10352 = vmatmul.mubr.bf16.gmra.mxu0 %v9607
      %v10353 = vpop.f32.mrf.mxu0
      %v10354 = vadd.f32 0.0, %v10353
      %v10355 = vpop.f32.mrf.mxu0
      %v10356 = vpop.f32.mrf.mxu0
      %v10357 = vadd.f32 0.0, %v10356
      %v10358 = vpop.f32.mrf.mxu0
      %10359 = vmatprep.mubr.bf16.mxu0 %v9617
      %10360 = vmatmul.mubr.bf16.gmra.mxu0 %v9616
      %v10361 = vpop.f32.mrf.mxu0
      %v10362 = vadd.f32 0.0, %v10361
      %v10363 = vpop.f32.mrf.mxu0
      %v10364 = vpop.f32.mrf.mxu0
      %v10365 = vadd.f32 0.0, %v10364
      %v10366 = vpop.f32.mrf.mxu0
      %10367 = vmatprep.mubr.bf16.mxu0 %v9626
      %10368 = vmatmul.mubr.bf16.gmra.mxu0 %v9625
      %v10369 = vpop.f32.mrf.mxu0
      %v10370 = vadd.f32 0.0, %v10369
      %v10371 = vpop.f32.mrf.mxu0
      %v10372 = vpop.f32.mrf.mxu0
      %v10373 = vadd.f32 0.0, %v10372
      %v10374 = vpop.f32.mrf.mxu0
      %10375 = vmatprep.mubr.bf16.mxu0 %v9635
      %10376 = vmatmul.mubr.bf16.gmra.mxu0 %v9634
      %v10377 = vpop.f32.mrf.mxu0
      %v10378 = vadd.f32 0.0, %v10377
      %v10379 = vpop.f32.mrf.mxu0
      %v10380 = vpop.f32.mrf.mxu0
      %v10381 = vadd.f32 0.0, %v10380
      %v10382 = vpop.f32.mrf.mxu0
      %10383 = vmatprep.mubr.bf16.mxu0 %v9644
      %10384 = vmatmul.mubr.bf16.gmra.mxu0 %v9643
      %v10385 = vpop.f32.mrf.mxu0
      %v10386 = vadd.f32 0.0, %v10385
      %v10387 = vpop.f32.mrf.mxu0
      %v10388 = vpop.f32.mrf.mxu0
      %v10389 = vadd.f32 0.0, %v10388
      %v10390 = vpop.f32.mrf.mxu0
      %10391 = vmatprep.mubr.bf16.mxu0 %v9653
      %10392 = vmatmul.mubr.bf16.gmra.mxu0 %v9652
      %v10393 = vpop.f32.mrf.mxu0
      %v10394 = vadd.f32 0.0, %v10393
      %v10395 = vpop.f32.mrf.mxu0
      %v10396 = vpop.f32.mrf.mxu0
      %v10397 = vadd.f32 0.0, %v10396
      %v10398 = vpop.f32.mrf.mxu0
      %10399 = vmatprep.mubr.bf16.mxu0 %v9662
      %10400 = vmatmul.mubr.bf16.gmra.mxu0 %v9661
      %v10401 = vpop.f32.mrf.mxu0
      %v10402 = vadd.f32 0.0, %v10401
      %v10403 = vpop.f32.mrf.mxu0
      %v10404 = vpop.f32.mrf.mxu0
      %v10405 = vadd.f32 0.0, %v10404
      %v10406 = vpop.f32.mrf.mxu0
      %10407 = vmatprep.mubr.bf16.mxu0 %v9671
      %10408 = vmatmul.mubr.bf16.gmra.mxu0 %v9670
      %v10409 = vpop.f32.mrf.mxu0
      %v10410 = vadd.f32 0.0, %v10409
      %v10411 = vpop.f32.mrf.mxu0
      %v10412 = vpop.f32.mrf.mxu0
      %v10413 = vadd.f32 0.0, %v10412
      %v10414 = vpop.f32.mrf.mxu0
      %10415 = vdwg.mxu0
      %10416 = vmatprep.subr.bf16.mxu0 0
      %10417 = vmatpush1.bf16.msra.mxu0 %v10134
      %10418 = vmatprep.subr.bf16.mxu0 0
      %10419 = vmatpush1.bf16.msra.mxu0 %v10133
      %10420 = vmatprep.subr.bf16.mxu0 0
      %10421 = vmatpush1.bf16.msra.mxu0 %v10132
      %10422 = vmatprep.subr.bf16.mxu0 0
      %10423 = vmatpush1.bf16.msra.mxu0 %v10131
      %10424 = vmatprep.subr.bf16.mxu0 0
      %10425 = vmatpush1.bf16.msra.mxu0 %v10130
      %10426 = vmatprep.subr.bf16.mxu0 0
      %10427 = vmatpush1.bf16.msra.mxu0 %v10129
      %10428 = vmatprep.subr.bf16.mxu0 0
      %10429 = vmatpush1.bf16.msra.mxu0 %v10128
      %10430 = vmatprep.subr.bf16.mxu0 0
      %10431 = vmatpush1.bf16.msra.mxu0 %v10127
      %10432 = vmatprep.subr.bf16.mxu0 0
      %10433 = vmatpush2.bf16.msra.mxu0 %v10142
      %10434 = vmatprep.subr.bf16.mxu0 0
      %10435 = vmatpush2.bf16.msra.mxu0 %v10141
      %10436 = vmatprep.subr.bf16.mxu0 0
      %10437 = vmatpush2.bf16.msra.mxu0 %v10140
      %10438 = vmatprep.subr.bf16.mxu0 0
      %10439 = vmatpush2.bf16.msra.mxu0 %v10139
      %10440 = vmatprep.subr.bf16.mxu0 0
      %10441 = vmatpush2.bf16.msra.mxu0 %v10138
      %10442 = vmatprep.subr.bf16.mxu0 0
      %10443 = vmatpush2.bf16.msra.mxu0 %v10137
      %10444 = vmatprep.subr.bf16.mxu0 0
      %10445 = vmatpush2.bf16.msra.mxu0 %v10136
      %10446 = vmatprep.subr.bf16.mxu0 0
      %10447 = vmatpush2.bf16.msra.mxu0 %v10135
      %10448 = vmatprep.mubr.bf16.mxu0 %v9538
      %10449 = vmatmul.mubr.bf16.gmra.mxu0 %v9537
      %v10450 = vpop.f32.mrf.mxu0
      %v10451 = vadd.f32 %v10290, %v10450
      %v10452 = vpop.f32.mrf.mxu0
      %v10453 = vpop.f32.mrf.mxu0
      %v10454 = vadd.f32 %v10293, %v10453
      %v10455 = vpop.f32.mrf.mxu0
      %10456 = vmatprep.mubr.bf16.mxu0 %v9547
      %10457 = vmatmul.mubr.bf16.gmra.mxu0 %v9546
      %v10458 = vpop.f32.mrf.mxu0
      %v10459 = vadd.f32 %v10298, %v10458
      %v10460 = vpop.f32.mrf.mxu0
      %v10461 = vpop.f32.mrf.mxu0
      %v10462 = vadd.f32 %v10301, %v10461
      %v10463 = vpop.f32.mrf.mxu0
      %10464 = vmatprep.mubr.bf16.mxu0 %v9556
      %10465 = vmatmul.mubr.bf16.gmra.mxu0 %v9555
      %v10466 = vpop.f32.mrf.mxu0
      %v10467 = vadd.f32 %v10306, %v10466
      %v10468 = vpop.f32.mrf.mxu0
      %v10469 = vpop.f32.mrf.mxu0
      %v10470 = vadd.f32 %v10309, %v10469
      %v10471 = vpop.f32.mrf.mxu0
      %10472 = vmatprep.mubr.bf16.mxu0 %v9565
      %10473 = vmatmul.mubr.bf16.gmra.mxu0 %v9564
      %v10474 = vpop.f32.mrf.mxu0
      %v10475 = vadd.f32 %v10314, %v10474
      %v10476 = vpop.f32.mrf.mxu0
      %v10477 = vpop.f32.mrf.mxu0
      %v10478 = vadd.f32 %v10317, %v10477
      %v10479 = vpop.f32.mrf.mxu0
      %10480 = vmatprep.mubr.bf16.mxu0 %v9574
      %10481 = vmatmul.mubr.bf16.gmra.mxu0 %v9573
      %v10482 = vpop.f32.mrf.mxu0
      %v10483 = vadd.f32 %v10322, %v10482
      %v10484 = vpop.f32.mrf.mxu0
      %v10485 = vpop.f32.mrf.mxu0
      %v10486 = vadd.f32 %v10325, %v10485
      %v10487 = vpop.f32.mrf.mxu0
      %10488 = vmatprep.mubr.bf16.mxu0 %v9583
      %10489 = vmatmul.mubr.bf16.gmra.mxu0 %v9582
      %v10490 = vpop.f32.mrf.mxu0
      %v10491 = vadd.f32 %v10330, %v10490
      %v10492 = vpop.f32.mrf.mxu0
      %v10493 = vpop.f32.mrf.mxu0
      %v10494 = vadd.f32 %v10333, %v10493
      %v10495 = vpop.f32.mrf.mxu0
      %10496 = vmatprep.mubr.bf16.mxu0 %v9592
      %10497 = vmatmul.mubr.bf16.gmra.mxu0 %v9591
      %v10498 = vpop.f32.mrf.mxu0
      %v10499 = vadd.f32 %v10338, %v10498
      %v10500 = vpop.f32.mrf.mxu0
      %v10501 = vpop.f32.mrf.mxu0
      %v10502 = vadd.f32 %v10341, %v10501
      %v10503 = vpop.f32.mrf.mxu0
      %10504 = vmatprep.mubr.bf16.mxu0 %v9601
      %10505 = vmatmul.mubr.bf16.gmra.mxu0 %v9600
      %v10506 = vpop.f32.mrf.mxu0
      %v10507 = vadd.f32 %v10346, %v10506
      %v10508 = vpop.f32.mrf.mxu0
      %v10509 = vpop.f32.mrf.mxu0
      %v10510 = vadd.f32 %v10349, %v10509
      %v10511 = vpop.f32.mrf.mxu0
      %10512 = vmatprep.mubr.bf16.mxu0 %v9610
      %10513 = vmatmul.mubr.bf16.gmra.mxu0 %v9609
      %v10514 = vpop.f32.mrf.mxu0
      %v10515 = vadd.f32 %v10354, %v10514
      %v10516 = vpop.f32.mrf.mxu0
      %v10517 = vpop.f32.mrf.mxu0
      %v10518 = vadd.f32 %v10357, %v10517
      %v10519 = vpop.f32.mrf.mxu0
      %10520 = vmatprep.mubr.bf16.mxu0 %v9619
      %10521 = vmatmul.mubr.bf16.gmra.mxu0 %v9618
      %v10522 = vpop.f32.mrf.mxu0
      %v10523 = vadd.f32 %v10362, %v10522
      %v10524 = vpop.f32.mrf.mxu0
      %v10525 = vpop.f32.mrf.mxu0
      %v10526 = vadd.f32 %v10365, %v10525
      %v10527 = vpop.f32.mrf.mxu0
      %10528 = vmatprep.mubr.bf16.mxu0 %v9628
      %10529 = vmatmul.mubr.bf16.gmra.mxu0 %v9627
      %v10530 = vpop.f32.mrf.mxu0
      %v10531 = vadd.f32 %v10370, %v10530
      %v10532 = vpop.f32.mrf.mxu0
      %v10533 = vpop.f32.mrf.mxu0
      %v10534 = vadd.f32 %v10373, %v10533
      %v10535 = vpop.f32.mrf.mxu0
      %10536 = vmatprep.mubr.bf16.mxu0 %v9637
      %10537 = vmatmul.mubr.bf16.gmra.mxu0 %v9636
      %v10538 = vpop.f32.mrf.mxu0
      %v10539 = vadd.f32 %v10378, %v10538
      %v10540 = vpop.f32.mrf.mxu0
      %v10541 = vpop.f32.mrf.mxu0
      %v10542 = vadd.f32 %v10381, %v10541
      %v10543 = vpop.f32.mrf.mxu0
      %10544 = vmatprep.mubr.bf16.mxu0 %v9646
      %10545 = vmatmul.mubr.bf16.gmra.mxu0 %v9645
      %v10546 = vpop.f32.mrf.mxu0
      %v10547 = vadd.f32 %v10386, %v10546
      %v10548 = vpop.f32.mrf.mxu0
      %v10549 = vpop.f32.mrf.mxu0
      %v10550 = vadd.f32 %v10389, %v10549
      %v10551 = vpop.f32.mrf.mxu0
      %10552 = vmatprep.mubr.bf16.mxu0 %v9655
      %10553 = vmatmul.mubr.bf16.gmra.mxu0 %v9654
      %v10554 = vpop.f32.mrf.mxu0
      %v10555 = vadd.f32 %v10394, %v10554
      %v10556 = vpop.f32.mrf.mxu0
      %v10557 = vpop.f32.mrf.mxu0
      %v10558 = vadd.f32 %v10397, %v10557
      %v10559 = vpop.f32.mrf.mxu0
      %10560 = vmatprep.mubr.bf16.mxu0 %v9664
      %10561 = vmatmul.mubr.bf16.gmra.mxu0 %v9663
      %v10562 = vpop.f32.mrf.mxu0
      %v10563 = vadd.f32 %v10402, %v10562
      %v10564 = vpop.f32.mrf.mxu0
      %v10565 = vpop.f32.mrf.mxu0
      %v10566 = vadd.f32 %v10405, %v10565
      %v10567 = vpop.f32.mrf.mxu0
      %10568 = vmatprep.mubr.bf16.mxu0 %v9673
      %10569 = vmatmul.mubr.bf16.gmra.mxu0 %v9672
      %v10570 = vpop.f32.mrf.mxu0
      %v10571 = vadd.f32 %v10410, %v10570
      %v10572 = vpop.f32.mrf.mxu0
      %v10573 = vpop.f32.mrf.mxu0
      %v10574 = vadd.f32 %v10413, %v10573
      %v10575 = vpop.f32.mrf.mxu0
      %10576 = vdwg.mxu0
      %10577 = vmatprep.subr.bf16.mxu0 0
      %10578 = vmatpush1.bf16.msra.mxu0 %v10150
      %10579 = vmatprep.subr.bf16.mxu0 0
      %10580 = vmatpush1.bf16.msra.mxu0 %v10149
      %10581 = vmatprep.subr.bf16.mxu0 0
      %10582 = vmatpush1.bf16.msra.mxu0 %v10148
      %10583 = vmatprep.subr.bf16.mxu0 0
      %10584 = vmatpush1.bf16.msra.mxu0 %v10147
      %10585 = vmatprep.subr.bf16.mxu0 0
      %10586 = vmatpush1.bf16.msra.mxu0 %v10146
      %10587 = vmatprep.subr.bf16.mxu0 0
      %10588 = vmatpush1.bf16.msra.mxu0 %v10145
      %10589 = vmatprep.subr.bf16.mxu0 0
      %10590 = vmatpush1.bf16.msra.mxu0 %v10144
      %10591 = vmatprep.subr.bf16.mxu0 0
      %10592 = vmatpush1.bf16.msra.mxu0 %v10143
      %10593 = vmatprep.subr.bf16.mxu0 0
      %10594 = vmatpush2.bf16.msra.mxu0 %v10158
      %10595 = vmatprep.subr.bf16.mxu0 0
      %10596 = vmatpush2.bf16.msra.mxu0 %v10157
      %10597 = vmatprep.subr.bf16.mxu0 0
      %10598 = vmatpush2.bf16.msra.mxu0 %v10156
      %10599 = vmatprep.subr.bf16.mxu0 0
      %10600 = vmatpush2.bf16.msra.mxu0 %v10155
      %10601 = vmatprep.subr.bf16.mxu0 0
      %10602 = vmatpush2.bf16.msra.mxu0 %v10154
      %10603 = vmatprep.subr.bf16.mxu0 0
      %10604 = vmatpush2.bf16.msra.mxu0 %v10153
      %10605 = vmatprep.subr.bf16.mxu0 0
      %10606 = vmatpush2.bf16.msra.mxu0 %v10152
      %10607 = vmatprep.subr.bf16.mxu0 0
      %10608 = vmatpush2.bf16.msra.mxu0 %v10151
      %10609 = vmatprep.mubr.bf16.mxu0 %v9540
      %10610 = vmatmul.mubr.bf16.gmra.mxu0 %v9539
      %v10611 = vpop.f32.mrf.mxu0
      %v10612 = vadd.f32 %v10451, %v10611
      %v10613 = vpop.f32.mrf.mxu0
      %v10614 = vpop.f32.mrf.mxu0
      %v10615 = vadd.f32 %v10454, %v10614
      %v10616 = vpop.f32.mrf.mxu0
      %10617 = vmatprep.mubr.bf16.mxu0 %v9549
      %10618 = vmatmul.mubr.bf16.gmra.mxu0 %v9548
      %v10619 = vpop.f32.mrf.mxu0
      %v10620 = vadd.f32 %v10459, %v10619
      %v10621 = vpop.f32.mrf.mxu0
      %v10622 = vpop.f32.mrf.mxu0
      %v10623 = vadd.f32 %v10462, %v10622
      %v10624 = vpop.f32.mrf.mxu0
      %10625 = vmatprep.mubr.bf16.mxu0 %v9558
      %10626 = vmatmul.mubr.bf16.gmra.mxu0 %v9557
      %v10627 = vpop.f32.mrf.mxu0
      %v10628 = vadd.f32 %v10467, %v10627
      %v10629 = vpop.f32.mrf.mxu0
      %v10630 = vpop.f32.mrf.mxu0
      %v10631 = vadd.f32 %v10470, %v10630
      %v10632 = vpop.f32.mrf.mxu0
      %10633 = vmatprep.mubr.bf16.mxu0 %v9567
      %10634 = vmatmul.mubr.bf16.gmra.mxu0 %v9566
      %v10635 = vpop.f32.mrf.mxu0
      %v10636 = vadd.f32 %v10475, %v10635
      %v10637 = vpop.f32.mrf.mxu0
      %v10638 = vpop.f32.mrf.mxu0
      %v10639 = vadd.f32 %v10478, %v10638
      %v10640 = vpop.f32.mrf.mxu0
      %10641 = vmatprep.mubr.bf16.mxu0 %v9576
      %10642 = vmatmul.mubr.bf16.gmra.mxu0 %v9575
      %v10643 = vpop.f32.mrf.mxu0
      %v10644 = vadd.f32 %v10483, %v10643
      %v10645 = vpop.f32.mrf.mxu0
      %v10646 = vpop.f32.mrf.mxu0
      %v10647 = vadd.f32 %v10486, %v10646
      %v10648 = vpop.f32.mrf.mxu0
      %10649 = vmatprep.mubr.bf16.mxu0 %v9585
      %10650 = vmatmul.mubr.bf16.gmra.mxu0 %v9584
      %v10651 = vpop.f32.mrf.mxu0
      %v10652 = vadd.f32 %v10491, %v10651
      %v10653 = vpop.f32.mrf.mxu0
      %v10654 = vpop.f32.mrf.mxu0
      %v10655 = vadd.f32 %v10494, %v10654
      %v10656 = vpop.f32.mrf.mxu0
      %10657 = vmatprep.mubr.bf16.mxu0 %v9594
      %10658 = vmatmul.mubr.bf16.gmra.mxu0 %v9593
      %v10659 = vpop.f32.mrf.mxu0
      %v10660 = vadd.f32 %v10499, %v10659
      %v10661 = vpop.f32.mrf.mxu0
      %v10662 = vpop.f32.mrf.mxu0
      %v10663 = vadd.f32 %v10502, %v10662
      %v10664 = vpop.f32.mrf.mxu0
      %10665 = vmatprep.mubr.bf16.mxu0 %v9603
      %10666 = vmatmul.mubr.bf16.gmra.mxu0 %v9602
      %v10667 = vpop.f32.mrf.mxu0
      %v10668 = vadd.f32 %v10507, %v10667
      %v10669 = vpop.f32.mrf.mxu0
      %v10670 = vpop.f32.mrf.mxu0
      %v10671 = vadd.f32 %v10510, %v10670
      %v10672 = vpop.f32.mrf.mxu0
      %10673 = vmatprep.mubr.bf16.mxu0 %v9612
      %10674 = vmatmul.mubr.bf16.gmra.mxu0 %v9611
      %v10675 = vpop.f32.mrf.mxu0
      %v10676 = vadd.f32 %v10515, %v10675
      %v10677 = vpop.f32.mrf.mxu0
      %v10678 = vpop.f32.mrf.mxu0
      %v10679 = vadd.f32 %v10518, %v10678
      %v10680 = vpop.f32.mrf.mxu0
      %10681 = vmatprep.mubr.bf16.mxu0 %v9621
      %10682 = vmatmul.mubr.bf16.gmra.mxu0 %v9620
      %v10683 = vpop.f32.mrf.mxu0
      %v10684 = vadd.f32 %v10523, %v10683
      %v10685 = vpop.f32.mrf.mxu0
      %v10686 = vpop.f32.mrf.mxu0
      %v10687 = vadd.f32 %v10526, %v10686
      %v10688 = vpop.f32.mrf.mxu0
      %10689 = vmatprep.mubr.bf16.mxu0 %v9630
      %10690 = vmatmul.mubr.bf16.gmra.mxu0 %v9629
      %v10691 = vpop.f32.mrf.mxu0
      %v10692 = vadd.f32 %v10531, %v10691
      %v10693 = vpop.f32.mrf.mxu0
      %v10694 = vpop.f32.mrf.mxu0
      %v10695 = vadd.f32 %v10534, %v10694
      %v10696 = vpop.f32.mrf.mxu0
      %10697 = vmatprep.mubr.bf16.mxu0 %v9639
      %10698 = vmatmul.mubr.bf16.gmra.mxu0 %v9638
      %v10699 = vpop.f32.mrf.mxu0
      %v10700 = vadd.f32 %v10539, %v10699
      %v10701 = vpop.f32.mrf.mxu0
      %v10702 = vpop.f32.mrf.mxu0
      %v10703 = vadd.f32 %v10542, %v10702
      %v10704 = vpop.f32.mrf.mxu0
      %10705 = vmatprep.mubr.bf16.mxu0 %v9648
      %10706 = vmatmul.mubr.bf16.gmra.mxu0 %v9647
      %v10707 = vpop.f32.mrf.mxu0
      %v10708 = vadd.f32 %v10547, %v10707
      %v10709 = vpop.f32.mrf.mxu0
      %v10710 = vpop.f32.mrf.mxu0
      %v10711 = vadd.f32 %v10550, %v10710
      %v10712 = vpop.f32.mrf.mxu0
      %10713 = vmatprep.mubr.bf16.mxu0 %v9657
      %10714 = vmatmul.mubr.bf16.gmra.mxu0 %v9656
      %v10715 = vpop.f32.mrf.mxu0
      %v10716 = vadd.f32 %v10555, %v10715
      %v10717 = vpop.f32.mrf.mxu0
      %v10718 = vpop.f32.mrf.mxu0
      %v10719 = vadd.f32 %v10558, %v10718
      %v10720 = vpop.f32.mrf.mxu0
      %10721 = vmatprep.mubr.bf16.mxu0 %v9666
      %10722 = vmatmul.mubr.bf16.gmra.mxu0 %v9665
      %v10723 = vpop.f32.mrf.mxu0
      %v10724 = vadd.f32 %v10563, %v10723
      %v10725 = vpop.f32.mrf.mxu0
      %v10726 = vpop.f32.mrf.mxu0
      %v10727 = vadd.f32 %v10566, %v10726
      %v10728 = vpop.f32.mrf.mxu0
      %10729 = vmatprep.mubr.bf16.mxu0 %v9675
      %10730 = vmatmul.mubr.bf16.gmra.mxu0 %v9674
      %v10731 = vpop.f32.mrf.mxu0
      %v10732 = vadd.f32 %v10571, %v10731
      %v10733 = vpop.f32.mrf.mxu0
      %v10734 = vpop.f32.mrf.mxu0
      %v10735 = vadd.f32 %v10574, %v10734
      %v10736 = vpop.f32.mrf.mxu0
      %10737 = vdwg.mxu0
      %10738 = vmatprep.subr.bf16.mxu0 0
      %10739 = vmatpush1.bf16.msra.mxu0 %v10166
      %10740 = vmatprep.subr.bf16.mxu0 0
      %10741 = vmatpush1.bf16.msra.mxu0 %v10165
      %10742 = vmatprep.subr.bf16.mxu0 0
      %10743 = vmatpush1.bf16.msra.mxu0 %v10164
      %10744 = vmatprep.subr.bf16.mxu0 0
      %10745 = vmatpush1.bf16.msra.mxu0 %v10163
      %10746 = vmatprep.subr.bf16.mxu0 0
      %10747 = vmatpush1.bf16.msra.mxu0 %v10162
      %10748 = vmatprep.subr.bf16.mxu0 0
      %10749 = vmatpush1.bf16.msra.mxu0 %v10161
      %10750 = vmatprep.subr.bf16.mxu0 0
      %10751 = vmatpush1.bf16.msra.mxu0 %v10160
      %10752 = vmatprep.subr.bf16.mxu0 0
      %10753 = vmatpush1.bf16.msra.mxu0 %v10159
      %10754 = vmatprep.subr.bf16.mxu0 0
      %10755 = vmatpush2.bf16.msra.mxu0 %v10174
      %10756 = vmatprep.subr.bf16.mxu0 0
      %10757 = vmatpush2.bf16.msra.mxu0 %v10173
      %10758 = vmatprep.subr.bf16.mxu0 0
      %10759 = vmatpush2.bf16.msra.mxu0 %v10172
      %10760 = vmatprep.subr.bf16.mxu0 0
      %10761 = vmatpush2.bf16.msra.mxu0 %v10171
      %10762 = vmatprep.subr.bf16.mxu0 0
      %10763 = vmatpush2.bf16.msra.mxu0 %v10170
      %10764 = vmatprep.subr.bf16.mxu0 0
      %10765 = vmatpush2.bf16.msra.mxu0 %v10169
      %10766 = vmatprep.subr.bf16.mxu0 0
      %10767 = vmatpush2.bf16.msra.mxu0 %v10168
      %10768 = vmatprep.subr.bf16.mxu0 0
      %10769 = vmatpush2.bf16.msra.mxu0 %v10167
      %10770 = vmatprep.mubr.bf16.mxu0 %v9542
      %10771 = vmatmul.mubr.bf16.gmra.mxu0 %v9541
      %v10772 = vpop.f32.mrf.mxu0
      %v10773 = vadd.f32 %v10612, %v10772
      %v10774 = vpop.f32.mrf.mxu0
      %v10775 = vpop.f32.mrf.mxu0
      %v10776 = vadd.f32 %v10615, %v10775
      %v10777 = vpop.f32.mrf.mxu0
      %10778 = vmatprep.mubr.bf16.mxu0 %v9551
      %10779 = vmatmul.mubr.bf16.gmra.mxu0 %v9550
      %v10780 = vpop.f32.mrf.mxu0
      %v10781 = vadd.f32 %v10620, %v10780
      %v10782 = vpop.f32.mrf.mxu0
      %v10783 = vpop.f32.mrf.mxu0
      %v10784 = vadd.f32 %v10623, %v10783
      %v10785 = vpop.f32.mrf.mxu0
      %10786 = vmatprep.mubr.bf16.mxu0 %v9560
      %10787 = vmatmul.mubr.bf16.gmra.mxu0 %v9559
      %v10788 = vpop.f32.mrf.mxu0
      %v10789 = vadd.f32 %v10628, %v10788
      %v10790 = vpop.f32.mrf.mxu0
      %v10791 = vpop.f32.mrf.mxu0
      %v10792 = vadd.f32 %v10631, %v10791
      %v10793 = vpop.f32.mrf.mxu0
      %10794 = vmatprep.mubr.bf16.mxu0 %v9569
      %10795 = vmatmul.mubr.bf16.gmra.mxu0 %v9568
      %v10796 = vpop.f32.mrf.mxu0
      %v10797 = vadd.f32 %v10636, %v10796
      %v10798 = vpop.f32.mrf.mxu0
      %v10799 = vpop.f32.mrf.mxu0
      %v10800 = vadd.f32 %v10639, %v10799
      %v10801 = vpop.f32.mrf.mxu0
      %10802 = vmatprep.mubr.bf16.mxu0 %v9578
      %10803 = vmatmul.mubr.bf16.gmra.mxu0 %v9577
      %v10804 = vpop.f32.mrf.mxu0
      %v10805 = vadd.f32 %v10644, %v10804
      %v10806 = vpop.f32.mrf.mxu0
      %v10807 = vpop.f32.mrf.mxu0
      %v10808 = vadd.f32 %v10647, %v10807
      %v10809 = vpop.f32.mrf.mxu0
      %10810 = vmatprep.mubr.bf16.mxu0 %v9587
      %10811 = vmatmul.mubr.bf16.gmra.mxu0 %v9586
      %v10812 = vpop.f32.mrf.mxu0
      %v10813 = vadd.f32 %v10652, %v10812
      %v10814 = vpop.f32.mrf.mxu0
      %v10815 = vpop.f32.mrf.mxu0
      %v10816 = vadd.f32 %v10655, %v10815
      %v10817 = vpop.f32.mrf.mxu0
      %10818 = vmatprep.mubr.bf16.mxu0 %v9596
      %10819 = vmatmul.mubr.bf16.gmra.mxu0 %v9595
      %v10820 = vpop.f32.mrf.mxu0
      %v10821 = vadd.f32 %v10660, %v10820
      %v10822 = vpop.f32.mrf.mxu0
      %v10823 = vpop.f32.mrf.mxu0
      %v10824 = vadd.f32 %v10663, %v10823
      %v10825 = vpop.f32.mrf.mxu0
      %10826 = vmatprep.mubr.bf16.mxu0 %v9605
      %10827 = vmatmul.mubr.bf16.gmra.mxu0 %v9604
      %v10828 = vpop.f32.mrf.mxu0
      %v10829 = vadd.f32 %v10668, %v10828
      %v10830 = vpop.f32.mrf.mxu0
      %v10831 = vpop.f32.mrf.mxu0
      %v10832 = vadd.f32 %v10671, %v10831
      %v10833 = vpop.f32.mrf.mxu0
      %10834 = vmatprep.mubr.bf16.mxu0 %v9614
      %10835 = vmatmul.mubr.bf16.gmra.mxu0 %v9613
      %v10836 = vpop.f32.mrf.mxu0
      %v10837 = vadd.f32 %v10676, %v10836
      %v10838 = vpop.f32.mrf.mxu0
      %v10839 = vpop.f32.mrf.mxu0
      %v10840 = vadd.f32 %v10679, %v10839
      %v10841 = vpop.f32.mrf.mxu0
      %10842 = vmatprep.mubr.bf16.mxu0 %v9623
      %10843 = vmatmul.mubr.bf16.gmra.mxu0 %v9622
      %v10844 = vpop.f32.mrf.mxu0
      %v10845 = vadd.f32 %v10684, %v10844
      %v10846 = vpop.f32.mrf.mxu0
      %v10847 = vpop.f32.mrf.mxu0
      %v10848 = vadd.f32 %v10687, %v10847
      %v10849 = vpop.f32.mrf.mxu0
      %10850 = vmatprep.mubr.bf16.mxu0 %v9632
      %10851 = vmatmul.mubr.bf16.gmra.mxu0 %v9631
      %v10852 = vpop.f32.mrf.mxu0
      %v10853 = vadd.f32 %v10692, %v10852
      %v10854 = vpop.f32.mrf.mxu0
      %v10855 = vpop.f32.mrf.mxu0
      %v10856 = vadd.f32 %v10695, %v10855
      %v10857 = vpop.f32.mrf.mxu0
      %10858 = vmatprep.mubr.bf16.mxu0 %v9641
      %10859 = vmatmul.mubr.bf16.gmra.mxu0 %v9640
      %v10860 = vpop.f32.mrf.mxu0
      %v10861 = vadd.f32 %v10700, %v10860
      %v10862 = vpop.f32.mrf.mxu0
      %v10863 = vpop.f32.mrf.mxu0
      %v10864 = vadd.f32 %v10703, %v10863
      %v10865 = vpop.f32.mrf.mxu0
      %10866 = vmatprep.mubr.bf16.mxu0 %v9650
      %10867 = vmatmul.mubr.bf16.gmra.mxu0 %v9649
      %v10868 = vpop.f32.mrf.mxu0
      %v10869 = vadd.f32 %v10708, %v10868
      %v10870 = vpop.f32.mrf.mxu0
      %v10871 = vpop.f32.mrf.mxu0
      %v10872 = vadd.f32 %v10711, %v10871
      %v10873 = vpop.f32.mrf.mxu0
      %10874 = vmatprep.mubr.bf16.mxu0 %v9659
      %10875 = vmatmul.mubr.bf16.gmra.mxu0 %v9658
      %v10876 = vpop.f32.mrf.mxu0
      %v10877 = vadd.f32 %v10716, %v10876
      %v10878 = vpop.f32.mrf.mxu0
      %v10879 = vpop.f32.mrf.mxu0
      %v10880 = vadd.f32 %v10719, %v10879
      %v10881 = vpop.f32.mrf.mxu0
      %10882 = vmatprep.mubr.bf16.mxu0 %v9668
      %10883 = vmatmul.mubr.bf16.gmra.mxu0 %v9667
      %v10884 = vpop.f32.mrf.mxu0
      %v10885 = vadd.f32 %v10724, %v10884
      %v10886 = vpop.f32.mrf.mxu0
      %v10887 = vpop.f32.mrf.mxu0
      %v10888 = vadd.f32 %v10727, %v10887
      %v10889 = vpop.f32.mrf.mxu0
      %10890 = vmatprep.mubr.bf16.mxu0 %v9677
      %10891 = vmatmul.mubr.bf16.gmra.mxu0 %v9676
      %v10892 = vpop.f32.mrf.mxu0
      %v10893 = vadd.f32 %v10732, %v10892
      %v10894 = vpop.f32.mrf.mxu0
      %v10895 = vpop.f32.mrf.mxu0
      %v10896 = vadd.f32 %v10735, %v10895
      %v10897 = vpop.f32.mrf.mxu0
      %10898 = vdwg.mxu0
      %10899 = vmatprep.subr.bf16.mxu0 0
      %10900 = vmatpush1.bf16.msra.mxu0 %v10182
      %10901 = vmatprep.subr.bf16.mxu0 0
      %10902 = vmatpush1.bf16.msra.mxu0 %v10181
      %10903 = vmatprep.subr.bf16.mxu0 0
      %10904 = vmatpush1.bf16.msra.mxu0 %v10180
      %10905 = vmatprep.subr.bf16.mxu0 0
      %10906 = vmatpush1.bf16.msra.mxu0 %v10179
      %10907 = vmatprep.subr.bf16.mxu0 0
      %10908 = vmatpush1.bf16.msra.mxu0 %v10178
      %10909 = vmatprep.subr.bf16.mxu0 0
      %10910 = vmatpush1.bf16.msra.mxu0 %v10177
      %10911 = vmatprep.subr.bf16.mxu0 0
      %10912 = vmatpush1.bf16.msra.mxu0 %v10176
      %10913 = vmatprep.subr.bf16.mxu0 0
      %10914 = vmatpush1.bf16.msra.mxu0 %v10175
      %10915 = vmatprep.subr.bf16.mxu0 0
      %10916 = vmatpush2.bf16.msra.mxu0 0
      %10917 = vmatprep.subr.bf16.mxu0 0
      %10918 = vmatpush2.bf16.msra.mxu0 0
      %10919 = vmatprep.subr.bf16.mxu0 0
      %10920 = vmatpush2.bf16.msra.mxu0 0
      %10921 = vmatprep.subr.bf16.mxu0 0
      %10922 = vmatpush2.bf16.msra.mxu0 0
      %10923 = vmatprep.subr.bf16.mxu0 0
      %10924 = vmatpush2.bf16.msra.mxu0 0
      %10925 = vmatprep.subr.bf16.mxu0 0
      %10926 = vmatpush2.bf16.msra.mxu0 0
      %10927 = vmatprep.subr.bf16.mxu0 0
      %10928 = vmatpush2.bf16.msra.mxu0 0
      %10929 = vmatprep.subr.bf16.mxu0 0
      %10930 = vmatpush2.bf16.msra.mxu0 0
      %10931 = vmatprep.mubr.bf16.mxu0 0
      %10932 = vmatmul.mubr.bf16.gmra.mxu0 %v9543
      %v10933 = vpop.f32.mrf.mxu0
      %v10934 = vadd.f32 %v10773, %v10933
      %v10935 = vpop.f32.mrf.mxu0
      %v10936 = vpop.f32.mrf.mxu0
      %v10937 = vadd.f32 %v10776, %v10936
      %v10938 = vpop.f32.mrf.mxu0
      %10939 = vmatprep.mubr.bf16.mxu0 0
      %10940 = vmatmul.mubr.bf16.gmra.mxu0 %v9552
      %v10941 = vpop.f32.mrf.mxu0
      %v10942 = vadd.f32 %v10781, %v10941
      %v10943 = vpop.f32.mrf.mxu0
      %v10944 = vpop.f32.mrf.mxu0
      %v10945 = vadd.f32 %v10784, %v10944
      %v10946 = vpop.f32.mrf.mxu0
      %10947 = vmatprep.mubr.bf16.mxu0 0
      %10948 = vmatmul.mubr.bf16.gmra.mxu0 %v9561
      %v10949 = vpop.f32.mrf.mxu0
      %v10950 = vadd.f32 %v10789, %v10949
      %v10951 = vpop.f32.mrf.mxu0
      %v10952 = vpop.f32.mrf.mxu0
      %v10953 = vadd.f32 %v10792, %v10952
      %v10954 = vpop.f32.mrf.mxu0
      %10955 = vmatprep.mubr.bf16.mxu0 0
      %10956 = vmatmul.mubr.bf16.gmra.mxu0 %v9570
      %v10957 = vpop.f32.mrf.mxu0
      %v10958 = vadd.f32 %v10797, %v10957
      %v10959 = vpop.f32.mrf.mxu0
      %v10960 = vpop.f32.mrf.mxu0
      %v10961 = vadd.f32 %v10800, %v10960
      %v10962 = vpop.f32.mrf.mxu0
      %10963 = vmatprep.mubr.bf16.mxu0 0
      %10964 = vmatmul.mubr.bf16.gmra.mxu0 %v9579
      %v10965 = vpop.f32.mrf.mxu0
      %v10966 = vadd.f32 %v10805, %v10965
      %v10967 = vpop.f32.mrf.mxu0
      %v10968 = vpop.f32.mrf.mxu0
      %v10969 = vadd.f32 %v10808, %v10968
      %v10970 = vpop.f32.mrf.mxu0
      %10971 = vmatprep.mubr.bf16.mxu0 0
      %10972 = vmatmul.mubr.bf16.gmra.mxu0 %v9588
      %v10973 = vpop.f32.mrf.mxu0
      %v10974 = vadd.f32 %v10813, %v10973
      %v10975 = vpop.f32.mrf.mxu0
      %v10976 = vpop.f32.mrf.mxu0
      %v10977 = vadd.f32 %v10816, %v10976
      %v10978 = vpop.f32.mrf.mxu0
      %10979 = vmatprep.mubr.bf16.mxu0 0
      %10980 = vmatmul.mubr.bf16.gmra.mxu0 %v9597
      %v10981 = vpop.f32.mrf.mxu0
      %v10982 = vadd.f32 %v10821, %v10981
      %v10983 = vpop.f32.mrf.mxu0
      %v10984 = vpop.f32.mrf.mxu0
      %v10985 = vadd.f32 %v10824, %v10984
      %v10986 = vpop.f32.mrf.mxu0
      %10987 = vmatprep.mubr.bf16.mxu0 0
      %10988 = vmatmul.mubr.bf16.gmra.mxu0 %v9606
      %v10989 = vpop.f32.mrf.mxu0
      %v10990 = vadd.f32 %v10829, %v10989
      %v10991 = vpop.f32.mrf.mxu0
      %v10992 = vpop.f32.mrf.mxu0
      %v10993 = vadd.f32 %v10832, %v10992
      %v10994 = vpop.f32.mrf.mxu0
      %10995 = vmatprep.mubr.bf16.mxu0 0
      %10996 = vmatmul.mubr.bf16.gmra.mxu0 %v9615
      %v10997 = vpop.f32.mrf.mxu0
      %v10998 = vadd.f32 %v10837, %v10997
      %v10999 = vpop.f32.mrf.mxu0
      %v11000 = vpop.f32.mrf.mxu0
      %v11001 = vadd.f32 %v10840, %v11000
      %v11002 = vpop.f32.mrf.mxu0
      %11003 = vmatprep.mubr.bf16.mxu0 0
      %11004 = vmatmul.mubr.bf16.gmra.mxu0 %v9624
      %v11005 = vpop.f32.mrf.mxu0
      %v11006 = vadd.f32 %v10845, %v11005
      %v11007 = vpop.f32.mrf.mxu0
      %v11008 = vpop.f32.mrf.mxu0
      %v11009 = vadd.f32 %v10848, %v11008
      %v11010 = vpop.f32.mrf.mxu0
      %11011 = vmatprep.mubr.bf16.mxu0 0
      %11012 = vmatmul.mubr.bf16.gmra.mxu0 %v9633
      %v11013 = vpop.f32.mrf.mxu0
      %v11014 = vadd.f32 %v10853, %v11013
      %v11015 = vpop.f32.mrf.mxu0
      %v11016 = vpop.f32.mrf.mxu0
      %v11017 = vadd.f32 %v10856, %v11016
      %v11018 = vpop.f32.mrf.mxu0
      %11019 = vmatprep.mubr.bf16.mxu0 0
      %11020 = vmatmul.mubr.bf16.gmra.mxu0 %v9642
      %v11021 = vpop.f32.mrf.mxu0
      %v11022 = vadd.f32 %v10861, %v11021
      %v11023 = vpop.f32.mrf.mxu0
      %v11024 = vpop.f32.mrf.mxu0
      %v11025 = vadd.f32 %v10864, %v11024
      %v11026 = vpop.f32.mrf.mxu0
      %11027 = vmatprep.mubr.bf16.mxu0 0
      %11028 = vmatmul.mubr.bf16.gmra.mxu0 %v9651
      %v11029 = vpop.f32.mrf.mxu0
      %v11030 = vadd.f32 %v10869, %v11029
      %v11031 = vpop.f32.mrf.mxu0
      %v11032 = vpop.f32.mrf.mxu0
      %v11033 = vadd.f32 %v10872, %v11032
      %v11034 = vpop.f32.mrf.mxu0
      %11035 = vmatprep.mubr.bf16.mxu0 0
      %11036 = vmatmul.mubr.bf16.gmra.mxu0 %v9660
      %v11037 = vpop.f32.mrf.mxu0
      %v11038 = vadd.f32 %v10877, %v11037
      %v11039 = vpop.f32.mrf.mxu0
      %v11040 = vpop.f32.mrf.mxu0
      %v11041 = vadd.f32 %v10880, %v11040
      %v11042 = vpop.f32.mrf.mxu0
      %11043 = vmatprep.mubr.bf16.mxu0 0
      %11044 = vmatmul.mubr.bf16.gmra.mxu0 %v9669
      %v11045 = vpop.f32.mrf.mxu0
      %v11046 = vadd.f32 %v10885, %v11045
      %v11047 = vpop.f32.mrf.mxu0
      %v11048 = vpop.f32.mrf.mxu0
      %v11049 = vadd.f32 %v10888, %v11048
      %v11050 = vpop.f32.mrf.mxu0
      %11051 = vmatprep.mubr.bf16.mxu0 0
      %11052 = vmatmul.mubr.bf16.gmra.mxu0 %v9678
      %v11053 = vpop.f32.mrf.mxu0
      %v11054 = vadd.f32 %v10893, %v11053
      %v11055 = vpop.f32.mrf.mxu0
      %v11056 = vpop.f32.mrf.mxu0
      %v11057 = vadd.f32 %v10896, %v11056
      %v11058 = vpop.f32.mrf.mxu0
      %11059 = vdwg.mxu0
      %v11060 = vld [vmem:[%s5] sm:$0x1]
      %v11062 = vlaneseq
      %v11063 = vshrl.u32 %v11062, 7
      %v11064 = vsub.s32 0, %v11063
      %v11065 = vrot.slane %v11060, %v11064
      %v11067 = vmul.f32 %v10934, %v11065
      %v11068 = vmul.f32 %v10937, %v11065
      %v11069 = vmul.f32 %v10942, %v11065
      %v11070 = vmul.f32 %v10945, %v11065
      %v11071 = vmul.f32 %v10950, %v11065
      %v11072 = vmul.f32 %v10953, %v11065
      %v11073 = vmul.f32 %v10958, %v11065
      %v11074 = vmul.f32 %v10961, %v11065
      %v11075 = vmul.f32 %v10966, %v11065
      %v11076 = vmul.f32 %v10969, %v11065
      %v11077 = vmul.f32 %v10974, %v11065
      %v11078 = vmul.f32 %v10977, %v11065
      %v11079 = vmul.f32 %v10982, %v11065
      %v11080 = vmul.f32 %v10985, %v11065
      %v11081 = vmul.f32 %v10990, %v11065
      %v11082 = vmul.f32 %v10993, %v11065
      %v11083 = vmul.f32 %v10998, %v11065
      %v11084 = vmul.f32 %v11001, %v11065
      %v11085 = vmul.f32 %v11006, %v11065
      %v11086 = vmul.f32 %v11009, %v11065
      %v11087 = vmul.f32 %v11014, %v11065
      %v11088 = vmul.f32 %v11017, %v11065
      %v11089 = vmul.f32 %v11022, %v11065
      %v11090 = vmul.f32 %v11025, %v11065
      %v11091 = vmul.f32 %v11030, %v11065
      %v11092 = vmul.f32 %v11033, %v11065
      %v11093 = vmul.f32 %v11038, %v11065
      %v11094 = vmul.f32 %v11041, %v11065
      %v11095 = vmul.f32 %v11046, %v11065
      %v11096 = vmul.f32 %v11049, %v11065
      %v11097 = vmul.f32 %v11054, %v11065
      %v11098 = vmul.f32 %v11057, %v11065
      %v11099 = vld [vmem:[%s6] sm:$0x1]
      %v11101 = vlaneseq
      %v11102 = vshrl.u32 %v11101, 7
      %v11103 = vsub.s32 0, %v11102
      %v11104 = vrot.slane %v11099, %v11103
      %v11106 = vadd.f32 %v11067, %v11104
      %v11107 = vadd.f32 %v11068, %v11104
      %v11108 = vadd.f32 %v11069, %v11104
      %v11109 = vadd.f32 %v11070, %v11104
      %v11110 = vadd.f32 %v11071, %v11104
      %v11111 = vadd.f32 %v11072, %v11104
      %v11112 = vadd.f32 %v11073, %v11104
      %v11113 = vadd.f32 %v11074, %v11104
      %v11114 = vadd.f32 %v11075, %v11104
      %v11115 = vadd.f32 %v11076, %v11104
      %v11116 = vadd.f32 %v11077, %v11104
      %v11117 = vadd.f32 %v11078, %v11104
      %v11118 = vadd.f32 %v11079, %v11104
      %v11119 = vadd.f32 %v11080, %v11104
      %v11120 = vadd.f32 %v11081, %v11104
      %v11121 = vadd.f32 %v11082, %v11104
      %v11122 = vadd.f32 %v11083, %v11104
      %v11123 = vadd.f32 %v11084, %v11104
      %v11124 = vadd.f32 %v11085, %v11104
      %v11125 = vadd.f32 %v11086, %v11104
      %v11126 = vadd.f32 %v11087, %v11104
      %v11127 = vadd.f32 %v11088, %v11104
      %v11128 = vadd.f32 %v11089, %v11104
      %v11129 = vadd.f32 %v11090, %v11104
      %v11130 = vadd.f32 %v11091, %v11104
      %v11131 = vadd.f32 %v11092, %v11104
      %v11132 = vadd.f32 %v11093, %v11104
      %v11133 = vadd.f32 %v11094, %v11104
      %v11134 = vadd.f32 %v11095, %v11104
      %v11135 = vadd.f32 %v11096, %v11104
      %v11136 = vadd.f32 %v11097, %v11104
      %v11137 = vadd.f32 %v11098, %v11104
      %v11138 = vmax.f32 %v11106, 0.0
      %v11139 = vmax.f32 %v11107, 0.0
      %v11140 = vmax.f32 %v11108, 0.0
      %v11141 = vmax.f32 %v11109, 0.0
      %v11142 = vmax.f32 %v11110, 0.0
      %v11143 = vmax.f32 %v11111, 0.0
      %v11144 = vmax.f32 %v11112, 0.0
      %v11145 = vmax.f32 %v11113, 0.0
      %v11146 = vmax.f32 %v11114, 0.0
      %v11147 = vmax.f32 %v11115, 0.0
      %v11148 = vmax.f32 %v11116, 0.0
      %v11149 = vmax.f32 %v11117, 0.0
      %v11150 = vmax.f32 %v11118, 0.0
      %v11151 = vmax.f32 %v11119, 0.0
      %v11152 = vmax.f32 %v11120, 0.0
      %v11153 = vmax.f32 %v11121, 0.0
      %v11154 = vmax.f32 %v11122, 0.0
      %v11155 = vmax.f32 %v11123, 0.0
      %v11156 = vmax.f32 %v11124, 0.0
      %v11157 = vmax.f32 %v11125, 0.0
      %v11158 = vmax.f32 %v11126, 0.0
      %v11159 = vmax.f32 %v11127, 0.0
      %v11160 = vmax.f32 %v11128, 0.0
      %v11161 = vmax.f32 %v11129, 0.0
      %v11162 = vmax.f32 %v11130, 0.0
      %v11163 = vmax.f32 %v11131, 0.0
      %v11164 = vmax.f32 %v11132, 0.0
      %v11165 = vmax.f32 %v11133, 0.0
      %v11166 = vmax.f32 %v11134, 0.0
      %v11167 = vmax.f32 %v11135, 0.0
      %v11168 = vmax.f32 %v11136, 0.0
      %v11169 = vmax.f32 %v11137, 0.0
      %11170 = vst [vmem:[%s278] sm:$0xff] %v11138
      %11171 = vst [vmem:[%s278 + $0x8] sm:$0xff] %v11139
      %11172 = vst [vmem:[%s278 + $0x10] sm:$0xff] %v11140
      %11173 = vst [vmem:[%s278 + $0x18] sm:$0xff] %v11141
      %11174 = vst [vmem:[%s278 + $0x20] sm:$0xff] %v11142
      %11175 = vst [vmem:[%s278 + $0x28] sm:$0xff] %v11143
      %11176 = vst [vmem:[%s278 + $0x30] sm:$0xff] %v11144
      %11177 = vst [vmem:[%s278 + $0x38] sm:$0xff] %v11145
      %11178 = vst [vmem:[%s278 + $0x40] sm:$0xff] %v11146
      %11179 = vst [vmem:[%s278 + $0x48] sm:$0xff] %v11147
      %11180 = vst [vmem:[%s278 + $0x50] sm:$0xff] %v11148
      %11181 = vst [vmem:[%s278 + $0x58] sm:$0xff] %v11149
      %11182 = vst [vmem:[%s278 + $0x60] sm:$0xff] %v11150
      %11183 = vst [vmem:[%s278 + $0x68] sm:$0xff] %v11151
      %11184 = vst [vmem:[%s278 + $0x70] sm:$0xff] %v11152
      %11185 = vst [vmem:[%s278 + $0x78] sm:$0xff] %v11153
      %11186 = vst [vmem:[%s278 + $0x80] sm:$0xff] %v11154
      %11187 = vst [vmem:[%s278 + $0x88] sm:$0xff] %v11155
      %11188 = vst [vmem:[%s278 + $0x90] sm:$0xff] %v11156
      %11189 = vst [vmem:[%s278 + $0x98] sm:$0xff] %v11157
      %11190 = vst [vmem:[%s278 + $0xa0] sm:$0xff] %v11158
      %11191 = vst [vmem:[%s278 + $0xa8] sm:$0xff] %v11159
      %11192 = vst [vmem:[%s278 + $0xb0] sm:$0xff] %v11160
      %11193 = vst [vmem:[%s278 + $0xb8] sm:$0xff] %v11161
      %11194 = vst [vmem:[%s278 + $0xc0] sm:$0xff] %v11162
      %11195 = vst [vmem:[%s278 + $0xc8] sm:$0xff] %v11163
      %11196 = vst [vmem:[%s278 + $0xd0] sm:$0xff] %v11164
      %11197 = vst [vmem:[%s278 + $0xd8] sm:$0xff] %v11165
      %11198 = vst [vmem:[%s278 + $0xe0] sm:$0xff] %v11166
      %11199 = vst [vmem:[%s278 + $0xe8] sm:$0xff] %v11167
      %11200 = vst [vmem:[%s278 + $0xf0] sm:$0xff] %v11168
      %11201 = vst [vmem:[%s278 + $0xf8] sm:$0xff] %v11169
      %p11202 = scmp.lt.s32.totalorder %s18, 1
      %s11203 = scalar_select %p11202, %s18, 1
      %s11204 = smul.addr %s11203, 32
      %s11205 = smul.addr %s11204, 8
      %s11206 = scalar_lea.vmem %s7, %s11205
      // Predicated region
      $region49: #{double_conv_forward.1} parent=47 // pred_check
        %p11207 = pneg %p188
      $region50: #{double_conv_forward.1} parent=47 // pred_check_branch
        %11209 = sbr.rel (%p11207) target = $region52
      $region51: #{double_conv_forward.1} parent=47 // pred_region
        _
      $region52: #{double_conv_forward.1} parent=47 // pred_fallthru
        _
    $region48: #{double_conv_forward.1} parent=5 // pred_fallthru
      _
    %p11210 = scmp.le.s32.totalorder 2, %s13
    // Predicated region
    $region53: #{double_conv_forward.1} parent=5 // pred_check
      %p11211 = pneg %p11210
    $region54: #{double_conv_forward.1} parent=5 // pred_check_branch
      %11213 = sbr.rel (%p11211) target = $region56
    $region55: #{double_conv_forward.1} parent=5 // pred_region
      %s11214 = ssub.s32 %s13, 2
      // Predicated region
      $region57: #{double_conv_forward.1} parent=55 // pred_check
        %p11215 = pneg %p194
      $region58: #{double_conv_forward.1} parent=55 // pred_check_branch
        %11217 = sbr.rel (%p11215) target = $region60
      $region59: #{double_conv_forward.1} parent=55 // pred_region
        %p11218 = scmp.lt.s32.totalorder %s19, 1
        %s11219 = scalar_select %p11218, %s19, 1
        %s11220 = smul.addr %s11219, 32
        %s11221 = smul.addr %s11220, 8
        %s11222 = scalar_lea.vmem %s7, %s11221
      $region60: #{double_conv_forward.1} parent=55 // pred_fallthru
        _
    $region56: #{double_conv_forward.1} parent=5 // pred_fallthru
      _
  $region6: #{double_conv_forward.1} parent=0 // loop_footer
    %s17 = sadd.s32 1, %s13
  $region7: #{double_conv_forward.1} parent=0 // loop_footer_branch
    %12 = sbr.rel target = $region3
  $region8: #{double_conv_forward.1} parent=0 // loop_exit
    _

</llo_original>
